<compile_context>
chip_gen: v6e
topology: v6e:2x2x1
jax: 0.10.0
libtpu: 0.0.40
codegen_flags: <defaults>
</compile_context>

<pallas_src>
import functools

import jax
import jax.numpy as jnp
from jax.experimental import pallas as pl
from jax.experimental.pallas import tpu as pltpu

LANE = 128            # lane-padded channel width carried through the network
K0 = 7 * 7 * 3        # stem im2col depth (147)
K0P = 256             # stem K padded to two full 128-lane groups


def _default_vmem_limit():
    # v5e/v6e: 128 MiB physical VMEM -> 64 MiB scoped budget.
    # v7x:      64 MiB physical VMEM -> stay <= 48 MiB.
    try:
        cap = int(pltpu.get_tpu_info().vmem_capacity_bytes)
    except Exception:
        return 48 * 1024 * 1024
    return int(min(64 * 1024 * 1024, max(32 * 1024 * 1024, (cap * 3) // 4)))


_VMEM_LIMIT = _default_vmem_limit()


# ----------------------------- Pallas kernels ------------------------------

def _conv_bn_relu_kernel(a_ref, w_ref, s_ref, b_ref, o_ref):
    # stem: conv0 (im2col matmul, bf16 operands) + folded norm0 + relu0,
    # f32 accumulation / BN math, lane-dense (TM, 128) bf16 store.
    acc = jnp.dot(a_ref[...], w_ref[...], preferred_element_type=jnp.float32)
    o_ref[...] = jnp.maximum(acc * s_ref[...] + b_ref[...], 0.0).astype(o_ref.dtype)


def _bottleneck_kernel(x_ref, w_ref, s1_ref, b1_ref, s2_ref, b2_ref, o_ref):
    # dense layer bottleneck: norm1+relu (prologue, f32) -> conv1 1x1 (MXU, bf16)
    # -> norm2+relu (epilogue, f32).  Output is the REAL bw=32 channels only.
    a = jnp.maximum(x_ref[...].astype(jnp.float32) * s1_ref[...] + b1_ref[...], 0.0)
    acc = jnp.dot(a.astype(jnp.bfloat16), w_ref[...],
                  preferred_element_type=jnp.float32)
    o_ref[...] = jnp.maximum(acc * s2_ref[...] + b2_ref[...], 0.0).astype(o_ref.dtype)


def _conv2_add_kernel(p_ref, feat_ref, w_ref, o_ref):
    # 3x3 conv (im2col matmul over K = 9*bw, padded to 384) whose weight columns
    # sit at this layer's channel offset inside the 128-wide padded feature
    # buffer, plus the running feature map -> DenseNet concat as a fused add.
    acc = jnp.dot(p_ref[...], w_ref[...], preferred_element_type=jnp.float32)
    o_ref[...] = (feat_ref[...].astype(jnp.float32) + acc).astype(o_ref.dtype)


def _maxpool_kernel(p_ref, o_ref, *, taps):
    # p: (TM, taps, 128) window patches; unrolled VPU maximum chain over taps
    # (no XLU sublane reduce), lane-dense (TM, 128) store.
    m = p_ref[:, 0, :]
    for t in range(1, taps):
        m = jnp.maximum(m, p_ref[:, t, :])
    o_ref[...] = m


def _head_kernel(f_ref, s5_ref, b5_ref, w_ref, b_ref, o_ref, *, apply_sigmoid):
    # fused: norm5 -> forward()'s relu -> avg_pool2d(16,1) -> Linear -> sigmoid.
    # f: (B, 256, 128) lane-padded bf16 features; all elementwise math in f32.
    f = jnp.maximum(f_ref[...].astype(jnp.float32) * s5_ref[...] + b5_ref[...], 0.0)
    pooled = jnp.mean(f, axis=1)                           # (B, 128)
    logits = jnp.dot(pooled.astype(jnp.bfloat16), w_ref[...],
                     preferred_element_type=jnp.float32) + b_ref[...]
    if apply_sigmoid:
        logits = jax.nn.sigmoid(logits)
    o_ref[...] = logits.astype(o_ref.dtype)


# ------------------------- pallas_call wrappers -----------------------------

def _vmem_spec():
    return pl.BlockSpec(memory_space=pltpu.MemorySpace.VMEM)


def _pick_tm(m):
    # Big tiles (amortize ~0.35us/step) but always >= 2 grid steps (target ~8)
    # so v7x's two TensorCores both get work and double-buffering can overlap.
    tm = pl.next_power_of_2(max(1, pl.cdiv(m, 8)))
    return int(min(1024, max(128, tm)))


def _pad_rows(a, mp):
    m = a.shape[0]
    if m == mp:
        return a
    return jnp.pad(a, ((0, mp - m),) + ((0, 0),) * (a.ndim - 1))


def _call_matmul_fused(kernel_fn, row_inputs, bcast_inputs, n_out,
                       out_dtype=jnp.bfloat16, alias_row_input=None):
    """Gridded fused matmul call.

    row_inputs:   2-D arrays sharing leading dim M, tiled over M (TM rows);
                  M is padded up to a TM multiple (no single-block fallback).
    bcast_inputs: 2-D arrays replicated to every M tile (weights / BN vectors).
    """
    m = row_inputs[0].shape[0]
    tm = _pick_tm(m)
    mp = tm * pl.cdiv(m, tm)
    row_inputs = [_pad_rows(a, mp) for a in row_inputs]
    grid = (mp // tm,)

    in_specs = [pl.BlockSpec((tm, a.shape[1]), lambda i: (i, 0)) for a in row_inputs]
    in_specs += [pl.BlockSpec(b.shape, lambda i: (0, 0)) for b in bcast_inputs]
    out_specs = pl.BlockSpec((tm, n_out), lambda i: (i, 0))

    k = row_inputs[0].shape[1]
    flops = 2 * int(mp) * int(k) * int(n_out)
    out_bytes = int(mp) * int(n_out) * (jnp.finfo(out_dtype).bits // 8)
    bytes_accessed = (sum(int(a.size) * int(a.dtype.itemsize)
                          for a in (*row_inputs, *bcast_inputs)) + out_bytes)

    io_aliases = {alias_row_input: 0} if alias_row_input is not None else {}

    y = pl.pallas_call(
        kernel_fn,
        out_shape=jax.ShapeDtypeStruct((mp, n_out), out_dtype),
        grid=grid,
        in_specs=in_specs,
        out_specs=out_specs,
        input_output_aliases=io_aliases,
        compiler_params=pltpu.CompilerParams(
            dimension_semantics=("parallel",),      # megacore / both v7x TCs
            vmem_limit_bytes=_VMEM_LIMIT),
        cost_estimate=pl.CostEstimate(flops=flops, transcendentals=0,
                                      bytes_accessed=bytes_accessed),
    )(*row_inputs, *bcast_inputs)
    return y[:m] if mp != m else y


def _extract_patches(x, kh, kw, stride, pad, pad_value=0.0):
    # x: (B, H, W, C) NHWC -> (B, Ho, Wo, kh*kw, C)   [pure XLA indexing glue]
    # TODO(synk): at ImageNet scale this HBM patch materialization should move
    # into a halo-blocked Pallas kernel; with bw=32-wide bf16 patches it is a
    # 3x amplification of the (small) bottleneck activation, not of feat.
    B, H, W, C = x.shape
    xp = jnp.pad(x, ((0, 0), (pad, pad), (pad, pad), (0, 0)),
                 constant_values=pad_value)
    Ho = (H + 2 * pad - kh) // stride + 1
    Wo = (W + 2 * pad - kw) // stride + 1
    cols = []
    for i in range(kh):
        for j in range(kw):
            cols.append(xp[:, i:i + stride * Ho:stride, j:j + stride * Wo:stride, :])
    return jnp.stack(cols, axis=3), Ho, Wo


def max_pool2d(x, k, stride, pad):
    B, _, _, C = x.shape
    patches, Ho, Wo = _extract_patches(x, k, k, stride, pad, pad_value=-jnp.inf)
    m = B * Ho * Wo
    taps = k * k
    p = patches.reshape(m, taps, C)
    tm = _pick_tm(m)
    mp = tm * pl.cdiv(m, tm)
    p = _pad_rows(p, mp)
    y = pl.pallas_call(
        functools.partial(_maxpool_kernel, taps=taps),
        out_shape=jax.ShapeDtypeStruct((mp, C), x.dtype),
        grid=(mp // tm,),
        in_specs=[pl.BlockSpec((tm, taps, C), lambda i: (i, 0, 0))],
        out_specs=pl.BlockSpec((tm, C), lambda i: (i, 0)),
        compiler_params=pltpu.CompilerParams(
            dimension_semantics=("parallel",),
            vmem_limit_bytes=_VMEM_LIMIT),
    )(p)
    return y[:m].reshape(B, Ho, Wo, C)


def classifier_head(feat2d, B, H, W, s5, b5, fc_w, fc_b, training_type):
    assert H == 16 and W == 16, "avg_pool2d(kernel_size=16, stride=1) expects 16x16"
    f = feat2d.reshape(B, H * W, LANE)
    kern = functools.partial(_head_kernel,
                             apply_sigmoid=(training_type == 'onevsall'))
    return pl.pallas_call(
        kern,
        out_shape=jax.ShapeDtypeStruct((B, LANE), jnp.float32),   # lane-dense out
        in_specs=[_vmem_spec()] * 5,
        out_specs=_vmem_spec(),
        compiler_params=pltpu.CompilerParams(vmem_limit_bytes=_VMEM_LIMIT),
    )(f, s5, b5, fc_w, fc_b)


# ----------------------------- parameters -----------------------------------

def _bn_fold(key, c, width, eps=1e-5):
    # eval-mode BN folded to per-channel scale/shift, zero-padded to `width`,
    # kept in f32 (elementwise math stays f32 inside the kernels).
    k1, k2, k3, k4 = jax.random.split(key, 4)
    gamma = 1.0 + 0.1 * jax.random.normal(k1, (c,), jnp.float32)
    beta = 0.1 * jax.random.normal(k2, (c,), jnp.float32)
    mean = 0.1 * jax.random.normal(k3, (c,), jnp.float32)
    var = 1.0 + 0.1 * jnp.abs(jax.random.normal(k4, (c,), jnp.float32))
    scale = gamma / jnp.sqrt(var + eps)
    shift = beta - mean * scale
    s = jnp.zeros((width,), jnp.float32).at[:c].set(scale)
    b = jnp.zeros((width,), jnp.float32).at[:c].set(shift)
    return s.reshape(1, width), b.reshape(1, width)


def init_params(key, *, in_ch=3, num_init_features=16, growth_rate=8,
                bn_size=4, num_layers=3, num_classes=4):
    keys = jax.random.split(key, 4 + 4 * num_layers)
    ki = iter(keys)

    # conv0: (7,7,in_ch,nif) -> (K0P, 128) bf16, im2col row order = (kh, kw, cin)
    w0 = jax.random.normal(next(ki), (7, 7, in_ch, num_init_features),
                           jnp.float32) * (2.0 / K0) ** 0.5
    conv0 = (jnp.zeros((K0P, LANE), jnp.float32)
             .at[:K0, :num_init_features].set(w0.reshape(K0, num_init_features)))
    n0s, n0b = _bn_fold(next(ki), num_init_features, LANE)

    params = {'conv0': conv0.astype(jnp.bfloat16),
              'norm0_s': n0s, 'norm0_b': n0b, 'block': []}

    c = num_init_features
    bw = bn_size * growth_rate                      # real bottleneck width (32)
    kp2 = 128 * pl.cdiv(9 * bw, 128)                # 3x3-conv K padded (288->384)
    for _ in range(num_layers):
        n1s, n1b = _bn_fold(next(ki), c, LANE)
        w1d = jax.random.normal(next(ki), (c, bw), jnp.float32) * (2.0 / c) ** 0.5
        w1 = jnp.zeros((LANE, bw), jnp.float32).at[:c, :].set(w1d)

        n2s, n2b = _bn_fold(next(ki), bw, bw)
        fan2 = 9 * bw
        w2d = jax.random.normal(next(ki), (3, 3, bw, growth_rate),
                                jnp.float32) * (2.0 / fan2) ** 0.5
        # real (9*bw, growth) weights placed at output-channel offset c inside
        # the 128-wide padded feature buffer -> concat becomes a disjoint add.
        w2 = (jnp.zeros((kp2, LANE), jnp.float32)
              .at[:9 * bw, c:c + growth_rate].set(w2d.reshape(9 * bw, growth_rate)))

        params['block'].append({'w1': w1.astype(jnp.bfloat16),
                                'n1_s': n1s, 'n1_b': n1b,
                                'n2_s': n2s, 'n2_b': n2b,
                                'w2': w2.astype(jnp.bfloat16)})
        c += growth_rate

    n5s, n5b = _bn_fold(next(ki), c, LANE)
    params['norm5_s'] = n5s
    params['norm5_b'] = n5b

    bound = 1.0 / (c ** 0.5)
    fcw = jax.random.uniform(next(ki), (c, num_classes), jnp.float32, -bound, bound)
    params['fc_w'] = (jnp.zeros((LANE, LANE), jnp.float32)
                      .at[:c, :num_classes].set(fcw)).astype(jnp.bfloat16)
    params['fc_b'] = jnp.zeros((1, LANE), jnp.float32)   # classifier.bias.data.zero_()
    return params


# ------------------------------- forward ------------------------------------

def densenet_imagenet_forward(params, x_nchw, *, num_classes=4,
                              training_type='onevsall'):
    # NCHW (PyTorch) -> NHWC (kernel layout)
    x = jnp.transpose(x_nchw, (0, 2, 3, 1)).astype(jnp.float32)
    B = x.shape[0]

    # ----- stem: conv0 (7x7/s2) + norm0 + relu0, one fused gridded matmul -----
    patches, Ho, Wo = _extract_patches(x, 7, 7, stride=2, pad=3)
    a = patches.reshape(B * Ho * Wo, K0)
    a = jnp.pad(a, ((0, 0), (0, K0P - K0))).astype(jnp.bfloat16)
    y = _call_matmul_fused(_conv_bn_relu_kernel, [a],
                           [params['conv0'], params['norm0_s'], params['norm0_b']],
                           LANE)
    feat = y.reshape(B, Ho, Wo, LANE)

    # ----- pool0: maxpool 3x3 / s2 / pad 1 (gridded, lane-dense 128-wide) -----
    feat = max_pool2d(feat, 3, stride=2, pad=1)
    B_, H, W, _ = feat.shape
    M = B_ * H * W
    feat2d = feat.reshape(M, LANE)                     # bf16 running features

    # ----- dense block: 2 fused pallas_calls per layer -----
    # TODO(synk): fuse bottleneck + halo-tiled 3x3 into one kernel per layer so
    # y1 and its patches never touch HBM.
    for lp in params['block']:
        bw = lp['w1'].shape[1]
        kp2 = lp['w2'].shape[0]
        # norm1+relu -> conv1 (1x1) -> norm2+relu, fused; output only bw cols.
        y1 = _call_matmul_fused(_bottleneck_kernel, [feat2d],
                                [lp['w1'], lp['n1_s'], lp['n1_b'],
                                 lp['n2_s'], lp['n2_b']],
                                bw)
        # conv2 (3x3, K = 9*bw padded) + concat-as-add, fused; feat2d aliased
        # into the output (in-place HBM update of the running feature buffer).
        p, _, _ = _extract_patches(y1.reshape(B_, H, W, bw), 3, 3, stride=1, pad=1)
        p = p.reshape(M, 9 * bw)
        p = jnp.pad(p, ((0, 0), (0, kp2 - 9 * bw)))
        feat2d = _call_matmul_fused(_conv2_add_kernel, [p, feat2d], [lp['w2']],
                                    LANE, alias_row_input=1)

    # ----- norm5 + relu -> avg_pool2d(16,1) -> view -> Linear -> sigmoid, fused -----
    logits = classifier_head(feat2d, B_, H, W,
                             params['norm5_s'], params['norm5_b'],
                             params['fc_w'], params['fc_b'], training_type)
    return logits[:, :num_classes]


# --------------------------------- main --------------------------------------

if __name__ == "__main__":
    NUM_CLASSES = 4
    key = jax.random.PRNGKey(0)
    pkey, xkey = jax.random.split(key)

    params = init_params(pkey, num_classes=NUM_CLASSES)
    # 64x64 input -> /2 (conv0) -> /2 (pool0) -> 16x16 feature map (so the
    # avg_pool2d(kernel_size=16, stride=1) in forward reduces to a 1x1 map).
    x = jax.random.normal(xkey, (2, 3, 64, 64), jnp.float32)

    fwd = jax.jit(functools.partial(densenet_imagenet_forward,
                                    num_classes=NUM_CLASSES,
                                    training_type='onevsall'))
    out = fwd(params, x)
    jax.block_until_ready(out)

    assert out.shape == (2, NUM_CLASSES)
    assert bool(jnp.all(jnp.isfinite(out)))
    assert bool(jnp.all((out >= 0.0) & (out <= 1.0)))   # sigmoid output (onevsall)
    print("KERNEL_OK")
</pallas_src>

<mosaic_0001>
module attributes {stable_mosaic.version = 11 : i64} {
  func.func @_conv_bn_relu_kernel(%arg0: i32, %arg1: memref<256x256xbf16, #tpu.memory_space<vmem>>, %arg2: memref<256x128xbf16, #tpu.memory_space<vmem>>, %arg3: memref<1x128xf32, #tpu.memory_space<vmem>>, %arg4: memref<1x128xf32, #tpu.memory_space<vmem>>, %arg5: memref<256x128xbf16, #tpu.memory_space<vmem>>) attributes {dimension_semantics = [#tpu.dimension_semantics<parallel>], iteration_bounds = array<i64: 8>, scalar_prefetch = 0 : i64, scratch_operands = 0 : i64, tpu.core_type = #tpu.core_type<tc>, window_params = [{transform_indices = @transform_0, window_bounds = array<i64: 256, 256>}, {pipeline_mode = #tpu.pipeline_mode<synchronous>, transform_indices = @transform_1, window_bounds = array<i64: 256, 128>}, {pipeline_mode = #tpu.pipeline_mode<synchronous>, transform_indices = @transform_2, window_bounds = array<i64: 1, 128>}, {pipeline_mode = #tpu.pipeline_mode<synchronous>, transform_indices = @transform_3, window_bounds = array<i64: 1, 128>}, {transform_indices = @transform_4, window_bounds = array<i64: 256, 128>}]} {
    %c0 = arith.constant 0 : index
    %c0_0 = arith.constant 0 : index
    %0 = vector.load %arg1[%c0, %c0_0] : memref<256x256xbf16, #tpu.memory_space<vmem>>, vector<256x256xbf16>
    %c0_1 = arith.constant 0 : index
    %c0_2 = arith.constant 0 : index
    %1 = vector.load %arg2[%c0_1, %c0_2] : memref<256x128xbf16, #tpu.memory_space<vmem>>, vector<256x128xbf16>
    %cst = arith.constant dense<0.000000e+00> : vector<256x128xf32>
    %2 = tpu.matmul %0, %1, %cst {dimension_numbers = #tpu.dot_dimension_numbers<[1], [0], [0], [1], [0, 0, 1, 1], [], []>} : vector<256x256xbf16>, vector<256x128xbf16>, vector<256x128xf32> -> vector<256x128xf32>
    %c0_3 = arith.constant 0 : index
    %c0_4 = arith.constant 0 : index
    %3 = vector.load %arg3[%c0_3, %c0_4] : memref<1x128xf32, #tpu.memory_space<vmem>>, vector<1x128xf32>
    %4 = vector.broadcast %3 : vector<1x128xf32> to vector<256x128xf32>
    %5 = arith.mulf %2, %4 : vector<256x128xf32>
    %c0_5 = arith.constant 0 : index
    %c0_6 = arith.constant 0 : index
    %6 = vector.load %arg4[%c0_5, %c0_6] : memref<1x128xf32, #tpu.memory_space<vmem>>, vector<1x128xf32>
    %7 = vector.broadcast %6 : vector<1x128xf32> to vector<256x128xf32>
    %8 = arith.addf %5, %7 : vector<256x128xf32>
    %cst_7 = arith.constant 0.000000e+00 : f32
    %9 = vector.broadcast %cst_7 : f32 to vector<256x128xf32>
    %10 = arith.maximumf %8, %9 : vector<256x128xf32>
    %11 = arith.truncf %10 : vector<256x128xf32> to vector<256x128xbf16>
    %c0_8 = arith.constant 0 : index
    %c0_9 = arith.constant 0 : index
    %12 = vector.load %arg5[%c0_8, %c0_9] : memref<256x128xbf16, #tpu.memory_space<vmem>>, vector<256x128xbf16>
    tpu.vector_store %arg5[%c0_8, %c0_9], %11 {strides = array<i32>} : memref<256x128xbf16, #tpu.memory_space<vmem>>, vector<256x128xbf16>,
    return
  }
  func.func @transform_0(%arg0: i32) -> (i32, i32) {
    %c0_i32 = arith.constant 0 : i32
    %c0_i32_0 = arith.constant 0 : i32
    return %arg0, %c0_i32 : i32, i32
  }
  func.func @transform_1(%arg0: i32) -> (i32, i32) {
    %c0_i32 = arith.constant 0 : i32
    %c0_i32_0 = arith.constant 0 : i32
    %c0_i32_1 = arith.constant 0 : i32
    return %c0_i32, %c0_i32_0 : i32, i32
  }
  func.func @transform_2(%arg0: i32) -> (i32, i32) {
    %c0_i32 = arith.constant 0 : i32
    %c0_i32_0 = arith.constant 0 : i32
    %c0_i32_1 = arith.constant 0 : i32
    return %c0_i32, %c0_i32_0 : i32, i32
  }
  func.func @transform_3(%arg0: i32) -> (i32, i32) {
    %c0_i32 = arith.constant 0 : i32
    %c0_i32_0 = arith.constant 0 : i32
    %c0_i32_1 = arith.constant 0 : i32
    return %c0_i32, %c0_i32_0 : i32, i32
  }
  func.func @transform_4(%arg0: i32) -> (i32, i32) {
    %c0_i32 = arith.constant 0 : i32
    %c0_i32_0 = arith.constant 0 : i32
    return %arg0, %c0_i32 : i32, i32
  }
}

module attributes {stable_mosaic.version = 11 : i64} {
  func.func @_maxpool_kernel(%arg0: i32, %arg1: memref<128x9x128xbf16, #tpu.memory_space<vmem>>, %arg2: memref<128x128xbf16, #tpu.memory_space<vmem>>) attributes {dimension_semantics = [#tpu.dimension_semantics<parallel>], iteration_bounds = array<i64: 4>, scalar_prefetch = 0 : i64, scratch_operands = 0 : i64, tpu.core_type = #tpu.core_type<tc>, window_params = [{transform_indices = @transform_0, window_bounds = array<i64: 128, 9, 128>}, {transform_indices = @transform_1, window_bounds = array<i64: 128, 128>}]} {
    %c0 = arith.constant 0 : index
    %c0_0 = arith.constant 0 : index
    %c0_1 = arith.constant 0 : index
    %0 = vector.load %arg1[%c0, %c0_0, %c0_1] : memref<128x9x128xbf16, #tpu.memory_space<vmem>>, vector<128x1x128xbf16>
    %1 = vector.shape_cast %0 : vector<128x1x128xbf16> to vector<128x128xbf16>
    %c0_2 = arith.constant 0 : index
    %c1 = arith.constant 1 : index
    %c0_3 = arith.constant 0 : index
    %2 = vector.load %arg1[%c0_2, %c1, %c0_3] : memref<128x9x128xbf16, #tpu.memory_space<vmem>>, vector<128x1x128xbf16>
    %3 = vector.shape_cast %2 : vector<128x1x128xbf16> to vector<128x128xbf16>
    %4 = arith.maximumf %1, %3 : vector<128x128xbf16>
    %c0_4 = arith.constant 0 : index
    %c2 = arith.constant 2 : index
    %c0_5 = arith.constant 0 : index
    %5 = vector.load %arg1[%c0_4, %c2, %c0_5] : memref<128x9x128xbf16, #tpu.memory_space<vmem>>, vector<128x1x128xbf16>
    %6 = vector.shape_cast %5 : vector<128x1x128xbf16> to vector<128x128xbf16>
    %7 = arith.maximumf %4, %6 : vector<128x128xbf16>
    %c0_6 = arith.constant 0 : index
    %c3 = arith.constant 3 : index
    %c0_7 = arith.constant 0 : index
    %8 = vector.load %arg1[%c0_6, %c3, %c0_7] : memref<128x9x128xbf16, #tpu.memory_space<vmem>>, vector<128x1x128xbf16>
    %9 = vector.shape_cast %8 : vector<128x1x128xbf16> to vector<128x128xbf16>
    %10 = arith.maximumf %7, %9 : vector<128x128xbf16>
    %c0_8 = arith.constant 0 : index
    %c4 = arith.constant 4 : index
    %c0_9 = arith.constant 0 : index
    %11 = vector.load %arg1[%c0_8, %c4, %c0_9] : memref<128x9x128xbf16, #tpu.memory_space<vmem>>, vector<128x1x128xbf16>
    %12 = vector.shape_cast %11 : vector<128x1x128xbf16> to vector<128x128xbf16>
    %13 = arith.maximumf %10, %12 : vector<128x128xbf16>
    %c0_10 = arith.constant 0 : index
    %c5 = arith.constant 5 : index
    %c0_11 = arith.constant 0 : index
    %14 = vector.load %arg1[%c0_10, %c5, %c0_11] : memref<128x9x128xbf16, #tpu.memory_space<vmem>>, vector<128x1x128xbf16>
    %15 = vector.shape_cast %14 : vector<128x1x128xbf16> to vector<128x128xbf16>
    %16 = arith.maximumf %13, %15 : vector<128x128xbf16>
    %c0_12 = arith.constant 0 : index
    %c6 = arith.constant 6 : index
    %c0_13 = arith.constant 0 : index
    %17 = vector.load %arg1[%c0_12, %c6, %c0_13] : memref<128x9x128xbf16, #tpu.memory_space<vmem>>, vector<128x1x128xbf16>
    %18 = vector.shape_cast %17 : vector<128x1x128xbf16> to vector<128x128xbf16>
    %19 = arith.maximumf %16, %18 : vector<128x128xbf16>
    %c0_14 = arith.constant 0 : index
    %c7 = arith.constant 7 : index
    %c0_15 = arith.constant 0 : index
    %20 = vector.load %arg1[%c0_14, %c7, %c0_15] : memref<128x9x128xbf16, #tpu.memory_space<vmem>>, vector<128x1x128xbf16>
    %21 = vector.shape_cast %20 : vector<128x1x128xbf16> to vector<128x128xbf16>
    %22 = arith.maximumf %19, %21 : vector<128x128xbf16>
    %c0_16 = arith.constant 0 : index
    %c8 = arith.constant 8 : index
    %c0_17 = arith.constant 0 : index
    %23 = vector.load %arg1[%c0_16, %c8, %c0_17] : memref<128x9x128xbf16, #tpu.memory_space<vmem>>, vector<128x1x128xbf16>
    %24 = vector.shape_cast %23 : vector<128x1x128xbf16> to vector<128x128xbf16>
    %25 = arith.maximumf %22, %24 : vector<128x128xbf16>
    %c0_18 = arith.constant 0 : index
    %c0_19 = arith.constant 0 : index
    %26 = vector.load %arg2[%c0_18, %c0_19] : memref<128x128xbf16, #tpu.memory_space<vmem>>, vector<128x128xbf16>
    tpu.vector_store %arg2[%c0_18, %c0_19], %25 {strides = array<i32>} : memref<128x128xbf16, #tpu.memory_space<vmem>>, vector<128x128xbf16>,
    return
  }
  func.func @transform_0(%arg0: i32) -> (i32, i32, i32) {
    %c0_i32 = arith.constant 0 : i32
    %c0_i32_0 = arith.constant 0 : i32
    %c0_i32_1 = arith.constant 0 : i32
    return %arg0, %c0_i32, %c0_i32_0 : i32, i32, i32
  }
  func.func @transform_1(%arg0: i32) -> (i32, i32) {
    %c0_i32 = arith.constant 0 : i32
    %c0_i32_0 = arith.constant 0 : i32
    return %arg0, %c0_i32 : i32, i32
  }
}

module attributes {stable_mosaic.version = 11 : i64} {
  func.func @_bottleneck_kernel(%arg0: i32, %arg1: memref<128x128xbf16, #tpu.memory_space<vmem>>, %arg2: memref<128x32xbf16, #tpu.memory_space<vmem>>, %arg3: memref<1x128xf32, #tpu.memory_space<vmem>>, %arg4: memref<1x128xf32, #tpu.memory_space<vmem>>, %arg5: memref<1x32xf32, #tpu.memory_space<vmem>>, %arg6: memref<1x32xf32, #tpu.memory_space<vmem>>, %arg7: memref<128x32xbf16, #tpu.memory_space<vmem>>) attributes {dimension_semantics = [#tpu.dimension_semantics<parallel>], iteration_bounds = array<i64: 4>, scalar_prefetch = 0 : i64, scratch_operands = 0 : i64, tpu.core_type = #tpu.core_type<tc>, window_params = [{transform_indices = @transform_0, window_bounds = array<i64: 128, 128>}, {pipeline_mode = #tpu.pipeline_mode<synchronous>, transform_indices = @transform_1, window_bounds = array<i64: 128, 32>}, {pipeline_mode = #tpu.pipeline_mode<synchronous>, transform_indices = @transform_2, window_bounds = array<i64: 1, 128>}, {pipeline_mode = #tpu.pipeline_mode<synchronous>, transform_indices = @transform_3, window_bounds = array<i64: 1, 128>}, {pipeline_mode = #tpu.pipeline_mode<synchronous>, transform_indices = @transform_4, window_bounds = array<i64: 1, 32>}, {pipeline_mode = #tpu.pipeline_mode<synchronous>, transform_indices = @transform_5, window_bounds = array<i64: 1, 32>}, {transform_indices = @transform_6, window_bounds = array<i64: 128, 32>}]} {
    %c0 = arith.constant 0 : index
    %c0_0 = arith.constant 0 : index
    %0 = vector.load %arg1[%c0, %c0_0] : memref<128x128xbf16, #tpu.memory_space<vmem>>, vector<128x128xbf16>
    %1 = arith.extf %0 : vector<128x128xbf16> to vector<128x128xf32>
    %c0_1 = arith.constant 0 : index
    %c0_2 = arith.constant 0 : index
    %2 = vector.load %arg3[%c0_1, %c0_2] : memref<1x128xf32, #tpu.memory_space<vmem>>, vector<1x128xf32>
    %3 = vector.broadcast %2 : vector<1x128xf32> to vector<128x128xf32>
    %4 = arith.mulf %1, %3 : vector<128x128xf32>
    %c0_3 = arith.constant 0 : index
    %c0_4 = arith.constant 0 : index
    %5 = vector.load %arg4[%c0_3, %c0_4] : memref<1x128xf32, #tpu.memory_space<vmem>>, vector<1x128xf32>
    %6 = vector.broadcast %5 : vector<1x128xf32> to vector<128x128xf32>
    %7 = arith.addf %4, %6 : vector<128x128xf32>
    %cst = arith.constant 0.000000e+00 : f32
    %8 = vector.broadcast %cst : f32 to vector<128x128xf32>
    %9 = arith.maximumf %7, %8 : vector<128x128xf32>
    %10 = arith.truncf %9 : vector<128x128xf32> to vector<128x128xbf16>
    %c0_5 = arith.constant 0 : index
    %c0_6 = arith.constant 0 : index
    %11 = vector.load %arg2[%c0_5, %c0_6] : memref<128x32xbf16, #tpu.memory_space<vmem>>, vector<128x32xbf16>
    %cst_7 = arith.constant dense<0.000000e+00> : vector<128x32xf32>
    %12 = tpu.matmul %10, %11, %cst_7 {dimension_numbers = #tpu.dot_dimension_numbers<[1], [0], [0], [1], [0, 0, 1, 1], [], []>} : vector<128x128xbf16>, vector<128x32xbf16>, vector<128x32xf32> -> vector<128x32xf32>
    %c0_8 = arith.constant 0 : index
    %c0_9 = arith.constant 0 : index
    %13 = vector.load %arg5[%c0_8, %c0_9] : memref<1x32xf32, #tpu.memory_space<vmem>>, vector<1x32xf32>
    %14 = vector.broadcast %13 : vector<1x32xf32> to vector<128x32xf32>
    %15 = arith.mulf %12, %14 : vector<128x32xf32>
    %c0_10 = arith.constant 0 : index
    %c0_11 = arith.constant 0 : index
    %16 = vector.load %arg6[%c0_10, %c0_11] : memref<1x32xf32, #tpu.memory_space<vmem>>, vector<1x32xf32>
    %17 = vector.broadcast %16 : vector<1x32xf32> to vector<128x32xf32>
    %18 = arith.addf %15, %17 : vector<128x32xf32>
    %cst_12 = arith.constant 0.000000e+00 : f32
    %19 = vector.broadcast %cst_12 : f32 to vector<128x32xf32>
    %20 = arith.maximumf %18, %19 : vector<128x32xf32>
    %21 = arith.truncf %20 : vector<128x32xf32> to vector<128x32xbf16>
    %c0_13 = arith.constant 0 : index
    %c0_14 = arith.constant 0 : index
    %22 = vector.load %arg7[%c0_13, %c0_14] : memref<128x32xbf16, #tpu.memory_space<vmem>>, vector<128x32xbf16>
    tpu.vector_store %arg7[%c0_13, %c0_14], %21 {strides = array<i32>} : memref<128x32xbf16, #tpu.memory_space<vmem>>, vector<128x32xbf16>,
    return
  }
  func.func @transform_0(%arg0: i32) -> (i32, i32) {
    %c0_i32 = arith.constant 0 : i32
    %c0_i32_0 = arith.constant 0 : i32
    return %arg0, %c0_i32 : i32, i32
  }
  func.func @transform_1(%arg0: i32) -> (i32, i32) {
    %c0_i32 = arith.constant 0 : i32
    %c0_i32_0 = arith.constant 0 : i32
    %c0_i32_1 = arith.constant 0 : i32
    return %c0_i32, %c0_i32_0 : i32, i32
  }
  func.func @transform_2(%arg0: i32) -> (i32, i32) {
    %c0_i32 = arith.constant 0 : i32
    %c0_i32_0 = arith.constant 0 : i32
    %c0_i32_1 = arith.constant 0 : i32
    return %c0_i32, %c0_i32_0 : i32, i32
  }
  func.func @transform_3(%arg0: i32) -> (i32, i32) {
    %c0_i32 = arith.constant 0 : i32
    %c0_i32_0 = arith.constant 0 : i32
    %c0_i32_1 = arith.constant 0 : i32
    return %c0_i32, %c0_i32_0 : i32, i32
  }
  func.func @transform_4(%arg0: i32) -> (i32, i32) {
    %c0_i32 = arith.constant 0 : i32
    %c0_i32_0 = arith.constant 0 : i32
    %c0_i32_1 = arith.constant 0 : i32
    return %c0_i32, %c0_i32_0 : i32, i32
  }
  func.func @transform_5(%arg0: i32) -> (i32, i32) {
    %c0_i32 = arith.constant 0 : i32
    %c0_i32_0 = arith.constant 0 : i32
    %c0_i32_1 = arith.constant 0 : i32
    return %c0_i32, %c0_i32_0 : i32, i32
  }
  func.func @transform_6(%arg0: i32) -> (i32, i32) {
    %c0_i32 = arith.constant 0 : i32
    %c0_i32_0 = arith.constant 0 : i32
    return %arg0, %c0_i32 : i32, i32
  }
}

module attributes {stable_mosaic.version = 11 : i64} {
  func.func @_conv2_add_kernel(%arg0: i32, %arg1: memref<128x384xbf16, #tpu.memory_space<vmem>>, %arg2: memref<128x128xbf16, #tpu.memory_space<vmem>>, %arg3: memref<384x128xbf16, #tpu.memory_space<vmem>>, %arg4: memref<128x128xbf16, #tpu.memory_space<vmem>>) attributes {dimension_semantics = [#tpu.dimension_semantics<parallel>], iteration_bounds = array<i64: 4>, scalar_prefetch = 0 : i64, scratch_operands = 0 : i64, tpu.core_type = #tpu.core_type<tc>, window_params = [{transform_indices = @transform_0, window_bounds = array<i64: 128, 384>}, {transform_indices = @transform_1, window_bounds = array<i64: 128, 128>}, {pipeline_mode = #tpu.pipeline_mode<synchronous>, transform_indices = @transform_2, window_bounds = array<i64: 384, 128>}, {transform_indices = @transform_3, window_bounds = array<i64: 128, 128>}]} {
    %c0 = arith.constant 0 : index
    %c0_0 = arith.constant 0 : index
    %0 = vector.load %arg1[%c0, %c0_0] : memref<128x384xbf16, #tpu.memory_space<vmem>>, vector<128x384xbf16>
    %c0_1 = arith.constant 0 : index
    %c0_2 = arith.constant 0 : index
    %1 = vector.load %arg3[%c0_1, %c0_2] : memref<384x128xbf16, #tpu.memory_space<vmem>>, vector<384x128xbf16>
    %cst = arith.constant dense<0.000000e+00> : vector<128x128xf32>
    %2 = tpu.matmul %0, %1, %cst {dimension_numbers = #tpu.dot_dimension_numbers<[1], [0], [0], [1], [0, 0, 1, 1], [], []>} : vector<128x384xbf16>, vector<384x128xbf16>, vector<128x128xf32> -> vector<128x128xf32>
    %c0_3 = arith.constant 0 : index
    %c0_4 = arith.constant 0 : index
    %3 = vector.load %arg2[%c0_3, %c0_4] : memref<128x128xbf16, #tpu.memory_space<vmem>>, vector<128x128xbf16>
    %4 = arith.extf %3 : vector<128x128xbf16> to vector<128x128xf32>
    %5 = arith.addf %4, %2 : vector<128x128xf32>
    %6 = arith.truncf %5 : vector<128x128xf32> to vector<128x128xbf16>
    %c0_5 = arith.constant 0 : index
    %c0_6 = arith.constant 0 : index
    %7 = vector.load %arg4[%c0_5, %c0_6] : memref<128x128xbf16, #tpu.memory_space<vmem>>, vector<128x128xbf16>
    tpu.vector_store %arg4[%c0_5, %c0_6], %6 {strides = array<i32>} : memref<128x128xbf16, #tpu.memory_space<vmem>>, vector<128x128xbf16>,
    return
  }
  func.func @transform_0(%arg0: i32) -> (i32, i32) {
    %c0_i32 = arith.constant 0 : i32
    %c0_i32_0 = arith.constant 0 : i32
    return %arg0, %c0_i32 : i32, i32
  }
  func.func @transform_1(%arg0: i32) -> (i32, i32) {
    %c0_i32 = arith.constant 0 : i32
    %c0_i32_0 = arith.constant 0 : i32
    return %arg0, %c0_i32 : i32, i32
  }
  func.func @transform_2(%arg0: i32) -> (i32, i32) {
    %c0_i32 = arith.constant 0 : i32
    %c0_i32_0 = arith.constant 0 : i32
    %c0_i32_1 = arith.constant 0 : i32
    return %c0_i32, %c0_i32_0 : i32, i32
  }
  func.func @transform_3(%arg0: i32) -> (i32, i32) {
    %c0_i32 = arith.constant 0 : i32
    %c0_i32_0 = arith.constant 0 : i32
    return %arg0, %c0_i32 : i32, i32
  }
}

module attributes {stable_mosaic.version = 11 : i64} {
  func.func @_head_kernel(%arg0: memref<2x256x128xbf16, #tpu.memory_space<vmem>>, %arg1: memref<1x128xf32, #tpu.memory_space<vmem>>, %arg2: memref<1x128xf32, #tpu.memory_space<vmem>>, %arg3: memref<128x128xbf16, #tpu.memory_space<vmem>>, %arg4: memref<1x128xf32, #tpu.memory_space<vmem>>, %arg5: memref<2x128xf32, #tpu.memory_space<vmem>>) attributes {dimension_semantics = [], scalar_prefetch = 0 : i64, scratch_operands = 0 : i64, tpu.core_type = #tpu.core_type<tc>} {
    %c0 = arith.constant 0 : index
    %c0_0 = arith.constant 0 : index
    %c0_1 = arith.constant 0 : index
    %0 = vector.load %arg0[%c0, %c0_0, %c0_1] : memref<2x256x128xbf16, #tpu.memory_space<vmem>>, vector<2x256x128xbf16>
    %1 = arith.extf %0 : vector<2x256x128xbf16> to vector<2x256x128xf32>
    %c0_2 = arith.constant 0 : index
    %c0_3 = arith.constant 0 : index
    %2 = vector.load %arg1[%c0_2, %c0_3] : memref<1x128xf32, #tpu.memory_space<vmem>>, vector<1x128xf32>
    %3 = vector.shape_cast %2 : vector<1x128xf32> to vector<1x1x128xf32>
    %4 = vector.broadcast %3 : vector<1x1x128xf32> to vector<2x256x128xf32>
    %5 = arith.mulf %1, %4 : vector<2x256x128xf32>
    %c0_4 = arith.constant 0 : index
    %c0_5 = arith.constant 0 : index
    %6 = vector.load %arg2[%c0_4, %c0_5] : memref<1x128xf32, #tpu.memory_space<vmem>>, vector<1x128xf32>
    %7 = vector.shape_cast %6 : vector<1x128xf32> to vector<1x1x128xf32>
    %8 = vector.broadcast %7 : vector<1x1x128xf32> to vector<2x256x128xf32>
    %9 = arith.addf %5, %8 : vector<2x256x128xf32>
    %cst = arith.constant 0.000000e+00 : f32
    %10 = vector.broadcast %cst : f32 to vector<2x256x128xf32>
    %11 = arith.maximumf %9, %10 : vector<2x256x128xf32>
    %cst_6 = arith.constant dense<0.000000e+00> : vector<2x128xf32>
    %12 = vector.multi_reduction <add>, %11, %cst_6 [1] : vector<2x256x128xf32> to vector<2x128xf32>
    %cst_7 = arith.constant 2.560000e+02 : f32
    %13 = vector.broadcast %cst_7 : f32 to vector<2x128xf32>
    %14 = arith.divf %12, %13 : vector<2x128xf32>
    %15 = arith.truncf %14 : vector<2x128xf32> to vector<2x128xbf16>
    %c0_8 = arith.constant 0 : index
    %c0_9 = arith.constant 0 : index
    %16 = vector.load %arg3[%c0_8, %c0_9] : memref<128x128xbf16, #tpu.memory_space<vmem>>, vector<128x128xbf16>
    %cst_10 = arith.constant dense<0.000000e+00> : vector<2x128xf32>
    %17 = tpu.matmul %15, %16, %cst_10 {dimension_numbers = #tpu.dot_dimension_numbers<[1], [0], [0], [1], [0, 0, 1, 1], [], []>} : vector<2x128xbf16>, vector<128x128xbf16>, vector<2x128xf32> -> vector<2x128xf32>
    %c0_11 = arith.constant 0 : index
    %c0_12 = arith.constant 0 : index
    %18 = vector.load %arg4[%c0_11, %c0_12] : memref<1x128xf32, #tpu.memory_space<vmem>>, vector<1x128xf32>
    %19 = vector.broadcast %18 : vector<1x128xf32> to vector<2x128xf32>
    %20 = arith.addf %17, %19 : vector<2x128xf32>
    %21 = arith.negf %20 : vector<2x128xf32>
    %22 = math.exp %21 : vector<2x128xf32>
    %cst_13 = arith.constant 1.000000e+00 : f32
    %23 = vector.broadcast %cst_13 : f32 to vector<2x128xf32>
    %24 = arith.addf %23, %22 : vector<2x128xf32>
    %25 = arith.divf %23, %24 : vector<2x128xf32>
    %c0_14 = arith.constant 0 : index
    %c0_15 = arith.constant 0 : index
    %26 = vector.load %arg5[%c0_14, %c0_15] : memref<2x128xf32, #tpu.memory_space<vmem>>, vector<2x128xf32>
    tpu.vector_store %arg5[%c0_14, %c0_15], %25 {strides = array<i32>} : memref<2x128xf32, #tpu.memory_space<vmem>>, vector<2x128xf32>,
    return
  }
}

</mosaic_0001>

<llo_original>
// kernel: densenet_imagenet_forward.9
$region0: #{densenet_imagenet_forward.9}
  #allocation0 [shape = 'u32[]', space=smem, size = 0x4, offset = 0x4, fixed_abs, tag = 'smem constant byte address 0x4 - core index']
  #allocation1 [shape = 'u32[144,128]{1,0:T(1,128)}', space=vmem, size = 0x12000, scoped, tag = 'internal scratch']
  %s0 = inlined_call_operand.vmem [shape: bf16[2048,256], index: 0, kind: input, shape index: {}]
  %s1 = inlined_call_operand.vmem [shape: bf16[256,128], index: 1, kind: input, shape index: {}]
  %s2 = inlined_call_operand.vmem [shape: f32[1,128], index: 2, kind: input, shape index: {}]
  %s3 = inlined_call_operand.vmem [shape: f32[1,128], index: 3, kind: input, shape index: {}]
  %s4 = inlined_call_operand.vmem [shape: bf16[2048,128], index: 4, kind: output, shape index: {}]
  %s5 = sld [smem:[#allocation0]]
  $region49: #{densenet_imagenet_forward.9} parent=0
    _
  %s7 = ssub.s32 1, %s5
  %s8 = scalar_select 0, %s7, %s5
  loop: start=0, step=1, limit=10
  $region2: #{densenet_imagenet_forward.9} parent=0 // loop_pre_header
    _
  $region3: #{densenet_imagenet_forward.9} parent=0 // loop_header
    %s10 = sphi 0, %s14
    %p11 = scmp.ge.s32.totalorder %s10, 10
    %s20 = sphi 0, %s22
    %s23 = sphi 0, %s20
    %s24 = sphi 0, %s23
    %s40 = sphi 0, %s24
    %s44 = sphi 0, %s44
    %s46 = sphi 0, %s44
    %s47 = sphi 0, %s46
    %s61 = sphi 0, %s47
    %s65 = sphi 0, %s65
    %s67 = sphi 0, %s65
    %s68 = sphi 0, %s67
    %s82 = sphi 0, %s68
    %s86 = sphi 0, %s86
    %s88 = sphi 0, %s86
    %s89 = sphi 0, %s88
    %s103 = sphi 0, %s89
    %s109 = sphi 0, %s111
    %s112 = sphi 0, %s109
    %s113 = sphi 0, %s112
    %s129 = sphi 0, %s113
  $region4: #{densenet_imagenet_forward.9} parent=0 // loop_header_branch
    %13 = sbr.rel (%p11) target = $region8
  $region5: #{densenet_imagenet_forward.9} parent=0 // loop_body
    %s15 = ssub.s32 %s10, 1
    %s16 = ssub.s32 %s10, 2
    %s17 = sadd.s32 %s10, 1
    %s18 = ssub.s32 %s10, %s17
    %p19 = scmp.eq.s32.totalorder %s18, 0
    %s21 = sadd.s32 %s20, 1
    %s22 = scalar_select %p19, %s20, %s21
    %p25 = pneg %p19
    %p26 = scmp.eq.s32.totalorder %s10, 7
    %p27 = por %p25, %p26
    %p28 = scmp.ne.s32.totalorder %s20, %s23
    %p29 = scmp.eq.s32.totalorder %s10, 0
    %p30 = por %p28, %p29
    %p31 = scmp.ne.s32.totalorder %s20, %s23
    %p32 = scmp.eq.s32.totalorder %s15, 7
    %p33 = por %p31, %p32
    %p34 = scmp.ne.s32.totalorder %s23, %s24
    %p35 = scmp.eq.s32.totalorder %s15, 0
    %p36 = por %p34, %p35
    %p37 = scmp.ne.s32.totalorder %s23, %s24
    %p38 = scmp.eq.s32.totalorder %s16, 7
    %p39 = por %p37, %p38
    %p41 = scmp.ne.s32.totalorder %s24, %s40
    %p42 = scmp.eq.s32.totalorder %s16, 0
    %p43 = por %p41, %p42
    %s45 = sadd.s32 %s44, 1
    %p48 = scmp.eq.s32.totalorder %s10, 7
    %p49 = scmp.ne.s32.totalorder %s44, %s46
    %p50 = scmp.eq.s32.totalorder %s10, 0
    %p51 = por %p49, %p50
    %p52 = scmp.ne.s32.totalorder %s44, %s46
    %p53 = scmp.eq.s32.totalorder %s15, 7
    %p54 = por %p52, %p53
    %p55 = scmp.ne.s32.totalorder %s46, %s47
    %p56 = scmp.eq.s32.totalorder %s15, 0
    %p57 = por %p55, %p56
    %p58 = scmp.ne.s32.totalorder %s46, %s47
    %p59 = scmp.eq.s32.totalorder %s16, 7
    %p60 = por %p58, %p59
    %p62 = scmp.ne.s32.totalorder %s47, %s61
    %p63 = scmp.eq.s32.totalorder %s16, 0
    %p64 = por %p62, %p63
    %s66 = sadd.s32 %s65, 1
    %p69 = scmp.eq.s32.totalorder %s10, 7
    %p70 = scmp.ne.s32.totalorder %s65, %s67
    %p71 = scmp.eq.s32.totalorder %s10, 0
    %p72 = por %p70, %p71
    %p73 = scmp.ne.s32.totalorder %s65, %s67
    %p74 = scmp.eq.s32.totalorder %s15, 7
    %p75 = por %p73, %p74
    %p76 = scmp.ne.s32.totalorder %s67, %s68
    %p77 = scmp.eq.s32.totalorder %s15, 0
    %p78 = por %p76, %p77
    %p79 = scmp.ne.s32.totalorder %s67, %s68
    %p80 = scmp.eq.s32.totalorder %s16, 7
    %p81 = por %p79, %p80
    %p83 = scmp.ne.s32.totalorder %s68, %s82
    %p84 = scmp.eq.s32.totalorder %s16, 0
    %p85 = por %p83, %p84
    %s87 = sadd.s32 %s86, 1
    %p90 = scmp.eq.s32.totalorder %s10, 7
    %p91 = scmp.ne.s32.totalorder %s86, %s88
    %p92 = scmp.eq.s32.totalorder %s10, 0
    %p93 = por %p91, %p92
    %p94 = scmp.ne.s32.totalorder %s86, %s88
    %p95 = scmp.eq.s32.totalorder %s15, 7
    %p96 = por %p94, %p95
    %p97 = scmp.ne.s32.totalorder %s88, %s89
    %p98 = scmp.eq.s32.totalorder %s15, 0
    %p99 = por %p97, %p98
    %p100 = scmp.ne.s32.totalorder %s88, %s89
    %p101 = scmp.eq.s32.totalorder %s16, 7
    %p102 = por %p100, %p101
    %p104 = scmp.ne.s32.totalorder %s89, %s103
    %p105 = scmp.eq.s32.totalorder %s16, 0
    %p106 = por %p104, %p105
    %s107 = ssub.s32 %s10, %s17
    %p108 = scmp.eq.s32.totalorder %s107, 0
    %s110 = sadd.s32 %s109, 1
    %s111 = scalar_select %p108, %s109, %s110
    %p114 = pneg %p108
    %p115 = scmp.eq.s32.totalorder %s10, 7
    %p116 = por %p114, %p115
    %p117 = scmp.ne.s32.totalorder %s109, %s112
    %p118 = scmp.eq.s32.totalorder %s10, 0
    %p119 = por %p117, %p118
    %p120 = scmp.ne.s32.totalorder %s109, %s112
    %p121 = scmp.eq.s32.totalorder %s15, 7
    %p122 = por %p120, %p121
    %p123 = scmp.ne.s32.totalorder %s112, %s113
    %p124 = scmp.eq.s32.totalorder %s15, 0
    %p125 = por %p123, %p124
    %p126 = scmp.ne.s32.totalorder %s112, %s113
    %p127 = scmp.eq.s32.totalorder %s16, 7
    %p128 = por %p126, %p127
    %p130 = scmp.ne.s32.totalorder %s113, %s129
    %p131 = scmp.eq.s32.totalorder %s16, 0
    %p132 = por %p130, %p131
    %p133 = scmp.le.s32.totalorder 1, %s10
    %p134 = scmp.lt.s32.totalorder %s10, 9
    %p135 = pnand %p133, %p134
    %p136 = pneg %p135
    // Predicated region
    $region9: #{densenet_imagenet_forward.9} parent=5 // pred_check
      _
    $region10: #{densenet_imagenet_forward.9} parent=5 // pred_check_branch
      %138 = sbr.rel (%p135) target = $region12
    $region11: #{densenet_imagenet_forward.9} parent=5 // pred_region
      %s139 = ssub.s32 %s10, 1
      // Predicated region
      $region13: #{densenet_imagenet_forward.9} parent=11 // pred_check
        %p140 = pneg %p57
      $region14: #{densenet_imagenet_forward.9} parent=11 // pred_check_branch
        %142 = sbr.rel (%p140) target = $region16
      $region15: #{densenet_imagenet_forward.9} parent=11 // pred_region
        _
      $region16: #{densenet_imagenet_forward.9} parent=11 // pred_fallthru
        _
      // Predicated region
      $region17: #{densenet_imagenet_forward.9} parent=11 // pred_check
        %p143 = pneg %p78
      $region18: #{densenet_imagenet_forward.9} parent=11 // pred_check_branch
        %145 = sbr.rel (%p143) target = $region20
      $region19: #{densenet_imagenet_forward.9} parent=11 // pred_region
        _
      $region20: #{densenet_imagenet_forward.9} parent=11 // pred_fallthru
        _
      // Predicated region
      $region21: #{densenet_imagenet_forward.9} parent=11 // pred_check
        %p146 = pneg %p99
      $region22: #{densenet_imagenet_forward.9} parent=11 // pred_check_branch
        %148 = sbr.rel (%p146) target = $region24
      $region23: #{densenet_imagenet_forward.9} parent=11 // pred_region
        _
      $region24: #{densenet_imagenet_forward.9} parent=11 // pred_fallthru
        _
    $region12: #{densenet_imagenet_forward.9} parent=5 // pred_fallthru
      _
    %p149 = scmp.lt.s32.totalorder %s10, 8
    // Predicated region
    $region25: #{densenet_imagenet_forward.9} parent=5 // pred_check
      %p150 = pneg %p149
    $region26: #{densenet_imagenet_forward.9} parent=5 // pred_check_branch
      %152 = sbr.rel (%p150) target = $region28
    $region27: #{densenet_imagenet_forward.9} parent=5 // pred_region
      // Predicated region
      $region29: #{densenet_imagenet_forward.9} parent=27 // pred_check
        %p153 = pneg %p30
      $region30: #{densenet_imagenet_forward.9} parent=27 // pred_check_branch
        %155 = sbr.rel (%p153) target = $region32
      $region31: #{densenet_imagenet_forward.9} parent=27 // pred_region
        %s156 = smul.u32 32, %s10
        %p157 = scmp.lt.s32.totalorder %s156, 255
        %s158 = scalar_select %p157, %s156, 255
        %s159 = smul.addr %s158, 2
        %s160 = smul.addr %s159, 4
        %s161 = scalar_lea.vmem %s0, %s160
        %s162 = smul.u32 32, %s10
      $region32: #{densenet_imagenet_forward.9} parent=27 // pred_fallthru
        _
    $region28: #{densenet_imagenet_forward.9} parent=5 // pred_fallthru
      _
    %p163 = scmp.le.s32.totalorder 1, %s10
    %p164 = scmp.lt.s32.totalorder %s10, 9
    %p165 = pnand %p163, %p164
    %p166 = pneg %p165
    // Predicated region
    $region33: #{densenet_imagenet_forward.9} parent=5 // pred_check
      _
    $region34: #{densenet_imagenet_forward.9} parent=5 // pred_check_branch
      %168 = sbr.rel (%p165) target = $region36
    $region35: #{densenet_imagenet_forward.9} parent=5 // pred_region
      %s169 = ssub.s32 %s10, 1
      %s170 = smul.u32 32, %s15
      %p171 = scmp.lt.s32.totalorder %s170, 255
      %s172 = scalar_select %p171, %s170, 255
      %s173 = smul.addr %s172, 2
      %s174 = smul.addr %s173, 4
      %s175 = scalar_lea.vmem %s0, %s174
      %p176 = pneg %p36
      %p177 = pneg %p33
      %p178 = pneg %p57
      %p179 = pneg %p54
      %p180 = pneg %p78
      %p181 = pneg %p75
      %p182 = pneg %p99
      %p183 = pneg %p96
      %p184 = pneg %p125
      %p185 = pneg %p122
      %s186 = smul.u32 32, %s15
      %p187 = scmp.lt.s32.totalorder %s186, 255
      %s188 = scalar_select %p187, %s186, 255
      %s189 = smul.addr %s188, 4
      %s190 = scalar_lea.vmem %s4, %s189
      %s191 = smul.u32 32, %s15
      %p192 = scmp.lt.s32.totalorder %s191, 255
      %s193 = scalar_select %p192, %s191, 255
      %s194 = smul.addr %s193, 2
      %s195 = smul.addr %s194, 4
      %s196 = scalar_lea.vmem %s0, %s195
      %s197 = smul.u32 32, %s15
      %s198 = smul.u32 32, %s15
      %p199 = scmp.lt.s32.totalorder %s198, 255
      %s200 = scalar_select %p199, %s198, 255
      %s201 = smul.addr %s200, 4
      %s202 = scalar_lea.vmem %s4, %s201
      %s203 = smul.u32 32, %s15
      %v205 = vld [vmem:[%s196] sm:$0xff]
      %v206 = vld [vmem:[%s196 + $0x8] sm:$0xff]
      %v207 = vld [vmem:[%s196 + $0x10] sm:$0xff]
      %v208 = vld [vmem:[%s196 + $0x18] sm:$0xff]
      %v209 = vld [vmem:[%s196 + $0x20] sm:$0xff]
      %v210 = vld [vmem:[%s196 + $0x28] sm:$0xff]
      %v211 = vld [vmem:[%s196 + $0x30] sm:$0xff]
      %v212 = vld [vmem:[%s196 + $0x38] sm:$0xff]
      %v213 = vld [vmem:[%s196 + $0x40] sm:$0xff]
      %v214 = vld [vmem:[%s196 + $0x48] sm:$0xff]
      %v215 = vld [vmem:[%s196 + $0x50] sm:$0xff]
      %v216 = vld [vmem:[%s196 + $0x58] sm:$0xff]
      %v217 = vld [vmem:[%s196 + $0x60] sm:$0xff]
      %v218 = vld [vmem:[%s196 + $0x68] sm:$0xff]
      %v219 = vld [vmem:[%s196 + $0x70] sm:$0xff]
      %v220 = vld [vmem:[%s196 + $0x78] sm:$0xff]
      %v221 = vld [vmem:[%s196 + $0x80] sm:$0xff]
      %v222 = vld [vmem:[%s196 + $0x88] sm:$0xff]
      %v223 = vld [vmem:[%s196 + $0x90] sm:$0xff]
      %v224 = vld [vmem:[%s196 + $0x98] sm:$0xff]
      %v225 = vld [vmem:[%s196 + $0xa0] sm:$0xff]
      %v226 = vld [vmem:[%s196 + $0xa8] sm:$0xff]
      %v227 = vld [vmem:[%s196 + $0xb0] sm:$0xff]
      %v228 = vld [vmem:[%s196 + $0xb8] sm:$0xff]
      %v229 = vld [vmem:[%s196 + $0xc0] sm:$0xff]
      %v230 = vld [vmem:[%s196 + $0xc8] sm:$0xff]
      %v231 = vld [vmem:[%s196 + $0xd0] sm:$0xff]
      %v232 = vld [vmem:[%s196 + $0xd8] sm:$0xff]
      %v233 = vld [vmem:[%s196 + $0xe0] sm:$0xff]
      %v234 = vld [vmem:[%s196 + $0xe8] sm:$0xff]
      %v235 = vld [vmem:[%s196 + $0xf0] sm:$0xff]
      %v236 = vld [vmem:[%s196 + $0xf8] sm:$0xff]
      %v237 = vld [vmem:[%s1] sm:$0xf]
      %v238 = vld [vmem:[%s1 + $0x4] sm:$0xf]
      %v239 = vld [vmem:[%s1 + $0x8] sm:$0xf]
      %v240 = vld [vmem:[%s1 + $0xc] sm:$0xf]
      %v241 = vld [vmem:[%s1 + $0x10] sm:$0xf]
      %v242 = vld [vmem:[%s1 + $0x14] sm:$0xf]
      %v243 = vld [vmem:[%s1 + $0x18] sm:$0xf]
      %v244 = vld [vmem:[%s1 + $0x1c] sm:$0xf]
      %v245 = vld [vmem:[%s1 + $0x20] sm:$0xf]
      %v246 = vld [vmem:[%s1 + $0x24] sm:$0xf]
      %v247 = vld [vmem:[%s1 + $0x28] sm:$0xf]
      %v248 = vld [vmem:[%s1 + $0x2c] sm:$0xf]
      %v249 = vld [vmem:[%s1 + $0x30] sm:$0xf]
      %v250 = vld [vmem:[%s1 + $0x34] sm:$0xf]
      %v251 = vld [vmem:[%s1 + $0x38] sm:$0xf]
      %v252 = vld [vmem:[%s1 + $0x3c] sm:$0xf]
      %v253 = vld [vmem:[%s1 + $0x40] sm:$0xf]
      %v254 = vld [vmem:[%s1 + $0x44] sm:$0xf]
      %v255 = vld [vmem:[%s1 + $0x48] sm:$0xf]
      %v256 = vld [vmem:[%s1 + $0x4c] sm:$0xf]
      %v257 = vld [vmem:[%s1 + $0x50] sm:$0xf]
      %v258 = vld [vmem:[%s1 + $0x54] sm:$0xf]
      %v259 = vld [vmem:[%s1 + $0x58] sm:$0xf]
      %v260 = vld [vmem:[%s1 + $0x5c] sm:$0xf]
      %v261 = vld [vmem:[%s1 + $0x60] sm:$0xf]
      %v262 = vld [vmem:[%s1 + $0x64] sm:$0xf]
      %v263 = vld [vmem:[%s1 + $0x68] sm:$0xf]
      %v264 = vld [vmem:[%s1 + $0x6c] sm:$0xf]
      %v265 = vld [vmem:[%s1 + $0x70] sm:$0xf]
      %v266 = vld [vmem:[%s1 + $0x74] sm:$0xf]
      %v267 = vld [vmem:[%s1 + $0x78] sm:$0xf]
      %v268 = vld [vmem:[%s1 + $0x7c] sm:$0xf]
      %v301 = vunpack.c.l.b16 %v205
      %v302 = vunpack.c.h.b16 %v205
      %v303 = vunpack.c.l.b16 %v206
      %v304 = vunpack.c.h.b16 %v206
      %v305 = vunpack.c.l.b16 %v207
      %v306 = vunpack.c.h.b16 %v207
      %v307 = vunpack.c.l.b16 %v208
      %v308 = vunpack.c.h.b16 %v208
      %v309 = vunpack.c.l.b16 %v209
      %v310 = vunpack.c.h.b16 %v209
      %v311 = vunpack.c.l.b16 %v210
      %v312 = vunpack.c.h.b16 %v210
      %v313 = vunpack.c.l.b16 %v211
      %v314 = vunpack.c.h.b16 %v211
      %v315 = vunpack.c.l.b16 %v212
      %v316 = vunpack.c.h.b16 %v212
      %v317 = vunpack.c.l.b16 %v213
      %v318 = vunpack.c.h.b16 %v213
      %v319 = vunpack.c.l.b16 %v214
      %v320 = vunpack.c.h.b16 %v214
      %v321 = vunpack.c.l.b16 %v215
      %v322 = vunpack.c.h.b16 %v215
      %v323 = vunpack.c.l.b16 %v216
      %v324 = vunpack.c.h.b16 %v216
      %v325 = vunpack.c.l.b16 %v217
      %v326 = vunpack.c.h.b16 %v217
      %v327 = vunpack.c.l.b16 %v218
      %v328 = vunpack.c.h.b16 %v218
      %v329 = vunpack.c.l.b16 %v219
      %v330 = vunpack.c.h.b16 %v219
      %v331 = vunpack.c.l.b16 %v220
      %v332 = vunpack.c.h.b16 %v220
      %v333 = vunpack.c.l.b16 %v221
      %v334 = vunpack.c.h.b16 %v221
      %v335 = vunpack.c.l.b16 %v222
      %v336 = vunpack.c.h.b16 %v222
      %v337 = vunpack.c.l.b16 %v223
      %v338 = vunpack.c.h.b16 %v223
      %v339 = vunpack.c.l.b16 %v224
      %v340 = vunpack.c.h.b16 %v224
      %v341 = vunpack.c.l.b16 %v225
      %v342 = vunpack.c.h.b16 %v225
      %v343 = vunpack.c.l.b16 %v226
      %v344 = vunpack.c.h.b16 %v226
      %v345 = vunpack.c.l.b16 %v227
      %v346 = vunpack.c.h.b16 %v227
      %v347 = vunpack.c.l.b16 %v228
      %v348 = vunpack.c.h.b16 %v228
      %v349 = vunpack.c.l.b16 %v229
      %v350 = vunpack.c.h.b16 %v229
      %v351 = vunpack.c.l.b16 %v230
      %v352 = vunpack.c.h.b16 %v230
      %v353 = vunpack.c.l.b16 %v231
      %v354 = vunpack.c.h.b16 %v231
      %v355 = vunpack.c.l.b16 %v232
      %v356 = vunpack.c.h.b16 %v232
      %v357 = vunpack.c.l.b16 %v233
      %v358 = vunpack.c.h.b16 %v233
      %v359 = vunpack.c.l.b16 %v234
      %v360 = vunpack.c.h.b16 %v234
      %v361 = vunpack.c.l.b16 %v235
      %v362 = vunpack.c.h.b16 %v235
      %v363 = vunpack.c.l.b16 %v236
      %v364 = vunpack.c.h.b16 %v236
      %v365 = vpack.c.b16 %v303, %v301
      %v366 = vpack.c.b16 %v304, %v302
      %v367 = vpack.c.b16 %v307, %v305
      %v368 = vpack.c.b16 %v308, %v306
      %v369 = vpack.c.b16 %v311, %v309
      %v370 = vpack.c.b16 %v312, %v310
      %v371 = vpack.c.b16 %v315, %v313
      %v372 = vpack.c.b16 %v316, %v314
      %v373 = vpack.c.b16 %v319, %v317
      %v374 = vpack.c.b16 %v320, %v318
      %v375 = vpack.c.b16 %v323, %v321
      %v376 = vpack.c.b16 %v324, %v322
      %v377 = vpack.c.b16 %v327, %v325
      %v378 = vpack.c.b16 %v328, %v326
      %v379 = vpack.c.b16 %v331, %v329
      %v380 = vpack.c.b16 %v332, %v330
      %v381 = vpack.c.b16 %v335, %v333
      %v382 = vpack.c.b16 %v336, %v334
      %v383 = vpack.c.b16 %v339, %v337
      %v384 = vpack.c.b16 %v340, %v338
      %v385 = vpack.c.b16 %v343, %v341
      %v386 = vpack.c.b16 %v344, %v342
      %v387 = vpack.c.b16 %v347, %v345
      %v388 = vpack.c.b16 %v348, %v346
      %v389 = vpack.c.b16 %v351, %v349
      %v390 = vpack.c.b16 %v352, %v350
      %v391 = vpack.c.b16 %v355, %v353
      %v392 = vpack.c.b16 %v356, %v354
      %v393 = vpack.c.b16 %v359, %v357
      %v394 = vpack.c.b16 %v360, %v358
      %v395 = vpack.c.b16 %v363, %v361
      %v396 = vpack.c.b16 %v364, %v362
      %v461 = vunpack.c.l.b16 %v237
      %v462 = vunpack.c.l.b16 %v238
      %v463 = vunpack.c.l.b16 %v239
      %v464 = vunpack.c.l.b16 %v240
      %v465 = vunpack.c.l.b16 %v241
      %v466 = vunpack.c.l.b16 %v242
      %v467 = vunpack.c.l.b16 %v243
      %v468 = vunpack.c.l.b16 %v244
      %v469 = vunpack.c.l.b16 %v245
      %v470 = vunpack.c.l.b16 %v246
      %v471 = vunpack.c.l.b16 %v247
      %v472 = vunpack.c.l.b16 %v248
      %v473 = vunpack.c.l.b16 %v249
      %v474 = vunpack.c.l.b16 %v250
      %v475 = vunpack.c.l.b16 %v251
      %v476 = vunpack.c.l.b16 %v252
      %v477 = vunpack.c.l.b16 %v253
      %v478 = vunpack.c.l.b16 %v254
      %v479 = vunpack.c.l.b16 %v255
      %v480 = vunpack.c.l.b16 %v256
      %v481 = vunpack.c.l.b16 %v257
      %v482 = vunpack.c.l.b16 %v258
      %v483 = vunpack.c.l.b16 %v259
      %v484 = vunpack.c.l.b16 %v260
      %v485 = vunpack.c.l.b16 %v261
      %v486 = vunpack.c.l.b16 %v262
      %v487 = vunpack.c.l.b16 %v263
      %v488 = vunpack.c.l.b16 %v264
      %v489 = vunpack.c.l.b16 %v265
      %v490 = vunpack.c.l.b16 %v266
      %v491 = vunpack.c.l.b16 %v267
      %v492 = vunpack.c.l.b16 %v268
      %v493 = vpack.c.b16 %v462, %v461
      %v494 = vpack.c.b16 %v464, %v463
      %v495 = vpack.c.b16 %v466, %v465
      %v496 = vpack.c.b16 %v468, %v467
      %v497 = vpack.c.b16 %v470, %v469
      %v498 = vpack.c.b16 %v472, %v471
      %v499 = vpack.c.b16 %v474, %v473
      %v500 = vpack.c.b16 %v476, %v475
      %v501 = vpack.c.b16 %v478, %v477
      %v502 = vpack.c.b16 %v480, %v479
      %v503 = vpack.c.b16 %v482, %v481
      %v504 = vpack.c.b16 %v484, %v483
      %v505 = vpack.c.b16 %v486, %v485
      %v506 = vpack.c.b16 %v488, %v487
      %v507 = vpack.c.b16 %v490, %v489
      %v508 = vpack.c.b16 %v492, %v491
      %525 = vmatprep.subr.bf16.mxu0 0
      %526 = vmatpush1.bf16.msra.mxu0 %v500
      %527 = vmatprep.subr.bf16.mxu0 0
      %528 = vmatpush1.bf16.msra.mxu0 %v499
      %529 = vmatprep.subr.bf16.mxu0 0
      %530 = vmatpush1.bf16.msra.mxu0 %v498
      %531 = vmatprep.subr.bf16.mxu0 0
      %532 = vmatpush1.bf16.msra.mxu0 %v497
      %533 = vmatprep.subr.bf16.mxu0 0
      %534 = vmatpush1.bf16.msra.mxu0 %v496
      %535 = vmatprep.subr.bf16.mxu0 0
      %536 = vmatpush1.bf16.msra.mxu0 %v495
      %537 = vmatprep.subr.bf16.mxu0 0
      %538 = vmatpush1.bf16.msra.mxu0 %v494
      %539 = vmatprep.subr.bf16.mxu0 0
      %540 = vmatpush1.bf16.msra.mxu0 %v493
      %541 = vmatprep.subr.bf16.mxu0 0
      %542 = vmatpush2.bf16.msra.mxu0 %v508
      %543 = vmatprep.subr.bf16.mxu0 0
      %544 = vmatpush2.bf16.msra.mxu0 %v507
      %545 = vmatprep.subr.bf16.mxu0 0
      %546 = vmatpush2.bf16.msra.mxu0 %v506
      %547 = vmatprep.subr.bf16.mxu0 0
      %548 = vmatpush2.bf16.msra.mxu0 %v505
      %549 = vmatprep.subr.bf16.mxu0 0
      %550 = vmatpush2.bf16.msra.mxu0 %v504
      %551 = vmatprep.subr.bf16.mxu0 0
      %552 = vmatpush2.bf16.msra.mxu0 %v503
      %553 = vmatprep.subr.bf16.mxu0 0
      %554 = vmatpush2.bf16.msra.mxu0 %v502
      %555 = vmatprep.subr.bf16.mxu0 0
      %556 = vmatpush2.bf16.msra.mxu0 %v501
      %557 = vmatprep.mubr.bf16.mxu0 %v366
      %558 = vmatmul.mubr.bf16.gmra.mxu0 %v365
      %v559 = vpop.f32.mrf.mxu0
      %v560 = vadd.f32 0.0, %v559
      %v561 = vpop.f32.mrf.mxu0
      %v562 = vpop.f32.mrf.mxu0
      %v563 = vadd.f32 0.0, %v562
      %v564 = vpop.f32.mrf.mxu0
      %565 = vmatprep.mubr.bf16.mxu0 %v368
      %566 = vmatmul.mubr.bf16.gmra.mxu0 %v367
      %v567 = vpop.f32.mrf.mxu0
      %v568 = vadd.f32 0.0, %v567
      %v569 = vpop.f32.mrf.mxu0
      %v570 = vpop.f32.mrf.mxu0
      %v571 = vadd.f32 0.0, %v570
      %v572 = vpop.f32.mrf.mxu0
      %573 = vmatprep.mubr.bf16.mxu0 %v370
      %574 = vmatmul.mubr.bf16.gmra.mxu0 %v369
      %v575 = vpop.f32.mrf.mxu0
      %v576 = vadd.f32 0.0, %v575
      %v577 = vpop.f32.mrf.mxu0
      %v578 = vpop.f32.mrf.mxu0
      %v579 = vadd.f32 0.0, %v578
      %v580 = vpop.f32.mrf.mxu0
      %581 = vmatprep.mubr.bf16.mxu0 %v372
      %582 = vmatmul.mubr.bf16.gmra.mxu0 %v371
      %v583 = vpop.f32.mrf.mxu0
      %v584 = vadd.f32 0.0, %v583
      %v585 = vpop.f32.mrf.mxu0
      %v586 = vpop.f32.mrf.mxu0
      %v587 = vadd.f32 0.0, %v586
      %v588 = vpop.f32.mrf.mxu0
      %589 = vmatprep.mubr.bf16.mxu0 %v374
      %590 = vmatmul.mubr.bf16.gmra.mxu0 %v373
      %v591 = vpop.f32.mrf.mxu0
      %v592 = vadd.f32 0.0, %v591
      %v593 = vpop.f32.mrf.mxu0
      %v594 = vpop.f32.mrf.mxu0
      %v595 = vadd.f32 0.0, %v594
      %v596 = vpop.f32.mrf.mxu0
      %597 = vmatprep.mubr.bf16.mxu0 %v376
      %598 = vmatmul.mubr.bf16.gmra.mxu0 %v375
      %v599 = vpop.f32.mrf.mxu0
      %v600 = vadd.f32 0.0, %v599
      %v601 = vpop.f32.mrf.mxu0
      %v602 = vpop.f32.mrf.mxu0
      %v603 = vadd.f32 0.0, %v602
      %v604 = vpop.f32.mrf.mxu0
      %605 = vmatprep.mubr.bf16.mxu0 %v378
      %606 = vmatmul.mubr.bf16.gmra.mxu0 %v377
      %v607 = vpop.f32.mrf.mxu0
      %v608 = vadd.f32 0.0, %v607
      %v609 = vpop.f32.mrf.mxu0
      %v610 = vpop.f32.mrf.mxu0
      %v611 = vadd.f32 0.0, %v610
      %v612 = vpop.f32.mrf.mxu0
      %613 = vmatprep.mubr.bf16.mxu0 %v380
      %614 = vmatmul.mubr.bf16.gmra.mxu0 %v379
      %v615 = vpop.f32.mrf.mxu0
      %v616 = vadd.f32 0.0, %v615
      %v617 = vpop.f32.mrf.mxu0
      %v618 = vpop.f32.mrf.mxu0
      %v619 = vadd.f32 0.0, %v618
      %v620 = vpop.f32.mrf.mxu0
      %621 = vmatprep.mubr.bf16.mxu0 %v382
      %622 = vmatmul.mubr.bf16.gmra.mxu0 %v381
      %v623 = vpop.f32.mrf.mxu0
      %v624 = vadd.f32 0.0, %v623
      %v625 = vpop.f32.mrf.mxu0
      %v626 = vpop.f32.mrf.mxu0
      %v627 = vadd.f32 0.0, %v626
      %v628 = vpop.f32.mrf.mxu0
      %629 = vmatprep.mubr.bf16.mxu0 %v384
      %630 = vmatmul.mubr.bf16.gmra.mxu0 %v383
      %v631 = vpop.f32.mrf.mxu0
      %v632 = vadd.f32 0.0, %v631
      %v633 = vpop.f32.mrf.mxu0
      %v634 = vpop.f32.mrf.mxu0
      %v635 = vadd.f32 0.0, %v634
      %v636 = vpop.f32.mrf.mxu0
      %637 = vmatprep.mubr.bf16.mxu0 %v386
      %638 = vmatmul.mubr.bf16.gmra.mxu0 %v385
      %v639 = vpop.f32.mrf.mxu0
      %v640 = vadd.f32 0.0, %v639
      %v641 = vpop.f32.mrf.mxu0
      %v642 = vpop.f32.mrf.mxu0
      %v643 = vadd.f32 0.0, %v642
      %v644 = vpop.f32.mrf.mxu0
      %645 = vmatprep.mubr.bf16.mxu0 %v388
      %646 = vmatmul.mubr.bf16.gmra.mxu0 %v387
      %v647 = vpop.f32.mrf.mxu0
      %v648 = vadd.f32 0.0, %v647
      %v649 = vpop.f32.mrf.mxu0
      %v650 = vpop.f32.mrf.mxu0
      %v651 = vadd.f32 0.0, %v650
      %v652 = vpop.f32.mrf.mxu0
      %653 = vmatprep.mubr.bf16.mxu0 %v390
      %654 = vmatmul.mubr.bf16.gmra.mxu0 %v389
      %v655 = vpop.f32.mrf.mxu0
      %v656 = vadd.f32 0.0, %v655
      %v657 = vpop.f32.mrf.mxu0
      %v658 = vpop.f32.mrf.mxu0
      %v659 = vadd.f32 0.0, %v658
      %v660 = vpop.f32.mrf.mxu0
      %661 = vmatprep.mubr.bf16.mxu0 %v392
      %662 = vmatmul.mubr.bf16.gmra.mxu0 %v391
      %v663 = vpop.f32.mrf.mxu0
      %v664 = vadd.f32 0.0, %v663
      %v665 = vpop.f32.mrf.mxu0
      %v666 = vpop.f32.mrf.mxu0
      %v667 = vadd.f32 0.0, %v666
      %v668 = vpop.f32.mrf.mxu0
      %669 = vmatprep.mubr.bf16.mxu0 %v394
      %670 = vmatmul.mubr.bf16.gmra.mxu0 %v393
      %v671 = vpop.f32.mrf.mxu0
      %v672 = vadd.f32 0.0, %v671
      %v673 = vpop.f32.mrf.mxu0
      %v674 = vpop.f32.mrf.mxu0
      %v675 = vadd.f32 0.0, %v674
      %v676 = vpop.f32.mrf.mxu0
      %677 = vmatprep.mubr.bf16.mxu0 %v396
      %678 = vmatmul.mubr.bf16.gmra.mxu0 %v395
      %v679 = vpop.f32.mrf.mxu0
      %v680 = vadd.f32 0.0, %v679
      %v681 = vpop.f32.mrf.mxu0
      %v682 = vpop.f32.mrf.mxu0
      %v683 = vadd.f32 0.0, %v682
      %v684 = vpop.f32.mrf.mxu0
      %685 = vdwg.mxu0
      %v686 = vld [vmem:[%s2] sm:$0x1]
      %v688 = vlaneseq
      %v689 = vshrl.u32 %v688, 7
      %v690 = vsub.s32 0, %v689
      %v691 = vrot.slane %v686, %v690
      %v693 = vmul.f32 %v560, %v691
      %v694 = vmul.f32 %v563, %v691
      %v695 = vmul.f32 %v568, %v691
      %v696 = vmul.f32 %v571, %v691
      %v697 = vmul.f32 %v576, %v691
      %v698 = vmul.f32 %v579, %v691
      %v699 = vmul.f32 %v584, %v691
      %v700 = vmul.f32 %v587, %v691
      %v701 = vmul.f32 %v592, %v691
      %v702 = vmul.f32 %v595, %v691
      %v703 = vmul.f32 %v600, %v691
      %v704 = vmul.f32 %v603, %v691
      %v705 = vmul.f32 %v608, %v691
      %v706 = vmul.f32 %v611, %v691
      %v707 = vmul.f32 %v616, %v691
      %v708 = vmul.f32 %v619, %v691
      %v709 = vmul.f32 %v624, %v691
      %v710 = vmul.f32 %v627, %v691
      %v711 = vmul.f32 %v632, %v691
      %v712 = vmul.f32 %v635, %v691
      %v713 = vmul.f32 %v640, %v691
      %v714 = vmul.f32 %v643, %v691
      %v715 = vmul.f32 %v648, %v691
      %v716 = vmul.f32 %v651, %v691
      %v717 = vmul.f32 %v656, %v691
      %v718 = vmul.f32 %v659, %v691
      %v719 = vmul.f32 %v664, %v691
      %v720 = vmul.f32 %v667, %v691
      %v721 = vmul.f32 %v672, %v691
      %v722 = vmul.f32 %v675, %v691
      %v723 = vmul.f32 %v680, %v691
      %v724 = vmul.f32 %v683, %v691
      %v725 = vld [vmem:[%s3] sm:$0x1]
      %v727 = vlaneseq
      %v728 = vshrl.u32 %v727, 7
      %v729 = vsub.s32 0, %v728
      %v730 = vrot.slane %v725, %v729
      %v732 = vadd.f32 %v693, %v730
      %v733 = vadd.f32 %v694, %v730
      %v734 = vadd.f32 %v695, %v730
      %v735 = vadd.f32 %v696, %v730
      %v736 = vadd.f32 %v697, %v730
      %v737 = vadd.f32 %v698, %v730
      %v738 = vadd.f32 %v699, %v730
      %v739 = vadd.f32 %v700, %v730
      %v740 = vadd.f32 %v701, %v730
      %v741 = vadd.f32 %v702, %v730
      %v742 = vadd.f32 %v703, %v730
      %v743 = vadd.f32 %v704, %v730
      %v744 = vadd.f32 %v705, %v730
      %v745 = vadd.f32 %v706, %v730
      %v746 = vadd.f32 %v707, %v730
      %v747 = vadd.f32 %v708, %v730
      %v748 = vadd.f32 %v709, %v730
      %v749 = vadd.f32 %v710, %v730
      %v750 = vadd.f32 %v711, %v730
      %v751 = vadd.f32 %v712, %v730
      %v752 = vadd.f32 %v713, %v730
      %v753 = vadd.f32 %v714, %v730
      %v754 = vadd.f32 %v715, %v730
      %v755 = vadd.f32 %v716, %v730
      %v756 = vadd.f32 %v717, %v730
      %v757 = vadd.f32 %v718, %v730
      %v758 = vadd.f32 %v719, %v730
      %v759 = vadd.f32 %v720, %v730
      %v760 = vadd.f32 %v721, %v730
      %v761 = vadd.f32 %v722, %v730
      %v762 = vadd.f32 %v723, %v730
      %v763 = vadd.f32 %v724, %v730
      %v764 = vmax.f32 %v732, 0.0
      %v765 = vmax.f32 %v733, 0.0
      %v766 = vmax.f32 %v734, 0.0
      %v767 = vmax.f32 %v735, 0.0
      %v768 = vmax.f32 %v736, 0.0
      %v769 = vmax.f32 %v737, 0.0
      %v770 = vmax.f32 %v738, 0.0
      %v771 = vmax.f32 %v739, 0.0
      %v772 = vmax.f32 %v740, 0.0
      %v773 = vmax.f32 %v741, 0.0
      %v774 = vmax.f32 %v742, 0.0
      %v775 = vmax.f32 %v743, 0.0
      %v776 = vmax.f32 %v744, 0.0
      %v777 = vmax.f32 %v745, 0.0
      %v778 = vmax.f32 %v746, 0.0
      %v779 = vmax.f32 %v747, 0.0
      %v780 = vmax.f32 %v748, 0.0
      %v781 = vmax.f32 %v749, 0.0
      %v782 = vmax.f32 %v750, 0.0
      %v783 = vmax.f32 %v751, 0.0
      %v784 = vmax.f32 %v752, 0.0
      %v785 = vmax.f32 %v753, 0.0
      %v786 = vmax.f32 %v754, 0.0
      %v787 = vmax.f32 %v755, 0.0
      %v788 = vmax.f32 %v756, 0.0
      %v789 = vmax.f32 %v757, 0.0
      %v790 = vmax.f32 %v758, 0.0
      %v791 = vmax.f32 %v759, 0.0
      %v792 = vmax.f32 %v760, 0.0
      %v793 = vmax.f32 %v761, 0.0
      %v794 = vmax.f32 %v762, 0.0
      %v795 = vmax.f32 %v763, 0.0
      %v796 = vpack.c.bf16 %v765, %v764
      %v797 = vpack.c.bf16 %v767, %v766
      %v798 = vpack.c.bf16 %v769, %v768
      %v799 = vpack.c.bf16 %v771, %v770
      %v800 = vpack.c.bf16 %v773, %v772
      %v801 = vpack.c.bf16 %v775, %v774
      %v802 = vpack.c.bf16 %v777, %v776
      %v803 = vpack.c.bf16 %v779, %v778
      %v804 = vpack.c.bf16 %v781, %v780
      %v805 = vpack.c.bf16 %v783, %v782
      %v806 = vpack.c.bf16 %v785, %v784
      %v807 = vpack.c.bf16 %v787, %v786
      %v808 = vpack.c.bf16 %v789, %v788
      %v809 = vpack.c.bf16 %v791, %v790
      %v810 = vpack.c.bf16 %v793, %v792
      %v811 = vpack.c.bf16 %v795, %v794
      %v828 = vunpack.c.l.b16 %v796
      %v829 = vunpack.c.h.b16 %v796
      %v830 = vunpack.c.l.b16 %v797
      %v831 = vunpack.c.h.b16 %v797
      %v832 = vunpack.c.l.b16 %v798
      %v833 = vunpack.c.h.b16 %v798
      %v834 = vunpack.c.l.b16 %v799
      %v835 = vunpack.c.h.b16 %v799
      %v836 = vunpack.c.l.b16 %v800
      %v837 = vunpack.c.h.b16 %v800
      %v838 = vunpack.c.l.b16 %v801
      %v839 = vunpack.c.h.b16 %v801
      %v840 = vunpack.c.l.b16 %v802
      %v841 = vunpack.c.h.b16 %v802
      %v842 = vunpack.c.l.b16 %v803
      %v843 = vunpack.c.h.b16 %v803
      %v844 = vunpack.c.l.b16 %v804
      %v845 = vunpack.c.h.b16 %v804
      %v846 = vunpack.c.l.b16 %v805
      %v847 = vunpack.c.h.b16 %v805
      %v848 = vunpack.c.l.b16 %v806
      %v849 = vunpack.c.h.b16 %v806
      %v850 = vunpack.c.l.b16 %v807
      %v851 = vunpack.c.h.b16 %v807
      %v852 = vunpack.c.l.b16 %v808
      %v853 = vunpack.c.h.b16 %v808
      %v854 = vunpack.c.l.b16 %v809
      %v855 = vunpack.c.h.b16 %v809
      %v856 = vunpack.c.l.b16 %v810
      %v857 = vunpack.c.h.b16 %v810
      %v858 = vunpack.c.l.b16 %v811
      %v859 = vunpack.c.h.b16 %v811
      %v860 = vpack.c.b16 %v828, %v828
      %v861 = vpack.c.b16 %v829, %v829
      %v862 = vpack.c.b16 %v830, %v830
      %v863 = vpack.c.b16 %v831, %v831
      %v864 = vpack.c.b16 %v832, %v832
      %v865 = vpack.c.b16 %v833, %v833
      %v866 = vpack.c.b16 %v834, %v834
      %v867 = vpack.c.b16 %v835, %v835
      %v868 = vpack.c.b16 %v836, %v836
      %v869 = vpack.c.b16 %v837, %v837
      %v870 = vpack.c.b16 %v838, %v838
      %v871 = vpack.c.b16 %v839, %v839
      %v872 = vpack.c.b16 %v840, %v840
      %v873 = vpack.c.b16 %v841, %v841
      %v874 = vpack.c.b16 %v842, %v842
      %v875 = vpack.c.b16 %v843, %v843
      %v876 = vpack.c.b16 %v844, %v844
      %v877 = vpack.c.b16 %v845, %v845
      %v878 = vpack.c.b16 %v846, %v846
      %v879 = vpack.c.b16 %v847, %v847
      %v880 = vpack.c.b16 %v848, %v848
      %v881 = vpack.c.b16 %v849, %v849
      %v882 = vpack.c.b16 %v850, %v850
      %v883 = vpack.c.b16 %v851, %v851
      %v884 = vpack.c.b16 %v852, %v852
      %v885 = vpack.c.b16 %v853, %v853
      %v886 = vpack.c.b16 %v854, %v854
      %v887 = vpack.c.b16 %v855, %v855
      %v888 = vpack.c.b16 %v856, %v856
      %v889 = vpack.c.b16 %v857, %v857
      %v890 = vpack.c.b16 %v858, %v858
      %v891 = vpack.c.b16 %v859, %v859
      %924 = vst [vmem:[%s202] sm:$0xf] %v860
      %925 = vst [vmem:[%s202 + $0x4] sm:$0xf] %v861
      %926 = vst [vmem:[%s202 + $0x8] sm:$0xf] %v862
      %927 = vst [vmem:[%s202 + $0xc] sm:$0xf] %v863
      %928 = vst [vmem:[%s202 + $0x10] sm:$0xf] %v864
      %929 = vst [vmem:[%s202 + $0x14] sm:$0xf] %v865
      %930 = vst [vmem:[%s202 + $0x18] sm:$0xf] %v866
      %931 = vst [vmem:[%s202 + $0x1c] sm:$0xf] %v867
      %932 = vst [vmem:[%s202 + $0x20] sm:$0xf] %v868
      %933 = vst [vmem:[%s202 + $0x24] sm:$0xf] %v869
      %934 = vst [vmem:[%s202 + $0x28] sm:$0xf] %v870
      %935 = vst [vmem:[%s202 + $0x2c] sm:$0xf] %v871
      %936 = vst [vmem:[%s202 + $0x30] sm:$0xf] %v872
      %937 = vst [vmem:[%s202 + $0x34] sm:$0xf] %v873
      %938 = vst [vmem:[%s202 + $0x38] sm:$0xf] %v874
      %939 = vst [vmem:[%s202 + $0x3c] sm:$0xf] %v875
      %940 = vst [vmem:[%s202 + $0x40] sm:$0xf] %v876
      %941 = vst [vmem:[%s202 + $0x44] sm:$0xf] %v877
      %942 = vst [vmem:[%s202 + $0x48] sm:$0xf] %v878
      %943 = vst [vmem:[%s202 + $0x4c] sm:$0xf] %v879
      %944 = vst [vmem:[%s202 + $0x50] sm:$0xf] %v880
      %945 = vst [vmem:[%s202 + $0x54] sm:$0xf] %v881
      %946 = vst [vmem:[%s202 + $0x58] sm:$0xf] %v882
      %947 = vst [vmem:[%s202 + $0x5c] sm:$0xf] %v883
      %948 = vst [vmem:[%s202 + $0x60] sm:$0xf] %v884
      %949 = vst [vmem:[%s202 + $0x64] sm:$0xf] %v885
      %950 = vst [vmem:[%s202 + $0x68] sm:$0xf] %v886
      %951 = vst [vmem:[%s202 + $0x6c] sm:$0xf] %v887
      %952 = vst [vmem:[%s202 + $0x70] sm:$0xf] %v888
      %953 = vst [vmem:[%s202 + $0x74] sm:$0xf] %v889
      %954 = vst [vmem:[%s202 + $0x78] sm:$0xf] %v890
      %955 = vst [vmem:[%s202 + $0x7c] sm:$0xf] %v891
      %s956 = smul.u32 32, %s15
      %p957 = scmp.lt.s32.totalorder %s956, 255
      %s958 = scalar_select %p957, %s956, 255
      %s959 = smul.addr %s958, 4
      %s960 = scalar_lea.vmem %s4, %s959
      // Predicated region
      $region37: #{densenet_imagenet_forward.9} parent=35 // pred_check
        %p961 = pneg %p122
      $region38: #{densenet_imagenet_forward.9} parent=35 // pred_check_branch
        %963 = sbr.rel (%p961) target = $region40
      $region39: #{densenet_imagenet_forward.9} parent=35 // pred_region
        %s964 = smul.u32 32, %s15
      $region40: #{densenet_imagenet_forward.9} parent=35 // pred_fallthru
        _
    $region36: #{densenet_imagenet_forward.9} parent=5 // pred_fallthru
      _
    %p965 = scmp.le.s32.totalorder 2, %s10
    // Predicated region
    $region41: #{densenet_imagenet_forward.9} parent=5 // pred_check
      %p966 = pneg %p965
    $region42: #{densenet_imagenet_forward.9} parent=5 // pred_check_branch
      %968 = sbr.rel (%p966) target = $region44
    $region43: #{densenet_imagenet_forward.9} parent=5 // pred_region
      %s969 = ssub.s32 %s10, 2
      // Predicated region
      $region45: #{densenet_imagenet_forward.9} parent=43 // pred_check
        %p970 = pneg %p128
      $region46: #{densenet_imagenet_forward.9} parent=43 // pred_check_branch
        %972 = sbr.rel (%p970) target = $region48
      $region47: #{densenet_imagenet_forward.9} parent=43 // pred_region
        %s973 = smul.u32 32, %s16
        %p974 = scmp.lt.s32.totalorder %s973, 255
        %s975 = scalar_select %p974, %s973, 255
        %s976 = smul.addr %s975, 4
        %s977 = scalar_lea.vmem %s4, %s976
      $region48: #{densenet_imagenet_forward.9} parent=43 // pred_fallthru
        _
    $region44: #{densenet_imagenet_forward.9} parent=5 // pred_fallthru
      _
  $region6: #{densenet_imagenet_forward.9} parent=0 // loop_footer
    %s14 = sadd.s32 1, %s10
  $region7: #{densenet_imagenet_forward.9} parent=0 // loop_footer_branch
    %9 = sbr.rel target = $region3
  $region8: #{densenet_imagenet_forward.9} parent=0 // loop_exit
    _

// kernel: densenet_imagenet_forward.11
$region0: #{densenet_imagenet_forward.11}
  #allocation0 [shape = 'u32[]', space=smem, size = 0x4, offset = 0x4, fixed_abs, tag = 'smem constant byte address 0x4 - core index']
  #allocation1 [shape = 'u32[144,128]{1,0:T(1,128)}', space=vmem, size = 0x12000, scoped, tag = 'internal scratch']
  %s0 = inlined_call_operand.vmem [shape: bf16[512,128], index: 0, kind: input, shape index: {}]
  %s1 = inlined_call_operand.vmem [shape: bf16[128,32], index: 1, kind: input, shape index: {}]
  %s2 = inlined_call_operand.vmem [shape: f32[1,128], index: 2, kind: input, shape index: {}]
  %s3 = inlined_call_operand.vmem [shape: f32[1,128], index: 3, kind: input, shape index: {}]
  %s4 = inlined_call_operand.vmem [shape: f32[1,32], index: 4, kind: input, shape index: {}]
  %s5 = inlined_call_operand.vmem [shape: f32[1,32], index: 5, kind: input, shape index: {}]
  %s6 = inlined_call_operand.vmem [shape: bf16[512,32], index: 6, kind: output, shape index: {}]
  %s7 = sld [smem:[#allocation0]]
  $region57: #{densenet_imagenet_forward.11} parent=0
    _
  %s9 = ssub.s32 1, %s7
  %s10 = scalar_select 0, %s9, %s7
  loop: start=0, step=1, limit=6
  $region2: #{densenet_imagenet_forward.11} parent=0 // loop_pre_header
    _
  $region3: #{densenet_imagenet_forward.11} parent=0 // loop_header
    %s12 = sphi 0, %s16
    %p13 = scmp.ge.s32.totalorder %s12, 6
    %s22 = sphi 0, %s24
    %s25 = sphi 0, %s22
    %s26 = sphi 0, %s25
    %s42 = sphi 0, %s26
    %s46 = sphi 0, %s46
    %s48 = sphi 0, %s46
    %s49 = sphi 0, %s48
    %s63 = sphi 0, %s49
    %s67 = sphi 0, %s67
    %s69 = sphi 0, %s67
    %s70 = sphi 0, %s69
    %s84 = sphi 0, %s70
    %s88 = sphi 0, %s88
    %s90 = sphi 0, %s88
    %s91 = sphi 0, %s90
    %s105 = sphi 0, %s91
    %s109 = sphi 0, %s109
    %s111 = sphi 0, %s109
    %s112 = sphi 0, %s111
    %s126 = sphi 0, %s112
    %s130 = sphi 0, %s130
    %s132 = sphi 0, %s130
    %s133 = sphi 0, %s132
    %s147 = sphi 0, %s133
    %s153 = sphi 0, %s155
    %s156 = sphi 0, %s153
    %s157 = sphi 0, %s156
    %s173 = sphi 0, %s157
  $region4: #{densenet_imagenet_forward.11} parent=0 // loop_header_branch
    %15 = sbr.rel (%p13) target = $region8
  $region5: #{densenet_imagenet_forward.11} parent=0 // loop_body
    %s17 = ssub.s32 %s12, 1
    %s18 = ssub.s32 %s12, 2
    %s19 = sadd.s32 %s12, 1
    %s20 = ssub.s32 %s12, %s19
    %p21 = scmp.eq.s32.totalorder %s20, 0
    %s23 = sadd.s32 %s22, 1
    %s24 = scalar_select %p21, %s22, %s23
    %p27 = pneg %p21
    %p28 = scmp.eq.s32.totalorder %s12, 3
    %p29 = por %p27, %p28
    %p30 = scmp.ne.s32.totalorder %s22, %s25
    %p31 = scmp.eq.s32.totalorder %s12, 0
    %p32 = por %p30, %p31
    %p33 = scmp.ne.s32.totalorder %s22, %s25
    %p34 = scmp.eq.s32.totalorder %s17, 3
    %p35 = por %p33, %p34
    %p36 = scmp.ne.s32.totalorder %s25, %s26
    %p37 = scmp.eq.s32.totalorder %s17, 0
    %p38 = por %p36, %p37
    %p39 = scmp.ne.s32.totalorder %s25, %s26
    %p40 = scmp.eq.s32.totalorder %s18, 3
    %p41 = por %p39, %p40
    %p43 = scmp.ne.s32.totalorder %s26, %s42
    %p44 = scmp.eq.s32.totalorder %s18, 0
    %p45 = por %p43, %p44
    %s47 = sadd.s32 %s46, 1
    %p50 = scmp.eq.s32.totalorder %s12, 3
    %p51 = scmp.ne.s32.totalorder %s46, %s48
    %p52 = scmp.eq.s32.totalorder %s12, 0
    %p53 = por %p51, %p52
    %p54 = scmp.ne.s32.totalorder %s46, %s48
    %p55 = scmp.eq.s32.totalorder %s17, 3
    %p56 = por %p54, %p55
    %p57 = scmp.ne.s32.totalorder %s48, %s49
    %p58 = scmp.eq.s32.totalorder %s17, 0
    %p59 = por %p57, %p58
    %p60 = scmp.ne.s32.totalorder %s48, %s49
    %p61 = scmp.eq.s32.totalorder %s18, 3
    %p62 = por %p60, %p61
    %p64 = scmp.ne.s32.totalorder %s49, %s63
    %p65 = scmp.eq.s32.totalorder %s18, 0
    %p66 = por %p64, %p65
    %s68 = sadd.s32 %s67, 1
    %p71 = scmp.eq.s32.totalorder %s12, 3
    %p72 = scmp.ne.s32.totalorder %s67, %s69
    %p73 = scmp.eq.s32.totalorder %s12, 0
    %p74 = por %p72, %p73
    %p75 = scmp.ne.s32.totalorder %s67, %s69
    %p76 = scmp.eq.s32.totalorder %s17, 3
    %p77 = por %p75, %p76
    %p78 = scmp.ne.s32.totalorder %s69, %s70
    %p79 = scmp.eq.s32.totalorder %s17, 0
    %p80 = por %p78, %p79
    %p81 = scmp.ne.s32.totalorder %s69, %s70
    %p82 = scmp.eq.s32.totalorder %s18, 3
    %p83 = por %p81, %p82
    %p85 = scmp.ne.s32.totalorder %s70, %s84
    %p86 = scmp.eq.s32.totalorder %s18, 0
    %p87 = por %p85, %p86
    %s89 = sadd.s32 %s88, 1
    %p92 = scmp.eq.s32.totalorder %s12, 3
    %p93 = scmp.ne.s32.totalorder %s88, %s90
    %p94 = scmp.eq.s32.totalorder %s12, 0
    %p95 = por %p93, %p94
    %p96 = scmp.ne.s32.totalorder %s88, %s90
    %p97 = scmp.eq.s32.totalorder %s17, 3
    %p98 = por %p96, %p97
    %p99 = scmp.ne.s32.totalorder %s90, %s91
    %p100 = scmp.eq.s32.totalorder %s17, 0
    %p101 = por %p99, %p100
    %p102 = scmp.ne.s32.totalorder %s90, %s91
    %p103 = scmp.eq.s32.totalorder %s18, 3
    %p104 = por %p102, %p103
    %p106 = scmp.ne.s32.totalorder %s91, %s105
    %p107 = scmp.eq.s32.totalorder %s18, 0
    %p108 = por %p106, %p107
    %s110 = sadd.s32 %s109, 1
    %p113 = scmp.eq.s32.totalorder %s12, 3
    %p114 = scmp.ne.s32.totalorder %s109, %s111
    %p115 = scmp.eq.s32.totalorder %s12, 0
    %p116 = por %p114, %p115
    %p117 = scmp.ne.s32.totalorder %s109, %s111
    %p118 = scmp.eq.s32.totalorder %s17, 3
    %p119 = por %p117, %p118
    %p120 = scmp.ne.s32.totalorder %s111, %s112
    %p121 = scmp.eq.s32.totalorder %s17, 0
    %p122 = por %p120, %p121
    %p123 = scmp.ne.s32.totalorder %s111, %s112
    %p124 = scmp.eq.s32.totalorder %s18, 3
    %p125 = por %p123, %p124
    %p127 = scmp.ne.s32.totalorder %s112, %s126
    %p128 = scmp.eq.s32.totalorder %s18, 0
    %p129 = por %p127, %p128
    %s131 = sadd.s32 %s130, 1
    %p134 = scmp.eq.s32.totalorder %s12, 3
    %p135 = scmp.ne.s32.totalorder %s130, %s132
    %p136 = scmp.eq.s32.totalorder %s12, 0
    %p137 = por %p135, %p136
    %p138 = scmp.ne.s32.totalorder %s130, %s132
    %p139 = scmp.eq.s32.totalorder %s17, 3
    %p140 = por %p138, %p139
    %p141 = scmp.ne.s32.totalorder %s132, %s133
    %p142 = scmp.eq.s32.totalorder %s17, 0
    %p143 = por %p141, %p142
    %p144 = scmp.ne.s32.totalorder %s132, %s133
    %p145 = scmp.eq.s32.totalorder %s18, 3
    %p146 = por %p144, %p145
    %p148 = scmp.ne.s32.totalorder %s133, %s147
    %p149 = scmp.eq.s32.totalorder %s18, 0
    %p150 = por %p148, %p149
    %s151 = ssub.s32 %s12, %s19
    %p152 = scmp.eq.s32.totalorder %s151, 0
    %s154 = sadd.s32 %s153, 1
    %s155 = scalar_select %p152, %s153, %s154
    %p158 = pneg %p152
    %p159 = scmp.eq.s32.totalorder %s12, 3
    %p160 = por %p158, %p159
    %p161 = scmp.ne.s32.totalorder %s153, %s156
    %p162 = scmp.eq.s32.totalorder %s12, 0
    %p163 = por %p161, %p162
    %p164 = scmp.ne.s32.totalorder %s153, %s156
    %p165 = scmp.eq.s32.totalorder %s17, 3
    %p166 = por %p164, %p165
    %p167 = scmp.ne.s32.totalorder %s156, %s157
    %p168 = scmp.eq.s32.totalorder %s17, 0
    %p169 = por %p167, %p168
    %p170 = scmp.ne.s32.totalorder %s156, %s157
    %p171 = scmp.eq.s32.totalorder %s18, 3
    %p172 = por %p170, %p171
    %p174 = scmp.ne.s32.totalorder %s157, %s173
    %p175 = scmp.eq.s32.totalorder %s18, 0
    %p176 = por %p174, %p175
    %p177 = scmp.le.s32.totalorder 1, %s12
    %p178 = scmp.lt.s32.totalorder %s12, 5
    %p179 = pnand %p177, %p178
    %p180 = pneg %p179
    // Predicated region
    $region9: #{densenet_imagenet_forward.11} parent=5 // pred_check
      _
    $region10: #{densenet_imagenet_forward.11} parent=5 // pred_check_branch
      %182 = sbr.rel (%p179) target = $region12
    $region11: #{densenet_imagenet_forward.11} parent=5 // pred_region
      %s183 = ssub.s32 %s12, 1
      // Predicated region
      $region13: #{densenet_imagenet_forward.11} parent=11 // pred_check
        %p184 = pneg %p59
      $region14: #{densenet_imagenet_forward.11} parent=11 // pred_check_branch
        %186 = sbr.rel (%p184) target = $region16
      $region15: #{densenet_imagenet_forward.11} parent=11 // pred_region
        _
      $region16: #{densenet_imagenet_forward.11} parent=11 // pred_fallthru
        _
      // Predicated region
      $region17: #{densenet_imagenet_forward.11} parent=11 // pred_check
        %p187 = pneg %p80
      $region18: #{densenet_imagenet_forward.11} parent=11 // pred_check_branch
        %189 = sbr.rel (%p187) target = $region20
      $region19: #{densenet_imagenet_forward.11} parent=11 // pred_region
        _
      $region20: #{densenet_imagenet_forward.11} parent=11 // pred_fallthru
        _
      // Predicated region
      $region21: #{densenet_imagenet_forward.11} parent=11 // pred_check
        %p190 = pneg %p101
      $region22: #{densenet_imagenet_forward.11} parent=11 // pred_check_branch
        %192 = sbr.rel (%p190) target = $region24
      $region23: #{densenet_imagenet_forward.11} parent=11 // pred_region
        _
      $region24: #{densenet_imagenet_forward.11} parent=11 // pred_fallthru
        _
      // Predicated region
      $region25: #{densenet_imagenet_forward.11} parent=11 // pred_check
        %p193 = pneg %p122
      $region26: #{densenet_imagenet_forward.11} parent=11 // pred_check_branch
        %195 = sbr.rel (%p193) target = $region28
      $region27: #{densenet_imagenet_forward.11} parent=11 // pred_region
        _
      $region28: #{densenet_imagenet_forward.11} parent=11 // pred_fallthru
        _
      // Predicated region
      $region29: #{densenet_imagenet_forward.11} parent=11 // pred_check
        %p196 = pneg %p143
      $region30: #{densenet_imagenet_forward.11} parent=11 // pred_check_branch
        %198 = sbr.rel (%p196) target = $region32
      $region31: #{densenet_imagenet_forward.11} parent=11 // pred_region
        _
      $region32: #{densenet_imagenet_forward.11} parent=11 // pred_fallthru
        _
    $region12: #{densenet_imagenet_forward.11} parent=5 // pred_fallthru
      _
    %p199 = scmp.lt.s32.totalorder %s12, 4
    // Predicated region
    $region33: #{densenet_imagenet_forward.11} parent=5 // pred_check
      %p200 = pneg %p199
    $region34: #{densenet_imagenet_forward.11} parent=5 // pred_check_branch
      %202 = sbr.rel (%p200) target = $region36
    $region35: #{densenet_imagenet_forward.11} parent=5 // pred_region
      // Predicated region
      $region37: #{densenet_imagenet_forward.11} parent=35 // pred_check
        %p203 = pneg %p32
      $region38: #{densenet_imagenet_forward.11} parent=35 // pred_check_branch
        %205 = sbr.rel (%p203) target = $region40
      $region39: #{densenet_imagenet_forward.11} parent=35 // pred_region
        %s206 = smul.u32 16, %s12
        %p207 = scmp.lt.s32.totalorder %s206, 63
        %s208 = scalar_select %p207, %s206, 63
        %s209 = smul.addr %s208, 4
        %s210 = scalar_lea.vmem %s0, %s209
        %s211 = smul.u32 16, %s12
      $region40: #{densenet_imagenet_forward.11} parent=35 // pred_fallthru
        _
    $region36: #{densenet_imagenet_forward.11} parent=5 // pred_fallthru
      _
    %p212 = scmp.le.s32.totalorder 1, %s12
    %p213 = scmp.lt.s32.totalorder %s12, 5
    %p214 = pnand %p212, %p213
    %p215 = pneg %p214
    // Predicated region
    $region41: #{densenet_imagenet_forward.11} parent=5 // pred_check
      _
    $region42: #{densenet_imagenet_forward.11} parent=5 // pred_check_branch
      %217 = sbr.rel (%p214) target = $region44
    $region43: #{densenet_imagenet_forward.11} parent=5 // pred_region
      %s218 = ssub.s32 %s12, 1
      %s219 = smul.u32 16, %s17
      %p220 = scmp.lt.s32.totalorder %s219, 63
      %s221 = scalar_select %p220, %s219, 63
      %s222 = smul.addr %s221, 4
      %s223 = scalar_lea.vmem %s0, %s222
      %p224 = pneg %p38
      %p225 = pneg %p35
      %p226 = pneg %p59
      %p227 = pneg %p56
      %p228 = pneg %p80
      %p229 = pneg %p77
      %p230 = pneg %p101
      %p231 = pneg %p98
      %p232 = pneg %p122
      %p233 = pneg %p119
      %p234 = pneg %p143
      %p235 = pneg %p140
      %p236 = pneg %p169
      %p237 = pneg %p166
      %s238 = smul.u32 16, %s17
      %p239 = scmp.lt.s32.totalorder %s238, 63
      %s240 = scalar_select %p239, %s238, 63
      %s241 = smul.addr %s240, 4
      %s242 = scalar_lea.vmem %s6, %s241
      %s243 = smul.u32 16, %s17
      %p244 = scmp.lt.s32.totalorder %s243, 63
      %s245 = scalar_select %p244, %s243, 63
      %s246 = smul.addr %s245, 4
      %s247 = scalar_lea.vmem %s0, %s246
      %s248 = smul.u32 16, %s17
      %s249 = smul.u32 16, %s17
      %p250 = scmp.lt.s32.totalorder %s249, 63
      %s251 = scalar_select %p250, %s249, 63
      %s252 = smul.addr %s251, 4
      %s253 = scalar_lea.vmem %s6, %s252
      %s254 = smul.u32 16, %s17
      %v256 = vld [vmem:[%s247] sm:$0xf]
      %v257 = vld [vmem:[%s247 + $0x4] sm:$0xf]
      %v258 = vld [vmem:[%s247 + $0x8] sm:$0xf]
      %v259 = vld [vmem:[%s247 + $0xc] sm:$0xf]
      %v260 = vld [vmem:[%s247 + $0x10] sm:$0xf]
      %v261 = vld [vmem:[%s247 + $0x14] sm:$0xf]
      %v262 = vld [vmem:[%s247 + $0x18] sm:$0xf]
      %v263 = vld [vmem:[%s247 + $0x1c] sm:$0xf]
      %v264 = vld [vmem:[%s247 + $0x20] sm:$0xf]
      %v265 = vld [vmem:[%s247 + $0x24] sm:$0xf]
      %v266 = vld [vmem:[%s247 + $0x28] sm:$0xf]
      %v267 = vld [vmem:[%s247 + $0x2c] sm:$0xf]
      %v268 = vld [vmem:[%s247 + $0x30] sm:$0xf]
      %v269 = vld [vmem:[%s247 + $0x34] sm:$0xf]
      %v270 = vld [vmem:[%s247 + $0x38] sm:$0xf]
      %v271 = vld [vmem:[%s247 + $0x3c] sm:$0xf]
      %v272 = vunpack.c.l.bf16 %v256
      %v273 = vunpack.c.l.bf16 %v257
      %v274 = vunpack.c.l.bf16 %v258
      %v275 = vunpack.c.l.bf16 %v259
      %v276 = vunpack.c.l.bf16 %v260
      %v277 = vunpack.c.l.bf16 %v261
      %v278 = vunpack.c.l.bf16 %v262
      %v279 = vunpack.c.l.bf16 %v263
      %v280 = vunpack.c.l.bf16 %v264
      %v281 = vunpack.c.l.bf16 %v265
      %v282 = vunpack.c.l.bf16 %v266
      %v283 = vunpack.c.l.bf16 %v267
      %v284 = vunpack.c.l.bf16 %v268
      %v285 = vunpack.c.l.bf16 %v269
      %v286 = vunpack.c.l.bf16 %v270
      %v287 = vunpack.c.l.bf16 %v271
      %v288 = vld [vmem:[%s2] sm:$0x1]
      %v290 = vlaneseq
      %v291 = vshrl.u32 %v290, 7
      %v292 = vsub.s32 0, %v291
      %v293 = vrot.slane %v288, %v292
      %v295 = vmul.f32 %v272, %v293
      %v296 = vmul.f32 %v273, %v293
      %v297 = vmul.f32 %v274, %v293
      %v298 = vmul.f32 %v275, %v293
      %v299 = vmul.f32 %v276, %v293
      %v300 = vmul.f32 %v277, %v293
      %v301 = vmul.f32 %v278, %v293
      %v302 = vmul.f32 %v279, %v293
      %v303 = vmul.f32 %v280, %v293
      %v304 = vmul.f32 %v281, %v293
      %v305 = vmul.f32 %v282, %v293
      %v306 = vmul.f32 %v283, %v293
      %v307 = vmul.f32 %v284, %v293
      %v308 = vmul.f32 %v285, %v293
      %v309 = vmul.f32 %v286, %v293
      %v310 = vmul.f32 %v287, %v293
      %v311 = vld [vmem:[%s3] sm:$0x1]
      %v313 = vlaneseq
      %v314 = vshrl.u32 %v313, 7
      %v315 = vsub.s32 0, %v314
      %v316 = vrot.slane %v311, %v315
      %v318 = vadd.f32 %v295, %v316
      %v319 = vadd.f32 %v296, %v316
      %v320 = vadd.f32 %v297, %v316
      %v321 = vadd.f32 %v298, %v316
      %v322 = vadd.f32 %v299, %v316
      %v323 = vadd.f32 %v300, %v316
      %v324 = vadd.f32 %v301, %v316
      %v325 = vadd.f32 %v302, %v316
      %v326 = vadd.f32 %v303, %v316
      %v327 = vadd.f32 %v304, %v316
      %v328 = vadd.f32 %v305, %v316
      %v329 = vadd.f32 %v306, %v316
      %v330 = vadd.f32 %v307, %v316
      %v331 = vadd.f32 %v308, %v316
      %v332 = vadd.f32 %v309, %v316
      %v333 = vadd.f32 %v310, %v316
      %v334 = vmax.f32 %v318, 0.0
      %v335 = vmax.f32 %v319, 0.0
      %v336 = vmax.f32 %v320, 0.0
      %v337 = vmax.f32 %v321, 0.0
      %v338 = vmax.f32 %v322, 0.0
      %v339 = vmax.f32 %v323, 0.0
      %v340 = vmax.f32 %v324, 0.0
      %v341 = vmax.f32 %v325, 0.0
      %v342 = vmax.f32 %v326, 0.0
      %v343 = vmax.f32 %v327, 0.0
      %v344 = vmax.f32 %v328, 0.0
      %v345 = vmax.f32 %v329, 0.0
      %v346 = vmax.f32 %v330, 0.0
      %v347 = vmax.f32 %v331, 0.0
      %v348 = vmax.f32 %v332, 0.0
      %v349 = vmax.f32 %v333, 0.0
      %v350 = vpack.c.bf16 %v335, %v334
      %v351 = vpack.c.bf16 %v337, %v336
      %v352 = vpack.c.bf16 %v339, %v338
      %v353 = vpack.c.bf16 %v341, %v340
      %v354 = vpack.c.bf16 %v343, %v342
      %v355 = vpack.c.bf16 %v345, %v344
      %v356 = vpack.c.bf16 %v347, %v346
      %v357 = vpack.c.bf16 %v349, %v348
      %v358 = vld [vmem:[%s1] sm:$0xf]
      %v359 = vld [vmem:[%s1 + $0x4] sm:$0xf]
      %v360 = vld [vmem:[%s1 + $0x8] sm:$0xf]
      %v361 = vld [vmem:[%s1 + $0xc] sm:$0xf]
      %v362 = vld [vmem:[%s1 + $0x10] sm:$0xf]
      %v363 = vld [vmem:[%s1 + $0x14] sm:$0xf]
      %v364 = vld [vmem:[%s1 + $0x18] sm:$0xf]
      %v365 = vld [vmem:[%s1 + $0x1c] sm:$0xf]
      %v366 = vld [vmem:[%s1 + $0x20] sm:$0xf]
      %v367 = vld [vmem:[%s1 + $0x24] sm:$0xf]
      %v368 = vld [vmem:[%s1 + $0x28] sm:$0xf]
      %v369 = vld [vmem:[%s1 + $0x2c] sm:$0xf]
      %v370 = vld [vmem:[%s1 + $0x30] sm:$0xf]
      %v371 = vld [vmem:[%s1 + $0x34] sm:$0xf]
      %v372 = vld [vmem:[%s1 + $0x38] sm:$0xf]
      %v373 = vld [vmem:[%s1 + $0x3c] sm:$0xf]
      %v390 = vunpack.c.l.b16 %v358
      %v391 = vunpack.c.l.b16 %v359
      %v392 = vunpack.c.l.b16 %v360
      %v393 = vunpack.c.l.b16 %v361
      %v394 = vunpack.c.l.b16 %v362
      %v395 = vunpack.c.l.b16 %v363
      %v396 = vunpack.c.l.b16 %v364
      %v397 = vunpack.c.l.b16 %v365
      %v398 = vunpack.c.l.b16 %v366
      %v399 = vunpack.c.l.b16 %v367
      %v400 = vunpack.c.l.b16 %v368
      %v401 = vunpack.c.l.b16 %v369
      %v402 = vunpack.c.l.b16 %v370
      %v403 = vunpack.c.l.b16 %v371
      %v404 = vunpack.c.l.b16 %v372
      %v405 = vunpack.c.l.b16 %v373
      %v406 = vpack.c.b16 %v391, %v390
      %v407 = vpack.c.b16 %v393, %v392
      %v408 = vpack.c.b16 %v395, %v394
      %v409 = vpack.c.b16 %v397, %v396
      %v410 = vpack.c.b16 %v399, %v398
      %v411 = vpack.c.b16 %v401, %v400
      %v412 = vpack.c.b16 %v403, %v402
      %v413 = vpack.c.b16 %v405, %v404
      %422 = vmatprep.subr.bf16.mxu0 0
      %423 = vmatpush1.bf16.msra.mxu0 %v413
      %424 = vmatprep.subr.bf16.mxu0 0
      %425 = vmatpush1.bf16.msra.mxu0 %v412
      %426 = vmatprep.subr.bf16.mxu0 0
      %427 = vmatpush1.bf16.msra.mxu0 %v411
      %428 = vmatprep.subr.bf16.mxu0 0
      %429 = vmatpush1.bf16.msra.mxu0 %v410
      %430 = vmatprep.subr.bf16.mxu0 0
      %431 = vmatpush1.bf16.msra.mxu0 %v409
      %432 = vmatprep.subr.bf16.mxu0 0
      %433 = vmatpush1.bf16.msra.mxu0 %v408
      %434 = vmatprep.subr.bf16.mxu0 0
      %435 = vmatpush1.bf16.msra.mxu0 %v407
      %436 = vmatprep.subr.bf16.mxu0 0
      %437 = vmatpush1.bf16.msra.mxu0 %v406
      %438 = vmatprep.subr.bf16.mxu0 0
      %439 = vmatpush2.bf16.msra.mxu0 0
      %440 = vmatprep.subr.bf16.mxu0 0
      %441 = vmatpush2.bf16.msra.mxu0 0
      %442 = vmatprep.subr.bf16.mxu0 0
      %443 = vmatpush2.bf16.msra.mxu0 0
      %444 = vmatprep.subr.bf16.mxu0 0
      %445 = vmatpush2.bf16.msra.mxu0 0
      %446 = vmatprep.subr.bf16.mxu0 0
      %447 = vmatpush2.bf16.msra.mxu0 0
      %448 = vmatprep.subr.bf16.mxu0 0
      %449 = vmatpush2.bf16.msra.mxu0 0
      %450 = vmatprep.subr.bf16.mxu0 0
      %451 = vmatpush2.bf16.msra.mxu0 0
      %452 = vmatprep.subr.bf16.mxu0 0
      %453 = vmatpush2.bf16.msra.mxu0 0
      %454 = vmatprep.mubr.bf16.mxu0 0
      %455 = vmatmul.mubr.bf16.gmra.mxu0 %v350
      %v456 = vpop.f32.mrf.mxu0
      %v457 = vadd.f32 0.0, %v456
      %v458 = vpop.f32.mrf.mxu0
      %v459 = vpop.f32.mrf.mxu0
      %v460 = vadd.f32 0.0, %v459
      %v461 = vpop.f32.mrf.mxu0
      %462 = vmatprep.mubr.bf16.mxu0 0
      %463 = vmatmul.mubr.bf16.gmra.mxu0 %v351
      %v464 = vpop.f32.mrf.mxu0
      %v465 = vadd.f32 0.0, %v464
      %v466 = vpop.f32.mrf.mxu0
      %v467 = vpop.f32.mrf.mxu0
      %v468 = vadd.f32 0.0, %v467
      %v469 = vpop.f32.mrf.mxu0
      %470 = vmatprep.mubr.bf16.mxu0 0
      %471 = vmatmul.mubr.bf16.gmra.mxu0 %v352
      %v472 = vpop.f32.mrf.mxu0
      %v473 = vadd.f32 0.0, %v472
      %v474 = vpop.f32.mrf.mxu0
      %v475 = vpop.f32.mrf.mxu0
      %v476 = vadd.f32 0.0, %v475
      %v477 = vpop.f32.mrf.mxu0
      %478 = vmatprep.mubr.bf16.mxu0 0
      %479 = vmatmul.mubr.bf16.gmra.mxu0 %v353
      %v480 = vpop.f32.mrf.mxu0
      %v481 = vadd.f32 0.0, %v480
      %v482 = vpop.f32.mrf.mxu0
      %v483 = vpop.f32.mrf.mxu0
      %v484 = vadd.f32 0.0, %v483
      %v485 = vpop.f32.mrf.mxu0
      %486 = vmatprep.mubr.bf16.mxu0 0
      %487 = vmatmul.mubr.bf16.gmra.mxu0 %v354
      %v488 = vpop.f32.mrf.mxu0
      %v489 = vadd.f32 0.0, %v488
      %v490 = vpop.f32.mrf.mxu0
      %v491 = vpop.f32.mrf.mxu0
      %v492 = vadd.f32 0.0, %v491
      %v493 = vpop.f32.mrf.mxu0
      %494 = vmatprep.mubr.bf16.mxu0 0
      %495 = vmatmul.mubr.bf16.gmra.mxu0 %v355
      %v496 = vpop.f32.mrf.mxu0
      %v497 = vadd.f32 0.0, %v496
      %v498 = vpop.f32.mrf.mxu0
      %v499 = vpop.f32.mrf.mxu0
      %v500 = vadd.f32 0.0, %v499
      %v501 = vpop.f32.mrf.mxu0
      %502 = vmatprep.mubr.bf16.mxu0 0
      %503 = vmatmul.mubr.bf16.gmra.mxu0 %v356
      %v504 = vpop.f32.mrf.mxu0
      %v505 = vadd.f32 0.0, %v504
      %v506 = vpop.f32.mrf.mxu0
      %v507 = vpop.f32.mrf.mxu0
      %v508 = vadd.f32 0.0, %v507
      %v509 = vpop.f32.mrf.mxu0
      %510 = vmatprep.mubr.bf16.mxu0 0
      %511 = vmatmul.mubr.bf16.gmra.mxu0 %v357
      %v512 = vpop.f32.mrf.mxu0
      %v513 = vadd.f32 0.0, %v512
      %v514 = vpop.f32.mrf.mxu0
      %v515 = vpop.f32.mrf.mxu0
      %v516 = vadd.f32 0.0, %v515
      %v517 = vpop.f32.mrf.mxu0
      %518 = vdwg.mxu0
      %v519 = vld [vmem:[%s4] sm:$0x1]
      %v521 = vlaneseq
      %v522 = vshrl.u32 %v521, 7
      %v523 = vsub.s32 0, %v522
      %v524 = vrot.slane %v519, %v523
      %v526 = vmul.f32 %v457, %v524
      %v527 = vmul.f32 %v460, %v524
      %v528 = vmul.f32 %v465, %v524
      %v529 = vmul.f32 %v468, %v524
      %v530 = vmul.f32 %v473, %v524
      %v531 = vmul.f32 %v476, %v524
      %v532 = vmul.f32 %v481, %v524
      %v533 = vmul.f32 %v484, %v524
      %v534 = vmul.f32 %v489, %v524
      %v535 = vmul.f32 %v492, %v524
      %v536 = vmul.f32 %v497, %v524
      %v537 = vmul.f32 %v500, %v524
      %v538 = vmul.f32 %v505, %v524
      %v539 = vmul.f32 %v508, %v524
      %v540 = vmul.f32 %v513, %v524
      %v541 = vmul.f32 %v516, %v524
      %v542 = vld [vmem:[%s5] sm:$0x1]
      %v544 = vlaneseq
      %v545 = vshrl.u32 %v544, 7
      %v546 = vsub.s32 0, %v545
      %v547 = vrot.slane %v542, %v546
      %v549 = vadd.f32 %v526, %v547
      %v550 = vadd.f32 %v527, %v547
      %v551 = vadd.f32 %v528, %v547
      %v552 = vadd.f32 %v529, %v547
      %v553 = vadd.f32 %v530, %v547
      %v554 = vadd.f32 %v531, %v547
      %v555 = vadd.f32 %v532, %v547
      %v556 = vadd.f32 %v533, %v547
      %v557 = vadd.f32 %v534, %v547
      %v558 = vadd.f32 %v535, %v547
      %v559 = vadd.f32 %v536, %v547
      %v560 = vadd.f32 %v537, %v547
      %v561 = vadd.f32 %v538, %v547
      %v562 = vadd.f32 %v539, %v547
      %v563 = vadd.f32 %v540, %v547
      %v564 = vadd.f32 %v541, %v547
      %v565 = vmax.f32 %v549, 0.0
      %v566 = vmax.f32 %v550, 0.0
      %v567 = vmax.f32 %v551, 0.0
      %v568 = vmax.f32 %v552, 0.0
      %v569 = vmax.f32 %v553, 0.0
      %v570 = vmax.f32 %v554, 0.0
      %v571 = vmax.f32 %v555, 0.0
      %v572 = vmax.f32 %v556, 0.0
      %v573 = vmax.f32 %v557, 0.0
      %v574 = vmax.f32 %v558, 0.0
      %v575 = vmax.f32 %v559, 0.0
      %v576 = vmax.f32 %v560, 0.0
      %v577 = vmax.f32 %v561, 0.0
      %v578 = vmax.f32 %v562, 0.0
      %v579 = vmax.f32 %v563, 0.0
      %v580 = vmax.f32 %v564, 0.0
      %v581 = vpack.c.bf16 %v566, %v565
      %v582 = vpack.c.bf16 %v568, %v567
      %v583 = vpack.c.bf16 %v570, %v569
      %v584 = vpack.c.bf16 %v572, %v571
      %v585 = vpack.c.bf16 %v574, %v573
      %v586 = vpack.c.bf16 %v576, %v575
      %v587 = vpack.c.bf16 %v578, %v577
      %v588 = vpack.c.bf16 %v580, %v579
      %v597 = vunpack.c.l.b16 %v581
      %v598 = vunpack.c.h.b16 %v581
      %v599 = vunpack.c.l.b16 %v582
      %v600 = vunpack.c.h.b16 %v582
      %v601 = vunpack.c.l.b16 %v583
      %v602 = vunpack.c.h.b16 %v583
      %v603 = vunpack.c.l.b16 %v584
      %v604 = vunpack.c.h.b16 %v584
      %v605 = vunpack.c.l.b16 %v585
      %v606 = vunpack.c.h.b16 %v585
      %v607 = vunpack.c.l.b16 %v586
      %v608 = vunpack.c.h.b16 %v586
      %v609 = vunpack.c.l.b16 %v587
      %v610 = vunpack.c.h.b16 %v587
      %v611 = vunpack.c.l.b16 %v588
      %v612 = vunpack.c.h.b16 %v588
      %v613 = vpack.c.b16 %v597, %v597
      %v614 = vpack.c.b16 %v598, %v598
      %v615 = vpack.c.b16 %v599, %v599
      %v616 = vpack.c.b16 %v600, %v600
      %v617 = vpack.c.b16 %v601, %v601
      %v618 = vpack.c.b16 %v602, %v602
      %v619 = vpack.c.b16 %v603, %v603
      %v620 = vpack.c.b16 %v604, %v604
      %v621 = vpack.c.b16 %v605, %v605
      %v622 = vpack.c.b16 %v606, %v606
      %v623 = vpack.c.b16 %v607, %v607
      %v624 = vpack.c.b16 %v608, %v608
      %v625 = vpack.c.b16 %v609, %v609
      %v626 = vpack.c.b16 %v610, %v610
      %v627 = vpack.c.b16 %v611, %v611
      %v628 = vpack.c.b16 %v612, %v612
      %vm645 = vcmask 257024
      %646 = vst.msk [vmem:[%s253] sm:$0xf] %vm645, %v613
      %647 = vst.msk [vmem:[%s253 + $0x4] sm:$0xf] %vm645, %v614
      %648 = vst.msk [vmem:[%s253 + $0x8] sm:$0xf] %vm645, %v615
      %649 = vst.msk [vmem:[%s253 + $0xc] sm:$0xf] %vm645, %v616
      %650 = vst.msk [vmem:[%s253 + $0x10] sm:$0xf] %vm645, %v617
      %651 = vst.msk [vmem:[%s253 + $0x14] sm:$0xf] %vm645, %v618
      %652 = vst.msk [vmem:[%s253 + $0x18] sm:$0xf] %vm645, %v619
      %653 = vst.msk [vmem:[%s253 + $0x1c] sm:$0xf] %vm645, %v620
      %654 = vst.msk [vmem:[%s253 + $0x20] sm:$0xf] %vm645, %v621
      %655 = vst.msk [vmem:[%s253 + $0x24] sm:$0xf] %vm645, %v622
      %656 = vst.msk [vmem:[%s253 + $0x28] sm:$0xf] %vm645, %v623
      %657 = vst.msk [vmem:[%s253 + $0x2c] sm:$0xf] %vm645, %v624
      %658 = vst.msk [vmem:[%s253 + $0x30] sm:$0xf] %vm645, %v625
      %659 = vst.msk [vmem:[%s253 + $0x34] sm:$0xf] %vm645, %v626
      %660 = vst.msk [vmem:[%s253 + $0x38] sm:$0xf] %vm645, %v627
      %661 = vst.msk [vmem:[%s253 + $0x3c] sm:$0xf] %vm645, %v628
      %s662 = smul.u32 16, %s17
      %p663 = scmp.lt.s32.totalorder %s662, 63
      %s664 = scalar_select %p663, %s662, 63
      %s665 = smul.addr %s664, 4
      %s666 = scalar_lea.vmem %s6, %s665
      // Predicated region
      $region45: #{densenet_imagenet_forward.11} parent=43 // pred_check
        %p667 = pneg %p166
      $region46: #{densenet_imagenet_forward.11} parent=43 // pred_check_branch
        %669 = sbr.rel (%p667) target = $region48
      $region47: #{densenet_imagenet_forward.11} parent=43 // pred_region
        %s670 = smul.u32 16, %s17
      $region48: #{densenet_imagenet_forward.11} parent=43 // pred_fallthru
        _
    $region44: #{densenet_imagenet_forward.11} parent=5 // pred_fallthru
      _
    %p671 = scmp.le.s32.totalorder 2, %s12
    // Predicated region
    $region49: #{densenet_imagenet_forward.11} parent=5 // pred_check
      %p672 = pneg %p671
    $region50: #{densenet_imagenet_forward.11} parent=5 // pred_check_branch
      %674 = sbr.rel (%p672) target = $region52
    $region51: #{densenet_imagenet_forward.11} parent=5 // pred_region
      %s675 = ssub.s32 %s12, 2
      // Predicated region
      $region53: #{densenet_imagenet_forward.11} parent=51 // pred_check
        %p676 = pneg %p172
      $region54: #{densenet_imagenet_forward.11} parent=51 // pred_check_branch
        %678 = sbr.rel (%p676) target = $region56
      $region55: #{densenet_imagenet_forward.11} parent=51 // pred_region
        %s679 = smul.u32 16, %s18
        %p680 = scmp.lt.s32.totalorder %s679, 63
        %s681 = scalar_select %p680, %s679, 63
        %s682 = smul.addr %s681, 4
        %s683 = scalar_lea.vmem %s6, %s682
      $region56: #{densenet_imagenet_forward.11} parent=51 // pred_fallthru
        _
    $region52: #{densenet_imagenet_forward.11} parent=5 // pred_fallthru
      _
  $region6: #{densenet_imagenet_forward.11} parent=0 // loop_footer
    %s16 = sadd.s32 1, %s12
  $region7: #{densenet_imagenet_forward.11} parent=0 // loop_footer_branch
    %11 = sbr.rel target = $region3
  $region8: #{densenet_imagenet_forward.11} parent=0 // loop_exit
    _

// kernel: densenet_imagenet_forward.10
$region0: #{densenet_imagenet_forward.10}
  #allocation0 [shape = 'u32[]', space=smem, size = 0x4, offset = 0x4, fixed_abs, tag = 'smem constant byte address 0x4 - core index']
  #allocation1 [shape = 'u32[144,128]{1,0:T(1,128)}', space=vmem, size = 0x12000, scoped, tag = 'internal scratch']
  %s0 = inlined_call_operand.vmem [shape: bf16[512,9,128], index: 0, kind: input, shape index: {}]
  %s1 = inlined_call_operand.vmem [shape: bf16[512,128], index: 1, kind: output, shape index: {}]
  %s2 = sld [smem:[#allocation0]]
  $region37: #{densenet_imagenet_forward.10} parent=0
    _
  %s4 = ssub.s32 1, %s2
  %s5 = scalar_select 0, %s4, %s2
  loop: start=0, step=1, limit=6
  $region2: #{densenet_imagenet_forward.10} parent=0 // loop_pre_header
    _
  $region3: #{densenet_imagenet_forward.10} parent=0 // loop_header
    %s7 = sphi 0, %s11
    %p8 = scmp.ge.s32.totalorder %s7, 6
    %s17 = sphi 0, %s19
    %s20 = sphi 0, %s17
    %s21 = sphi 0, %s20
    %s37 = sphi 0, %s21
    %s43 = sphi 0, %s45
    %s46 = sphi 0, %s43
    %s47 = sphi 0, %s46
    %s63 = sphi 0, %s47
  $region4: #{densenet_imagenet_forward.10} parent=0 // loop_header_branch
    %10 = sbr.rel (%p8) target = $region8
  $region5: #{densenet_imagenet_forward.10} parent=0 // loop_body
    %s12 = ssub.s32 %s7, 1
    %s13 = ssub.s32 %s7, 2
    %s14 = sadd.s32 %s7, 1
    %s15 = ssub.s32 %s7, %s14
    %p16 = scmp.eq.s32.totalorder %s15, 0
    %s18 = sadd.s32 %s17, 1
    %s19 = scalar_select %p16, %s17, %s18
    %p22 = pneg %p16
    %p23 = scmp.eq.s32.totalorder %s7, 3
    %p24 = por %p22, %p23
    %p25 = scmp.ne.s32.totalorder %s17, %s20
    %p26 = scmp.eq.s32.totalorder %s7, 0
    %p27 = por %p25, %p26
    %p28 = scmp.ne.s32.totalorder %s17, %s20
    %p29 = scmp.eq.s32.totalorder %s12, 3
    %p30 = por %p28, %p29
    %p31 = scmp.ne.s32.totalorder %s20, %s21
    %p32 = scmp.eq.s32.totalorder %s12, 0
    %p33 = por %p31, %p32
    %p34 = scmp.ne.s32.totalorder %s20, %s21
    %p35 = scmp.eq.s32.totalorder %s13, 3
    %p36 = por %p34, %p35
    %p38 = scmp.ne.s32.totalorder %s21, %s37
    %p39 = scmp.eq.s32.totalorder %s13, 0
    %p40 = por %p38, %p39
    %s41 = ssub.s32 %s7, %s14
    %p42 = scmp.eq.s32.totalorder %s41, 0
    %s44 = sadd.s32 %s43, 1
    %s45 = scalar_select %p42, %s43, %s44
    %p48 = pneg %p42
    %p49 = scmp.eq.s32.totalorder %s7, 3
    %p50 = por %p48, %p49
    %p51 = scmp.ne.s32.totalorder %s43, %s46
    %p52 = scmp.eq.s32.totalorder %s7, 0
    %p53 = por %p51, %p52
    %p54 = scmp.ne.s32.totalorder %s43, %s46
    %p55 = scmp.eq.s32.totalorder %s12, 3
    %p56 = por %p54, %p55
    %p57 = scmp.ne.s32.totalorder %s46, %s47
    %p58 = scmp.eq.s32.totalorder %s12, 0
    %p59 = por %p57, %p58
    %p60 = scmp.ne.s32.totalorder %s46, %s47
    %p61 = scmp.eq.s32.totalorder %s13, 3
    %p62 = por %p60, %p61
    %p64 = scmp.ne.s32.totalorder %s47, %s63
    %p65 = scmp.eq.s32.totalorder %s13, 0
    %p66 = por %p64, %p65
    %p67 = scmp.le.s32.totalorder 1, %s7
    %p68 = scmp.lt.s32.totalorder %s7, 5
    %p69 = pnand %p67, %p68
    %p70 = pneg %p69
    // Predicated region
    $region9: #{densenet_imagenet_forward.10} parent=5 // pred_check
      _
    $region10: #{densenet_imagenet_forward.10} parent=5 // pred_check_branch
      %72 = sbr.rel (%p69) target = $region12
    $region11: #{densenet_imagenet_forward.10} parent=5 // pred_region
      %s73 = ssub.s32 %s7, 1
    $region12: #{densenet_imagenet_forward.10} parent=5 // pred_fallthru
      _
    %p74 = scmp.lt.s32.totalorder %s7, 4
    // Predicated region
    $region13: #{densenet_imagenet_forward.10} parent=5 // pred_check
      %p75 = pneg %p74
    $region14: #{densenet_imagenet_forward.10} parent=5 // pred_check_branch
      %77 = sbr.rel (%p75) target = $region16
    $region15: #{densenet_imagenet_forward.10} parent=5 // pred_region
      // Predicated region
      $region17: #{densenet_imagenet_forward.10} parent=15 // pred_check
        %p78 = pneg %p27
      $region18: #{densenet_imagenet_forward.10} parent=15 // pred_check_branch
        %80 = sbr.rel (%p78) target = $region20
      $region19: #{densenet_imagenet_forward.10} parent=15 // pred_region
        %s81 = smul.u32 128, %s7
        %p82 = scmp.lt.s32.totalorder %s81, 511
        %s83 = scalar_select %p82, %s81, 511
        %s84 = smul.addr %s83, 2
        %s85 = smul.addr %s84, 4
        %s86 = scalar_lea.vmem %s0, %s85
        %s87 = smul.u32 128, %s7
      $region20: #{densenet_imagenet_forward.10} parent=15 // pred_fallthru
        _
    $region16: #{densenet_imagenet_forward.10} parent=5 // pred_fallthru
      _
    %p88 = scmp.le.s32.totalorder 1, %s7
    %p89 = scmp.lt.s32.totalorder %s7, 5
    %p90 = pnand %p88, %p89
    %p91 = pneg %p90
    // Predicated region
    $region21: #{densenet_imagenet_forward.10} parent=5 // pred_check
      _
    $region22: #{densenet_imagenet_forward.10} parent=5 // pred_check_branch
      %93 = sbr.rel (%p90) target = $region24
    $region23: #{densenet_imagenet_forward.10} parent=5 // pred_region
      %s94 = ssub.s32 %s7, 1
      %s95 = smul.u32 128, %s12
      %p96 = scmp.lt.s32.totalorder %s95, 511
      %s97 = scalar_select %p96, %s95, 511
      %s98 = smul.addr %s97, 2
      %s99 = smul.addr %s98, 4
      %s100 = scalar_lea.vmem %s0, %s99
      %p101 = pneg %p33
      %p102 = pneg %p30
      %p103 = pneg %p59
      %p104 = pneg %p56
      %s105 = smul.u32 16, %s12
      %p106 = scmp.lt.s32.totalorder %s105, 63
      %s107 = scalar_select %p106, %s105, 63
      %s108 = smul.addr %s107, 4
      %s109 = scalar_lea.vmem %s1, %s108
      %s110 = smul.u32 128, %s12
      %p111 = scmp.lt.s32.totalorder %s110, 511
      %s112 = scalar_select %p111, %s110, 511
      %s113 = smul.addr %s112, 2
      %s114 = smul.addr %s113, 4
      %s115 = scalar_lea.vmem %s0, %s114
      %s116 = smul.u32 128, %s12
      %s117 = smul.u32 16, %s12
      %p118 = scmp.lt.s32.totalorder %s117, 63
      %s119 = scalar_select %p118, %s117, 63
      %s120 = smul.addr %s119, 4
      %s121 = scalar_lea.vmem %s1, %s120
      %s122 = smul.u32 16, %s12
      %v123 = vld [vmem:[%s115] sm:$0x1]
      %v124 = vld [vmem:[%s115 + $0x8] sm:$0x1]
      %v125 = vld [vmem:[%s115 + $0x10] sm:$0x1]
      %v126 = vld [vmem:[%s115 + $0x18] sm:$0x1]
      %v127 = vld [vmem:[%s115 + $0x20] sm:$0x1]
      %v128 = vld [vmem:[%s115 + $0x28] sm:$0x1]
      %v129 = vld [vmem:[%s115 + $0x30] sm:$0x1]
      %v130 = vld [vmem:[%s115 + $0x38] sm:$0x1]
      %v131 = vld [vmem:[%s115 + $0x40] sm:$0x1]
      %v132 = vld [vmem:[%s115 + $0x48] sm:$0x1]
      %v133 = vld [vmem:[%s115 + $0x50] sm:$0x1]
      %v134 = vld [vmem:[%s115 + $0x58] sm:$0x1]
      %v135 = vld [vmem:[%s115 + $0x60] sm:$0x1]
      %v136 = vld [vmem:[%s115 + $0x68] sm:$0x1]
      %v137 = vld [vmem:[%s115 + $0x70] sm:$0x1]
      %v138 = vld [vmem:[%s115 + $0x78] sm:$0x1]
      %v139 = vld [vmem:[%s115 + $0x80] sm:$0x1]
      %v140 = vld [vmem:[%s115 + $0x88] sm:$0x1]
      %v141 = vld [vmem:[%s115 + $0x90] sm:$0x1]
      %v142 = vld [vmem:[%s115 + $0x98] sm:$0x1]
      %v143 = vld [vmem:[%s115 + $0xa0] sm:$0x1]
      %v144 = vld [vmem:[%s115 + $0xa8] sm:$0x1]
      %v145 = vld [vmem:[%s115 + $0xb0] sm:$0x1]
      %v146 = vld [vmem:[%s115 + $0xb8] sm:$0x1]
      %v147 = vld [vmem:[%s115 + $0xc0] sm:$0x1]
      %v148 = vld [vmem:[%s115 + $0xc8] sm:$0x1]
      %v149 = vld [vmem:[%s115 + $0xd0] sm:$0x1]
      %v150 = vld [vmem:[%s115 + $0xd8] sm:$0x1]
      %v151 = vld [vmem:[%s115 + $0xe0] sm:$0x1]
      %v152 = vld [vmem:[%s115 + $0xe8] sm:$0x1]
      %v153 = vld [vmem:[%s115 + $0xf0] sm:$0x1]
      %v154 = vld [vmem:[%s115 + $0xf8] sm:$0x1]
      %v155 = vld [vmem:[%s115 + $0x100] sm:$0x1]
      %v156 = vld [vmem:[%s115 + $0x108] sm:$0x1]
      %v157 = vld [vmem:[%s115 + $0x110] sm:$0x1]
      %v158 = vld [vmem:[%s115 + $0x118] sm:$0x1]
      %v159 = vld [vmem:[%s115 + $0x120] sm:$0x1]
      %v160 = vld [vmem:[%s115 + $0x128] sm:$0x1]
      %v161 = vld [vmem:[%s115 + $0x130] sm:$0x1]
      %v162 = vld [vmem:[%s115 + $0x138] sm:$0x1]
      %v163 = vld [vmem:[%s115 + $0x140] sm:$0x1]
      %v164 = vld [vmem:[%s115 + $0x148] sm:$0x1]
      %v165 = vld [vmem:[%s115 + $0x150] sm:$0x1]
      %v166 = vld [vmem:[%s115 + $0x158] sm:$0x1]
      %v167 = vld [vmem:[%s115 + $0x160] sm:$0x1]
      %v168 = vld [vmem:[%s115 + $0x168] sm:$0x1]
      %v169 = vld [vmem:[%s115 + $0x170] sm:$0x1]
      %v170 = vld [vmem:[%s115 + $0x178] sm:$0x1]
      %v171 = vld [vmem:[%s115 + $0x180] sm:$0x1]
      %v172 = vld [vmem:[%s115 + $0x188] sm:$0x1]
      %v173 = vld [vmem:[%s115 + $0x190] sm:$0x1]
      %v174 = vld [vmem:[%s115 + $0x198] sm:$0x1]
      %v175 = vld [vmem:[%s115 + $0x1a0] sm:$0x1]
      %v176 = vld [vmem:[%s115 + $0x1a8] sm:$0x1]
      %v177 = vld [vmem:[%s115 + $0x1b0] sm:$0x1]
      %v178 = vld [vmem:[%s115 + $0x1b8] sm:$0x1]
      %v179 = vld [vmem:[%s115 + $0x1c0] sm:$0x1]
      %v180 = vld [vmem:[%s115 + $0x1c8] sm:$0x1]
      %v181 = vld [vmem:[%s115 + $0x1d0] sm:$0x1]
      %v182 = vld [vmem:[%s115 + $0x1d8] sm:$0x1]
      %v183 = vld [vmem:[%s115 + $0x1e0] sm:$0x1]
      %v184 = vld [vmem:[%s115 + $0x1e8] sm:$0x1]
      %v185 = vld [vmem:[%s115 + $0x1f0] sm:$0x1]
      %v186 = vld [vmem:[%s115 + $0x1f8] sm:$0x1]
      %v187 = vld [vmem:[%s115 + $0x200] sm:$0x1]
      %v188 = vld [vmem:[%s115 + $0x208] sm:$0x1]
      %v189 = vld [vmem:[%s115 + $0x210] sm:$0x1]
      %v190 = vld [vmem:[%s115 + $0x218] sm:$0x1]
      %v191 = vld [vmem:[%s115 + $0x220] sm:$0x1]
      %v192 = vld [vmem:[%s115 + $0x228] sm:$0x1]
      %v193 = vld [vmem:[%s115 + $0x230] sm:$0x1]
      %v194 = vld [vmem:[%s115 + $0x238] sm:$0x1]
      %v195 = vld [vmem:[%s115 + $0x240] sm:$0x1]
      %v196 = vld [vmem:[%s115 + $0x248] sm:$0x1]
      %v197 = vld [vmem:[%s115 + $0x250] sm:$0x1]
      %v198 = vld [vmem:[%s115 + $0x258] sm:$0x1]
      %v199 = vld [vmem:[%s115 + $0x260] sm:$0x1]
      %v200 = vld [vmem:[%s115 + $0x268] sm:$0x1]
      %v201 = vld [vmem:[%s115 + $0x270] sm:$0x1]
      %v202 = vld [vmem:[%s115 + $0x278] sm:$0x1]
      %v203 = vld [vmem:[%s115 + $0x280] sm:$0x1]
      %v204 = vld [vmem:[%s115 + $0x288] sm:$0x1]
      %v205 = vld [vmem:[%s115 + $0x290] sm:$0x1]
      %v206 = vld [vmem:[%s115 + $0x298] sm:$0x1]
      %v207 = vld [vmem:[%s115 + $0x2a0] sm:$0x1]
      %v208 = vld [vmem:[%s115 + $0x2a8] sm:$0x1]
      %v209 = vld [vmem:[%s115 + $0x2b0] sm:$0x1]
      %v210 = vld [vmem:[%s115 + $0x2b8] sm:$0x1]
      %v211 = vld [vmem:[%s115 + $0x2c0] sm:$0x1]
      %v212 = vld [vmem:[%s115 + $0x2c8] sm:$0x1]
      %v213 = vld [vmem:[%s115 + $0x2d0] sm:$0x1]
      %v214 = vld [vmem:[%s115 + $0x2d8] sm:$0x1]
      %v215 = vld [vmem:[%s115 + $0x2e0] sm:$0x1]
      %v216 = vld [vmem:[%s115 + $0x2e8] sm:$0x1]
      %v217 = vld [vmem:[%s115 + $0x2f0] sm:$0x1]
      %v218 = vld [vmem:[%s115 + $0x2f8] sm:$0x1]
      %v219 = vld [vmem:[%s115 + $0x300] sm:$0x1]
      %v220 = vld [vmem:[%s115 + $0x308] sm:$0x1]
      %v221 = vld [vmem:[%s115 + $0x310] sm:$0x1]
      %v222 = vld [vmem:[%s115 + $0x318] sm:$0x1]
      %v223 = vld [vmem:[%s115 + $0x320] sm:$0x1]
      %v224 = vld [vmem:[%s115 + $0x328] sm:$0x1]
      %v225 = vld [vmem:[%s115 + $0x330] sm:$0x1]
      %v226 = vld [vmem:[%s115 + $0x338] sm:$0x1]
      %v227 = vld [vmem:[%s115 + $0x340] sm:$0x1]
      %v228 = vld [vmem:[%s115 + $0x348] sm:$0x1]
      %v229 = vld [vmem:[%s115 + $0x350] sm:$0x1]
      %v230 = vld [vmem:[%s115 + $0x358] sm:$0x1]
      %v231 = vld [vmem:[%s115 + $0x360] sm:$0x1]
      %v232 = vld [vmem:[%s115 + $0x368] sm:$0x1]
      %v233 = vld [vmem:[%s115 + $0x370] sm:$0x1]
      %v234 = vld [vmem:[%s115 + $0x378] sm:$0x1]
      %v235 = vld [vmem:[%s115 + $0x380] sm:$0x1]
      %v236 = vld [vmem:[%s115 + $0x388] sm:$0x1]
      %v237 = vld [vmem:[%s115 + $0x390] sm:$0x1]
      %v238 = vld [vmem:[%s115 + $0x398] sm:$0x1]
      %v239 = vld [vmem:[%s115 + $0x3a0] sm:$0x1]
      %v240 = vld [vmem:[%s115 + $0x3a8] sm:$0x1]
      %v241 = vld [vmem:[%s115 + $0x3b0] sm:$0x1]
      %v242 = vld [vmem:[%s115 + $0x3b8] sm:$0x1]
      %v243 = vld [vmem:[%s115 + $0x3c0] sm:$0x1]
      %v244 = vld [vmem:[%s115 + $0x3c8] sm:$0x1]
      %v245 = vld [vmem:[%s115 + $0x3d0] sm:$0x1]
      %v246 = vld [vmem:[%s115 + $0x3d8] sm:$0x1]
      %v247 = vld [vmem:[%s115 + $0x3e0] sm:$0x1]
      %v248 = vld [vmem:[%s115 + $0x3e8] sm:$0x1]
      %v249 = vld [vmem:[%s115 + $0x3f0] sm:$0x1]
      %v250 = vld [vmem:[%s115 + $0x3f8] sm:$0x1]
      %v252 = vshrl.u32 %v123, 16
      %v254 = vrot.slane %v252, 4
      %v255 = vrot.slane %v254, 4
      %v257 = vshrl.u32 %v124, 16
      %v259 = vrot.slane %v257, 4
      %v260 = vrot.slane %v259, 4
      %v262 = vshrl.u32 %v125, 16
      %v264 = vrot.slane %v262, 4
      %v265 = vrot.slane %v264, 4
      %v267 = vshrl.u32 %v126, 16
      %v269 = vrot.slane %v267, 4
      %v270 = vrot.slane %v269, 4
      %v272 = vshrl.u32 %v127, 16
      %v274 = vrot.slane %v272, 4
      %v275 = vrot.slane %v274, 4
      %v277 = vshrl.u32 %v128, 16
      %v279 = vrot.slane %v277, 4
      %v280 = vrot.slane %v279, 4
      %v282 = vshrl.u32 %v129, 16
      %v284 = vrot.slane %v282, 4
      %v285 = vrot.slane %v284, 4
      %v287 = vshrl.u32 %v130, 16
      %v289 = vrot.slane %v287, 4
      %v290 = vrot.slane %v289, 4
      %v292 = vshrl.u32 %v131, 16
      %v294 = vrot.slane %v292, 4
      %v295 = vrot.slane %v294, 4
      %v297 = vshrl.u32 %v132, 16
      %v299 = vrot.slane %v297, 4
      %v300 = vrot.slane %v299, 4
      %v302 = vshrl.u32 %v133, 16
      %v304 = vrot.slane %v302, 4
      %v305 = vrot.slane %v304, 4
      %v307 = vshrl.u32 %v134, 16
      %v309 = vrot.slane %v307, 4
      %v310 = vrot.slane %v309, 4
      %v312 = vshrl.u32 %v135, 16
      %v314 = vrot.slane %v312, 4
      %v315 = vrot.slane %v314, 4
      %v317 = vshrl.u32 %v136, 16
      %v319 = vrot.slane %v317, 4
      %v320 = vrot.slane %v319, 4
      %v322 = vshrl.u32 %v137, 16
      %v324 = vrot.slane %v322, 4
      %v325 = vrot.slane %v324, 4
      %v327 = vshrl.u32 %v138, 16
      %v329 = vrot.slane %v327, 4
      %v330 = vrot.slane %v329, 4
      %v332 = vshrl.u32 %v139, 16
      %v334 = vrot.slane %v332, 4
      %v335 = vrot.slane %v334, 4
      %v337 = vshrl.u32 %v140, 16
      %v339 = vrot.slane %v337, 4
      %v340 = vrot.slane %v339, 4
      %v342 = vshrl.u32 %v141, 16
      %v344 = vrot.slane %v342, 4
      %v345 = vrot.slane %v344, 4
      %v347 = vshrl.u32 %v142, 16
      %v349 = vrot.slane %v347, 4
      %v350 = vrot.slane %v349, 4
      %v352 = vshrl.u32 %v143, 16
      %v354 = vrot.slane %v352, 4
      %v355 = vrot.slane %v354, 4
      %v357 = vshrl.u32 %v144, 16
      %v359 = vrot.slane %v357, 4
      %v360 = vrot.slane %v359, 4
      %v362 = vshrl.u32 %v145, 16
      %v364 = vrot.slane %v362, 4
      %v365 = vrot.slane %v364, 4
      %v367 = vshrl.u32 %v146, 16
      %v369 = vrot.slane %v367, 4
      %v370 = vrot.slane %v369, 4
      %v372 = vshrl.u32 %v147, 16
      %v374 = vrot.slane %v372, 4
      %v375 = vrot.slane %v374, 4
      %v377 = vshrl.u32 %v148, 16
      %v379 = vrot.slane %v377, 4
      %v380 = vrot.slane %v379, 4
      %v382 = vshrl.u32 %v149, 16
      %v384 = vrot.slane %v382, 4
      %v385 = vrot.slane %v384, 4
      %v387 = vshrl.u32 %v150, 16
      %v389 = vrot.slane %v387, 4
      %v390 = vrot.slane %v389, 4
      %v392 = vshrl.u32 %v151, 16
      %v394 = vrot.slane %v392, 4
      %v395 = vrot.slane %v394, 4
      %v397 = vshrl.u32 %v152, 16
      %v399 = vrot.slane %v397, 4
      %v400 = vrot.slane %v399, 4
      %v402 = vshrl.u32 %v153, 16
      %v404 = vrot.slane %v402, 4
      %v405 = vrot.slane %v404, 4
      %v407 = vshrl.u32 %v154, 16
      %v409 = vrot.slane %v407, 4
      %v410 = vrot.slane %v409, 4
      %v412 = vshrl.u32 %v155, 16
      %v414 = vrot.slane %v412, 4
      %v415 = vrot.slane %v414, 4
      %v417 = vshrl.u32 %v156, 16
      %v419 = vrot.slane %v417, 4
      %v420 = vrot.slane %v419, 4
      %v422 = vshrl.u32 %v157, 16
      %v424 = vrot.slane %v422, 4
      %v425 = vrot.slane %v424, 4
      %v427 = vshrl.u32 %v158, 16
      %v429 = vrot.slane %v427, 4
      %v430 = vrot.slane %v429, 4
      %v432 = vshrl.u32 %v159, 16
      %v434 = vrot.slane %v432, 4
      %v435 = vrot.slane %v434, 4
      %v437 = vshrl.u32 %v160, 16
      %v439 = vrot.slane %v437, 4
      %v440 = vrot.slane %v439, 4
      %v442 = vshrl.u32 %v161, 16
      %v444 = vrot.slane %v442, 4
      %v445 = vrot.slane %v444, 4
      %v447 = vshrl.u32 %v162, 16
      %v449 = vrot.slane %v447, 4
      %v450 = vrot.slane %v449, 4
      %v452 = vshrl.u32 %v163, 16
      %v454 = vrot.slane %v452, 4
      %v455 = vrot.slane %v454, 4
      %v457 = vshrl.u32 %v164, 16
      %v459 = vrot.slane %v457, 4
      %v460 = vrot.slane %v459, 4
      %v462 = vshrl.u32 %v165, 16
      %v464 = vrot.slane %v462, 4
      %v465 = vrot.slane %v464, 4
      %v467 = vshrl.u32 %v166, 16
      %v469 = vrot.slane %v467, 4
      %v470 = vrot.slane %v469, 4
      %v472 = vshrl.u32 %v167, 16
      %v474 = vrot.slane %v472, 4
      %v475 = vrot.slane %v474, 4
      %v477 = vshrl.u32 %v168, 16
      %v479 = vrot.slane %v477, 4
      %v480 = vrot.slane %v479, 4
      %v482 = vshrl.u32 %v169, 16
      %v484 = vrot.slane %v482, 4
      %v485 = vrot.slane %v484, 4
      %v487 = vshrl.u32 %v170, 16
      %v489 = vrot.slane %v487, 4
      %v490 = vrot.slane %v489, 4
      %v492 = vshrl.u32 %v171, 16
      %v494 = vrot.slane %v492, 4
      %v495 = vrot.slane %v494, 4
      %v497 = vshrl.u32 %v172, 16
      %v499 = vrot.slane %v497, 4
      %v500 = vrot.slane %v499, 4
      %v502 = vshrl.u32 %v173, 16
      %v504 = vrot.slane %v502, 4
      %v505 = vrot.slane %v504, 4
      %v507 = vshrl.u32 %v174, 16
      %v509 = vrot.slane %v507, 4
      %v510 = vrot.slane %v509, 4
      %v512 = vshrl.u32 %v175, 16
      %v514 = vrot.slane %v512, 4
      %v515 = vrot.slane %v514, 4
      %v517 = vshrl.u32 %v176, 16
      %v519 = vrot.slane %v517, 4
      %v520 = vrot.slane %v519, 4
      %v522 = vshrl.u32 %v177, 16
      %v524 = vrot.slane %v522, 4
      %v525 = vrot.slane %v524, 4
      %v527 = vshrl.u32 %v178, 16
      %v529 = vrot.slane %v527, 4
      %v530 = vrot.slane %v529, 4
      %v532 = vshrl.u32 %v179, 16
      %v534 = vrot.slane %v532, 4
      %v535 = vrot.slane %v534, 4
      %v537 = vshrl.u32 %v180, 16
      %v539 = vrot.slane %v537, 4
      %v540 = vrot.slane %v539, 4
      %v542 = vshrl.u32 %v181, 16
      %v544 = vrot.slane %v542, 4
      %v545 = vrot.slane %v544, 4
      %v547 = vshrl.u32 %v182, 16
      %v549 = vrot.slane %v547, 4
      %v550 = vrot.slane %v549, 4
      %v552 = vshrl.u32 %v183, 16
      %v554 = vrot.slane %v552, 4
      %v555 = vrot.slane %v554, 4
      %v557 = vshrl.u32 %v184, 16
      %v559 = vrot.slane %v557, 4
      %v560 = vrot.slane %v559, 4
      %v562 = vshrl.u32 %v185, 16
      %v564 = vrot.slane %v562, 4
      %v565 = vrot.slane %v564, 4
      %v567 = vshrl.u32 %v186, 16
      %v569 = vrot.slane %v567, 4
      %v570 = vrot.slane %v569, 4
      %v572 = vshrl.u32 %v187, 16
      %v574 = vrot.slane %v572, 4
      %v575 = vrot.slane %v574, 4
      %v577 = vshrl.u32 %v188, 16
      %v579 = vrot.slane %v577, 4
      %v580 = vrot.slane %v579, 4
      %v582 = vshrl.u32 %v189, 16
      %v584 = vrot.slane %v582, 4
      %v585 = vrot.slane %v584, 4
      %v587 = vshrl.u32 %v190, 16
      %v589 = vrot.slane %v587, 4
      %v590 = vrot.slane %v589, 4
      %v592 = vshrl.u32 %v191, 16
      %v594 = vrot.slane %v592, 4
      %v595 = vrot.slane %v594, 4
      %v597 = vshrl.u32 %v192, 16
      %v599 = vrot.slane %v597, 4
      %v600 = vrot.slane %v599, 4
      %v602 = vshrl.u32 %v193, 16
      %v604 = vrot.slane %v602, 4
      %v605 = vrot.slane %v604, 4
      %v607 = vshrl.u32 %v194, 16
      %v609 = vrot.slane %v607, 4
      %v610 = vrot.slane %v609, 4
      %v612 = vshrl.u32 %v195, 16
      %v614 = vrot.slane %v612, 4
      %v615 = vrot.slane %v614, 4
      %v617 = vshrl.u32 %v196, 16
      %v619 = vrot.slane %v617, 4
      %v620 = vrot.slane %v619, 4
      %v622 = vshrl.u32 %v197, 16
      %v624 = vrot.slane %v622, 4
      %v625 = vrot.slane %v624, 4
      %v627 = vshrl.u32 %v198, 16
      %v629 = vrot.slane %v627, 4
      %v630 = vrot.slane %v629, 4
      %v632 = vshrl.u32 %v199, 16
      %v634 = vrot.slane %v632, 4
      %v635 = vrot.slane %v634, 4
      %v637 = vshrl.u32 %v200, 16
      %v639 = vrot.slane %v637, 4
      %v640 = vrot.slane %v639, 4
      %v642 = vshrl.u32 %v201, 16
      %v644 = vrot.slane %v642, 4
      %v645 = vrot.slane %v644, 4
      %v647 = vshrl.u32 %v202, 16
      %v649 = vrot.slane %v647, 4
      %v650 = vrot.slane %v649, 4
      %v652 = vshrl.u32 %v203, 16
      %v654 = vrot.slane %v652, 4
      %v655 = vrot.slane %v654, 4
      %v657 = vshrl.u32 %v204, 16
      %v659 = vrot.slane %v657, 4
      %v660 = vrot.slane %v659, 4
      %v662 = vshrl.u32 %v205, 16
      %v664 = vrot.slane %v662, 4
      %v665 = vrot.slane %v664, 4
      %v667 = vshrl.u32 %v206, 16
      %v669 = vrot.slane %v667, 4
      %v670 = vrot.slane %v669, 4
      %v672 = vshrl.u32 %v207, 16
      %v674 = vrot.slane %v672, 4
      %v675 = vrot.slane %v674, 4
      %v677 = vshrl.u32 %v208, 16
      %v679 = vrot.slane %v677, 4
      %v680 = vrot.slane %v679, 4
      %v682 = vshrl.u32 %v209, 16
      %v684 = vrot.slane %v682, 4
      %v685 = vrot.slane %v684, 4
      %v687 = vshrl.u32 %v210, 16
      %v689 = vrot.slane %v687, 4
      %v690 = vrot.slane %v689, 4
      %v692 = vshrl.u32 %v211, 16
      %v694 = vrot.slane %v692, 4
      %v695 = vrot.slane %v694, 4
      %v697 = vshrl.u32 %v212, 16
      %v699 = vrot.slane %v697, 4
      %v700 = vrot.slane %v699, 4
      %v702 = vshrl.u32 %v213, 16
      %v704 = vrot.slane %v702, 4
      %v705 = vrot.slane %v704, 4
      %v707 = vshrl.u32 %v214, 16
      %v709 = vrot.slane %v707, 4
      %v710 = vrot.slane %v709, 4
      %v712 = vshrl.u32 %v215, 16
      %v714 = vrot.slane %v712, 4
      %v715 = vrot.slane %v714, 4
      %v717 = vshrl.u32 %v216, 16
      %v719 = vrot.slane %v717, 4
      %v720 = vrot.slane %v719, 4
      %v722 = vshrl.u32 %v217, 16
      %v724 = vrot.slane %v722, 4
      %v725 = vrot.slane %v724, 4
      %v727 = vshrl.u32 %v218, 16
      %v729 = vrot.slane %v727, 4
      %v730 = vrot.slane %v729, 4
      %v732 = vshrl.u32 %v219, 16
      %v734 = vrot.slane %v732, 4
      %v735 = vrot.slane %v734, 4
      %v737 = vshrl.u32 %v220, 16
      %v739 = vrot.slane %v737, 4
      %v740 = vrot.slane %v739, 4
      %v742 = vshrl.u32 %v221, 16
      %v744 = vrot.slane %v742, 4
      %v745 = vrot.slane %v744, 4
      %v747 = vshrl.u32 %v222, 16
      %v749 = vrot.slane %v747, 4
      %v750 = vrot.slane %v749, 4
      %v752 = vshrl.u32 %v223, 16
      %v754 = vrot.slane %v752, 4
      %v755 = vrot.slane %v754, 4
      %v757 = vshrl.u32 %v224, 16
      %v759 = vrot.slane %v757, 4
      %v760 = vrot.slane %v759, 4
      %v762 = vshrl.u32 %v225, 16
      %v764 = vrot.slane %v762, 4
      %v765 = vrot.slane %v764, 4
      %v767 = vshrl.u32 %v226, 16
      %v769 = vrot.slane %v767, 4
      %v770 = vrot.slane %v769, 4
      %v772 = vshrl.u32 %v227, 16
      %v774 = vrot.slane %v772, 4
      %v775 = vrot.slane %v774, 4
      %v777 = vshrl.u32 %v228, 16
      %v779 = vrot.slane %v777, 4
      %v780 = vrot.slane %v779, 4
      %v782 = vshrl.u32 %v229, 16
      %v784 = vrot.slane %v782, 4
      %v785 = vrot.slane %v784, 4
      %v787 = vshrl.u32 %v230, 16
      %v789 = vrot.slane %v787, 4
      %v790 = vrot.slane %v789, 4
      %v792 = vshrl.u32 %v231, 16
      %v794 = vrot.slane %v792, 4
      %v795 = vrot.slane %v794, 4
      %v797 = vshrl.u32 %v232, 16
      %v799 = vrot.slane %v797, 4
      %v800 = vrot.slane %v799, 4
      %v802 = vshrl.u32 %v233, 16
      %v804 = vrot.slane %v802, 4
      %v805 = vrot.slane %v804, 4
      %v807 = vshrl.u32 %v234, 16
      %v809 = vrot.slane %v807, 4
      %v810 = vrot.slane %v809, 4
      %v812 = vshrl.u32 %v235, 16
      %v814 = vrot.slane %v812, 4
      %v815 = vrot.slane %v814, 4
      %v817 = vshrl.u32 %v236, 16
      %v819 = vrot.slane %v817, 4
      %v820 = vrot.slane %v819, 4
      %v822 = vshrl.u32 %v237, 16
      %v824 = vrot.slane %v822, 4
      %v825 = vrot.slane %v824, 4
      %v827 = vshrl.u32 %v238, 16
      %v829 = vrot.slane %v827, 4
      %v830 = vrot.slane %v829, 4
      %v832 = vshrl.u32 %v239, 16
      %v834 = vrot.slane %v832, 4
      %v835 = vrot.slane %v834, 4
      %v837 = vshrl.u32 %v240, 16
      %v839 = vrot.slane %v837, 4
      %v840 = vrot.slane %v839, 4
      %v842 = vshrl.u32 %v241, 16
      %v844 = vrot.slane %v842, 4
      %v845 = vrot.slane %v844, 4
      %v847 = vshrl.u32 %v242, 16
      %v849 = vrot.slane %v847, 4
      %v850 = vrot.slane %v849, 4
      %v852 = vshrl.u32 %v243, 16
      %v854 = vrot.slane %v852, 4
      %v855 = vrot.slane %v854, 4
      %v857 = vshrl.u32 %v244, 16
      %v859 = vrot.slane %v857, 4
      %v860 = vrot.slane %v859, 4
      %v862 = vshrl.u32 %v245, 16
      %v864 = vrot.slane %v862, 4
      %v865 = vrot.slane %v864, 4
      %v867 = vshrl.u32 %v246, 16
      %v869 = vrot.slane %v867, 4
      %v870 = vrot.slane %v869, 4
      %v872 = vshrl.u32 %v247, 16
      %v874 = vrot.slane %v872, 4
      %v875 = vrot.slane %v874, 4
      %v877 = vshrl.u32 %v248, 16
      %v879 = vrot.slane %v877, 4
      %v880 = vrot.slane %v879, 4
      %v882 = vshrl.u32 %v249, 16
      %v884 = vrot.slane %v882, 4
      %v885 = vrot.slane %v884, 4
      %v887 = vshrl.u32 %v250, 16
      %v889 = vrot.slane %v887, 4
      %v890 = vrot.slane %v889, 4
      %v1019 = vmax.bf16 %v123, %v255
      %v1020 = vmax.bf16 %v124, %v260
      %v1021 = vmax.bf16 %v125, %v265
      %v1022 = vmax.bf16 %v126, %v270
      %v1023 = vmax.bf16 %v127, %v275
      %v1024 = vmax.bf16 %v128, %v280
      %v1025 = vmax.bf16 %v129, %v285
      %v1026 = vmax.bf16 %v130, %v290
      %v1027 = vmax.bf16 %v131, %v295
      %v1028 = vmax.bf16 %v132, %v300
      %v1029 = vmax.bf16 %v133, %v305
      %v1030 = vmax.bf16 %v134, %v310
      %v1031 = vmax.bf16 %v135, %v315
      %v1032 = vmax.bf16 %v136, %v320
      %v1033 = vmax.bf16 %v137, %v325
      %v1034 = vmax.bf16 %v138, %v330
      %v1035 = vmax.bf16 %v139, %v335
      %v1036 = vmax.bf16 %v140, %v340
      %v1037 = vmax.bf16 %v141, %v345
      %v1038 = vmax.bf16 %v142, %v350
      %v1039 = vmax.bf16 %v143, %v355
      %v1040 = vmax.bf16 %v144, %v360
      %v1041 = vmax.bf16 %v145, %v365
      %v1042 = vmax.bf16 %v146, %v370
      %v1043 = vmax.bf16 %v147, %v375
      %v1044 = vmax.bf16 %v148, %v380
      %v1045 = vmax.bf16 %v149, %v385
      %v1046 = vmax.bf16 %v150, %v390
      %v1047 = vmax.bf16 %v151, %v395
      %v1048 = vmax.bf16 %v152, %v400
      %v1049 = vmax.bf16 %v153, %v405
      %v1050 = vmax.bf16 %v154, %v410
      %v1051 = vmax.bf16 %v155, %v415
      %v1052 = vmax.bf16 %v156, %v420
      %v1053 = vmax.bf16 %v157, %v425
      %v1054 = vmax.bf16 %v158, %v430
      %v1055 = vmax.bf16 %v159, %v435
      %v1056 = vmax.bf16 %v160, %v440
      %v1057 = vmax.bf16 %v161, %v445
      %v1058 = vmax.bf16 %v162, %v450
      %v1059 = vmax.bf16 %v163, %v455
      %v1060 = vmax.bf16 %v164, %v460
      %v1061 = vmax.bf16 %v165, %v465
      %v1062 = vmax.bf16 %v166, %v470
      %v1063 = vmax.bf16 %v167, %v475
      %v1064 = vmax.bf16 %v168, %v480
      %v1065 = vmax.bf16 %v169, %v485
      %v1066 = vmax.bf16 %v170, %v490
      %v1067 = vmax.bf16 %v171, %v495
      %v1068 = vmax.bf16 %v172, %v500
      %v1069 = vmax.bf16 %v173, %v505
      %v1070 = vmax.bf16 %v174, %v510
      %v1071 = vmax.bf16 %v175, %v515
      %v1072 = vmax.bf16 %v176, %v520
      %v1073 = vmax.bf16 %v177, %v525
      %v1074 = vmax.bf16 %v178, %v530
      %v1075 = vmax.bf16 %v179, %v535
      %v1076 = vmax.bf16 %v180, %v540
      %v1077 = vmax.bf16 %v181, %v545
      %v1078 = vmax.bf16 %v182, %v550
      %v1079 = vmax.bf16 %v183, %v555
      %v1080 = vmax.bf16 %v184, %v560
      %v1081 = vmax.bf16 %v185, %v565
      %v1082 = vmax.bf16 %v186, %v570
      %v1083 = vmax.bf16 %v187, %v575
      %v1084 = vmax.bf16 %v188, %v580
      %v1085 = vmax.bf16 %v189, %v585
      %v1086 = vmax.bf16 %v190, %v590
      %v1087 = vmax.bf16 %v191, %v595
      %v1088 = vmax.bf16 %v192, %v600
      %v1089 = vmax.bf16 %v193, %v605
      %v1090 = vmax.bf16 %v194, %v610
      %v1091 = vmax.bf16 %v195, %v615
      %v1092 = vmax.bf16 %v196, %v620
      %v1093 = vmax.bf16 %v197, %v625
      %v1094 = vmax.bf16 %v198, %v630
      %v1095 = vmax.bf16 %v199, %v635
      %v1096 = vmax.bf16 %v200, %v640
      %v1097 = vmax.bf16 %v201, %v645
      %v1098 = vmax.bf16 %v202, %v650
      %v1099 = vmax.bf16 %v203, %v655
      %v1100 = vmax.bf16 %v204, %v660
      %v1101 = vmax.bf16 %v205, %v665
      %v1102 = vmax.bf16 %v206, %v670
      %v1103 = vmax.bf16 %v207, %v675
      %v1104 = vmax.bf16 %v208, %v680
      %v1105 = vmax.bf16 %v209, %v685
      %v1106 = vmax.bf16 %v210, %v690
      %v1107 = vmax.bf16 %v211, %v695
      %v1108 = vmax.bf16 %v212, %v700
      %v1109 = vmax.bf16 %v213, %v705
      %v1110 = vmax.bf16 %v214, %v710
      %v1111 = vmax.bf16 %v215, %v715
      %v1112 = vmax.bf16 %v216, %v720
      %v1113 = vmax.bf16 %v217, %v725
      %v1114 = vmax.bf16 %v218, %v730
      %v1115 = vmax.bf16 %v219, %v735
      %v1116 = vmax.bf16 %v220, %v740
      %v1117 = vmax.bf16 %v221, %v745
      %v1118 = vmax.bf16 %v222, %v750
      %v1119 = vmax.bf16 %v223, %v755
      %v1120 = vmax.bf16 %v224, %v760
      %v1121 = vmax.bf16 %v225, %v765
      %v1122 = vmax.bf16 %v226, %v770
      %v1123 = vmax.bf16 %v227, %v775
      %v1124 = vmax.bf16 %v228, %v780
      %v1125 = vmax.bf16 %v229, %v785
      %v1126 = vmax.bf16 %v230, %v790
      %v1127 = vmax.bf16 %v231, %v795
      %v1128 = vmax.bf16 %v232, %v800
      %v1129 = vmax.bf16 %v233, %v805
      %v1130 = vmax.bf16 %v234, %v810
      %v1131 = vmax.bf16 %v235, %v815
      %v1132 = vmax.bf16 %v236, %v820
      %v1133 = vmax.bf16 %v237, %v825
      %v1134 = vmax.bf16 %v238, %v830
      %v1135 = vmax.bf16 %v239, %v835
      %v1136 = vmax.bf16 %v240, %v840
      %v1137 = vmax.bf16 %v241, %v845
      %v1138 = vmax.bf16 %v242, %v850
      %v1139 = vmax.bf16 %v243, %v855
      %v1140 = vmax.bf16 %v244, %v860
      %v1141 = vmax.bf16 %v245, %v865
      %v1142 = vmax.bf16 %v246, %v870
      %v1143 = vmax.bf16 %v247, %v875
      %v1144 = vmax.bf16 %v248, %v880
      %v1145 = vmax.bf16 %v249, %v885
      %v1146 = vmax.bf16 %v250, %v890
      %v1147 = vld [vmem:[%s115] sm:$0x2]
      %v1148 = vld [vmem:[%s115 + $0x8] sm:$0x2]
      %v1149 = vld [vmem:[%s115 + $0x10] sm:$0x2]
      %v1150 = vld [vmem:[%s115 + $0x18] sm:$0x2]
      %v1151 = vld [vmem:[%s115 + $0x20] sm:$0x2]
      %v1152 = vld [vmem:[%s115 + $0x28] sm:$0x2]
      %v1153 = vld [vmem:[%s115 + $0x30] sm:$0x2]
      %v1154 = vld [vmem:[%s115 + $0x38] sm:$0x2]
      %v1155 = vld [vmem:[%s115 + $0x40] sm:$0x2]
      %v1156 = vld [vmem:[%s115 + $0x48] sm:$0x2]
      %v1157 = vld [vmem:[%s115 + $0x50] sm:$0x2]
      %v1158 = vld [vmem:[%s115 + $0x58] sm:$0x2]
      %v1159 = vld [vmem:[%s115 + $0x60] sm:$0x2]
      %v1160 = vld [vmem:[%s115 + $0x68] sm:$0x2]
      %v1161 = vld [vmem:[%s115 + $0x70] sm:$0x2]
      %v1162 = vld [vmem:[%s115 + $0x78] sm:$0x2]
      %v1163 = vld [vmem:[%s115 + $0x80] sm:$0x2]
      %v1164 = vld [vmem:[%s115 + $0x88] sm:$0x2]
      %v1165 = vld [vmem:[%s115 + $0x90] sm:$0x2]
      %v1166 = vld [vmem:[%s115 + $0x98] sm:$0x2]
      %v1167 = vld [vmem:[%s115 + $0xa0] sm:$0x2]
      %v1168 = vld [vmem:[%s115 + $0xa8] sm:$0x2]
      %v1169 = vld [vmem:[%s115 + $0xb0] sm:$0x2]
      %v1170 = vld [vmem:[%s115 + $0xb8] sm:$0x2]
      %v1171 = vld [vmem:[%s115 + $0xc0] sm:$0x2]
      %v1172 = vld [vmem:[%s115 + $0xc8] sm:$0x2]
      %v1173 = vld [vmem:[%s115 + $0xd0] sm:$0x2]
      %v1174 = vld [vmem:[%s115 + $0xd8] sm:$0x2]
      %v1175 = vld [vmem:[%s115 + $0xe0] sm:$0x2]
      %v1176 = vld [vmem:[%s115 + $0xe8] sm:$0x2]
      %v1177 = vld [vmem:[%s115 + $0xf0] sm:$0x2]
      %v1178 = vld [vmem:[%s115 + $0xf8] sm:$0x2]
      %v1179 = vld [vmem:[%s115 + $0x100] sm:$0x2]
      %v1180 = vld [vmem:[%s115 + $0x108] sm:$0x2]
      %v1181 = vld [vmem:[%s115 + $0x110] sm:$0x2]
      %v1182 = vld [vmem:[%s115 + $0x118] sm:$0x2]
      %v1183 = vld [vmem:[%s115 + $0x120] sm:$0x2]
      %v1184 = vld [vmem:[%s115 + $0x128] sm:$0x2]
      %v1185 = vld [vmem:[%s115 + $0x130] sm:$0x2]
      %v1186 = vld [vmem:[%s115 + $0x138] sm:$0x2]
      %v1187 = vld [vmem:[%s115 + $0x140] sm:$0x2]
      %v1188 = vld [vmem:[%s115 + $0x148] sm:$0x2]
      %v1189 = vld [vmem:[%s115 + $0x150] sm:$0x2]
      %v1190 = vld [vmem:[%s115 + $0x158] sm:$0x2]
      %v1191 = vld [vmem:[%s115 + $0x160] sm:$0x2]
      %v1192 = vld [vmem:[%s115 + $0x168] sm:$0x2]
      %v1193 = vld [vmem:[%s115 + $0x170] sm:$0x2]
      %v1194 = vld [vmem:[%s115 + $0x178] sm:$0x2]
      %v1195 = vld [vmem:[%s115 + $0x180] sm:$0x2]
      %v1196 = vld [vmem:[%s115 + $0x188] sm:$0x2]
      %v1197 = vld [vmem:[%s115 + $0x190] sm:$0x2]
      %v1198 = vld [vmem:[%s115 + $0x198] sm:$0x2]
      %v1199 = vld [vmem:[%s115 + $0x1a0] sm:$0x2]
      %v1200 = vld [vmem:[%s115 + $0x1a8] sm:$0x2]
      %v1201 = vld [vmem:[%s115 + $0x1b0] sm:$0x2]
      %v1202 = vld [vmem:[%s115 + $0x1b8] sm:$0x2]
      %v1203 = vld [vmem:[%s115 + $0x1c0] sm:$0x2]
      %v1204 = vld [vmem:[%s115 + $0x1c8] sm:$0x2]
      %v1205 = vld [vmem:[%s115 + $0x1d0] sm:$0x2]
      %v1206 = vld [vmem:[%s115 + $0x1d8] sm:$0x2]
      %v1207 = vld [vmem:[%s115 + $0x1e0] sm:$0x2]
      %v1208 = vld [vmem:[%s115 + $0x1e8] sm:$0x2]
      %v1209 = vld [vmem:[%s115 + $0x1f0] sm:$0x2]
      %v1210 = vld [vmem:[%s115 + $0x1f8] sm:$0x2]
      %v1211 = vld [vmem:[%s115 + $0x200] sm:$0x2]
      %v1212 = vld [vmem:[%s115 + $0x208] sm:$0x2]
      %v1213 = vld [vmem:[%s115 + $0x210] sm:$0x2]
      %v1214 = vld [vmem:[%s115 + $0x218] sm:$0x2]
      %v1215 = vld [vmem:[%s115 + $0x220] sm:$0x2]
      %v1216 = vld [vmem:[%s115 + $0x228] sm:$0x2]
      %v1217 = vld [vmem:[%s115 + $0x230] sm:$0x2]
      %v1218 = vld [vmem:[%s115 + $0x238] sm:$0x2]
      %v1219 = vld [vmem:[%s115 + $0x240] sm:$0x2]
      %v1220 = vld [vmem:[%s115 + $0x248] sm:$0x2]
      %v1221 = vld [vmem:[%s115 + $0x250] sm:$0x2]
      %v1222 = vld [vmem:[%s115 + $0x258] sm:$0x2]
      %v1223 = vld [vmem:[%s115 + $0x260] sm:$0x2]
      %v1224 = vld [vmem:[%s115 + $0x268] sm:$0x2]
      %v1225 = vld [vmem:[%s115 + $0x270] sm:$0x2]
      %v1226 = vld [vmem:[%s115 + $0x278] sm:$0x2]
      %v1227 = vld [vmem:[%s115 + $0x280] sm:$0x2]
      %v1228 = vld [vmem:[%s115 + $0x288] sm:$0x2]
      %v1229 = vld [vmem:[%s115 + $0x290] sm:$0x2]
      %v1230 = vld [vmem:[%s115 + $0x298] sm:$0x2]
      %v1231 = vld [vmem:[%s115 + $0x2a0] sm:$0x2]
      %v1232 = vld [vmem:[%s115 + $0x2a8] sm:$0x2]
      %v1233 = vld [vmem:[%s115 + $0x2b0] sm:$0x2]
      %v1234 = vld [vmem:[%s115 + $0x2b8] sm:$0x2]
      %v1235 = vld [vmem:[%s115 + $0x2c0] sm:$0x2]
      %v1236 = vld [vmem:[%s115 + $0x2c8] sm:$0x2]
      %v1237 = vld [vmem:[%s115 + $0x2d0] sm:$0x2]
      %v1238 = vld [vmem:[%s115 + $0x2d8] sm:$0x2]
      %v1239 = vld [vmem:[%s115 + $0x2e0] sm:$0x2]
      %v1240 = vld [vmem:[%s115 + $0x2e8] sm:$0x2]
      %v1241 = vld [vmem:[%s115 + $0x2f0] sm:$0x2]
      %v1242 = vld [vmem:[%s115 + $0x2f8] sm:$0x2]
      %v1243 = vld [vmem:[%s115 + $0x300] sm:$0x2]
      %v1244 = vld [vmem:[%s115 + $0x308] sm:$0x2]
      %v1245 = vld [vmem:[%s115 + $0x310] sm:$0x2]
      %v1246 = vld [vmem:[%s115 + $0x318] sm:$0x2]
      %v1247 = vld [vmem:[%s115 + $0x320] sm:$0x2]
      %v1248 = vld [vmem:[%s115 + $0x328] sm:$0x2]
      %v1249 = vld [vmem:[%s115 + $0x330] sm:$0x2]
      %v1250 = vld [vmem:[%s115 + $0x338] sm:$0x2]
      %v1251 = vld [vmem:[%s115 + $0x340] sm:$0x2]
      %v1252 = vld [vmem:[%s115 + $0x348] sm:$0x2]
      %v1253 = vld [vmem:[%s115 + $0x350] sm:$0x2]
      %v1254 = vld [vmem:[%s115 + $0x358] sm:$0x2]
      %v1255 = vld [vmem:[%s115 + $0x360] sm:$0x2]
      %v1256 = vld [vmem:[%s115 + $0x368] sm:$0x2]
      %v1257 = vld [vmem:[%s115 + $0x370] sm:$0x2]
      %v1258 = vld [vmem:[%s115 + $0x378] sm:$0x2]
      %v1259 = vld [vmem:[%s115 + $0x380] sm:$0x2]
      %v1260 = vld [vmem:[%s115 + $0x388] sm:$0x2]
      %v1261 = vld [vmem:[%s115 + $0x390] sm:$0x2]
      %v1262 = vld [vmem:[%s115 + $0x398] sm:$0x2]
      %v1263 = vld [vmem:[%s115 + $0x3a0] sm:$0x2]
      %v1264 = vld [vmem:[%s115 + $0x3a8] sm:$0x2]
      %v1265 = vld [vmem:[%s115 + $0x3b0] sm:$0x2]
      %v1266 = vld [vmem:[%s115 + $0x3b8] sm:$0x2]
      %v1267 = vld [vmem:[%s115 + $0x3c0] sm:$0x2]
      %v1268 = vld [vmem:[%s115 + $0x3c8] sm:$0x2]
      %v1269 = vld [vmem:[%s115 + $0x3d0] sm:$0x2]
      %v1270 = vld [vmem:[%s115 + $0x3d8] sm:$0x2]
      %v1271 = vld [vmem:[%s115 + $0x3e0] sm:$0x2]
      %v1272 = vld [vmem:[%s115 + $0x3e8] sm:$0x2]
      %v1273 = vld [vmem:[%s115 + $0x3f0] sm:$0x2]
      %v1274 = vld [vmem:[%s115 + $0x3f8] sm:$0x2]
      %v1403 = vrot.slane %v1147, 5
      %v1404 = vrot.slane %v1403, 4
      %v1405 = vrot.slane %v1148, 5
      %v1406 = vrot.slane %v1405, 4
      %v1407 = vrot.slane %v1149, 5
      %v1408 = vrot.slane %v1407, 4
      %v1409 = vrot.slane %v1150, 5
      %v1410 = vrot.slane %v1409, 4
      %v1411 = vrot.slane %v1151, 5
      %v1412 = vrot.slane %v1411, 4
      %v1413 = vrot.slane %v1152, 5
      %v1414 = vrot.slane %v1413, 4
      %v1415 = vrot.slane %v1153, 5
      %v1416 = vrot.slane %v1415, 4
      %v1417 = vrot.slane %v1154, 5
      %v1418 = vrot.slane %v1417, 4
      %v1419 = vrot.slane %v1155, 5
      %v1420 = vrot.slane %v1419, 4
      %v1421 = vrot.slane %v1156, 5
      %v1422 = vrot.slane %v1421, 4
      %v1423 = vrot.slane %v1157, 5
      %v1424 = vrot.slane %v1423, 4
      %v1425 = vrot.slane %v1158, 5
      %v1426 = vrot.slane %v1425, 4
      %v1427 = vrot.slane %v1159, 5
      %v1428 = vrot.slane %v1427, 4
      %v1429 = vrot.slane %v1160, 5
      %v1430 = vrot.slane %v1429, 4
      %v1431 = vrot.slane %v1161, 5
      %v1432 = vrot.slane %v1431, 4
      %v1433 = vrot.slane %v1162, 5
      %v1434 = vrot.slane %v1433, 4
      %v1435 = vrot.slane %v1163, 5
      %v1436 = vrot.slane %v1435, 4
      %v1437 = vrot.slane %v1164, 5
      %v1438 = vrot.slane %v1437, 4
      %v1439 = vrot.slane %v1165, 5
      %v1440 = vrot.slane %v1439, 4
      %v1441 = vrot.slane %v1166, 5
      %v1442 = vrot.slane %v1441, 4
      %v1443 = vrot.slane %v1167, 5
      %v1444 = vrot.slane %v1443, 4
      %v1445 = vrot.slane %v1168, 5
      %v1446 = vrot.slane %v1445, 4
      %v1447 = vrot.slane %v1169, 5
      %v1448 = vrot.slane %v1447, 4
      %v1449 = vrot.slane %v1170, 5
      %v1450 = vrot.slane %v1449, 4
      %v1451 = vrot.slane %v1171, 5
      %v1452 = vrot.slane %v1451, 4
      %v1453 = vrot.slane %v1172, 5
      %v1454 = vrot.slane %v1453, 4
      %v1455 = vrot.slane %v1173, 5
      %v1456 = vrot.slane %v1455, 4
      %v1457 = vrot.slane %v1174, 5
      %v1458 = vrot.slane %v1457, 4
      %v1459 = vrot.slane %v1175, 5
      %v1460 = vrot.slane %v1459, 4
      %v1461 = vrot.slane %v1176, 5
      %v1462 = vrot.slane %v1461, 4
      %v1463 = vrot.slane %v1177, 5
      %v1464 = vrot.slane %v1463, 4
      %v1465 = vrot.slane %v1178, 5
      %v1466 = vrot.slane %v1465, 4
      %v1467 = vrot.slane %v1179, 5
      %v1468 = vrot.slane %v1467, 4
      %v1469 = vrot.slane %v1180, 5
      %v1470 = vrot.slane %v1469, 4
      %v1471 = vrot.slane %v1181, 5
      %v1472 = vrot.slane %v1471, 4
      %v1473 = vrot.slane %v1182, 5
      %v1474 = vrot.slane %v1473, 4
      %v1475 = vrot.slane %v1183, 5
      %v1476 = vrot.slane %v1475, 4
      %v1477 = vrot.slane %v1184, 5
      %v1478 = vrot.slane %v1477, 4
      %v1479 = vrot.slane %v1185, 5
      %v1480 = vrot.slane %v1479, 4
      %v1481 = vrot.slane %v1186, 5
      %v1482 = vrot.slane %v1481, 4
      %v1483 = vrot.slane %v1187, 5
      %v1484 = vrot.slane %v1483, 4
      %v1485 = vrot.slane %v1188, 5
      %v1486 = vrot.slane %v1485, 4
      %v1487 = vrot.slane %v1189, 5
      %v1488 = vrot.slane %v1487, 4
      %v1489 = vrot.slane %v1190, 5
      %v1490 = vrot.slane %v1489, 4
      %v1491 = vrot.slane %v1191, 5
      %v1492 = vrot.slane %v1491, 4
      %v1493 = vrot.slane %v1192, 5
      %v1494 = vrot.slane %v1493, 4
      %v1495 = vrot.slane %v1193, 5
      %v1496 = vrot.slane %v1495, 4
      %v1497 = vrot.slane %v1194, 5
      %v1498 = vrot.slane %v1497, 4
      %v1499 = vrot.slane %v1195, 5
      %v1500 = vrot.slane %v1499, 4
      %v1501 = vrot.slane %v1196, 5
      %v1502 = vrot.slane %v1501, 4
      %v1503 = vrot.slane %v1197, 5
      %v1504 = vrot.slane %v1503, 4
      %v1505 = vrot.slane %v1198, 5
      %v1506 = vrot.slane %v1505, 4
      %v1507 = vrot.slane %v1199, 5
      %v1508 = vrot.slane %v1507, 4
      %v1509 = vrot.slane %v1200, 5
      %v1510 = vrot.slane %v1509, 4
      %v1511 = vrot.slane %v1201, 5
      %v1512 = vrot.slane %v1511, 4
      %v1513 = vrot.slane %v1202, 5
      %v1514 = vrot.slane %v1513, 4
      %v1515 = vrot.slane %v1203, 5
      %v1516 = vrot.slane %v1515, 4
      %v1517 = vrot.slane %v1204, 5
      %v1518 = vrot.slane %v1517, 4
      %v1519 = vrot.slane %v1205, 5
      %v1520 = vrot.slane %v1519, 4
      %v1521 = vrot.slane %v1206, 5
      %v1522 = vrot.slane %v1521, 4
      %v1523 = vrot.slane %v1207, 5
      %v1524 = vrot.slane %v1523, 4
      %v1525 = vrot.slane %v1208, 5
      %v1526 = vrot.slane %v1525, 4
      %v1527 = vrot.slane %v1209, 5
      %v1528 = vrot.slane %v1527, 4
      %v1529 = vrot.slane %v1210, 5
      %v1530 = vrot.slane %v1529, 4
      %v1531 = vrot.slane %v1211, 5
      %v1532 = vrot.slane %v1531, 4
      %v1533 = vrot.slane %v1212, 5
      %v1534 = vrot.slane %v1533, 4
      %v1535 = vrot.slane %v1213, 5
      %v1536 = vrot.slane %v1535, 4
      %v1537 = vrot.slane %v1214, 5
      %v1538 = vrot.slane %v1537, 4
      %v1539 = vrot.slane %v1215, 5
      %v1540 = vrot.slane %v1539, 4
      %v1541 = vrot.slane %v1216, 5
      %v1542 = vrot.slane %v1541, 4
      %v1543 = vrot.slane %v1217, 5
      %v1544 = vrot.slane %v1543, 4
      %v1545 = vrot.slane %v1218, 5
      %v1546 = vrot.slane %v1545, 4
      %v1547 = vrot.slane %v1219, 5
      %v1548 = vrot.slane %v1547, 4
      %v1549 = vrot.slane %v1220, 5
      %v1550 = vrot.slane %v1549, 4
      %v1551 = vrot.slane %v1221, 5
      %v1552 = vrot.slane %v1551, 4
      %v1553 = vrot.slane %v1222, 5
      %v1554 = vrot.slane %v1553, 4
      %v1555 = vrot.slane %v1223, 5
      %v1556 = vrot.slane %v1555, 4
      %v1557 = vrot.slane %v1224, 5
      %v1558 = vrot.slane %v1557, 4
      %v1559 = vrot.slane %v1225, 5
      %v1560 = vrot.slane %v1559, 4
      %v1561 = vrot.slane %v1226, 5
      %v1562 = vrot.slane %v1561, 4
      %v1563 = vrot.slane %v1227, 5
      %v1564 = vrot.slane %v1563, 4
      %v1565 = vrot.slane %v1228, 5
      %v1566 = vrot.slane %v1565, 4
      %v1567 = vrot.slane %v1229, 5
      %v1568 = vrot.slane %v1567, 4
      %v1569 = vrot.slane %v1230, 5
      %v1570 = vrot.slane %v1569, 4
      %v1571 = vrot.slane %v1231, 5
      %v1572 = vrot.slane %v1571, 4
      %v1573 = vrot.slane %v1232, 5
      %v1574 = vrot.slane %v1573, 4
      %v1575 = vrot.slane %v1233, 5
      %v1576 = vrot.slane %v1575, 4
      %v1577 = vrot.slane %v1234, 5
      %v1578 = vrot.slane %v1577, 4
      %v1579 = vrot.slane %v1235, 5
      %v1580 = vrot.slane %v1579, 4
      %v1581 = vrot.slane %v1236, 5
      %v1582 = vrot.slane %v1581, 4
      %v1583 = vrot.slane %v1237, 5
      %v1584 = vrot.slane %v1583, 4
      %v1585 = vrot.slane %v1238, 5
      %v1586 = vrot.slane %v1585, 4
      %v1587 = vrot.slane %v1239, 5
      %v1588 = vrot.slane %v1587, 4
      %v1589 = vrot.slane %v1240, 5
      %v1590 = vrot.slane %v1589, 4
      %v1591 = vrot.slane %v1241, 5
      %v1592 = vrot.slane %v1591, 4
      %v1593 = vrot.slane %v1242, 5
      %v1594 = vrot.slane %v1593, 4
      %v1595 = vrot.slane %v1243, 5
      %v1596 = vrot.slane %v1595, 4
      %v1597 = vrot.slane %v1244, 5
      %v1598 = vrot.slane %v1597, 4
      %v1599 = vrot.slane %v1245, 5
      %v1600 = vrot.slane %v1599, 4
      %v1601 = vrot.slane %v1246, 5
      %v1602 = vrot.slane %v1601, 4
      %v1603 = vrot.slane %v1247, 5
      %v1604 = vrot.slane %v1603, 4
      %v1605 = vrot.slane %v1248, 5
      %v1606 = vrot.slane %v1605, 4
      %v1607 = vrot.slane %v1249, 5
      %v1608 = vrot.slane %v1607, 4
      %v1609 = vrot.slane %v1250, 5
      %v1610 = vrot.slane %v1609, 4
      %v1611 = vrot.slane %v1251, 5
      %v1612 = vrot.slane %v1611, 4
      %v1613 = vrot.slane %v1252, 5
      %v1614 = vrot.slane %v1613, 4
      %v1615 = vrot.slane %v1253, 5
      %v1616 = vrot.slane %v1615, 4
      %v1617 = vrot.slane %v1254, 5
      %v1618 = vrot.slane %v1617, 4
      %v1619 = vrot.slane %v1255, 5
      %v1620 = vrot.slane %v1619, 4
      %v1621 = vrot.slane %v1256, 5
      %v1622 = vrot.slane %v1621, 4
      %v1623 = vrot.slane %v1257, 5
      %v1624 = vrot.slane %v1623, 4
      %v1625 = vrot.slane %v1258, 5
      %v1626 = vrot.slane %v1625, 4
      %v1627 = vrot.slane %v1259, 5
      %v1628 = vrot.slane %v1627, 4
      %v1629 = vrot.slane %v1260, 5
      %v1630 = vrot.slane %v1629, 4
      %v1631 = vrot.slane %v1261, 5
      %v1632 = vrot.slane %v1631, 4
      %v1633 = vrot.slane %v1262, 5
      %v1634 = vrot.slane %v1633, 4
      %v1635 = vrot.slane %v1263, 5
      %v1636 = vrot.slane %v1635, 4
      %v1637 = vrot.slane %v1264, 5
      %v1638 = vrot.slane %v1637, 4
      %v1639 = vrot.slane %v1265, 5
      %v1640 = vrot.slane %v1639, 4
      %v1641 = vrot.slane %v1266, 5
      %v1642 = vrot.slane %v1641, 4
      %v1643 = vrot.slane %v1267, 5
      %v1644 = vrot.slane %v1643, 4
      %v1645 = vrot.slane %v1268, 5
      %v1646 = vrot.slane %v1645, 4
      %v1647 = vrot.slane %v1269, 5
      %v1648 = vrot.slane %v1647, 4
      %v1649 = vrot.slane %v1270, 5
      %v1650 = vrot.slane %v1649, 4
      %v1651 = vrot.slane %v1271, 5
      %v1652 = vrot.slane %v1651, 4
      %v1653 = vrot.slane %v1272, 5
      %v1654 = vrot.slane %v1653, 4
      %v1655 = vrot.slane %v1273, 5
      %v1656 = vrot.slane %v1655, 4
      %v1657 = vrot.slane %v1274, 5
      %v1658 = vrot.slane %v1657, 4
      %v1787 = vmax.bf16 %v1019, %v1404
      %v1788 = vmax.bf16 %v1020, %v1406
      %v1789 = vmax.bf16 %v1021, %v1408
      %v1790 = vmax.bf16 %v1022, %v1410
      %v1791 = vmax.bf16 %v1023, %v1412
      %v1792 = vmax.bf16 %v1024, %v1414
      %v1793 = vmax.bf16 %v1025, %v1416
      %v1794 = vmax.bf16 %v1026, %v1418
      %v1795 = vmax.bf16 %v1027, %v1420
      %v1796 = vmax.bf16 %v1028, %v1422
      %v1797 = vmax.bf16 %v1029, %v1424
      %v1798 = vmax.bf16 %v1030, %v1426
      %v1799 = vmax.bf16 %v1031, %v1428
      %v1800 = vmax.bf16 %v1032, %v1430
      %v1801 = vmax.bf16 %v1033, %v1432
      %v1802 = vmax.bf16 %v1034, %v1434
      %v1803 = vmax.bf16 %v1035, %v1436
      %v1804 = vmax.bf16 %v1036, %v1438
      %v1805 = vmax.bf16 %v1037, %v1440
      %v1806 = vmax.bf16 %v1038, %v1442
      %v1807 = vmax.bf16 %v1039, %v1444
      %v1808 = vmax.bf16 %v1040, %v1446
      %v1809 = vmax.bf16 %v1041, %v1448
      %v1810 = vmax.bf16 %v1042, %v1450
      %v1811 = vmax.bf16 %v1043, %v1452
      %v1812 = vmax.bf16 %v1044, %v1454
      %v1813 = vmax.bf16 %v1045, %v1456
      %v1814 = vmax.bf16 %v1046, %v1458
      %v1815 = vmax.bf16 %v1047, %v1460
      %v1816 = vmax.bf16 %v1048, %v1462
      %v1817 = vmax.bf16 %v1049, %v1464
      %v1818 = vmax.bf16 %v1050, %v1466
      %v1819 = vmax.bf16 %v1051, %v1468
      %v1820 = vmax.bf16 %v1052, %v1470
      %v1821 = vmax.bf16 %v1053, %v1472
      %v1822 = vmax.bf16 %v1054, %v1474
      %v1823 = vmax.bf16 %v1055, %v1476
      %v1824 = vmax.bf16 %v1056, %v1478
      %v1825 = vmax.bf16 %v1057, %v1480
      %v1826 = vmax.bf16 %v1058, %v1482
      %v1827 = vmax.bf16 %v1059, %v1484
      %v1828 = vmax.bf16 %v1060, %v1486
      %v1829 = vmax.bf16 %v1061, %v1488
      %v1830 = vmax.bf16 %v1062, %v1490
      %v1831 = vmax.bf16 %v1063, %v1492
      %v1832 = vmax.bf16 %v1064, %v1494
      %v1833 = vmax.bf16 %v1065, %v1496
      %v1834 = vmax.bf16 %v1066, %v1498
      %v1835 = vmax.bf16 %v1067, %v1500
      %v1836 = vmax.bf16 %v1068, %v1502
      %v1837 = vmax.bf16 %v1069, %v1504
      %v1838 = vmax.bf16 %v1070, %v1506
      %v1839 = vmax.bf16 %v1071, %v1508
      %v1840 = vmax.bf16 %v1072, %v1510
      %v1841 = vmax.bf16 %v1073, %v1512
      %v1842 = vmax.bf16 %v1074, %v1514
      %v1843 = vmax.bf16 %v1075, %v1516
      %v1844 = vmax.bf16 %v1076, %v1518
      %v1845 = vmax.bf16 %v1077, %v1520
      %v1846 = vmax.bf16 %v1078, %v1522
      %v1847 = vmax.bf16 %v1079, %v1524
      %v1848 = vmax.bf16 %v1080, %v1526
      %v1849 = vmax.bf16 %v1081, %v1528
      %v1850 = vmax.bf16 %v1082, %v1530
      %v1851 = vmax.bf16 %v1083, %v1532
      %v1852 = vmax.bf16 %v1084, %v1534
      %v1853 = vmax.bf16 %v1085, %v1536
      %v1854 = vmax.bf16 %v1086, %v1538
      %v1855 = vmax.bf16 %v1087, %v1540
      %v1856 = vmax.bf16 %v1088, %v1542
      %v1857 = vmax.bf16 %v1089, %v1544
      %v1858 = vmax.bf16 %v1090, %v1546
      %v1859 = vmax.bf16 %v1091, %v1548
      %v1860 = vmax.bf16 %v1092, %v1550
      %v1861 = vmax.bf16 %v1093, %v1552
      %v1862 = vmax.bf16 %v1094, %v1554
      %v1863 = vmax.bf16 %v1095, %v1556
      %v1864 = vmax.bf16 %v1096, %v1558
      %v1865 = vmax.bf16 %v1097, %v1560
      %v1866 = vmax.bf16 %v1098, %v1562
      %v1867 = vmax.bf16 %v1099, %v1564
      %v1868 = vmax.bf16 %v1100, %v1566
      %v1869 = vmax.bf16 %v1101, %v1568
      %v1870 = vmax.bf16 %v1102, %v1570
      %v1871 = vmax.bf16 %v1103, %v1572
      %v1872 = vmax.bf16 %v1104, %v1574
      %v1873 = vmax.bf16 %v1105, %v1576
      %v1874 = vmax.bf16 %v1106, %v1578
      %v1875 = vmax.bf16 %v1107, %v1580
      %v1876 = vmax.bf16 %v1108, %v1582
      %v1877 = vmax.bf16 %v1109, %v1584
      %v1878 = vmax.bf16 %v1110, %v1586
      %v1879 = vmax.bf16 %v1111, %v1588
      %v1880 = vmax.bf16 %v1112, %v1590
      %v1881 = vmax.bf16 %v1113, %v1592
      %v1882 = vmax.bf16 %v1114, %v1594
      %v1883 = vmax.bf16 %v1115, %v1596
      %v1884 = vmax.bf16 %v1116, %v1598
      %v1885 = vmax.bf16 %v1117, %v1600
      %v1886 = vmax.bf16 %v1118, %v1602
      %v1887 = vmax.bf16 %v1119, %v1604
      %v1888 = vmax.bf16 %v1120, %v1606
      %v1889 = vmax.bf16 %v1121, %v1608
      %v1890 = vmax.bf16 %v1122, %v1610
      %v1891 = vmax.bf16 %v1123, %v1612
      %v1892 = vmax.bf16 %v1124, %v1614
      %v1893 = vmax.bf16 %v1125, %v1616
      %v1894 = vmax.bf16 %v1126, %v1618
      %v1895 = vmax.bf16 %v1127, %v1620
      %v1896 = vmax.bf16 %v1128, %v1622
      %v1897 = vmax.bf16 %v1129, %v1624
      %v1898 = vmax.bf16 %v1130, %v1626
      %v1899 = vmax.bf16 %v1131, %v1628
      %v1900 = vmax.bf16 %v1132, %v1630
      %v1901 = vmax.bf16 %v1133, %v1632
      %v1902 = vmax.bf16 %v1134, %v1634
      %v1903 = vmax.bf16 %v1135, %v1636
      %v1904 = vmax.bf16 %v1136, %v1638
      %v1905 = vmax.bf16 %v1137, %v1640
      %v1906 = vmax.bf16 %v1138, %v1642
      %v1907 = vmax.bf16 %v1139, %v1644
      %v1908 = vmax.bf16 %v1140, %v1646
      %v1909 = vmax.bf16 %v1141, %v1648
      %v1910 = vmax.bf16 %v1142, %v1650
      %v1911 = vmax.bf16 %v1143, %v1652
      %v1912 = vmax.bf16 %v1144, %v1654
      %v1913 = vmax.bf16 %v1145, %v1656
      %v1914 = vmax.bf16 %v1146, %v1658
      %v1916 = vshrl.u32 %v1147, 16
      %v1918 = vrot.slane %v1916, 5
      %v1919 = vrot.slane %v1918, 4
      %v1921 = vshrl.u32 %v1148, 16
      %v1923 = vrot.slane %v1921, 5
      %v1924 = vrot.slane %v1923, 4
      %v1926 = vshrl.u32 %v1149, 16
      %v1928 = vrot.slane %v1926, 5
      %v1929 = vrot.slane %v1928, 4
      %v1931 = vshrl.u32 %v1150, 16
      %v1933 = vrot.slane %v1931, 5
      %v1934 = vrot.slane %v1933, 4
      %v1936 = vshrl.u32 %v1151, 16
      %v1938 = vrot.slane %v1936, 5
      %v1939 = vrot.slane %v1938, 4
      %v1941 = vshrl.u32 %v1152, 16
      %v1943 = vrot.slane %v1941, 5
      %v1944 = vrot.slane %v1943, 4
      %v1946 = vshrl.u32 %v1153, 16
      %v1948 = vrot.slane %v1946, 5
      %v1949 = vrot.slane %v1948, 4
      %v1951 = vshrl.u32 %v1154, 16
      %v1953 = vrot.slane %v1951, 5
      %v1954 = vrot.slane %v1953, 4
      %v1956 = vshrl.u32 %v1155, 16
      %v1958 = vrot.slane %v1956, 5
      %v1959 = vrot.slane %v1958, 4
      %v1961 = vshrl.u32 %v1156, 16
      %v1963 = vrot.slane %v1961, 5
      %v1964 = vrot.slane %v1963, 4
      %v1966 = vshrl.u32 %v1157, 16
      %v1968 = vrot.slane %v1966, 5
      %v1969 = vrot.slane %v1968, 4
      %v1971 = vshrl.u32 %v1158, 16
      %v1973 = vrot.slane %v1971, 5
      %v1974 = vrot.slane %v1973, 4
      %v1976 = vshrl.u32 %v1159, 16
      %v1978 = vrot.slane %v1976, 5
      %v1979 = vrot.slane %v1978, 4
      %v1981 = vshrl.u32 %v1160, 16
      %v1983 = vrot.slane %v1981, 5
      %v1984 = vrot.slane %v1983, 4
      %v1986 = vshrl.u32 %v1161, 16
      %v1988 = vrot.slane %v1986, 5
      %v1989 = vrot.slane %v1988, 4
      %v1991 = vshrl.u32 %v1162, 16
      %v1993 = vrot.slane %v1991, 5
      %v1994 = vrot.slane %v1993, 4
      %v1996 = vshrl.u32 %v1163, 16
      %v1998 = vrot.slane %v1996, 5
      %v1999 = vrot.slane %v1998, 4
      %v2001 = vshrl.u32 %v1164, 16
      %v2003 = vrot.slane %v2001, 5
      %v2004 = vrot.slane %v2003, 4
      %v2006 = vshrl.u32 %v1165, 16
      %v2008 = vrot.slane %v2006, 5
      %v2009 = vrot.slane %v2008, 4
      %v2011 = vshrl.u32 %v1166, 16
      %v2013 = vrot.slane %v2011, 5
      %v2014 = vrot.slane %v2013, 4
      %v2016 = vshrl.u32 %v1167, 16
      %v2018 = vrot.slane %v2016, 5
      %v2019 = vrot.slane %v2018, 4
      %v2021 = vshrl.u32 %v1168, 16
      %v2023 = vrot.slane %v2021, 5
      %v2024 = vrot.slane %v2023, 4
      %v2026 = vshrl.u32 %v1169, 16
      %v2028 = vrot.slane %v2026, 5
      %v2029 = vrot.slane %v2028, 4
      %v2031 = vshrl.u32 %v1170, 16
      %v2033 = vrot.slane %v2031, 5
      %v2034 = vrot.slane %v2033, 4
      %v2036 = vshrl.u32 %v1171, 16
      %v2038 = vrot.slane %v2036, 5
      %v2039 = vrot.slane %v2038, 4
      %v2041 = vshrl.u32 %v1172, 16
      %v2043 = vrot.slane %v2041, 5
      %v2044 = vrot.slane %v2043, 4
      %v2046 = vshrl.u32 %v1173, 16
      %v2048 = vrot.slane %v2046, 5
      %v2049 = vrot.slane %v2048, 4
      %v2051 = vshrl.u32 %v1174, 16
      %v2053 = vrot.slane %v2051, 5
      %v2054 = vrot.slane %v2053, 4
      %v2056 = vshrl.u32 %v1175, 16
      %v2058 = vrot.slane %v2056, 5
      %v2059 = vrot.slane %v2058, 4
      %v2061 = vshrl.u32 %v1176, 16
      %v2063 = vrot.slane %v2061, 5
      %v2064 = vrot.slane %v2063, 4
      %v2066 = vshrl.u32 %v1177, 16
      %v2068 = vrot.slane %v2066, 5
      %v2069 = vrot.slane %v2068, 4
      %v2071 = vshrl.u32 %v1178, 16
      %v2073 = vrot.slane %v2071, 5
      %v2074 = vrot.slane %v2073, 4
      %v2076 = vshrl.u32 %v1179, 16
      %v2078 = vrot.slane %v2076, 5
      %v2079 = vrot.slane %v2078, 4
      %v2081 = vshrl.u32 %v1180, 16
      %v2083 = vrot.slane %v2081, 5
      %v2084 = vrot.slane %v2083, 4
      %v2086 = vshrl.u32 %v1181, 16
      %v2088 = vrot.slane %v2086, 5
      %v2089 = vrot.slane %v2088, 4
      %v2091 = vshrl.u32 %v1182, 16
      %v2093 = vrot.slane %v2091, 5
      %v2094 = vrot.slane %v2093, 4
      %v2096 = vshrl.u32 %v1183, 16
      %v2098 = vrot.slane %v2096, 5
      %v2099 = vrot.slane %v2098, 4
      %v2101 = vshrl.u32 %v1184, 16
      %v2103 = vrot.slane %v2101, 5
      %v2104 = vrot.slane %v2103, 4
      %v2106 = vshrl.u32 %v1185, 16
      %v2108 = vrot.slane %v2106, 5
      %v2109 = vrot.slane %v2108, 4
      %v2111 = vshrl.u32 %v1186, 16
      %v2113 = vrot.slane %v2111, 5
      %v2114 = vrot.slane %v2113, 4
      %v2116 = vshrl.u32 %v1187, 16
      %v2118 = vrot.slane %v2116, 5
      %v2119 = vrot.slane %v2118, 4
      %v2121 = vshrl.u32 %v1188, 16
      %v2123 = vrot.slane %v2121, 5
      %v2124 = vrot.slane %v2123, 4
      %v2126 = vshrl.u32 %v1189, 16
      %v2128 = vrot.slane %v2126, 5
      %v2129 = vrot.slane %v2128, 4
      %v2131 = vshrl.u32 %v1190, 16
      %v2133 = vrot.slane %v2131, 5
      %v2134 = vrot.slane %v2133, 4
      %v2136 = vshrl.u32 %v1191, 16
      %v2138 = vrot.slane %v2136, 5
      %v2139 = vrot.slane %v2138, 4
      %v2141 = vshrl.u32 %v1192, 16
      %v2143 = vrot.slane %v2141, 5
      %v2144 = vrot.slane %v2143, 4
      %v2146 = vshrl.u32 %v1193, 16
      %v2148 = vrot.slane %v2146, 5
      %v2149 = vrot.slane %v2148, 4
      %v2151 = vshrl.u32 %v1194, 16
      %v2153 = vrot.slane %v2151, 5
      %v2154 = vrot.slane %v2153, 4
      %v2156 = vshrl.u32 %v1195, 16
      %v2158 = vrot.slane %v2156, 5
      %v2159 = vrot.slane %v2158, 4
      %v2161 = vshrl.u32 %v1196, 16
      %v2163 = vrot.slane %v2161, 5
      %v2164 = vrot.slane %v2163, 4
      %v2166 = vshrl.u32 %v1197, 16
      %v2168 = vrot.slane %v2166, 5
      %v2169 = vrot.slane %v2168, 4
      %v2171 = vshrl.u32 %v1198, 16
      %v2173 = vrot.slane %v2171, 5
      %v2174 = vrot.slane %v2173, 4
      %v2176 = vshrl.u32 %v1199, 16
      %v2178 = vrot.slane %v2176, 5
      %v2179 = vrot.slane %v2178, 4
      %v2181 = vshrl.u32 %v1200, 16
      %v2183 = vrot.slane %v2181, 5
      %v2184 = vrot.slane %v2183, 4
      %v2186 = vshrl.u32 %v1201, 16
      %v2188 = vrot.slane %v2186, 5
      %v2189 = vrot.slane %v2188, 4
      %v2191 = vshrl.u32 %v1202, 16
      %v2193 = vrot.slane %v2191, 5
      %v2194 = vrot.slane %v2193, 4
      %v2196 = vshrl.u32 %v1203, 16
      %v2198 = vrot.slane %v2196, 5
      %v2199 = vrot.slane %v2198, 4
      %v2201 = vshrl.u32 %v1204, 16
      %v2203 = vrot.slane %v2201, 5
      %v2204 = vrot.slane %v2203, 4
      %v2206 = vshrl.u32 %v1205, 16
      %v2208 = vrot.slane %v2206, 5
      %v2209 = vrot.slane %v2208, 4
      %v2211 = vshrl.u32 %v1206, 16
      %v2213 = vrot.slane %v2211, 5
      %v2214 = vrot.slane %v2213, 4
      %v2216 = vshrl.u32 %v1207, 16
      %v2218 = vrot.slane %v2216, 5
      %v2219 = vrot.slane %v2218, 4
      %v2221 = vshrl.u32 %v1208, 16
      %v2223 = vrot.slane %v2221, 5
      %v2224 = vrot.slane %v2223, 4
      %v2226 = vshrl.u32 %v1209, 16
      %v2228 = vrot.slane %v2226, 5
      %v2229 = vrot.slane %v2228, 4
      %v2231 = vshrl.u32 %v1210, 16
      %v2233 = vrot.slane %v2231, 5
      %v2234 = vrot.slane %v2233, 4
      %v2236 = vshrl.u32 %v1211, 16
      %v2238 = vrot.slane %v2236, 5
      %v2239 = vrot.slane %v2238, 4
      %v2241 = vshrl.u32 %v1212, 16
      %v2243 = vrot.slane %v2241, 5
      %v2244 = vrot.slane %v2243, 4
      %v2246 = vshrl.u32 %v1213, 16
      %v2248 = vrot.slane %v2246, 5
      %v2249 = vrot.slane %v2248, 4
      %v2251 = vshrl.u32 %v1214, 16
      %v2253 = vrot.slane %v2251, 5
      %v2254 = vrot.slane %v2253, 4
      %v2256 = vshrl.u32 %v1215, 16
      %v2258 = vrot.slane %v2256, 5
      %v2259 = vrot.slane %v2258, 4
      %v2261 = vshrl.u32 %v1216, 16
      %v2263 = vrot.slane %v2261, 5
      %v2264 = vrot.slane %v2263, 4
      %v2266 = vshrl.u32 %v1217, 16
      %v2268 = vrot.slane %v2266, 5
      %v2269 = vrot.slane %v2268, 4
      %v2271 = vshrl.u32 %v1218, 16
      %v2273 = vrot.slane %v2271, 5
      %v2274 = vrot.slane %v2273, 4
      %v2276 = vshrl.u32 %v1219, 16
      %v2278 = vrot.slane %v2276, 5
      %v2279 = vrot.slane %v2278, 4
      %v2281 = vshrl.u32 %v1220, 16
      %v2283 = vrot.slane %v2281, 5
      %v2284 = vrot.slane %v2283, 4
      %v2286 = vshrl.u32 %v1221, 16
      %v2288 = vrot.slane %v2286, 5
      %v2289 = vrot.slane %v2288, 4
      %v2291 = vshrl.u32 %v1222, 16
      %v2293 = vrot.slane %v2291, 5
      %v2294 = vrot.slane %v2293, 4
      %v2296 = vshrl.u32 %v1223, 16
      %v2298 = vrot.slane %v2296, 5
      %v2299 = vrot.slane %v2298, 4
      %v2301 = vshrl.u32 %v1224, 16
      %v2303 = vrot.slane %v2301, 5
      %v2304 = vrot.slane %v2303, 4
      %v2306 = vshrl.u32 %v1225, 16
      %v2308 = vrot.slane %v2306, 5
      %v2309 = vrot.slane %v2308, 4
      %v2311 = vshrl.u32 %v1226, 16
      %v2313 = vrot.slane %v2311, 5
      %v2314 = vrot.slane %v2313, 4
      %v2316 = vshrl.u32 %v1227, 16
      %v2318 = vrot.slane %v2316, 5
      %v2319 = vrot.slane %v2318, 4
      %v2321 = vshrl.u32 %v1228, 16
      %v2323 = vrot.slane %v2321, 5
      %v2324 = vrot.slane %v2323, 4
      %v2326 = vshrl.u32 %v1229, 16
      %v2328 = vrot.slane %v2326, 5
      %v2329 = vrot.slane %v2328, 4
      %v2331 = vshrl.u32 %v1230, 16
      %v2333 = vrot.slane %v2331, 5
      %v2334 = vrot.slane %v2333, 4
      %v2336 = vshrl.u32 %v1231, 16
      %v2338 = vrot.slane %v2336, 5
      %v2339 = vrot.slane %v2338, 4
      %v2341 = vshrl.u32 %v1232, 16
      %v2343 = vrot.slane %v2341, 5
      %v2344 = vrot.slane %v2343, 4
      %v2346 = vshrl.u32 %v1233, 16
      %v2348 = vrot.slane %v2346, 5
      %v2349 = vrot.slane %v2348, 4
      %v2351 = vshrl.u32 %v1234, 16
      %v2353 = vrot.slane %v2351, 5
      %v2354 = vrot.slane %v2353, 4
      %v2356 = vshrl.u32 %v1235, 16
      %v2358 = vrot.slane %v2356, 5
      %v2359 = vrot.slane %v2358, 4
      %v2361 = vshrl.u32 %v1236, 16
      %v2363 = vrot.slane %v2361, 5
      %v2364 = vrot.slane %v2363, 4
      %v2366 = vshrl.u32 %v1237, 16
      %v2368 = vrot.slane %v2366, 5
      %v2369 = vrot.slane %v2368, 4
      %v2371 = vshrl.u32 %v1238, 16
      %v2373 = vrot.slane %v2371, 5
      %v2374 = vrot.slane %v2373, 4
      %v2376 = vshrl.u32 %v1239, 16
      %v2378 = vrot.slane %v2376, 5
      %v2379 = vrot.slane %v2378, 4
      %v2381 = vshrl.u32 %v1240, 16
      %v2383 = vrot.slane %v2381, 5
      %v2384 = vrot.slane %v2383, 4
      %v2386 = vshrl.u32 %v1241, 16
      %v2388 = vrot.slane %v2386, 5
      %v2389 = vrot.slane %v2388, 4
      %v2391 = vshrl.u32 %v1242, 16
      %v2393 = vrot.slane %v2391, 5
      %v2394 = vrot.slane %v2393, 4
      %v2396 = vshrl.u32 %v1243, 16
      %v2398 = vrot.slane %v2396, 5
      %v2399 = vrot.slane %v2398, 4
      %v2401 = vshrl.u32 %v1244, 16
      %v2403 = vrot.slane %v2401, 5
      %v2404 = vrot.slane %v2403, 4
      %v2406 = vshrl.u32 %v1245, 16
      %v2408 = vrot.slane %v2406, 5
      %v2409 = vrot.slane %v2408, 4
      %v2411 = vshrl.u32 %v1246, 16
      %v2413 = vrot.slane %v2411, 5
      %v2414 = vrot.slane %v2413, 4
      %v2416 = vshrl.u32 %v1247, 16
      %v2418 = vrot.slane %v2416, 5
      %v2419 = vrot.slane %v2418, 4
      %v2421 = vshrl.u32 %v1248, 16
      %v2423 = vrot.slane %v2421, 5
      %v2424 = vrot.slane %v2423, 4
      %v2426 = vshrl.u32 %v1249, 16
      %v2428 = vrot.slane %v2426, 5
      %v2429 = vrot.slane %v2428, 4
      %v2431 = vshrl.u32 %v1250, 16
      %v2433 = vrot.slane %v2431, 5
      %v2434 = vrot.slane %v2433, 4
      %v2436 = vshrl.u32 %v1251, 16
      %v2438 = vrot.slane %v2436, 5
      %v2439 = vrot.slane %v2438, 4
      %v2441 = vshrl.u32 %v1252, 16
      %v2443 = vrot.slane %v2441, 5
      %v2444 = vrot.slane %v2443, 4
      %v2446 = vshrl.u32 %v1253, 16
      %v2448 = vrot.slane %v2446, 5
      %v2449 = vrot.slane %v2448, 4
      %v2451 = vshrl.u32 %v1254, 16
      %v2453 = vrot.slane %v2451, 5
      %v2454 = vrot.slane %v2453, 4
      %v2456 = vshrl.u32 %v1255, 16
      %v2458 = vrot.slane %v2456, 5
      %v2459 = vrot.slane %v2458, 4
      %v2461 = vshrl.u32 %v1256, 16
      %v2463 = vrot.slane %v2461, 5
      %v2464 = vrot.slane %v2463, 4
      %v2466 = vshrl.u32 %v1257, 16
      %v2468 = vrot.slane %v2466, 5
      %v2469 = vrot.slane %v2468, 4
      %v2471 = vshrl.u32 %v1258, 16
      %v2473 = vrot.slane %v2471, 5
      %v2474 = vrot.slane %v2473, 4
      %v2476 = vshrl.u32 %v1259, 16
      %v2478 = vrot.slane %v2476, 5
      %v2479 = vrot.slane %v2478, 4
      %v2481 = vshrl.u32 %v1260, 16
      %v2483 = vrot.slane %v2481, 5
      %v2484 = vrot.slane %v2483, 4
      %v2486 = vshrl.u32 %v1261, 16
      %v2488 = vrot.slane %v2486, 5
      %v2489 = vrot.slane %v2488, 4
      %v2491 = vshrl.u32 %v1262, 16
      %v2493 = vrot.slane %v2491, 5
      %v2494 = vrot.slane %v2493, 4
      %v2496 = vshrl.u32 %v1263, 16
      %v2498 = vrot.slane %v2496, 5
      %v2499 = vrot.slane %v2498, 4
      %v2501 = vshrl.u32 %v1264, 16
      %v2503 = vrot.slane %v2501, 5
      %v2504 = vrot.slane %v2503, 4
      %v2506 = vshrl.u32 %v1265, 16
      %v2508 = vrot.slane %v2506, 5
      %v2509 = vrot.slane %v2508, 4
      %v2511 = vshrl.u32 %v1266, 16
      %v2513 = vrot.slane %v2511, 5
      %v2514 = vrot.slane %v2513, 4
      %v2516 = vshrl.u32 %v1267, 16
      %v2518 = vrot.slane %v2516, 5
      %v2519 = vrot.slane %v2518, 4
      %v2521 = vshrl.u32 %v1268, 16
      %v2523 = vrot.slane %v2521, 5
      %v2524 = vrot.slane %v2523, 4
      %v2526 = vshrl.u32 %v1269, 16
      %v2528 = vrot.slane %v2526, 5
      %v2529 = vrot.slane %v2528, 4
      %v2531 = vshrl.u32 %v1270, 16
      %v2533 = vrot.slane %v2531, 5
      %v2534 = vrot.slane %v2533, 4
      %v2536 = vshrl.u32 %v1271, 16
      %v2538 = vrot.slane %v2536, 5
      %v2539 = vrot.slane %v2538, 4
      %v2541 = vshrl.u32 %v1272, 16
      %v2543 = vrot.slane %v2541, 5
      %v2544 = vrot.slane %v2543, 4
      %v2546 = vshrl.u32 %v1273, 16
      %v2548 = vrot.slane %v2546, 5
      %v2549 = vrot.slane %v2548, 4
      %v2551 = vshrl.u32 %v1274, 16
      %v2553 = vrot.slane %v2551, 5
      %v2554 = vrot.slane %v2553, 4
      %v2683 = vmax.bf16 %v1787, %v1919
      %v2684 = vmax.bf16 %v1788, %v1924
      %v2685 = vmax.bf16 %v1789, %v1929
      %v2686 = vmax.bf16 %v1790, %v1934
      %v2687 = vmax.bf16 %v1791, %v1939
      %v2688 = vmax.bf16 %v1792, %v1944
      %v2689 = vmax.bf16 %v1793, %v1949
      %v2690 = vmax.bf16 %v1794, %v1954
      %v2691 = vmax.bf16 %v1795, %v1959
      %v2692 = vmax.bf16 %v1796, %v1964
      %v2693 = vmax.bf16 %v1797, %v1969
      %v2694 = vmax.bf16 %v1798, %v1974
      %v2695 = vmax.bf16 %v1799, %v1979
      %v2696 = vmax.bf16 %v1800, %v1984
      %v2697 = vmax.bf16 %v1801, %v1989
      %v2698 = vmax.bf16 %v1802, %v1994
      %v2699 = vmax.bf16 %v1803, %v1999
      %v2700 = vmax.bf16 %v1804, %v2004
      %v2701 = vmax.bf16 %v1805, %v2009
      %v2702 = vmax.bf16 %v1806, %v2014
      %v2703 = vmax.bf16 %v1807, %v2019
      %v2704 = vmax.bf16 %v1808, %v2024
      %v2705 = vmax.bf16 %v1809, %v2029
      %v2706 = vmax.bf16 %v1810, %v2034
      %v2707 = vmax.bf16 %v1811, %v2039
      %v2708 = vmax.bf16 %v1812, %v2044
      %v2709 = vmax.bf16 %v1813, %v2049
      %v2710 = vmax.bf16 %v1814, %v2054
      %v2711 = vmax.bf16 %v1815, %v2059
      %v2712 = vmax.bf16 %v1816, %v2064
      %v2713 = vmax.bf16 %v1817, %v2069
      %v2714 = vmax.bf16 %v1818, %v2074
      %v2715 = vmax.bf16 %v1819, %v2079
      %v2716 = vmax.bf16 %v1820, %v2084
      %v2717 = vmax.bf16 %v1821, %v2089
      %v2718 = vmax.bf16 %v1822, %v2094
      %v2719 = vmax.bf16 %v1823, %v2099
      %v2720 = vmax.bf16 %v1824, %v2104
      %v2721 = vmax.bf16 %v1825, %v2109
      %v2722 = vmax.bf16 %v1826, %v2114
      %v2723 = vmax.bf16 %v1827, %v2119
      %v2724 = vmax.bf16 %v1828, %v2124
      %v2725 = vmax.bf16 %v1829, %v2129
      %v2726 = vmax.bf16 %v1830, %v2134
      %v2727 = vmax.bf16 %v1831, %v2139
      %v2728 = vmax.bf16 %v1832, %v2144
      %v2729 = vmax.bf16 %v1833, %v2149
      %v2730 = vmax.bf16 %v1834, %v2154
      %v2731 = vmax.bf16 %v1835, %v2159
      %v2732 = vmax.bf16 %v1836, %v2164
      %v2733 = vmax.bf16 %v1837, %v2169
      %v2734 = vmax.bf16 %v1838, %v2174
      %v2735 = vmax.bf16 %v1839, %v2179
      %v2736 = vmax.bf16 %v1840, %v2184
      %v2737 = vmax.bf16 %v1841, %v2189
      %v2738 = vmax.bf16 %v1842, %v2194
      %v2739 = vmax.bf16 %v1843, %v2199
      %v2740 = vmax.bf16 %v1844, %v2204
      %v2741 = vmax.bf16 %v1845, %v2209
      %v2742 = vmax.bf16 %v1846, %v2214
      %v2743 = vmax.bf16 %v1847, %v2219
      %v2744 = vmax.bf16 %v1848, %v2224
      %v2745 = vmax.bf16 %v1849, %v2229
      %v2746 = vmax.bf16 %v1850, %v2234
      %v2747 = vmax.bf16 %v1851, %v2239
      %v2748 = vmax.bf16 %v1852, %v2244
      %v2749 = vmax.bf16 %v1853, %v2249
      %v2750 = vmax.bf16 %v1854, %v2254
      %v2751 = vmax.bf16 %v1855, %v2259
      %v2752 = vmax.bf16 %v1856, %v2264
      %v2753 = vmax.bf16 %v1857, %v2269
      %v2754 = vmax.bf16 %v1858, %v2274
      %v2755 = vmax.bf16 %v1859, %v2279
      %v2756 = vmax.bf16 %v1860, %v2284
      %v2757 = vmax.bf16 %v1861, %v2289
      %v2758 = vmax.bf16 %v1862, %v2294
      %v2759 = vmax.bf16 %v1863, %v2299
      %v2760 = vmax.bf16 %v1864, %v2304
      %v2761 = vmax.bf16 %v1865, %v2309
      %v2762 = vmax.bf16 %v1866, %v2314
      %v2763 = vmax.bf16 %v1867, %v2319
      %v2764 = vmax.bf16 %v1868, %v2324
      %v2765 = vmax.bf16 %v1869, %v2329
      %v2766 = vmax.bf16 %v1870, %v2334
      %v2767 = vmax.bf16 %v1871, %v2339
      %v2768 = vmax.bf16 %v1872, %v2344
      %v2769 = vmax.bf16 %v1873, %v2349
      %v2770 = vmax.bf16 %v1874, %v2354
      %v2771 = vmax.bf16 %v1875, %v2359
      %v2772 = vmax.bf16 %v1876, %v2364
      %v2773 = vmax.bf16 %v1877, %v2369
      %v2774 = vmax.bf16 %v1878, %v2374
      %v2775 = vmax.bf16 %v1879, %v2379
      %v2776 = vmax.bf16 %v1880, %v2384
      %v2777 = vmax.bf16 %v1881, %v2389
      %v2778 = vmax.bf16 %v1882, %v2394
      %v2779 = vmax.bf16 %v1883, %v2399
      %v2780 = vmax.bf16 %v1884, %v2404
      %v2781 = vmax.bf16 %v1885, %v2409
      %v2782 = vmax.bf16 %v1886, %v2414
      %v2783 = vmax.bf16 %v1887, %v2419
      %v2784 = vmax.bf16 %v1888, %v2424
      %v2785 = vmax.bf16 %v1889, %v2429
      %v2786 = vmax.bf16 %v1890, %v2434
      %v2787 = vmax.bf16 %v1891, %v2439
      %v2788 = vmax.bf16 %v1892, %v2444
      %v2789 = vmax.bf16 %v1893, %v2449
      %v2790 = vmax.bf16 %v1894, %v2454
      %v2791 = vmax.bf16 %v1895, %v2459
      %v2792 = vmax.bf16 %v1896, %v2464
      %v2793 = vmax.bf16 %v1897, %v2469
      %v2794 = vmax.bf16 %v1898, %v2474
      %v2795 = vmax.bf16 %v1899, %v2479
      %v2796 = vmax.bf16 %v1900, %v2484
      %v2797 = vmax.bf16 %v1901, %v2489
      %v2798 = vmax.bf16 %v1902, %v2494
      %v2799 = vmax.bf16 %v1903, %v2499
      %v2800 = vmax.bf16 %v1904, %v2504
      %v2801 = vmax.bf16 %v1905, %v2509
      %v2802 = vmax.bf16 %v1906, %v2514
      %v2803 = vmax.bf16 %v1907, %v2519
      %v2804 = vmax.bf16 %v1908, %v2524
      %v2805 = vmax.bf16 %v1909, %v2529
      %v2806 = vmax.bf16 %v1910, %v2534
      %v2807 = vmax.bf16 %v1911, %v2539
      %v2808 = vmax.bf16 %v1912, %v2544
      %v2809 = vmax.bf16 %v1913, %v2549
      %v2810 = vmax.bf16 %v1914, %v2554
      %v2811 = vld [vmem:[%s115] sm:$0x4]
      %v2812 = vld [vmem:[%s115 + $0x8] sm:$0x4]
      %v2813 = vld [vmem:[%s115 + $0x10] sm:$0x4]
      %v2814 = vld [vmem:[%s115 + $0x18] sm:$0x4]
      %v2815 = vld [vmem:[%s115 + $0x20] sm:$0x4]
      %v2816 = vld [vmem:[%s115 + $0x28] sm:$0x4]
      %v2817 = vld [vmem:[%s115 + $0x30] sm:$0x4]
      %v2818 = vld [vmem:[%s115 + $0x38] sm:$0x4]
      %v2819 = vld [vmem:[%s115 + $0x40] sm:$0x4]
      %v2820 = vld [vmem:[%s115 + $0x48] sm:$0x4]
      %v2821 = vld [vmem:[%s115 + $0x50] sm:$0x4]
      %v2822 = vld [vmem:[%s115 + $0x58] sm:$0x4]
      %v2823 = vld [vmem:[%s115 + $0x60] sm:$0x4]
      %v2824 = vld [vmem:[%s115 + $0x68] sm:$0x4]
      %v2825 = vld [vmem:[%s115 + $0x70] sm:$0x4]
      %v2826 = vld [vmem:[%s115 + $0x78] sm:$0x4]
      %v2827 = vld [vmem:[%s115 + $0x80] sm:$0x4]
      %v2828 = vld [vmem:[%s115 + $0x88] sm:$0x4]
      %v2829 = vld [vmem:[%s115 + $0x90] sm:$0x4]
      %v2830 = vld [vmem:[%s115 + $0x98] sm:$0x4]
      %v2831 = vld [vmem:[%s115 + $0xa0] sm:$0x4]
      %v2832 = vld [vmem:[%s115 + $0xa8] sm:$0x4]
      %v2833 = vld [vmem:[%s115 + $0xb0] sm:$0x4]
      %v2834 = vld [vmem:[%s115 + $0xb8] sm:$0x4]
      %v2835 = vld [vmem:[%s115 + $0xc0] sm:$0x4]
      %v2836 = vld [vmem:[%s115 + $0xc8] sm:$0x4]
      %v2837 = vld [vmem:[%s115 + $0xd0] sm:$0x4]
      %v2838 = vld [vmem:[%s115 + $0xd8] sm:$0x4]
      %v2839 = vld [vmem:[%s115 + $0xe0] sm:$0x4]
      %v2840 = vld [vmem:[%s115 + $0xe8] sm:$0x4]
      %v2841 = vld [vmem:[%s115 + $0xf0] sm:$0x4]
      %v2842 = vld [vmem:[%s115 + $0xf8] sm:$0x4]
      %v2843 = vld [vmem:[%s115 + $0x100] sm:$0x4]
      %v2844 = vld [vmem:[%s115 + $0x108] sm:$0x4]
      %v2845 = vld [vmem:[%s115 + $0x110] sm:$0x4]
      %v2846 = vld [vmem:[%s115 + $0x118] sm:$0x4]
      %v2847 = vld [vmem:[%s115 + $0x120] sm:$0x4]
      %v2848 = vld [vmem:[%s115 + $0x128] sm:$0x4]
      %v2849 = vld [vmem:[%s115 + $0x130] sm:$0x4]
      %v2850 = vld [vmem:[%s115 + $0x138] sm:$0x4]
      %v2851 = vld [vmem:[%s115 + $0x140] sm:$0x4]
      %v2852 = vld [vmem:[%s115 + $0x148] sm:$0x4]
      %v2853 = vld [vmem:[%s115 + $0x150] sm:$0x4]
      %v2854 = vld [vmem:[%s115 + $0x158] sm:$0x4]
      %v2855 = vld [vmem:[%s115 + $0x160] sm:$0x4]
      %v2856 = vld [vmem:[%s115 + $0x168] sm:$0x4]
      %v2857 = vld [vmem:[%s115 + $0x170] sm:$0x4]
      %v2858 = vld [vmem:[%s115 + $0x178] sm:$0x4]
      %v2859 = vld [vmem:[%s115 + $0x180] sm:$0x4]
      %v2860 = vld [vmem:[%s115 + $0x188] sm:$0x4]
      %v2861 = vld [vmem:[%s115 + $0x190] sm:$0x4]
      %v2862 = vld [vmem:[%s115 + $0x198] sm:$0x4]
      %v2863 = vld [vmem:[%s115 + $0x1a0] sm:$0x4]
      %v2864 = vld [vmem:[%s115 + $0x1a8] sm:$0x4]
      %v2865 = vld [vmem:[%s115 + $0x1b0] sm:$0x4]
      %v2866 = vld [vmem:[%s115 + $0x1b8] sm:$0x4]
      %v2867 = vld [vmem:[%s115 + $0x1c0] sm:$0x4]
      %v2868 = vld [vmem:[%s115 + $0x1c8] sm:$0x4]
      %v2869 = vld [vmem:[%s115 + $0x1d0] sm:$0x4]
      %v2870 = vld [vmem:[%s115 + $0x1d8] sm:$0x4]
      %v2871 = vld [vmem:[%s115 + $0x1e0] sm:$0x4]
      %v2872 = vld [vmem:[%s115 + $0x1e8] sm:$0x4]
      %v2873 = vld [vmem:[%s115 + $0x1f0] sm:$0x4]
      %v2874 = vld [vmem:[%s115 + $0x1f8] sm:$0x4]
      %v2875 = vld [vmem:[%s115 + $0x200] sm:$0x4]
      %v2876 = vld [vmem:[%s115 + $0x208] sm:$0x4]
      %v2877 = vld [vmem:[%s115 + $0x210] sm:$0x4]
      %v2878 = vld [vmem:[%s115 + $0x218] sm:$0x4]
      %v2879 = vld [vmem:[%s115 + $0x220] sm:$0x4]
      %v2880 = vld [vmem:[%s115 + $0x228] sm:$0x4]
      %v2881 = vld [vmem:[%s115 + $0x230] sm:$0x4]
      %v2882 = vld [vmem:[%s115 + $0x238] sm:$0x4]
      %v2883 = vld [vmem:[%s115 + $0x240] sm:$0x4]
      %v2884 = vld [vmem:[%s115 + $0x248] sm:$0x4]
      %v2885 = vld [vmem:[%s115 + $0x250] sm:$0x4]
      %v2886 = vld [vmem:[%s115 + $0x258] sm:$0x4]
      %v2887 = vld [vmem:[%s115 + $0x260] sm:$0x4]
      %v2888 = vld [vmem:[%s115 + $0x268] sm:$0x4]
      %v2889 = vld [vmem:[%s115 + $0x270] sm:$0x4]
      %v2890 = vld [vmem:[%s115 + $0x278] sm:$0x4]
      %v2891 = vld [vmem:[%s115 + $0x280] sm:$0x4]
      %v2892 = vld [vmem:[%s115 + $0x288] sm:$0x4]
      %v2893 = vld [vmem:[%s115 + $0x290] sm:$0x4]
      %v2894 = vld [vmem:[%s115 + $0x298] sm:$0x4]
      %v2895 = vld [vmem:[%s115 + $0x2a0] sm:$0x4]
      %v2896 = vld [vmem:[%s115 + $0x2a8] sm:$0x4]
      %v2897 = vld [vmem:[%s115 + $0x2b0] sm:$0x4]
      %v2898 = vld [vmem:[%s115 + $0x2b8] sm:$0x4]
      %v2899 = vld [vmem:[%s115 + $0x2c0] sm:$0x4]
      %v2900 = vld [vmem:[%s115 + $0x2c8] sm:$0x4]
      %v2901 = vld [vmem:[%s115 + $0x2d0] sm:$0x4]
      %v2902 = vld [vmem:[%s115 + $0x2d8] sm:$0x4]
      %v2903 = vld [vmem:[%s115 + $0x2e0] sm:$0x4]
      %v2904 = vld [vmem:[%s115 + $0x2e8] sm:$0x4]
      %v2905 = vld [vmem:[%s115 + $0x2f0] sm:$0x4]
      %v2906 = vld [vmem:[%s115 + $0x2f8] sm:$0x4]
      %v2907 = vld [vmem:[%s115 + $0x300] sm:$0x4]
      %v2908 = vld [vmem:[%s115 + $0x308] sm:$0x4]
      %v2909 = vld [vmem:[%s115 + $0x310] sm:$0x4]
      %v2910 = vld [vmem:[%s115 + $0x318] sm:$0x4]
      %v2911 = vld [vmem:[%s115 + $0x320] sm:$0x4]
      %v2912 = vld [vmem:[%s115 + $0x328] sm:$0x4]
      %v2913 = vld [vmem:[%s115 + $0x330] sm:$0x4]
      %v2914 = vld [vmem:[%s115 + $0x338] sm:$0x4]
      %v2915 = vld [vmem:[%s115 + $0x340] sm:$0x4]
      %v2916 = vld [vmem:[%s115 + $0x348] sm:$0x4]
      %v2917 = vld [vmem:[%s115 + $0x350] sm:$0x4]
      %v2918 = vld [vmem:[%s115 + $0x358] sm:$0x4]
      %v2919 = vld [vmem:[%s115 + $0x360] sm:$0x4]
      %v2920 = vld [vmem:[%s115 + $0x368] sm:$0x4]
      %v2921 = vld [vmem:[%s115 + $0x370] sm:$0x4]
      %v2922 = vld [vmem:[%s115 + $0x378] sm:$0x4]
      %v2923 = vld [vmem:[%s115 + $0x380] sm:$0x4]
      %v2924 = vld [vmem:[%s115 + $0x388] sm:$0x4]
      %v2925 = vld [vmem:[%s115 + $0x390] sm:$0x4]
      %v2926 = vld [vmem:[%s115 + $0x398] sm:$0x4]
      %v2927 = vld [vmem:[%s115 + $0x3a0] sm:$0x4]
      %v2928 = vld [vmem:[%s115 + $0x3a8] sm:$0x4]
      %v2929 = vld [vmem:[%s115 + $0x3b0] sm:$0x4]
      %v2930 = vld [vmem:[%s115 + $0x3b8] sm:$0x4]
      %v2931 = vld [vmem:[%s115 + $0x3c0] sm:$0x4]
      %v2932 = vld [vmem:[%s115 + $0x3c8] sm:$0x4]
      %v2933 = vld [vmem:[%s115 + $0x3d0] sm:$0x4]
      %v2934 = vld [vmem:[%s115 + $0x3d8] sm:$0x4]
      %v2935 = vld [vmem:[%s115 + $0x3e0] sm:$0x4]
      %v2936 = vld [vmem:[%s115 + $0x3e8] sm:$0x4]
      %v2937 = vld [vmem:[%s115 + $0x3f0] sm:$0x4]
      %v2938 = vld [vmem:[%s115 + $0x3f8] sm:$0x4]
      %v3067 = vrot.slane %v2811, 6
      %v3068 = vrot.slane %v3067, 4
      %v3069 = vrot.slane %v2812, 6
      %v3070 = vrot.slane %v3069, 4
      %v3071 = vrot.slane %v2813, 6
      %v3072 = vrot.slane %v3071, 4
      %v3073 = vrot.slane %v2814, 6
      %v3074 = vrot.slane %v3073, 4
      %v3075 = vrot.slane %v2815, 6
      %v3076 = vrot.slane %v3075, 4
      %v3077 = vrot.slane %v2816, 6
      %v3078 = vrot.slane %v3077, 4
      %v3079 = vrot.slane %v2817, 6
      %v3080 = vrot.slane %v3079, 4
      %v3081 = vrot.slane %v2818, 6
      %v3082 = vrot.slane %v3081, 4
      %v3083 = vrot.slane %v2819, 6
      %v3084 = vrot.slane %v3083, 4
      %v3085 = vrot.slane %v2820, 6
      %v3086 = vrot.slane %v3085, 4
      %v3087 = vrot.slane %v2821, 6
      %v3088 = vrot.slane %v3087, 4
      %v3089 = vrot.slane %v2822, 6
      %v3090 = vrot.slane %v3089, 4
      %v3091 = vrot.slane %v2823, 6
      %v3092 = vrot.slane %v3091, 4
      %v3093 = vrot.slane %v2824, 6
      %v3094 = vrot.slane %v3093, 4
      %v3095 = vrot.slane %v2825, 6
      %v3096 = vrot.slane %v3095, 4
      %v3097 = vrot.slane %v2826, 6
      %v3098 = vrot.slane %v3097, 4
      %v3099 = vrot.slane %v2827, 6
      %v3100 = vrot.slane %v3099, 4
      %v3101 = vrot.slane %v2828, 6
      %v3102 = vrot.slane %v3101, 4
      %v3103 = vrot.slane %v2829, 6
      %v3104 = vrot.slane %v3103, 4
      %v3105 = vrot.slane %v2830, 6
      %v3106 = vrot.slane %v3105, 4
      %v3107 = vrot.slane %v2831, 6
      %v3108 = vrot.slane %v3107, 4
      %v3109 = vrot.slane %v2832, 6
      %v3110 = vrot.slane %v3109, 4
      %v3111 = vrot.slane %v2833, 6
      %v3112 = vrot.slane %v3111, 4
      %v3113 = vrot.slane %v2834, 6
      %v3114 = vrot.slane %v3113, 4
      %v3115 = vrot.slane %v2835, 6
      %v3116 = vrot.slane %v3115, 4
      %v3117 = vrot.slane %v2836, 6
      %v3118 = vrot.slane %v3117, 4
      %v3119 = vrot.slane %v2837, 6
      %v3120 = vrot.slane %v3119, 4
      %v3121 = vrot.slane %v2838, 6
      %v3122 = vrot.slane %v3121, 4
      %v3123 = vrot.slane %v2839, 6
      %v3124 = vrot.slane %v3123, 4
      %v3125 = vrot.slane %v2840, 6
      %v3126 = vrot.slane %v3125, 4
      %v3127 = vrot.slane %v2841, 6
      %v3128 = vrot.slane %v3127, 4
      %v3129 = vrot.slane %v2842, 6
      %v3130 = vrot.slane %v3129, 4
      %v3131 = vrot.slane %v2843, 6
      %v3132 = vrot.slane %v3131, 4
      %v3133 = vrot.slane %v2844, 6
      %v3134 = vrot.slane %v3133, 4
      %v3135 = vrot.slane %v2845, 6
      %v3136 = vrot.slane %v3135, 4
      %v3137 = vrot.slane %v2846, 6
      %v3138 = vrot.slane %v3137, 4
      %v3139 = vrot.slane %v2847, 6
      %v3140 = vrot.slane %v3139, 4
      %v3141 = vrot.slane %v2848, 6
      %v3142 = vrot.slane %v3141, 4
      %v3143 = vrot.slane %v2849, 6
      %v3144 = vrot.slane %v3143, 4
      %v3145 = vrot.slane %v2850, 6
      %v3146 = vrot.slane %v3145, 4
      %v3147 = vrot.slane %v2851, 6
      %v3148 = vrot.slane %v3147, 4
      %v3149 = vrot.slane %v2852, 6
      %v3150 = vrot.slane %v3149, 4
      %v3151 = vrot.slane %v2853, 6
      %v3152 = vrot.slane %v3151, 4
      %v3153 = vrot.slane %v2854, 6
      %v3154 = vrot.slane %v3153, 4
      %v3155 = vrot.slane %v2855, 6
      %v3156 = vrot.slane %v3155, 4
      %v3157 = vrot.slane %v2856, 6
      %v3158 = vrot.slane %v3157, 4
      %v3159 = vrot.slane %v2857, 6
      %v3160 = vrot.slane %v3159, 4
      %v3161 = vrot.slane %v2858, 6
      %v3162 = vrot.slane %v3161, 4
      %v3163 = vrot.slane %v2859, 6
      %v3164 = vrot.slane %v3163, 4
      %v3165 = vrot.slane %v2860, 6
      %v3166 = vrot.slane %v3165, 4
      %v3167 = vrot.slane %v2861, 6
      %v3168 = vrot.slane %v3167, 4
      %v3169 = vrot.slane %v2862, 6
      %v3170 = vrot.slane %v3169, 4
      %v3171 = vrot.slane %v2863, 6
      %v3172 = vrot.slane %v3171, 4
      %v3173 = vrot.slane %v2864, 6
      %v3174 = vrot.slane %v3173, 4
      %v3175 = vrot.slane %v2865, 6
      %v3176 = vrot.slane %v3175, 4
      %v3177 = vrot.slane %v2866, 6
      %v3178 = vrot.slane %v3177, 4
      %v3179 = vrot.slane %v2867, 6
      %v3180 = vrot.slane %v3179, 4
      %v3181 = vrot.slane %v2868, 6
      %v3182 = vrot.slane %v3181, 4
      %v3183 = vrot.slane %v2869, 6
      %v3184 = vrot.slane %v3183, 4
      %v3185 = vrot.slane %v2870, 6
      %v3186 = vrot.slane %v3185, 4
      %v3187 = vrot.slane %v2871, 6
      %v3188 = vrot.slane %v3187, 4
      %v3189 = vrot.slane %v2872, 6
      %v3190 = vrot.slane %v3189, 4
      %v3191 = vrot.slane %v2873, 6
      %v3192 = vrot.slane %v3191, 4
      %v3193 = vrot.slane %v2874, 6
      %v3194 = vrot.slane %v3193, 4
      %v3195 = vrot.slane %v2875, 6
      %v3196 = vrot.slane %v3195, 4
      %v3197 = vrot.slane %v2876, 6
      %v3198 = vrot.slane %v3197, 4
      %v3199 = vrot.slane %v2877, 6
      %v3200 = vrot.slane %v3199, 4
      %v3201 = vrot.slane %v2878, 6
      %v3202 = vrot.slane %v3201, 4
      %v3203 = vrot.slane %v2879, 6
      %v3204 = vrot.slane %v3203, 4
      %v3205 = vrot.slane %v2880, 6
      %v3206 = vrot.slane %v3205, 4
      %v3207 = vrot.slane %v2881, 6
      %v3208 = vrot.slane %v3207, 4
      %v3209 = vrot.slane %v2882, 6
      %v3210 = vrot.slane %v3209, 4
      %v3211 = vrot.slane %v2883, 6
      %v3212 = vrot.slane %v3211, 4
      %v3213 = vrot.slane %v2884, 6
      %v3214 = vrot.slane %v3213, 4
      %v3215 = vrot.slane %v2885, 6
      %v3216 = vrot.slane %v3215, 4
      %v3217 = vrot.slane %v2886, 6
      %v3218 = vrot.slane %v3217, 4
      %v3219 = vrot.slane %v2887, 6
      %v3220 = vrot.slane %v3219, 4
      %v3221 = vrot.slane %v2888, 6
      %v3222 = vrot.slane %v3221, 4
      %v3223 = vrot.slane %v2889, 6
      %v3224 = vrot.slane %v3223, 4
      %v3225 = vrot.slane %v2890, 6
      %v3226 = vrot.slane %v3225, 4
      %v3227 = vrot.slane %v2891, 6
      %v3228 = vrot.slane %v3227, 4
      %v3229 = vrot.slane %v2892, 6
      %v3230 = vrot.slane %v3229, 4
      %v3231 = vrot.slane %v2893, 6
      %v3232 = vrot.slane %v3231, 4
      %v3233 = vrot.slane %v2894, 6
      %v3234 = vrot.slane %v3233, 4
      %v3235 = vrot.slane %v2895, 6
      %v3236 = vrot.slane %v3235, 4
      %v3237 = vrot.slane %v2896, 6
      %v3238 = vrot.slane %v3237, 4
      %v3239 = vrot.slane %v2897, 6
      %v3240 = vrot.slane %v3239, 4
      %v3241 = vrot.slane %v2898, 6
      %v3242 = vrot.slane %v3241, 4
      %v3243 = vrot.slane %v2899, 6
      %v3244 = vrot.slane %v3243, 4
      %v3245 = vrot.slane %v2900, 6
      %v3246 = vrot.slane %v3245, 4
      %v3247 = vrot.slane %v2901, 6
      %v3248 = vrot.slane %v3247, 4
      %v3249 = vrot.slane %v2902, 6
      %v3250 = vrot.slane %v3249, 4
      %v3251 = vrot.slane %v2903, 6
      %v3252 = vrot.slane %v3251, 4
      %v3253 = vrot.slane %v2904, 6
      %v3254 = vrot.slane %v3253, 4
      %v3255 = vrot.slane %v2905, 6
      %v3256 = vrot.slane %v3255, 4
      %v3257 = vrot.slane %v2906, 6
      %v3258 = vrot.slane %v3257, 4
      %v3259 = vrot.slane %v2907, 6
      %v3260 = vrot.slane %v3259, 4
      %v3261 = vrot.slane %v2908, 6
      %v3262 = vrot.slane %v3261, 4
      %v3263 = vrot.slane %v2909, 6
      %v3264 = vrot.slane %v3263, 4
      %v3265 = vrot.slane %v2910, 6
      %v3266 = vrot.slane %v3265, 4
      %v3267 = vrot.slane %v2911, 6
      %v3268 = vrot.slane %v3267, 4
      %v3269 = vrot.slane %v2912, 6
      %v3270 = vrot.slane %v3269, 4
      %v3271 = vrot.slane %v2913, 6
      %v3272 = vrot.slane %v3271, 4
      %v3273 = vrot.slane %v2914, 6
      %v3274 = vrot.slane %v3273, 4
      %v3275 = vrot.slane %v2915, 6
      %v3276 = vrot.slane %v3275, 4
      %v3277 = vrot.slane %v2916, 6
      %v3278 = vrot.slane %v3277, 4
      %v3279 = vrot.slane %v2917, 6
      %v3280 = vrot.slane %v3279, 4
      %v3281 = vrot.slane %v2918, 6
      %v3282 = vrot.slane %v3281, 4
      %v3283 = vrot.slane %v2919, 6
      %v3284 = vrot.slane %v3283, 4
      %v3285 = vrot.slane %v2920, 6
      %v3286 = vrot.slane %v3285, 4
      %v3287 = vrot.slane %v2921, 6
      %v3288 = vrot.slane %v3287, 4
      %v3289 = vrot.slane %v2922, 6
      %v3290 = vrot.slane %v3289, 4
      %v3291 = vrot.slane %v2923, 6
      %v3292 = vrot.slane %v3291, 4
      %v3293 = vrot.slane %v2924, 6
      %v3294 = vrot.slane %v3293, 4
      %v3295 = vrot.slane %v2925, 6
      %v3296 = vrot.slane %v3295, 4
      %v3297 = vrot.slane %v2926, 6
      %v3298 = vrot.slane %v3297, 4
      %v3299 = vrot.slane %v2927, 6
      %v3300 = vrot.slane %v3299, 4
      %v3301 = vrot.slane %v2928, 6
      %v3302 = vrot.slane %v3301, 4
      %v3303 = vrot.slane %v2929, 6
      %v3304 = vrot.slane %v3303, 4
      %v3305 = vrot.slane %v2930, 6
      %v3306 = vrot.slane %v3305, 4
      %v3307 = vrot.slane %v2931, 6
      %v3308 = vrot.slane %v3307, 4
      %v3309 = vrot.slane %v2932, 6
      %v3310 = vrot.slane %v3309, 4
      %v3311 = vrot.slane %v2933, 6
      %v3312 = vrot.slane %v3311, 4
      %v3313 = vrot.slane %v2934, 6
      %v3314 = vrot.slane %v3313, 4
      %v3315 = vrot.slane %v2935, 6
      %v3316 = vrot.slane %v3315, 4
      %v3317 = vrot.slane %v2936, 6
      %v3318 = vrot.slane %v3317, 4
      %v3319 = vrot.slane %v2937, 6
      %v3320 = vrot.slane %v3319, 4
      %v3321 = vrot.slane %v2938, 6
      %v3322 = vrot.slane %v3321, 4
      %v3451 = vmax.bf16 %v2683, %v3068
      %v3452 = vmax.bf16 %v2684, %v3070
      %v3453 = vmax.bf16 %v2685, %v3072
      %v3454 = vmax.bf16 %v2686, %v3074
      %v3455 = vmax.bf16 %v2687, %v3076
      %v3456 = vmax.bf16 %v2688, %v3078
      %v3457 = vmax.bf16 %v2689, %v3080
      %v3458 = vmax.bf16 %v2690, %v3082
      %v3459 = vmax.bf16 %v2691, %v3084
      %v3460 = vmax.bf16 %v2692, %v3086
      %v3461 = vmax.bf16 %v2693, %v3088
      %v3462 = vmax.bf16 %v2694, %v3090
      %v3463 = vmax.bf16 %v2695, %v3092
      %v3464 = vmax.bf16 %v2696, %v3094
      %v3465 = vmax.bf16 %v2697, %v3096
      %v3466 = vmax.bf16 %v2698, %v3098
      %v3467 = vmax.bf16 %v2699, %v3100
      %v3468 = vmax.bf16 %v2700, %v3102
      %v3469 = vmax.bf16 %v2701, %v3104
      %v3470 = vmax.bf16 %v2702, %v3106
      %v3471 = vmax.bf16 %v2703, %v3108
      %v3472 = vmax.bf16 %v2704, %v3110
      %v3473 = vmax.bf16 %v2705, %v3112
      %v3474 = vmax.bf16 %v2706, %v3114
      %v3475 = vmax.bf16 %v2707, %v3116
      %v3476 = vmax.bf16 %v2708, %v3118
      %v3477 = vmax.bf16 %v2709, %v3120
      %v3478 = vmax.bf16 %v2710, %v3122
      %v3479 = vmax.bf16 %v2711, %v3124
      %v3480 = vmax.bf16 %v2712, %v3126
      %v3481 = vmax.bf16 %v2713, %v3128
      %v3482 = vmax.bf16 %v2714, %v3130
      %v3483 = vmax.bf16 %v2715, %v3132
      %v3484 = vmax.bf16 %v2716, %v3134
      %v3485 = vmax.bf16 %v2717, %v3136
      %v3486 = vmax.bf16 %v2718, %v3138
      %v3487 = vmax.bf16 %v2719, %v3140
      %v3488 = vmax.bf16 %v2720, %v3142
      %v3489 = vmax.bf16 %v2721, %v3144
      %v3490 = vmax.bf16 %v2722, %v3146
      %v3491 = vmax.bf16 %v2723, %v3148
      %v3492 = vmax.bf16 %v2724, %v3150
      %v3493 = vmax.bf16 %v2725, %v3152
      %v3494 = vmax.bf16 %v2726, %v3154
      %v3495 = vmax.bf16 %v2727, %v3156
      %v3496 = vmax.bf16 %v2728, %v3158
      %v3497 = vmax.bf16 %v2729, %v3160
      %v3498 = vmax.bf16 %v2730, %v3162
      %v3499 = vmax.bf16 %v2731, %v3164
      %v3500 = vmax.bf16 %v2732, %v3166
      %v3501 = vmax.bf16 %v2733, %v3168
      %v3502 = vmax.bf16 %v2734, %v3170
      %v3503 = vmax.bf16 %v2735, %v3172
      %v3504 = vmax.bf16 %v2736, %v3174
      %v3505 = vmax.bf16 %v2737, %v3176
      %v3506 = vmax.bf16 %v2738, %v3178
      %v3507 = vmax.bf16 %v2739, %v3180
      %v3508 = vmax.bf16 %v2740, %v3182
      %v3509 = vmax.bf16 %v2741, %v3184
      %v3510 = vmax.bf16 %v2742, %v3186
      %v3511 = vmax.bf16 %v2743, %v3188
      %v3512 = vmax.bf16 %v2744, %v3190
      %v3513 = vmax.bf16 %v2745, %v3192
      %v3514 = vmax.bf16 %v2746, %v3194
      %v3515 = vmax.bf16 %v2747, %v3196
      %v3516 = vmax.bf16 %v2748, %v3198
      %v3517 = vmax.bf16 %v2749, %v3200
      %v3518 = vmax.bf16 %v2750, %v3202
      %v3519 = vmax.bf16 %v2751, %v3204
      %v3520 = vmax.bf16 %v2752, %v3206
      %v3521 = vmax.bf16 %v2753, %v3208
      %v3522 = vmax.bf16 %v2754, %v3210
      %v3523 = vmax.bf16 %v2755, %v3212
      %v3524 = vmax.bf16 %v2756, %v3214
      %v3525 = vmax.bf16 %v2757, %v3216
      %v3526 = vmax.bf16 %v2758, %v3218
      %v3527 = vmax.bf16 %v2759, %v3220
      %v3528 = vmax.bf16 %v2760, %v3222
      %v3529 = vmax.bf16 %v2761, %v3224
      %v3530 = vmax.bf16 %v2762, %v3226
      %v3531 = vmax.bf16 %v2763, %v3228
      %v3532 = vmax.bf16 %v2764, %v3230
      %v3533 = vmax.bf16 %v2765, %v3232
      %v3534 = vmax.bf16 %v2766, %v3234
      %v3535 = vmax.bf16 %v2767, %v3236
      %v3536 = vmax.bf16 %v2768, %v3238
      %v3537 = vmax.bf16 %v2769, %v3240
      %v3538 = vmax.bf16 %v2770, %v3242
      %v3539 = vmax.bf16 %v2771, %v3244
      %v3540 = vmax.bf16 %v2772, %v3246
      %v3541 = vmax.bf16 %v2773, %v3248
      %v3542 = vmax.bf16 %v2774, %v3250
      %v3543 = vmax.bf16 %v2775, %v3252
      %v3544 = vmax.bf16 %v2776, %v3254
      %v3545 = vmax.bf16 %v2777, %v3256
      %v3546 = vmax.bf16 %v2778, %v3258
      %v3547 = vmax.bf16 %v2779, %v3260
      %v3548 = vmax.bf16 %v2780, %v3262
      %v3549 = vmax.bf16 %v2781, %v3264
      %v3550 = vmax.bf16 %v2782, %v3266
      %v3551 = vmax.bf16 %v2783, %v3268
      %v3552 = vmax.bf16 %v2784, %v3270
      %v3553 = vmax.bf16 %v2785, %v3272
      %v3554 = vmax.bf16 %v2786, %v3274
      %v3555 = vmax.bf16 %v2787, %v3276
      %v3556 = vmax.bf16 %v2788, %v3278
      %v3557 = vmax.bf16 %v2789, %v3280
      %v3558 = vmax.bf16 %v2790, %v3282
      %v3559 = vmax.bf16 %v2791, %v3284
      %v3560 = vmax.bf16 %v2792, %v3286
      %v3561 = vmax.bf16 %v2793, %v3288
      %v3562 = vmax.bf16 %v2794, %v3290
      %v3563 = vmax.bf16 %v2795, %v3292
      %v3564 = vmax.bf16 %v2796, %v3294
      %v3565 = vmax.bf16 %v2797, %v3296
      %v3566 = vmax.bf16 %v2798, %v3298
      %v3567 = vmax.bf16 %v2799, %v3300
      %v3568 = vmax.bf16 %v2800, %v3302
      %v3569 = vmax.bf16 %v2801, %v3304
      %v3570 = vmax.bf16 %v2802, %v3306
      %v3571 = vmax.bf16 %v2803, %v3308
      %v3572 = vmax.bf16 %v2804, %v3310
      %v3573 = vmax.bf16 %v2805, %v3312
      %v3574 = vmax.bf16 %v2806, %v3314
      %v3575 = vmax.bf16 %v2807, %v3316
      %v3576 = vmax.bf16 %v2808, %v3318
      %v3577 = vmax.bf16 %v2809, %v3320
      %v3578 = vmax.bf16 %v2810, %v3322
      %v3580 = vshrl.u32 %v2811, 16
      %v3582 = vrot.slane %v3580, 6
      %v3583 = vrot.slane %v3582, 4
      %v3585 = vshrl.u32 %v2812, 16
      %v3587 = vrot.slane %v3585, 6
      %v3588 = vrot.slane %v3587, 4
      %v3590 = vshrl.u32 %v2813, 16
      %v3592 = vrot.slane %v3590, 6
      %v3593 = vrot.slane %v3592, 4
      %v3595 = vshrl.u32 %v2814, 16
      %v3597 = vrot.slane %v3595, 6
      %v3598 = vrot.slane %v3597, 4
      %v3600 = vshrl.u32 %v2815, 16
      %v3602 = vrot.slane %v3600, 6
      %v3603 = vrot.slane %v3602, 4
      %v3605 = vshrl.u32 %v2816, 16
      %v3607 = vrot.slane %v3605, 6
      %v3608 = vrot.slane %v3607, 4
      %v3610 = vshrl.u32 %v2817, 16
      %v3612 = vrot.slane %v3610, 6
      %v3613 = vrot.slane %v3612, 4
      %v3615 = vshrl.u32 %v2818, 16
      %v3617 = vrot.slane %v3615, 6
      %v3618 = vrot.slane %v3617, 4
      %v3620 = vshrl.u32 %v2819, 16
      %v3622 = vrot.slane %v3620, 6
      %v3623 = vrot.slane %v3622, 4
      %v3625 = vshrl.u32 %v2820, 16
      %v3627 = vrot.slane %v3625, 6
      %v3628 = vrot.slane %v3627, 4
      %v3630 = vshrl.u32 %v2821, 16
      %v3632 = vrot.slane %v3630, 6
      %v3633 = vrot.slane %v3632, 4
      %v3635 = vshrl.u32 %v2822, 16
      %v3637 = vrot.slane %v3635, 6
      %v3638 = vrot.slane %v3637, 4
      %v3640 = vshrl.u32 %v2823, 16
      %v3642 = vrot.slane %v3640, 6
      %v3643 = vrot.slane %v3642, 4
      %v3645 = vshrl.u32 %v2824, 16
      %v3647 = vrot.slane %v3645, 6
      %v3648 = vrot.slane %v3647, 4
      %v3650 = vshrl.u32 %v2825, 16
      %v3652 = vrot.slane %v3650, 6
      %v3653 = vrot.slane %v3652, 4
      %v3655 = vshrl.u32 %v2826, 16
      %v3657 = vrot.slane %v3655, 6
      %v3658 = vrot.slane %v3657, 4
      %v3660 = vshrl.u32 %v2827, 16
      %v3662 = vrot.slane %v3660, 6
      %v3663 = vrot.slane %v3662, 4
      %v3665 = vshrl.u32 %v2828, 16
      %v3667 = vrot.slane %v3665, 6
      %v3668 = vrot.slane %v3667, 4
      %v3670 = vshrl.u32 %v2829, 16
      %v3672 = vrot.slane %v3670, 6
      %v3673 = vrot.slane %v3672, 4
      %v3675 = vshrl.u32 %v2830, 16
      %v3677 = vrot.slane %v3675, 6
      %v3678 = vrot.slane %v3677, 4
      %v3680 = vshrl.u32 %v2831, 16
      %v3682 = vrot.slane %v3680, 6
      %v3683 = vrot.slane %v3682, 4
      %v3685 = vshrl.u32 %v2832, 16
      %v3687 = vrot.slane %v3685, 6
      %v3688 = vrot.slane %v3687, 4
      %v3690 = vshrl.u32 %v2833, 16
      %v3692 = vrot.slane %v3690, 6
      %v3693 = vrot.slane %v3692, 4
      %v3695 = vshrl.u32 %v2834, 16
      %v3697 = vrot.slane %v3695, 6
      %v3698 = vrot.slane %v3697, 4
      %v3700 = vshrl.u32 %v2835, 16
      %v3702 = vrot.slane %v3700, 6
      %v3703 = vrot.slane %v3702, 4
      %v3705 = vshrl.u32 %v2836, 16
      %v3707 = vrot.slane %v3705, 6
      %v3708 = vrot.slane %v3707, 4
      %v3710 = vshrl.u32 %v2837, 16
      %v3712 = vrot.slane %v3710, 6
      %v3713 = vrot.slane %v3712, 4
      %v3715 = vshrl.u32 %v2838, 16
      %v3717 = vrot.slane %v3715, 6
      %v3718 = vrot.slane %v3717, 4
      %v3720 = vshrl.u32 %v2839, 16
      %v3722 = vrot.slane %v3720, 6
      %v3723 = vrot.slane %v3722, 4
      %v3725 = vshrl.u32 %v2840, 16
      %v3727 = vrot.slane %v3725, 6
      %v3728 = vrot.slane %v3727, 4
      %v3730 = vshrl.u32 %v2841, 16
      %v3732 = vrot.slane %v3730, 6
      %v3733 = vrot.slane %v3732, 4
      %v3735 = vshrl.u32 %v2842, 16
      %v3737 = vrot.slane %v3735, 6
      %v3738 = vrot.slane %v3737, 4
      %v3740 = vshrl.u32 %v2843, 16
      %v3742 = vrot.slane %v3740, 6
      %v3743 = vrot.slane %v3742, 4
      %v3745 = vshrl.u32 %v2844, 16
      %v3747 = vrot.slane %v3745, 6
      %v3748 = vrot.slane %v3747, 4
      %v3750 = vshrl.u32 %v2845, 16
      %v3752 = vrot.slane %v3750, 6
      %v3753 = vrot.slane %v3752, 4
      %v3755 = vshrl.u32 %v2846, 16
      %v3757 = vrot.slane %v3755, 6
      %v3758 = vrot.slane %v3757, 4
      %v3760 = vshrl.u32 %v2847, 16
      %v3762 = vrot.slane %v3760, 6
      %v3763 = vrot.slane %v3762, 4
      %v3765 = vshrl.u32 %v2848, 16
      %v3767 = vrot.slane %v3765, 6
      %v3768 = vrot.slane %v3767, 4
      %v3770 = vshrl.u32 %v2849, 16
      %v3772 = vrot.slane %v3770, 6
      %v3773 = vrot.slane %v3772, 4
      %v3775 = vshrl.u32 %v2850, 16
      %v3777 = vrot.slane %v3775, 6
      %v3778 = vrot.slane %v3777, 4
      %v3780 = vshrl.u32 %v2851, 16
      %v3782 = vrot.slane %v3780, 6
      %v3783 = vrot.slane %v3782, 4
      %v3785 = vshrl.u32 %v2852, 16
      %v3787 = vrot.slane %v3785, 6
      %v3788 = vrot.slane %v3787, 4
      %v3790 = vshrl.u32 %v2853, 16
      %v3792 = vrot.slane %v3790, 6
      %v3793 = vrot.slane %v3792, 4
      %v3795 = vshrl.u32 %v2854, 16
      %v3797 = vrot.slane %v3795, 6
      %v3798 = vrot.slane %v3797, 4
      %v3800 = vshrl.u32 %v2855, 16
      %v3802 = vrot.slane %v3800, 6
      %v3803 = vrot.slane %v3802, 4
      %v3805 = vshrl.u32 %v2856, 16
      %v3807 = vrot.slane %v3805, 6
      %v3808 = vrot.slane %v3807, 4
      %v3810 = vshrl.u32 %v2857, 16
      %v3812 = vrot.slane %v3810, 6
      %v3813 = vrot.slane %v3812, 4
      %v3815 = vshrl.u32 %v2858, 16
      %v3817 = vrot.slane %v3815, 6
      %v3818 = vrot.slane %v3817, 4
      %v3820 = vshrl.u32 %v2859, 16
      %v3822 = vrot.slane %v3820, 6
      %v3823 = vrot.slane %v3822, 4
      %v3825 = vshrl.u32 %v2860, 16
      %v3827 = vrot.slane %v3825, 6
      %v3828 = vrot.slane %v3827, 4
      %v3830 = vshrl.u32 %v2861, 16
      %v3832 = vrot.slane %v3830, 6
      %v3833 = vrot.slane %v3832, 4
      %v3835 = vshrl.u32 %v2862, 16
      %v3837 = vrot.slane %v3835, 6
      %v3838 = vrot.slane %v3837, 4
      %v3840 = vshrl.u32 %v2863, 16
      %v3842 = vrot.slane %v3840, 6
      %v3843 = vrot.slane %v3842, 4
      %v3845 = vshrl.u32 %v2864, 16
      %v3847 = vrot.slane %v3845, 6
      %v3848 = vrot.slane %v3847, 4
      %v3850 = vshrl.u32 %v2865, 16
      %v3852 = vrot.slane %v3850, 6
      %v3853 = vrot.slane %v3852, 4
      %v3855 = vshrl.u32 %v2866, 16
      %v3857 = vrot.slane %v3855, 6
      %v3858 = vrot.slane %v3857, 4
      %v3860 = vshrl.u32 %v2867, 16
      %v3862 = vrot.slane %v3860, 6
      %v3863 = vrot.slane %v3862, 4
      %v3865 = vshrl.u32 %v2868, 16
      %v3867 = vrot.slane %v3865, 6
      %v3868 = vrot.slane %v3867, 4
      %v3870 = vshrl.u32 %v2869, 16
      %v3872 = vrot.slane %v3870, 6
      %v3873 = vrot.slane %v3872, 4
      %v3875 = vshrl.u32 %v2870, 16
      %v3877 = vrot.slane %v3875, 6
      %v3878 = vrot.slane %v3877, 4
      %v3880 = vshrl.u32 %v2871, 16
      %v3882 = vrot.slane %v3880, 6
      %v3883 = vrot.slane %v3882, 4
      %v3885 = vshrl.u32 %v2872, 16
      %v3887 = vrot.slane %v3885, 6
      %v3888 = vrot.slane %v3887, 4
      %v3890 = vshrl.u32 %v2873, 16
      %v3892 = vrot.slane %v3890, 6
      %v3893 = vrot.slane %v3892, 4
      %v3895 = vshrl.u32 %v2874, 16
      %v3897 = vrot.slane %v3895, 6
      %v3898 = vrot.slane %v3897, 4
      %v3900 = vshrl.u32 %v2875, 16
      %v3902 = vrot.slane %v3900, 6
      %v3903 = vrot.slane %v3902, 4
      %v3905 = vshrl.u32 %v2876, 16
      %v3907 = vrot.slane %v3905, 6
      %v3908 = vrot.slane %v3907, 4
      %v3910 = vshrl.u32 %v2877, 16
      %v3912 = vrot.slane %v3910, 6
      %v3913 = vrot.slane %v3912, 4
      %v3915 = vshrl.u32 %v2878, 16
      %v3917 = vrot.slane %v3915, 6
      %v3918 = vrot.slane %v3917, 4
      %v3920 = vshrl.u32 %v2879, 16
      %v3922 = vrot.slane %v3920, 6
      %v3923 = vrot.slane %v3922, 4
      %v3925 = vshrl.u32 %v2880, 16
      %v3927 = vrot.slane %v3925, 6
      %v3928 = vrot.slane %v3927, 4
      %v3930 = vshrl.u32 %v2881, 16
      %v3932 = vrot.slane %v3930, 6
      %v3933 = vrot.slane %v3932, 4
      %v3935 = vshrl.u32 %v2882, 16
      %v3937 = vrot.slane %v3935, 6
      %v3938 = vrot.slane %v3937, 4
      %v3940 = vshrl.u32 %v2883, 16
      %v3942 = vrot.slane %v3940, 6
      %v3943 = vrot.slane %v3942, 4
      %v3945 = vshrl.u32 %v2884, 16
      %v3947 = vrot.slane %v3945, 6
      %v3948 = vrot.slane %v3947, 4
      %v3950 = vshrl.u32 %v2885, 16
      %v3952 = vrot.slane %v3950, 6
      %v3953 = vrot.slane %v3952, 4
      %v3955 = vshrl.u32 %v2886, 16
      %v3957 = vrot.slane %v3955, 6
      %v3958 = vrot.slane %v3957, 4
      %v3960 = vshrl.u32 %v2887, 16
      %v3962 = vrot.slane %v3960, 6
      %v3963 = vrot.slane %v3962, 4
      %v3965 = vshrl.u32 %v2888, 16
      %v3967 = vrot.slane %v3965, 6
      %v3968 = vrot.slane %v3967, 4
      %v3970 = vshrl.u32 %v2889, 16
      %v3972 = vrot.slane %v3970, 6
      %v3973 = vrot.slane %v3972, 4
      %v3975 = vshrl.u32 %v2890, 16
      %v3977 = vrot.slane %v3975, 6
      %v3978 = vrot.slane %v3977, 4
      %v3980 = vshrl.u32 %v2891, 16
      %v3982 = vrot.slane %v3980, 6
      %v3983 = vrot.slane %v3982, 4
      %v3985 = vshrl.u32 %v2892, 16
      %v3987 = vrot.slane %v3985, 6
      %v3988 = vrot.slane %v3987, 4
      %v3990 = vshrl.u32 %v2893, 16
      %v3992 = vrot.slane %v3990, 6
      %v3993 = vrot.slane %v3992, 4
      %v3995 = vshrl.u32 %v2894, 16
      %v3997 = vrot.slane %v3995, 6
      %v3998 = vrot.slane %v3997, 4
      %v4000 = vshrl.u32 %v2895, 16
      %v4002 = vrot.slane %v4000, 6
      %v4003 = vrot.slane %v4002, 4
      %v4005 = vshrl.u32 %v2896, 16
      %v4007 = vrot.slane %v4005, 6
      %v4008 = vrot.slane %v4007, 4
      %v4010 = vshrl.u32 %v2897, 16
      %v4012 = vrot.slane %v4010, 6
      %v4013 = vrot.slane %v4012, 4
      %v4015 = vshrl.u32 %v2898, 16
      %v4017 = vrot.slane %v4015, 6
      %v4018 = vrot.slane %v4017, 4
      %v4020 = vshrl.u32 %v2899, 16
      %v4022 = vrot.slane %v4020, 6
      %v4023 = vrot.slane %v4022, 4
      %v4025 = vshrl.u32 %v2900, 16
      %v4027 = vrot.slane %v4025, 6
      %v4028 = vrot.slane %v4027, 4
      %v4030 = vshrl.u32 %v2901, 16
      %v4032 = vrot.slane %v4030, 6
      %v4033 = vrot.slane %v4032, 4
      %v4035 = vshrl.u32 %v2902, 16
      %v4037 = vrot.slane %v4035, 6
      %v4038 = vrot.slane %v4037, 4
      %v4040 = vshrl.u32 %v2903, 16
      %v4042 = vrot.slane %v4040, 6
      %v4043 = vrot.slane %v4042, 4
      %v4045 = vshrl.u32 %v2904, 16
      %v4047 = vrot.slane %v4045, 6
      %v4048 = vrot.slane %v4047, 4
      %v4050 = vshrl.u32 %v2905, 16
      %v4052 = vrot.slane %v4050, 6
      %v4053 = vrot.slane %v4052, 4
      %v4055 = vshrl.u32 %v2906, 16
      %v4057 = vrot.slane %v4055, 6
      %v4058 = vrot.slane %v4057, 4
      %v4060 = vshrl.u32 %v2907, 16
      %v4062 = vrot.slane %v4060, 6
      %v4063 = vrot.slane %v4062, 4
      %v4065 = vshrl.u32 %v2908, 16
      %v4067 = vrot.slane %v4065, 6
      %v4068 = vrot.slane %v4067, 4
      %v4070 = vshrl.u32 %v2909, 16
      %v4072 = vrot.slane %v4070, 6
      %v4073 = vrot.slane %v4072, 4
      %v4075 = vshrl.u32 %v2910, 16
      %v4077 = vrot.slane %v4075, 6
      %v4078 = vrot.slane %v4077, 4
      %v4080 = vshrl.u32 %v2911, 16
      %v4082 = vrot.slane %v4080, 6
      %v4083 = vrot.slane %v4082, 4
      %v4085 = vshrl.u32 %v2912, 16
      %v4087 = vrot.slane %v4085, 6
      %v4088 = vrot.slane %v4087, 4
      %v4090 = vshrl.u32 %v2913, 16
      %v4092 = vrot.slane %v4090, 6
      %v4093 = vrot.slane %v4092, 4
      %v4095 = vshrl.u32 %v2914, 16
      %v4097 = vrot.slane %v4095, 6
      %v4098 = vrot.slane %v4097, 4
      %v4100 = vshrl.u32 %v2915, 16
      %v4102 = vrot.slane %v4100, 6
      %v4103 = vrot.slane %v4102, 4
      %v4105 = vshrl.u32 %v2916, 16
      %v4107 = vrot.slane %v4105, 6
      %v4108 = vrot.slane %v4107, 4
      %v4110 = vshrl.u32 %v2917, 16
      %v4112 = vrot.slane %v4110, 6
      %v4113 = vrot.slane %v4112, 4
      %v4115 = vshrl.u32 %v2918, 16
      %v4117 = vrot.slane %v4115, 6
      %v4118 = vrot.slane %v4117, 4
      %v4120 = vshrl.u32 %v2919, 16
      %v4122 = vrot.slane %v4120, 6
      %v4123 = vrot.slane %v4122, 4
      %v4125 = vshrl.u32 %v2920, 16
      %v4127 = vrot.slane %v4125, 6
      %v4128 = vrot.slane %v4127, 4
      %v4130 = vshrl.u32 %v2921, 16
      %v4132 = vrot.slane %v4130, 6
      %v4133 = vrot.slane %v4132, 4
      %v4135 = vshrl.u32 %v2922, 16
      %v4137 = vrot.slane %v4135, 6
      %v4138 = vrot.slane %v4137, 4
      %v4140 = vshrl.u32 %v2923, 16
      %v4142 = vrot.slane %v4140, 6
      %v4143 = vrot.slane %v4142, 4
      %v4145 = vshrl.u32 %v2924, 16
      %v4147 = vrot.slane %v4145, 6
      %v4148 = vrot.slane %v4147, 4
      %v4150 = vshrl.u32 %v2925, 16
      %v4152 = vrot.slane %v4150, 6
      %v4153 = vrot.slane %v4152, 4
      %v4155 = vshrl.u32 %v2926, 16
      %v4157 = vrot.slane %v4155, 6
      %v4158 = vrot.slane %v4157, 4
      %v4160 = vshrl.u32 %v2927, 16
      %v4162 = vrot.slane %v4160, 6
      %v4163 = vrot.slane %v4162, 4
      %v4165 = vshrl.u32 %v2928, 16
      %v4167 = vrot.slane %v4165, 6
      %v4168 = vrot.slane %v4167, 4
      %v4170 = vshrl.u32 %v2929, 16
      %v4172 = vrot.slane %v4170, 6
      %v4173 = vrot.slane %v4172, 4
      %v4175 = vshrl.u32 %v2930, 16
      %v4177 = vrot.slane %v4175, 6
      %v4178 = vrot.slane %v4177, 4
      %v4180 = vshrl.u32 %v2931, 16
      %v4182 = vrot.slane %v4180, 6
      %v4183 = vrot.slane %v4182, 4
      %v4185 = vshrl.u32 %v2932, 16
      %v4187 = vrot.slane %v4185, 6
      %v4188 = vrot.slane %v4187, 4
      %v4190 = vshrl.u32 %v2933, 16
      %v4192 = vrot.slane %v4190, 6
      %v4193 = vrot.slane %v4192, 4
      %v4195 = vshrl.u32 %v2934, 16
      %v4197 = vrot.slane %v4195, 6
      %v4198 = vrot.slane %v4197, 4
      %v4200 = vshrl.u32 %v2935, 16
      %v4202 = vrot.slane %v4200, 6
      %v4203 = vrot.slane %v4202, 4
      %v4205 = vshrl.u32 %v2936, 16
      %v4207 = vrot.slane %v4205, 6
      %v4208 = vrot.slane %v4207, 4
      %v4210 = vshrl.u32 %v2937, 16
      %v4212 = vrot.slane %v4210, 6
      %v4213 = vrot.slane %v4212, 4
      %v4215 = vshrl.u32 %v2938, 16
      %v4217 = vrot.slane %v4215, 6
      %v4218 = vrot.slane %v4217, 4
      %v4347 = vmax.bf16 %v3451, %v3583
      %v4348 = vmax.bf16 %v3452, %v3588
      %v4349 = vmax.bf16 %v3453, %v3593
      %v4350 = vmax.bf16 %v3454, %v3598
      %v4351 = vmax.bf16 %v3455, %v3603
      %v4352 = vmax.bf16 %v3456, %v3608
      %v4353 = vmax.bf16 %v3457, %v3613
      %v4354 = vmax.bf16 %v3458, %v3618
      %v4355 = vmax.bf16 %v3459, %v3623
      %v4356 = vmax.bf16 %v3460, %v3628
      %v4357 = vmax.bf16 %v3461, %v3633
      %v4358 = vmax.bf16 %v3462, %v3638
      %v4359 = vmax.bf16 %v3463, %v3643
      %v4360 = vmax.bf16 %v3464, %v3648
      %v4361 = vmax.bf16 %v3465, %v3653
      %v4362 = vmax.bf16 %v3466, %v3658
      %v4363 = vmax.bf16 %v3467, %v3663
      %v4364 = vmax.bf16 %v3468, %v3668
      %v4365 = vmax.bf16 %v3469, %v3673
      %v4366 = vmax.bf16 %v3470, %v3678
      %v4367 = vmax.bf16 %v3471, %v3683
      %v4368 = vmax.bf16 %v3472, %v3688
      %v4369 = vmax.bf16 %v3473, %v3693
      %v4370 = vmax.bf16 %v3474, %v3698
      %v4371 = vmax.bf16 %v3475, %v3703
      %v4372 = vmax.bf16 %v3476, %v3708
      %v4373 = vmax.bf16 %v3477, %v3713
      %v4374 = vmax.bf16 %v3478, %v3718
      %v4375 = vmax.bf16 %v3479, %v3723
      %v4376 = vmax.bf16 %v3480, %v3728
      %v4377 = vmax.bf16 %v3481, %v3733
      %v4378 = vmax.bf16 %v3482, %v3738
      %v4379 = vmax.bf16 %v3483, %v3743
      %v4380 = vmax.bf16 %v3484, %v3748
      %v4381 = vmax.bf16 %v3485, %v3753
      %v4382 = vmax.bf16 %v3486, %v3758
      %v4383 = vmax.bf16 %v3487, %v3763
      %v4384 = vmax.bf16 %v3488, %v3768
      %v4385 = vmax.bf16 %v3489, %v3773
      %v4386 = vmax.bf16 %v3490, %v3778
      %v4387 = vmax.bf16 %v3491, %v3783
      %v4388 = vmax.bf16 %v3492, %v3788
      %v4389 = vmax.bf16 %v3493, %v3793
      %v4390 = vmax.bf16 %v3494, %v3798
      %v4391 = vmax.bf16 %v3495, %v3803
      %v4392 = vmax.bf16 %v3496, %v3808
      %v4393 = vmax.bf16 %v3497, %v3813
      %v4394 = vmax.bf16 %v3498, %v3818
      %v4395 = vmax.bf16 %v3499, %v3823
      %v4396 = vmax.bf16 %v3500, %v3828
      %v4397 = vmax.bf16 %v3501, %v3833
      %v4398 = vmax.bf16 %v3502, %v3838
      %v4399 = vmax.bf16 %v3503, %v3843
      %v4400 = vmax.bf16 %v3504, %v3848
      %v4401 = vmax.bf16 %v3505, %v3853
      %v4402 = vmax.bf16 %v3506, %v3858
      %v4403 = vmax.bf16 %v3507, %v3863
      %v4404 = vmax.bf16 %v3508, %v3868
      %v4405 = vmax.bf16 %v3509, %v3873
      %v4406 = vmax.bf16 %v3510, %v3878
      %v4407 = vmax.bf16 %v3511, %v3883
      %v4408 = vmax.bf16 %v3512, %v3888
      %v4409 = vmax.bf16 %v3513, %v3893
      %v4410 = vmax.bf16 %v3514, %v3898
      %v4411 = vmax.bf16 %v3515, %v3903
      %v4412 = vmax.bf16 %v3516, %v3908
      %v4413 = vmax.bf16 %v3517, %v3913
      %v4414 = vmax.bf16 %v3518, %v3918
      %v4415 = vmax.bf16 %v3519, %v3923
      %v4416 = vmax.bf16 %v3520, %v3928
      %v4417 = vmax.bf16 %v3521, %v3933
      %v4418 = vmax.bf16 %v3522, %v3938
      %v4419 = vmax.bf16 %v3523, %v3943
      %v4420 = vmax.bf16 %v3524, %v3948
      %v4421 = vmax.bf16 %v3525, %v3953
      %v4422 = vmax.bf16 %v3526, %v3958
      %v4423 = vmax.bf16 %v3527, %v3963
      %v4424 = vmax.bf16 %v3528, %v3968
      %v4425 = vmax.bf16 %v3529, %v3973
      %v4426 = vmax.bf16 %v3530, %v3978
      %v4427 = vmax.bf16 %v3531, %v3983
      %v4428 = vmax.bf16 %v3532, %v3988
      %v4429 = vmax.bf16 %v3533, %v3993
      %v4430 = vmax.bf16 %v3534, %v3998
      %v4431 = vmax.bf16 %v3535, %v4003
      %v4432 = vmax.bf16 %v3536, %v4008
      %v4433 = vmax.bf16 %v3537, %v4013
      %v4434 = vmax.bf16 %v3538, %v4018
      %v4435 = vmax.bf16 %v3539, %v4023
      %v4436 = vmax.bf16 %v3540, %v4028
      %v4437 = vmax.bf16 %v3541, %v4033
      %v4438 = vmax.bf16 %v3542, %v4038
      %v4439 = vmax.bf16 %v3543, %v4043
      %v4440 = vmax.bf16 %v3544, %v4048
      %v4441 = vmax.bf16 %v3545, %v4053
      %v4442 = vmax.bf16 %v3546, %v4058
      %v4443 = vmax.bf16 %v3547, %v4063
      %v4444 = vmax.bf16 %v3548, %v4068
      %v4445 = vmax.bf16 %v3549, %v4073
      %v4446 = vmax.bf16 %v3550, %v4078
      %v4447 = vmax.bf16 %v3551, %v4083
      %v4448 = vmax.bf16 %v3552, %v4088
      %v4449 = vmax.bf16 %v3553, %v4093
      %v4450 = vmax.bf16 %v3554, %v4098
      %v4451 = vmax.bf16 %v3555, %v4103
      %v4452 = vmax.bf16 %v3556, %v4108
      %v4453 = vmax.bf16 %v3557, %v4113
      %v4454 = vmax.bf16 %v3558, %v4118
      %v4455 = vmax.bf16 %v3559, %v4123
      %v4456 = vmax.bf16 %v3560, %v4128
      %v4457 = vmax.bf16 %v3561, %v4133
      %v4458 = vmax.bf16 %v3562, %v4138
      %v4459 = vmax.bf16 %v3563, %v4143
      %v4460 = vmax.bf16 %v3564, %v4148
      %v4461 = vmax.bf16 %v3565, %v4153
      %v4462 = vmax.bf16 %v3566, %v4158
      %v4463 = vmax.bf16 %v3567, %v4163
      %v4464 = vmax.bf16 %v3568, %v4168
      %v4465 = vmax.bf16 %v3569, %v4173
      %v4466 = vmax.bf16 %v3570, %v4178
      %v4467 = vmax.bf16 %v3571, %v4183
      %v4468 = vmax.bf16 %v3572, %v4188
      %v4469 = vmax.bf16 %v3573, %v4193
      %v4470 = vmax.bf16 %v3574, %v4198
      %v4471 = vmax.bf16 %v3575, %v4203
      %v4472 = vmax.bf16 %v3576, %v4208
      %v4473 = vmax.bf16 %v3577, %v4213
      %v4474 = vmax.bf16 %v3578, %v4218
      %v4475 = vld [vmem:[%s115] sm:$0x8]
      %v4476 = vld [vmem:[%s115 + $0x8] sm:$0x8]
      %v4477 = vld [vmem:[%s115 + $0x10] sm:$0x8]
      %v4478 = vld [vmem:[%s115 + $0x18] sm:$0x8]
      %v4479 = vld [vmem:[%s115 + $0x20] sm:$0x8]
      %v4480 = vld [vmem:[%s115 + $0x28] sm:$0x8]
      %v4481 = vld [vmem:[%s115 + $0x30] sm:$0x8]
      %v4482 = vld [vmem:[%s115 + $0x38] sm:$0x8]
      %v4483 = vld [vmem:[%s115 + $0x40] sm:$0x8]
      %v4484 = vld [vmem:[%s115 + $0x48] sm:$0x8]
      %v4485 = vld [vmem:[%s115 + $0x50] sm:$0x8]
      %v4486 = vld [vmem:[%s115 + $0x58] sm:$0x8]
      %v4487 = vld [vmem:[%s115 + $0x60] sm:$0x8]
      %v4488 = vld [vmem:[%s115 + $0x68] sm:$0x8]
      %v4489 = vld [vmem:[%s115 + $0x70] sm:$0x8]
      %v4490 = vld [vmem:[%s115 + $0x78] sm:$0x8]
      %v4491 = vld [vmem:[%s115 + $0x80] sm:$0x8]
      %v4492 = vld [vmem:[%s115 + $0x88] sm:$0x8]
      %v4493 = vld [vmem:[%s115 + $0x90] sm:$0x8]
      %v4494 = vld [vmem:[%s115 + $0x98] sm:$0x8]
      %v4495 = vld [vmem:[%s115 + $0xa0] sm:$0x8]
      %v4496 = vld [vmem:[%s115 + $0xa8] sm:$0x8]
      %v4497 = vld [vmem:[%s115 + $0xb0] sm:$0x8]
      %v4498 = vld [vmem:[%s115 + $0xb8] sm:$0x8]
      %v4499 = vld [vmem:[%s115 + $0xc0] sm:$0x8]
      %v4500 = vld [vmem:[%s115 + $0xc8] sm:$0x8]
      %v4501 = vld [vmem:[%s115 + $0xd0] sm:$0x8]
      %v4502 = vld [vmem:[%s115 + $0xd8] sm:$0x8]
      %v4503 = vld [vmem:[%s115 + $0xe0] sm:$0x8]
      %v4504 = vld [vmem:[%s115 + $0xe8] sm:$0x8]
      %v4505 = vld [vmem:[%s115 + $0xf0] sm:$0x8]
      %v4506 = vld [vmem:[%s115 + $0xf8] sm:$0x8]
      %v4507 = vld [vmem:[%s115 + $0x100] sm:$0x8]
      %v4508 = vld [vmem:[%s115 + $0x108] sm:$0x8]
      %v4509 = vld [vmem:[%s115 + $0x110] sm:$0x8]
      %v4510 = vld [vmem:[%s115 + $0x118] sm:$0x8]
      %v4511 = vld [vmem:[%s115 + $0x120] sm:$0x8]
      %v4512 = vld [vmem:[%s115 + $0x128] sm:$0x8]
      %v4513 = vld [vmem:[%s115 + $0x130] sm:$0x8]
      %v4514 = vld [vmem:[%s115 + $0x138] sm:$0x8]
      %v4515 = vld [vmem:[%s115 + $0x140] sm:$0x8]
      %v4516 = vld [vmem:[%s115 + $0x148] sm:$0x8]
      %v4517 = vld [vmem:[%s115 + $0x150] sm:$0x8]
      %v4518 = vld [vmem:[%s115 + $0x158] sm:$0x8]
      %v4519 = vld [vmem:[%s115 + $0x160] sm:$0x8]
      %v4520 = vld [vmem:[%s115 + $0x168] sm:$0x8]
      %v4521 = vld [vmem:[%s115 + $0x170] sm:$0x8]
      %v4522 = vld [vmem:[%s115 + $0x178] sm:$0x8]
      %v4523 = vld [vmem:[%s115 + $0x180] sm:$0x8]
      %v4524 = vld [vmem:[%s115 + $0x188] sm:$0x8]
      %v4525 = vld [vmem:[%s115 + $0x190] sm:$0x8]
      %v4526 = vld [vmem:[%s115 + $0x198] sm:$0x8]
      %v4527 = vld [vmem:[%s115 + $0x1a0] sm:$0x8]
      %v4528 = vld [vmem:[%s115 + $0x1a8] sm:$0x8]
      %v4529 = vld [vmem:[%s115 + $0x1b0] sm:$0x8]
      %v4530 = vld [vmem:[%s115 + $0x1b8] sm:$0x8]
      %v4531 = vld [vmem:[%s115 + $0x1c0] sm:$0x8]
      %v4532 = vld [vmem:[%s115 + $0x1c8] sm:$0x8]
      %v4533 = vld [vmem:[%s115 + $0x1d0] sm:$0x8]
      %v4534 = vld [vmem:[%s115 + $0x1d8] sm:$0x8]
      %v4535 = vld [vmem:[%s115 + $0x1e0] sm:$0x8]
      %v4536 = vld [vmem:[%s115 + $0x1e8] sm:$0x8]
      %v4537 = vld [vmem:[%s115 + $0x1f0] sm:$0x8]
      %v4538 = vld [vmem:[%s115 + $0x1f8] sm:$0x8]
      %v4539 = vld [vmem:[%s115 + $0x200] sm:$0x8]
      %v4540 = vld [vmem:[%s115 + $0x208] sm:$0x8]
      %v4541 = vld [vmem:[%s115 + $0x210] sm:$0x8]
      %v4542 = vld [vmem:[%s115 + $0x218] sm:$0x8]
      %v4543 = vld [vmem:[%s115 + $0x220] sm:$0x8]
      %v4544 = vld [vmem:[%s115 + $0x228] sm:$0x8]
      %v4545 = vld [vmem:[%s115 + $0x230] sm:$0x8]
      %v4546 = vld [vmem:[%s115 + $0x238] sm:$0x8]
      %v4547 = vld [vmem:[%s115 + $0x240] sm:$0x8]
      %v4548 = vld [vmem:[%s115 + $0x248] sm:$0x8]
      %v4549 = vld [vmem:[%s115 + $0x250] sm:$0x8]
      %v4550 = vld [vmem:[%s115 + $0x258] sm:$0x8]
      %v4551 = vld [vmem:[%s115 + $0x260] sm:$0x8]
      %v4552 = vld [vmem:[%s115 + $0x268] sm:$0x8]
      %v4553 = vld [vmem:[%s115 + $0x270] sm:$0x8]
      %v4554 = vld [vmem:[%s115 + $0x278] sm:$0x8]
      %v4555 = vld [vmem:[%s115 + $0x280] sm:$0x8]
      %v4556 = vld [vmem:[%s115 + $0x288] sm:$0x8]
      %v4557 = vld [vmem:[%s115 + $0x290] sm:$0x8]
      %v4558 = vld [vmem:[%s115 + $0x298] sm:$0x8]
      %v4559 = vld [vmem:[%s115 + $0x2a0] sm:$0x8]
      %v4560 = vld [vmem:[%s115 + $0x2a8] sm:$0x8]
      %v4561 = vld [vmem:[%s115 + $0x2b0] sm:$0x8]
      %v4562 = vld [vmem:[%s115 + $0x2b8] sm:$0x8]
      %v4563 = vld [vmem:[%s115 + $0x2c0] sm:$0x8]
      %v4564 = vld [vmem:[%s115 + $0x2c8] sm:$0x8]
      %v4565 = vld [vmem:[%s115 + $0x2d0] sm:$0x8]
      %v4566 = vld [vmem:[%s115 + $0x2d8] sm:$0x8]
      %v4567 = vld [vmem:[%s115 + $0x2e0] sm:$0x8]
      %v4568 = vld [vmem:[%s115 + $0x2e8] sm:$0x8]
      %v4569 = vld [vmem:[%s115 + $0x2f0] sm:$0x8]
      %v4570 = vld [vmem:[%s115 + $0x2f8] sm:$0x8]
      %v4571 = vld [vmem:[%s115 + $0x300] sm:$0x8]
      %v4572 = vld [vmem:[%s115 + $0x308] sm:$0x8]
      %v4573 = vld [vmem:[%s115 + $0x310] sm:$0x8]
      %v4574 = vld [vmem:[%s115 + $0x318] sm:$0x8]
      %v4575 = vld [vmem:[%s115 + $0x320] sm:$0x8]
      %v4576 = vld [vmem:[%s115 + $0x328] sm:$0x8]
      %v4577 = vld [vmem:[%s115 + $0x330] sm:$0x8]
      %v4578 = vld [vmem:[%s115 + $0x338] sm:$0x8]
      %v4579 = vld [vmem:[%s115 + $0x340] sm:$0x8]
      %v4580 = vld [vmem:[%s115 + $0x348] sm:$0x8]
      %v4581 = vld [vmem:[%s115 + $0x350] sm:$0x8]
      %v4582 = vld [vmem:[%s115 + $0x358] sm:$0x8]
      %v4583 = vld [vmem:[%s115 + $0x360] sm:$0x8]
      %v4584 = vld [vmem:[%s115 + $0x368] sm:$0x8]
      %v4585 = vld [vmem:[%s115 + $0x370] sm:$0x8]
      %v4586 = vld [vmem:[%s115 + $0x378] sm:$0x8]
      %v4587 = vld [vmem:[%s115 + $0x380] sm:$0x8]
      %v4588 = vld [vmem:[%s115 + $0x388] sm:$0x8]
      %v4589 = vld [vmem:[%s115 + $0x390] sm:$0x8]
      %v4590 = vld [vmem:[%s115 + $0x398] sm:$0x8]
      %v4591 = vld [vmem:[%s115 + $0x3a0] sm:$0x8]
      %v4592 = vld [vmem:[%s115 + $0x3a8] sm:$0x8]
      %v4593 = vld [vmem:[%s115 + $0x3b0] sm:$0x8]
      %v4594 = vld [vmem:[%s115 + $0x3b8] sm:$0x8]
      %v4595 = vld [vmem:[%s115 + $0x3c0] sm:$0x8]
      %v4596 = vld [vmem:[%s115 + $0x3c8] sm:$0x8]
      %v4597 = vld [vmem:[%s115 + $0x3d0] sm:$0x8]
      %v4598 = vld [vmem:[%s115 + $0x3d8] sm:$0x8]
      %v4599 = vld [vmem:[%s115 + $0x3e0] sm:$0x8]
      %v4600 = vld [vmem:[%s115 + $0x3e8] sm:$0x8]
      %v4601 = vld [vmem:[%s115 + $0x3f0] sm:$0x8]
      %v4602 = vld [vmem:[%s115 + $0x3f8] sm:$0x8]
      %v4731 = vrot.slane %v4475, 7
      %v4732 = vrot.slane %v4731, 4
      %v4733 = vrot.slane %v4476, 7
      %v4734 = vrot.slane %v4733, 4
      %v4735 = vrot.slane %v4477, 7
      %v4736 = vrot.slane %v4735, 4
      %v4737 = vrot.slane %v4478, 7
      %v4738 = vrot.slane %v4737, 4
      %v4739 = vrot.slane %v4479, 7
      %v4740 = vrot.slane %v4739, 4
      %v4741 = vrot.slane %v4480, 7
      %v4742 = vrot.slane %v4741, 4
      %v4743 = vrot.slane %v4481, 7
      %v4744 = vrot.slane %v4743, 4
      %v4745 = vrot.slane %v4482, 7
      %v4746 = vrot.slane %v4745, 4
      %v4747 = vrot.slane %v4483, 7
      %v4748 = vrot.slane %v4747, 4
      %v4749 = vrot.slane %v4484, 7
      %v4750 = vrot.slane %v4749, 4
      %v4751 = vrot.slane %v4485, 7
      %v4752 = vrot.slane %v4751, 4
      %v4753 = vrot.slane %v4486, 7
      %v4754 = vrot.slane %v4753, 4
      %v4755 = vrot.slane %v4487, 7
      %v4756 = vrot.slane %v4755, 4
      %v4757 = vrot.slane %v4488, 7
      %v4758 = vrot.slane %v4757, 4
      %v4759 = vrot.slane %v4489, 7
      %v4760 = vrot.slane %v4759, 4
      %v4761 = vrot.slane %v4490, 7
      %v4762 = vrot.slane %v4761, 4
      %v4763 = vrot.slane %v4491, 7
      %v4764 = vrot.slane %v4763, 4
      %v4765 = vrot.slane %v4492, 7
      %v4766 = vrot.slane %v4765, 4
      %v4767 = vrot.slane %v4493, 7
      %v4768 = vrot.slane %v4767, 4
      %v4769 = vrot.slane %v4494, 7
      %v4770 = vrot.slane %v4769, 4
      %v4771 = vrot.slane %v4495, 7
      %v4772 = vrot.slane %v4771, 4
      %v4773 = vrot.slane %v4496, 7
      %v4774 = vrot.slane %v4773, 4
      %v4775 = vrot.slane %v4497, 7
      %v4776 = vrot.slane %v4775, 4
      %v4777 = vrot.slane %v4498, 7
      %v4778 = vrot.slane %v4777, 4
      %v4779 = vrot.slane %v4499, 7
      %v4780 = vrot.slane %v4779, 4
      %v4781 = vrot.slane %v4500, 7
      %v4782 = vrot.slane %v4781, 4
      %v4783 = vrot.slane %v4501, 7
      %v4784 = vrot.slane %v4783, 4
      %v4785 = vrot.slane %v4502, 7
      %v4786 = vrot.slane %v4785, 4
      %v4787 = vrot.slane %v4503, 7
      %v4788 = vrot.slane %v4787, 4
      %v4789 = vrot.slane %v4504, 7
      %v4790 = vrot.slane %v4789, 4
      %v4791 = vrot.slane %v4505, 7
      %v4792 = vrot.slane %v4791, 4
      %v4793 = vrot.slane %v4506, 7
      %v4794 = vrot.slane %v4793, 4
      %v4795 = vrot.slane %v4507, 7
      %v4796 = vrot.slane %v4795, 4
      %v4797 = vrot.slane %v4508, 7
      %v4798 = vrot.slane %v4797, 4
      %v4799 = vrot.slane %v4509, 7
      %v4800 = vrot.slane %v4799, 4
      %v4801 = vrot.slane %v4510, 7
      %v4802 = vrot.slane %v4801, 4
      %v4803 = vrot.slane %v4511, 7
      %v4804 = vrot.slane %v4803, 4
      %v4805 = vrot.slane %v4512, 7
      %v4806 = vrot.slane %v4805, 4
      %v4807 = vrot.slane %v4513, 7
      %v4808 = vrot.slane %v4807, 4
      %v4809 = vrot.slane %v4514, 7
      %v4810 = vrot.slane %v4809, 4
      %v4811 = vrot.slane %v4515, 7
      %v4812 = vrot.slane %v4811, 4
      %v4813 = vrot.slane %v4516, 7
      %v4814 = vrot.slane %v4813, 4
      %v4815 = vrot.slane %v4517, 7
      %v4816 = vrot.slane %v4815, 4
      %v4817 = vrot.slane %v4518, 7
      %v4818 = vrot.slane %v4817, 4
      %v4819 = vrot.slane %v4519, 7
      %v4820 = vrot.slane %v4819, 4
      %v4821 = vrot.slane %v4520, 7
      %v4822 = vrot.slane %v4821, 4
      %v4823 = vrot.slane %v4521, 7
      %v4824 = vrot.slane %v4823, 4
      %v4825 = vrot.slane %v4522, 7
      %v4826 = vrot.slane %v4825, 4
      %v4827 = vrot.slane %v4523, 7
      %v4828 = vrot.slane %v4827, 4
      %v4829 = vrot.slane %v4524, 7
      %v4830 = vrot.slane %v4829, 4
      %v4831 = vrot.slane %v4525, 7
      %v4832 = vrot.slane %v4831, 4
      %v4833 = vrot.slane %v4526, 7
      %v4834 = vrot.slane %v4833, 4
      %v4835 = vrot.slane %v4527, 7
      %v4836 = vrot.slane %v4835, 4
      %v4837 = vrot.slane %v4528, 7
      %v4838 = vrot.slane %v4837, 4
      %v4839 = vrot.slane %v4529, 7
      %v4840 = vrot.slane %v4839, 4
      %v4841 = vrot.slane %v4530, 7
      %v4842 = vrot.slane %v4841, 4
      %v4843 = vrot.slane %v4531, 7
      %v4844 = vrot.slane %v4843, 4
      %v4845 = vrot.slane %v4532, 7
      %v4846 = vrot.slane %v4845, 4
      %v4847 = vrot.slane %v4533, 7
      %v4848 = vrot.slane %v4847, 4
      %v4849 = vrot.slane %v4534, 7
      %v4850 = vrot.slane %v4849, 4
      %v4851 = vrot.slane %v4535, 7
      %v4852 = vrot.slane %v4851, 4
      %v4853 = vrot.slane %v4536, 7
      %v4854 = vrot.slane %v4853, 4
      %v4855 = vrot.slane %v4537, 7
      %v4856 = vrot.slane %v4855, 4
      %v4857 = vrot.slane %v4538, 7
      %v4858 = vrot.slane %v4857, 4
      %v4859 = vrot.slane %v4539, 7
      %v4860 = vrot.slane %v4859, 4
      %v4861 = vrot.slane %v4540, 7
      %v4862 = vrot.slane %v4861, 4
      %v4863 = vrot.slane %v4541, 7
      %v4864 = vrot.slane %v4863, 4
      %v4865 = vrot.slane %v4542, 7
      %v4866 = vrot.slane %v4865, 4
      %v4867 = vrot.slane %v4543, 7
      %v4868 = vrot.slane %v4867, 4
      %v4869 = vrot.slane %v4544, 7
      %v4870 = vrot.slane %v4869, 4
      %v4871 = vrot.slane %v4545, 7
      %v4872 = vrot.slane %v4871, 4
      %v4873 = vrot.slane %v4546, 7
      %v4874 = vrot.slane %v4873, 4
      %v4875 = vrot.slane %v4547, 7
      %v4876 = vrot.slane %v4875, 4
      %v4877 = vrot.slane %v4548, 7
      %v4878 = vrot.slane %v4877, 4
      %v4879 = vrot.slane %v4549, 7
      %v4880 = vrot.slane %v4879, 4
      %v4881 = vrot.slane %v4550, 7
      %v4882 = vrot.slane %v4881, 4
      %v4883 = vrot.slane %v4551, 7
      %v4884 = vrot.slane %v4883, 4
      %v4885 = vrot.slane %v4552, 7
      %v4886 = vrot.slane %v4885, 4
      %v4887 = vrot.slane %v4553, 7
      %v4888 = vrot.slane %v4887, 4
      %v4889 = vrot.slane %v4554, 7
      %v4890 = vrot.slane %v4889, 4
      %v4891 = vrot.slane %v4555, 7
      %v4892 = vrot.slane %v4891, 4
      %v4893 = vrot.slane %v4556, 7
      %v4894 = vrot.slane %v4893, 4
      %v4895 = vrot.slane %v4557, 7
      %v4896 = vrot.slane %v4895, 4
      %v4897 = vrot.slane %v4558, 7
      %v4898 = vrot.slane %v4897, 4
      %v4899 = vrot.slane %v4559, 7
      %v4900 = vrot.slane %v4899, 4
      %v4901 = vrot.slane %v4560, 7
      %v4902 = vrot.slane %v4901, 4
      %v4903 = vrot.slane %v4561, 7
      %v4904 = vrot.slane %v4903, 4
      %v4905 = vrot.slane %v4562, 7
      %v4906 = vrot.slane %v4905, 4
      %v4907 = vrot.slane %v4563, 7
      %v4908 = vrot.slane %v4907, 4
      %v4909 = vrot.slane %v4564, 7
      %v4910 = vrot.slane %v4909, 4
      %v4911 = vrot.slane %v4565, 7
      %v4912 = vrot.slane %v4911, 4
      %v4913 = vrot.slane %v4566, 7
      %v4914 = vrot.slane %v4913, 4
      %v4915 = vrot.slane %v4567, 7
      %v4916 = vrot.slane %v4915, 4
      %v4917 = vrot.slane %v4568, 7
      %v4918 = vrot.slane %v4917, 4
      %v4919 = vrot.slane %v4569, 7
      %v4920 = vrot.slane %v4919, 4
      %v4921 = vrot.slane %v4570, 7
      %v4922 = vrot.slane %v4921, 4
      %v4923 = vrot.slane %v4571, 7
      %v4924 = vrot.slane %v4923, 4
      %v4925 = vrot.slane %v4572, 7
      %v4926 = vrot.slane %v4925, 4
      %v4927 = vrot.slane %v4573, 7
      %v4928 = vrot.slane %v4927, 4
      %v4929 = vrot.slane %v4574, 7
      %v4930 = vrot.slane %v4929, 4
      %v4931 = vrot.slane %v4575, 7
      %v4932 = vrot.slane %v4931, 4
      %v4933 = vrot.slane %v4576, 7
      %v4934 = vrot.slane %v4933, 4
      %v4935 = vrot.slane %v4577, 7
      %v4936 = vrot.slane %v4935, 4
      %v4937 = vrot.slane %v4578, 7
      %v4938 = vrot.slane %v4937, 4
      %v4939 = vrot.slane %v4579, 7
      %v4940 = vrot.slane %v4939, 4
      %v4941 = vrot.slane %v4580, 7
      %v4942 = vrot.slane %v4941, 4
      %v4943 = vrot.slane %v4581, 7
      %v4944 = vrot.slane %v4943, 4
      %v4945 = vrot.slane %v4582, 7
      %v4946 = vrot.slane %v4945, 4
      %v4947 = vrot.slane %v4583, 7
      %v4948 = vrot.slane %v4947, 4
      %v4949 = vrot.slane %v4584, 7
      %v4950 = vrot.slane %v4949, 4
      %v4951 = vrot.slane %v4585, 7
      %v4952 = vrot.slane %v4951, 4
      %v4953 = vrot.slane %v4586, 7
      %v4954 = vrot.slane %v4953, 4
      %v4955 = vrot.slane %v4587, 7
      %v4956 = vrot.slane %v4955, 4
      %v4957 = vrot.slane %v4588, 7
      %v4958 = vrot.slane %v4957, 4
      %v4959 = vrot.slane %v4589, 7
      %v4960 = vrot.slane %v4959, 4
      %v4961 = vrot.slane %v4590, 7
      %v4962 = vrot.slane %v4961, 4
      %v4963 = vrot.slane %v4591, 7
      %v4964 = vrot.slane %v4963, 4
      %v4965 = vrot.slane %v4592, 7
      %v4966 = vrot.slane %v4965, 4
      %v4967 = vrot.slane %v4593, 7
      %v4968 = vrot.slane %v4967, 4
      %v4969 = vrot.slane %v4594, 7
      %v4970 = vrot.slane %v4969, 4
      %v4971 = vrot.slane %v4595, 7
      %v4972 = vrot.slane %v4971, 4
      %v4973 = vrot.slane %v4596, 7
      %v4974 = vrot.slane %v4973, 4
      %v4975 = vrot.slane %v4597, 7
      %v4976 = vrot.slane %v4975, 4
      %v4977 = vrot.slane %v4598, 7
      %v4978 = vrot.slane %v4977, 4
      %v4979 = vrot.slane %v4599, 7
      %v4980 = vrot.slane %v4979, 4
      %v4981 = vrot.slane %v4600, 7
      %v4982 = vrot.slane %v4981, 4
      %v4983 = vrot.slane %v4601, 7
      %v4984 = vrot.slane %v4983, 4
      %v4985 = vrot.slane %v4602, 7
      %v4986 = vrot.slane %v4985, 4
      %v5115 = vmax.bf16 %v4347, %v4732
      %v5116 = vmax.bf16 %v4348, %v4734
      %v5117 = vmax.bf16 %v4349, %v4736
      %v5118 = vmax.bf16 %v4350, %v4738
      %v5119 = vmax.bf16 %v4351, %v4740
      %v5120 = vmax.bf16 %v4352, %v4742
      %v5121 = vmax.bf16 %v4353, %v4744
      %v5122 = vmax.bf16 %v4354, %v4746
      %v5123 = vmax.bf16 %v4355, %v4748
      %v5124 = vmax.bf16 %v4356, %v4750
      %v5125 = vmax.bf16 %v4357, %v4752
      %v5126 = vmax.bf16 %v4358, %v4754
      %v5127 = vmax.bf16 %v4359, %v4756
      %v5128 = vmax.bf16 %v4360, %v4758
      %v5129 = vmax.bf16 %v4361, %v4760
      %v5130 = vmax.bf16 %v4362, %v4762
      %v5131 = vmax.bf16 %v4363, %v4764
      %v5132 = vmax.bf16 %v4364, %v4766
      %v5133 = vmax.bf16 %v4365, %v4768
      %v5134 = vmax.bf16 %v4366, %v4770
      %v5135 = vmax.bf16 %v4367, %v4772
      %v5136 = vmax.bf16 %v4368, %v4774
      %v5137 = vmax.bf16 %v4369, %v4776
      %v5138 = vmax.bf16 %v4370, %v4778
      %v5139 = vmax.bf16 %v4371, %v4780
      %v5140 = vmax.bf16 %v4372, %v4782
      %v5141 = vmax.bf16 %v4373, %v4784
      %v5142 = vmax.bf16 %v4374, %v4786
      %v5143 = vmax.bf16 %v4375, %v4788
      %v5144 = vmax.bf16 %v4376, %v4790
      %v5145 = vmax.bf16 %v4377, %v4792
      %v5146 = vmax.bf16 %v4378, %v4794
      %v5147 = vmax.bf16 %v4379, %v4796
      %v5148 = vmax.bf16 %v4380, %v4798
      %v5149 = vmax.bf16 %v4381, %v4800
      %v5150 = vmax.bf16 %v4382, %v4802
      %v5151 = vmax.bf16 %v4383, %v4804
      %v5152 = vmax.bf16 %v4384, %v4806
      %v5153 = vmax.bf16 %v4385, %v4808
      %v5154 = vmax.bf16 %v4386, %v4810
      %v5155 = vmax.bf16 %v4387, %v4812
      %v5156 = vmax.bf16 %v4388, %v4814
      %v5157 = vmax.bf16 %v4389, %v4816
      %v5158 = vmax.bf16 %v4390, %v4818
      %v5159 = vmax.bf16 %v4391, %v4820
      %v5160 = vmax.bf16 %v4392, %v4822
      %v5161 = vmax.bf16 %v4393, %v4824
      %v5162 = vmax.bf16 %v4394, %v4826
      %v5163 = vmax.bf16 %v4395, %v4828
      %v5164 = vmax.bf16 %v4396, %v4830
      %v5165 = vmax.bf16 %v4397, %v4832
      %v5166 = vmax.bf16 %v4398, %v4834
      %v5167 = vmax.bf16 %v4399, %v4836
      %v5168 = vmax.bf16 %v4400, %v4838
      %v5169 = vmax.bf16 %v4401, %v4840
      %v5170 = vmax.bf16 %v4402, %v4842
      %v5171 = vmax.bf16 %v4403, %v4844
      %v5172 = vmax.bf16 %v4404, %v4846
      %v5173 = vmax.bf16 %v4405, %v4848
      %v5174 = vmax.bf16 %v4406, %v4850
      %v5175 = vmax.bf16 %v4407, %v4852
      %v5176 = vmax.bf16 %v4408, %v4854
      %v5177 = vmax.bf16 %v4409, %v4856
      %v5178 = vmax.bf16 %v4410, %v4858
      %v5179 = vmax.bf16 %v4411, %v4860
      %v5180 = vmax.bf16 %v4412, %v4862
      %v5181 = vmax.bf16 %v4413, %v4864
      %v5182 = vmax.bf16 %v4414, %v4866
      %v5183 = vmax.bf16 %v4415, %v4868
      %v5184 = vmax.bf16 %v4416, %v4870
      %v5185 = vmax.bf16 %v4417, %v4872
      %v5186 = vmax.bf16 %v4418, %v4874
      %v5187 = vmax.bf16 %v4419, %v4876
      %v5188 = vmax.bf16 %v4420, %v4878
      %v5189 = vmax.bf16 %v4421, %v4880
      %v5190 = vmax.bf16 %v4422, %v4882
      %v5191 = vmax.bf16 %v4423, %v4884
      %v5192 = vmax.bf16 %v4424, %v4886
      %v5193 = vmax.bf16 %v4425, %v4888
      %v5194 = vmax.bf16 %v4426, %v4890
      %v5195 = vmax.bf16 %v4427, %v4892
      %v5196 = vmax.bf16 %v4428, %v4894
      %v5197 = vmax.bf16 %v4429, %v4896
      %v5198 = vmax.bf16 %v4430, %v4898
      %v5199 = vmax.bf16 %v4431, %v4900
      %v5200 = vmax.bf16 %v4432, %v4902
      %v5201 = vmax.bf16 %v4433, %v4904
      %v5202 = vmax.bf16 %v4434, %v4906
      %v5203 = vmax.bf16 %v4435, %v4908
      %v5204 = vmax.bf16 %v4436, %v4910
      %v5205 = vmax.bf16 %v4437, %v4912
      %v5206 = vmax.bf16 %v4438, %v4914
      %v5207 = vmax.bf16 %v4439, %v4916
      %v5208 = vmax.bf16 %v4440, %v4918
      %v5209 = vmax.bf16 %v4441, %v4920
      %v5210 = vmax.bf16 %v4442, %v4922
      %v5211 = vmax.bf16 %v4443, %v4924
      %v5212 = vmax.bf16 %v4444, %v4926
      %v5213 = vmax.bf16 %v4445, %v4928
      %v5214 = vmax.bf16 %v4446, %v4930
      %v5215 = vmax.bf16 %v4447, %v4932
      %v5216 = vmax.bf16 %v4448, %v4934
      %v5217 = vmax.bf16 %v4449, %v4936
      %v5218 = vmax.bf16 %v4450, %v4938
      %v5219 = vmax.bf16 %v4451, %v4940
      %v5220 = vmax.bf16 %v4452, %v4942
      %v5221 = vmax.bf16 %v4453, %v4944
      %v5222 = vmax.bf16 %v4454, %v4946
      %v5223 = vmax.bf16 %v4455, %v4948
      %v5224 = vmax.bf16 %v4456, %v4950
      %v5225 = vmax.bf16 %v4457, %v4952
      %v5226 = vmax.bf16 %v4458, %v4954
      %v5227 = vmax.bf16 %v4459, %v4956
      %v5228 = vmax.bf16 %v4460, %v4958
      %v5229 = vmax.bf16 %v4461, %v4960
      %v5230 = vmax.bf16 %v4462, %v4962
      %v5231 = vmax.bf16 %v4463, %v4964
      %v5232 = vmax.bf16 %v4464, %v4966
      %v5233 = vmax.bf16 %v4465, %v4968
      %v5234 = vmax.bf16 %v4466, %v4970
      %v5235 = vmax.bf16 %v4467, %v4972
      %v5236 = vmax.bf16 %v4468, %v4974
      %v5237 = vmax.bf16 %v4469, %v4976
      %v5238 = vmax.bf16 %v4470, %v4978
      %v5239 = vmax.bf16 %v4471, %v4980
      %v5240 = vmax.bf16 %v4472, %v4982
      %v5241 = vmax.bf16 %v4473, %v4984
      %v5242 = vmax.bf16 %v4474, %v4986
      %v5244 = vshrl.u32 %v4475, 16
      %v5246 = vrot.slane %v5244, 7
      %v5247 = vrot.slane %v5246, 4
      %v5249 = vshrl.u32 %v4476, 16
      %v5251 = vrot.slane %v5249, 7
      %v5252 = vrot.slane %v5251, 4
      %v5254 = vshrl.u32 %v4477, 16
      %v5256 = vrot.slane %v5254, 7
      %v5257 = vrot.slane %v5256, 4
      %v5259 = vshrl.u32 %v4478, 16
      %v5261 = vrot.slane %v5259, 7
      %v5262 = vrot.slane %v5261, 4
      %v5264 = vshrl.u32 %v4479, 16
      %v5266 = vrot.slane %v5264, 7
      %v5267 = vrot.slane %v5266, 4
      %v5269 = vshrl.u32 %v4480, 16
      %v5271 = vrot.slane %v5269, 7
      %v5272 = vrot.slane %v5271, 4
      %v5274 = vshrl.u32 %v4481, 16
      %v5276 = vrot.slane %v5274, 7
      %v5277 = vrot.slane %v5276, 4
      %v5279 = vshrl.u32 %v4482, 16
      %v5281 = vrot.slane %v5279, 7
      %v5282 = vrot.slane %v5281, 4
      %v5284 = vshrl.u32 %v4483, 16
      %v5286 = vrot.slane %v5284, 7
      %v5287 = vrot.slane %v5286, 4
      %v5289 = vshrl.u32 %v4484, 16
      %v5291 = vrot.slane %v5289, 7
      %v5292 = vrot.slane %v5291, 4
      %v5294 = vshrl.u32 %v4485, 16
      %v5296 = vrot.slane %v5294, 7
      %v5297 = vrot.slane %v5296, 4
      %v5299 = vshrl.u32 %v4486, 16
      %v5301 = vrot.slane %v5299, 7
      %v5302 = vrot.slane %v5301, 4
      %v5304 = vshrl.u32 %v4487, 16
      %v5306 = vrot.slane %v5304, 7
      %v5307 = vrot.slane %v5306, 4
      %v5309 = vshrl.u32 %v4488, 16
      %v5311 = vrot.slane %v5309, 7
      %v5312 = vrot.slane %v5311, 4
      %v5314 = vshrl.u32 %v4489, 16
      %v5316 = vrot.slane %v5314, 7
      %v5317 = vrot.slane %v5316, 4
      %v5319 = vshrl.u32 %v4490, 16
      %v5321 = vrot.slane %v5319, 7
      %v5322 = vrot.slane %v5321, 4
      %v5324 = vshrl.u32 %v4491, 16
      %v5326 = vrot.slane %v5324, 7
      %v5327 = vrot.slane %v5326, 4
      %v5329 = vshrl.u32 %v4492, 16
      %v5331 = vrot.slane %v5329, 7
      %v5332 = vrot.slane %v5331, 4
      %v5334 = vshrl.u32 %v4493, 16
      %v5336 = vrot.slane %v5334, 7
      %v5337 = vrot.slane %v5336, 4
      %v5339 = vshrl.u32 %v4494, 16
      %v5341 = vrot.slane %v5339, 7
      %v5342 = vrot.slane %v5341, 4
      %v5344 = vshrl.u32 %v4495, 16
      %v5346 = vrot.slane %v5344, 7
      %v5347 = vrot.slane %v5346, 4
      %v5349 = vshrl.u32 %v4496, 16
      %v5351 = vrot.slane %v5349, 7
      %v5352 = vrot.slane %v5351, 4
      %v5354 = vshrl.u32 %v4497, 16
      %v5356 = vrot.slane %v5354, 7
      %v5357 = vrot.slane %v5356, 4
      %v5359 = vshrl.u32 %v4498, 16
      %v5361 = vrot.slane %v5359, 7
      %v5362 = vrot.slane %v5361, 4
      %v5364 = vshrl.u32 %v4499, 16
      %v5366 = vrot.slane %v5364, 7
      %v5367 = vrot.slane %v5366, 4
      %v5369 = vshrl.u32 %v4500, 16
      %v5371 = vrot.slane %v5369, 7
      %v5372 = vrot.slane %v5371, 4
      %v5374 = vshrl.u32 %v4501, 16
      %v5376 = vrot.slane %v5374, 7
      %v5377 = vrot.slane %v5376, 4
      %v5379 = vshrl.u32 %v4502, 16
      %v5381 = vrot.slane %v5379, 7
      %v5382 = vrot.slane %v5381, 4
      %v5384 = vshrl.u32 %v4503, 16
      %v5386 = vrot.slane %v5384, 7
      %v5387 = vrot.slane %v5386, 4
      %v5389 = vshrl.u32 %v4504, 16
      %v5391 = vrot.slane %v5389, 7
      %v5392 = vrot.slane %v5391, 4
      %v5394 = vshrl.u32 %v4505, 16
      %v5396 = vrot.slane %v5394, 7
      %v5397 = vrot.slane %v5396, 4
      %v5399 = vshrl.u32 %v4506, 16
      %v5401 = vrot.slane %v5399, 7
      %v5402 = vrot.slane %v5401, 4
      %v5404 = vshrl.u32 %v4507, 16
      %v5406 = vrot.slane %v5404, 7
      %v5407 = vrot.slane %v5406, 4
      %v5409 = vshrl.u32 %v4508, 16
      %v5411 = vrot.slane %v5409, 7
      %v5412 = vrot.slane %v5411, 4
      %v5414 = vshrl.u32 %v4509, 16
      %v5416 = vrot.slane %v5414, 7
      %v5417 = vrot.slane %v5416, 4
      %v5419 = vshrl.u32 %v4510, 16
      %v5421 = vrot.slane %v5419, 7
      %v5422 = vrot.slane %v5421, 4
      %v5424 = vshrl.u32 %v4511, 16
      %v5426 = vrot.slane %v5424, 7
      %v5427 = vrot.slane %v5426, 4
      %v5429 = vshrl.u32 %v4512, 16
      %v5431 = vrot.slane %v5429, 7
      %v5432 = vrot.slane %v5431, 4
      %v5434 = vshrl.u32 %v4513, 16
      %v5436 = vrot.slane %v5434, 7
      %v5437 = vrot.slane %v5436, 4
      %v5439 = vshrl.u32 %v4514, 16
      %v5441 = vrot.slane %v5439, 7
      %v5442 = vrot.slane %v5441, 4
      %v5444 = vshrl.u32 %v4515, 16
      %v5446 = vrot.slane %v5444, 7
      %v5447 = vrot.slane %v5446, 4
      %v5449 = vshrl.u32 %v4516, 16
      %v5451 = vrot.slane %v5449, 7
      %v5452 = vrot.slane %v5451, 4
      %v5454 = vshrl.u32 %v4517, 16
      %v5456 = vrot.slane %v5454, 7
      %v5457 = vrot.slane %v5456, 4
      %v5459 = vshrl.u32 %v4518, 16
      %v5461 = vrot.slane %v5459, 7
      %v5462 = vrot.slane %v5461, 4
      %v5464 = vshrl.u32 %v4519, 16
      %v5466 = vrot.slane %v5464, 7
      %v5467 = vrot.slane %v5466, 4
      %v5469 = vshrl.u32 %v4520, 16
      %v5471 = vrot.slane %v5469, 7
      %v5472 = vrot.slane %v5471, 4
      %v5474 = vshrl.u32 %v4521, 16
      %v5476 = vrot.slane %v5474, 7
      %v5477 = vrot.slane %v5476, 4
      %v5479 = vshrl.u32 %v4522, 16
      %v5481 = vrot.slane %v5479, 7
      %v5482 = vrot.slane %v5481, 4
      %v5484 = vshrl.u32 %v4523, 16
      %v5486 = vrot.slane %v5484, 7
      %v5487 = vrot.slane %v5486, 4
      %v5489 = vshrl.u32 %v4524, 16
      %v5491 = vrot.slane %v5489, 7
      %v5492 = vrot.slane %v5491, 4
      %v5494 = vshrl.u32 %v4525, 16
      %v5496 = vrot.slane %v5494, 7
      %v5497 = vrot.slane %v5496, 4
      %v5499 = vshrl.u32 %v4526, 16
      %v5501 = vrot.slane %v5499, 7
      %v5502 = vrot.slane %v5501, 4
      %v5504 = vshrl.u32 %v4527, 16
      %v5506 = vrot.slane %v5504, 7
      %v5507 = vrot.slane %v5506, 4
      %v5509 = vshrl.u32 %v4528, 16
      %v5511 = vrot.slane %v5509, 7
      %v5512 = vrot.slane %v5511, 4
      %v5514 = vshrl.u32 %v4529, 16
      %v5516 = vrot.slane %v5514, 7
      %v5517 = vrot.slane %v5516, 4
      %v5519 = vshrl.u32 %v4530, 16
      %v5521 = vrot.slane %v5519, 7
      %v5522 = vrot.slane %v5521, 4
      %v5524 = vshrl.u32 %v4531, 16
      %v5526 = vrot.slane %v5524, 7
      %v5527 = vrot.slane %v5526, 4
      %v5529 = vshrl.u32 %v4532, 16
      %v5531 = vrot.slane %v5529, 7
      %v5532 = vrot.slane %v5531, 4
      %v5534 = vshrl.u32 %v4533, 16
      %v5536 = vrot.slane %v5534, 7
      %v5537 = vrot.slane %v5536, 4
      %v5539 = vshrl.u32 %v4534, 16
      %v5541 = vrot.slane %v5539, 7
      %v5542 = vrot.slane %v5541, 4
      %v5544 = vshrl.u32 %v4535, 16
      %v5546 = vrot.slane %v5544, 7
      %v5547 = vrot.slane %v5546, 4
      %v5549 = vshrl.u32 %v4536, 16
      %v5551 = vrot.slane %v5549, 7
      %v5552 = vrot.slane %v5551, 4
      %v5554 = vshrl.u32 %v4537, 16
      %v5556 = vrot.slane %v5554, 7
      %v5557 = vrot.slane %v5556, 4
      %v5559 = vshrl.u32 %v4538, 16
      %v5561 = vrot.slane %v5559, 7
      %v5562 = vrot.slane %v5561, 4
      %v5564 = vshrl.u32 %v4539, 16
      %v5566 = vrot.slane %v5564, 7
      %v5567 = vrot.slane %v5566, 4
      %v5569 = vshrl.u32 %v4540, 16
      %v5571 = vrot.slane %v5569, 7
      %v5572 = vrot.slane %v5571, 4
      %v5574 = vshrl.u32 %v4541, 16
      %v5576 = vrot.slane %v5574, 7
      %v5577 = vrot.slane %v5576, 4
      %v5579 = vshrl.u32 %v4542, 16
      %v5581 = vrot.slane %v5579, 7
      %v5582 = vrot.slane %v5581, 4
      %v5584 = vshrl.u32 %v4543, 16
      %v5586 = vrot.slane %v5584, 7
      %v5587 = vrot.slane %v5586, 4
      %v5589 = vshrl.u32 %v4544, 16
      %v5591 = vrot.slane %v5589, 7
      %v5592 = vrot.slane %v5591, 4
      %v5594 = vshrl.u32 %v4545, 16
      %v5596 = vrot.slane %v5594, 7
      %v5597 = vrot.slane %v5596, 4
      %v5599 = vshrl.u32 %v4546, 16
      %v5601 = vrot.slane %v5599, 7
      %v5602 = vrot.slane %v5601, 4
      %v5604 = vshrl.u32 %v4547, 16
      %v5606 = vrot.slane %v5604, 7
      %v5607 = vrot.slane %v5606, 4
      %v5609 = vshrl.u32 %v4548, 16
      %v5611 = vrot.slane %v5609, 7
      %v5612 = vrot.slane %v5611, 4
      %v5614 = vshrl.u32 %v4549, 16
      %v5616 = vrot.slane %v5614, 7
      %v5617 = vrot.slane %v5616, 4
      %v5619 = vshrl.u32 %v4550, 16
      %v5621 = vrot.slane %v5619, 7
      %v5622 = vrot.slane %v5621, 4
      %v5624 = vshrl.u32 %v4551, 16
      %v5626 = vrot.slane %v5624, 7
      %v5627 = vrot.slane %v5626, 4
      %v5629 = vshrl.u32 %v4552, 16
      %v5631 = vrot.slane %v5629, 7
      %v5632 = vrot.slane %v5631, 4
      %v5634 = vshrl.u32 %v4553, 16
      %v5636 = vrot.slane %v5634, 7
      %v5637 = vrot.slane %v5636, 4
      %v5639 = vshrl.u32 %v4554, 16
      %v5641 = vrot.slane %v5639, 7
      %v5642 = vrot.slane %v5641, 4
      %v5644 = vshrl.u32 %v4555, 16
      %v5646 = vrot.slane %v5644, 7
      %v5647 = vrot.slane %v5646, 4
      %v5649 = vshrl.u32 %v4556, 16
      %v5651 = vrot.slane %v5649, 7
      %v5652 = vrot.slane %v5651, 4
      %v5654 = vshrl.u32 %v4557, 16
      %v5656 = vrot.slane %v5654, 7
      %v5657 = vrot.slane %v5656, 4
      %v5659 = vshrl.u32 %v4558, 16
      %v5661 = vrot.slane %v5659, 7
      %v5662 = vrot.slane %v5661, 4
      %v5664 = vshrl.u32 %v4559, 16
      %v5666 = vrot.slane %v5664, 7
      %v5667 = vrot.slane %v5666, 4
      %v5669 = vshrl.u32 %v4560, 16
      %v5671 = vrot.slane %v5669, 7
      %v5672 = vrot.slane %v5671, 4
      %v5674 = vshrl.u32 %v4561, 16
      %v5676 = vrot.slane %v5674, 7
      %v5677 = vrot.slane %v5676, 4
      %v5679 = vshrl.u32 %v4562, 16
      %v5681 = vrot.slane %v5679, 7
      %v5682 = vrot.slane %v5681, 4
      %v5684 = vshrl.u32 %v4563, 16
      %v5686 = vrot.slane %v5684, 7
      %v5687 = vrot.slane %v5686, 4
      %v5689 = vshrl.u32 %v4564, 16
      %v5691 = vrot.slane %v5689, 7
      %v5692 = vrot.slane %v5691, 4
      %v5694 = vshrl.u32 %v4565, 16
      %v5696 = vrot.slane %v5694, 7
      %v5697 = vrot.slane %v5696, 4
      %v5699 = vshrl.u32 %v4566, 16
      %v5701 = vrot.slane %v5699, 7
      %v5702 = vrot.slane %v5701, 4
      %v5704 = vshrl.u32 %v4567, 16
      %v5706 = vrot.slane %v5704, 7
      %v5707 = vrot.slane %v5706, 4
      %v5709 = vshrl.u32 %v4568, 16
      %v5711 = vrot.slane %v5709, 7
      %v5712 = vrot.slane %v5711, 4
      %v5714 = vshrl.u32 %v4569, 16
      %v5716 = vrot.slane %v5714, 7
      %v5717 = vrot.slane %v5716, 4
      %v5719 = vshrl.u32 %v4570, 16
      %v5721 = vrot.slane %v5719, 7
      %v5722 = vrot.slane %v5721, 4
      %v5724 = vshrl.u32 %v4571, 16
      %v5726 = vrot.slane %v5724, 7
      %v5727 = vrot.slane %v5726, 4
      %v5729 = vshrl.u32 %v4572, 16
      %v5731 = vrot.slane %v5729, 7
      %v5732 = vrot.slane %v5731, 4
      %v5734 = vshrl.u32 %v4573, 16
      %v5736 = vrot.slane %v5734, 7
      %v5737 = vrot.slane %v5736, 4
      %v5739 = vshrl.u32 %v4574, 16
      %v5741 = vrot.slane %v5739, 7
      %v5742 = vrot.slane %v5741, 4
      %v5744 = vshrl.u32 %v4575, 16
      %v5746 = vrot.slane %v5744, 7
      %v5747 = vrot.slane %v5746, 4
      %v5749 = vshrl.u32 %v4576, 16
      %v5751 = vrot.slane %v5749, 7
      %v5752 = vrot.slane %v5751, 4
      %v5754 = vshrl.u32 %v4577, 16
      %v5756 = vrot.slane %v5754, 7
      %v5757 = vrot.slane %v5756, 4
      %v5759 = vshrl.u32 %v4578, 16
      %v5761 = vrot.slane %v5759, 7
      %v5762 = vrot.slane %v5761, 4
      %v5764 = vshrl.u32 %v4579, 16
      %v5766 = vrot.slane %v5764, 7
      %v5767 = vrot.slane %v5766, 4
      %v5769 = vshrl.u32 %v4580, 16
      %v5771 = vrot.slane %v5769, 7
      %v5772 = vrot.slane %v5771, 4
      %v5774 = vshrl.u32 %v4581, 16
      %v5776 = vrot.slane %v5774, 7
      %v5777 = vrot.slane %v5776, 4
      %v5779 = vshrl.u32 %v4582, 16
      %v5781 = vrot.slane %v5779, 7
      %v5782 = vrot.slane %v5781, 4
      %v5784 = vshrl.u32 %v4583, 16
      %v5786 = vrot.slane %v5784, 7
      %v5787 = vrot.slane %v5786, 4
      %v5789 = vshrl.u32 %v4584, 16
      %v5791 = vrot.slane %v5789, 7
      %v5792 = vrot.slane %v5791, 4
      %v5794 = vshrl.u32 %v4585, 16
      %v5796 = vrot.slane %v5794, 7
      %v5797 = vrot.slane %v5796, 4
      %v5799 = vshrl.u32 %v4586, 16
      %v5801 = vrot.slane %v5799, 7
      %v5802 = vrot.slane %v5801, 4
      %v5804 = vshrl.u32 %v4587, 16
      %v5806 = vrot.slane %v5804, 7
      %v5807 = vrot.slane %v5806, 4
      %v5809 = vshrl.u32 %v4588, 16
      %v5811 = vrot.slane %v5809, 7
      %v5812 = vrot.slane %v5811, 4
      %v5814 = vshrl.u32 %v4589, 16
      %v5816 = vrot.slane %v5814, 7
      %v5817 = vrot.slane %v5816, 4
      %v5819 = vshrl.u32 %v4590, 16
      %v5821 = vrot.slane %v5819, 7
      %v5822 = vrot.slane %v5821, 4
      %v5824 = vshrl.u32 %v4591, 16
      %v5826 = vrot.slane %v5824, 7
      %v5827 = vrot.slane %v5826, 4
      %v5829 = vshrl.u32 %v4592, 16
      %v5831 = vrot.slane %v5829, 7
      %v5832 = vrot.slane %v5831, 4
      %v5834 = vshrl.u32 %v4593, 16
      %v5836 = vrot.slane %v5834, 7
      %v5837 = vrot.slane %v5836, 4
      %v5839 = vshrl.u32 %v4594, 16
      %v5841 = vrot.slane %v5839, 7
      %v5842 = vrot.slane %v5841, 4
      %v5844 = vshrl.u32 %v4595, 16
      %v5846 = vrot.slane %v5844, 7
      %v5847 = vrot.slane %v5846, 4
      %v5849 = vshrl.u32 %v4596, 16
      %v5851 = vrot.slane %v5849, 7
      %v5852 = vrot.slane %v5851, 4
      %v5854 = vshrl.u32 %v4597, 16
      %v5856 = vrot.slane %v5854, 7
      %v5857 = vrot.slane %v5856, 4
      %v5859 = vshrl.u32 %v4598, 16
      %v5861 = vrot.slane %v5859, 7
      %v5862 = vrot.slane %v5861, 4
      %v5864 = vshrl.u32 %v4599, 16
      %v5866 = vrot.slane %v5864, 7
      %v5867 = vrot.slane %v5866, 4
      %v5869 = vshrl.u32 %v4600, 16
      %v5871 = vrot.slane %v5869, 7
      %v5872 = vrot.slane %v5871, 4
      %v5874 = vshrl.u32 %v4601, 16
      %v5876 = vrot.slane %v5874, 7
      %v5877 = vrot.slane %v5876, 4
      %v5879 = vshrl.u32 %v4602, 16
      %v5881 = vrot.slane %v5879, 7
      %v5882 = vrot.slane %v5881, 4
      %v6011 = vmax.bf16 %v5115, %v5247
      %v6012 = vmax.bf16 %v5116, %v5252
      %v6013 = vmax.bf16 %v5117, %v5257
      %v6014 = vmax.bf16 %v5118, %v5262
      %v6015 = vmax.bf16 %v5119, %v5267
      %v6016 = vmax.bf16 %v5120, %v5272
      %v6017 = vmax.bf16 %v5121, %v5277
      %v6018 = vmax.bf16 %v5122, %v5282
      %v6019 = vmax.bf16 %v5123, %v5287
      %v6020 = vmax.bf16 %v5124, %v5292
      %v6021 = vmax.bf16 %v5125, %v5297
      %v6022 = vmax.bf16 %v5126, %v5302
      %v6023 = vmax.bf16 %v5127, %v5307
      %v6024 = vmax.bf16 %v5128, %v5312
      %v6025 = vmax.bf16 %v5129, %v5317
      %v6026 = vmax.bf16 %v5130, %v5322
      %v6027 = vmax.bf16 %v5131, %v5327
      %v6028 = vmax.bf16 %v5132, %v5332
      %v6029 = vmax.bf16 %v5133, %v5337
      %v6030 = vmax.bf16 %v5134, %v5342
      %v6031 = vmax.bf16 %v5135, %v5347
      %v6032 = vmax.bf16 %v5136, %v5352
      %v6033 = vmax.bf16 %v5137, %v5357
      %v6034 = vmax.bf16 %v5138, %v5362
      %v6035 = vmax.bf16 %v5139, %v5367
      %v6036 = vmax.bf16 %v5140, %v5372
      %v6037 = vmax.bf16 %v5141, %v5377
      %v6038 = vmax.bf16 %v5142, %v5382
      %v6039 = vmax.bf16 %v5143, %v5387
      %v6040 = vmax.bf16 %v5144, %v5392
      %v6041 = vmax.bf16 %v5145, %v5397
      %v6042 = vmax.bf16 %v5146, %v5402
      %v6043 = vmax.bf16 %v5147, %v5407
      %v6044 = vmax.bf16 %v5148, %v5412
      %v6045 = vmax.bf16 %v5149, %v5417
      %v6046 = vmax.bf16 %v5150, %v5422
      %v6047 = vmax.bf16 %v5151, %v5427
      %v6048 = vmax.bf16 %v5152, %v5432
      %v6049 = vmax.bf16 %v5153, %v5437
      %v6050 = vmax.bf16 %v5154, %v5442
      %v6051 = vmax.bf16 %v5155, %v5447
      %v6052 = vmax.bf16 %v5156, %v5452
      %v6053 = vmax.bf16 %v5157, %v5457
      %v6054 = vmax.bf16 %v5158, %v5462
      %v6055 = vmax.bf16 %v5159, %v5467
      %v6056 = vmax.bf16 %v5160, %v5472
      %v6057 = vmax.bf16 %v5161, %v5477
      %v6058 = vmax.bf16 %v5162, %v5482
      %v6059 = vmax.bf16 %v5163, %v5487
      %v6060 = vmax.bf16 %v5164, %v5492
      %v6061 = vmax.bf16 %v5165, %v5497
      %v6062 = vmax.bf16 %v5166, %v5502
      %v6063 = vmax.bf16 %v5167, %v5507
      %v6064 = vmax.bf16 %v5168, %v5512
      %v6065 = vmax.bf16 %v5169, %v5517
      %v6066 = vmax.bf16 %v5170, %v5522
      %v6067 = vmax.bf16 %v5171, %v5527
      %v6068 = vmax.bf16 %v5172, %v5532
      %v6069 = vmax.bf16 %v5173, %v5537
      %v6070 = vmax.bf16 %v5174, %v5542
      %v6071 = vmax.bf16 %v5175, %v5547
      %v6072 = vmax.bf16 %v5176, %v5552
      %v6073 = vmax.bf16 %v5177, %v5557
      %v6074 = vmax.bf16 %v5178, %v5562
      %v6075 = vmax.bf16 %v5179, %v5567
      %v6076 = vmax.bf16 %v5180, %v5572
      %v6077 = vmax.bf16 %v5181, %v5577
      %v6078 = vmax.bf16 %v5182, %v5582
      %v6079 = vmax.bf16 %v5183, %v5587
      %v6080 = vmax.bf16 %v5184, %v5592
      %v6081 = vmax.bf16 %v5185, %v5597
      %v6082 = vmax.bf16 %v5186, %v5602
      %v6083 = vmax.bf16 %v5187, %v5607
      %v6084 = vmax.bf16 %v5188, %v5612
      %v6085 = vmax.bf16 %v5189, %v5617
      %v6086 = vmax.bf16 %v5190, %v5622
      %v6087 = vmax.bf16 %v5191, %v5627
      %v6088 = vmax.bf16 %v5192, %v5632
      %v6089 = vmax.bf16 %v5193, %v5637
      %v6090 = vmax.bf16 %v5194, %v5642
      %v6091 = vmax.bf16 %v5195, %v5647
      %v6092 = vmax.bf16 %v5196, %v5652
      %v6093 = vmax.bf16 %v5197, %v5657
      %v6094 = vmax.bf16 %v5198, %v5662
      %v6095 = vmax.bf16 %v5199, %v5667
      %v6096 = vmax.bf16 %v5200, %v5672
      %v6097 = vmax.bf16 %v5201, %v5677
      %v6098 = vmax.bf16 %v5202, %v5682
      %v6099 = vmax.bf16 %v5203, %v5687
      %v6100 = vmax.bf16 %v5204, %v5692
      %v6101 = vmax.bf16 %v5205, %v5697
      %v6102 = vmax.bf16 %v5206, %v5702
      %v6103 = vmax.bf16 %v5207, %v5707
      %v6104 = vmax.bf16 %v5208, %v5712
      %v6105 = vmax.bf16 %v5209, %v5717
      %v6106 = vmax.bf16 %v5210, %v5722
      %v6107 = vmax.bf16 %v5211, %v5727
      %v6108 = vmax.bf16 %v5212, %v5732
      %v6109 = vmax.bf16 %v5213, %v5737
      %v6110 = vmax.bf16 %v5214, %v5742
      %v6111 = vmax.bf16 %v5215, %v5747
      %v6112 = vmax.bf16 %v5216, %v5752
      %v6113 = vmax.bf16 %v5217, %v5757
      %v6114 = vmax.bf16 %v5218, %v5762
      %v6115 = vmax.bf16 %v5219, %v5767
      %v6116 = vmax.bf16 %v5220, %v5772
      %v6117 = vmax.bf16 %v5221, %v5777
      %v6118 = vmax.bf16 %v5222, %v5782
      %v6119 = vmax.bf16 %v5223, %v5787
      %v6120 = vmax.bf16 %v5224, %v5792
      %v6121 = vmax.bf16 %v5225, %v5797
      %v6122 = vmax.bf16 %v5226, %v5802
      %v6123 = vmax.bf16 %v5227, %v5807
      %v6124 = vmax.bf16 %v5228, %v5812
      %v6125 = vmax.bf16 %v5229, %v5817
      %v6126 = vmax.bf16 %v5230, %v5822
      %v6127 = vmax.bf16 %v5231, %v5827
      %v6128 = vmax.bf16 %v5232, %v5832
      %v6129 = vmax.bf16 %v5233, %v5837
      %v6130 = vmax.bf16 %v5234, %v5842
      %v6131 = vmax.bf16 %v5235, %v5847
      %v6132 = vmax.bf16 %v5236, %v5852
      %v6133 = vmax.bf16 %v5237, %v5857
      %v6134 = vmax.bf16 %v5238, %v5862
      %v6135 = vmax.bf16 %v5239, %v5867
      %v6136 = vmax.bf16 %v5240, %v5872
      %v6137 = vmax.bf16 %v5241, %v5877
      %v6138 = vmax.bf16 %v5242, %v5882
      %v6139 = vld [vmem:[%s115 + $0x4] sm:$0x1]
      %v6140 = vld [vmem:[%s115 + $0xc] sm:$0x1]
      %v6141 = vld [vmem:[%s115 + $0x14] sm:$0x1]
      %v6142 = vld [vmem:[%s115 + $0x1c] sm:$0x1]
      %v6143 = vld [vmem:[%s115 + $0x24] sm:$0x1]
      %v6144 = vld [vmem:[%s115 + $0x2c] sm:$0x1]
      %v6145 = vld [vmem:[%s115 + $0x34] sm:$0x1]
      %v6146 = vld [vmem:[%s115 + $0x3c] sm:$0x1]
      %v6147 = vld [vmem:[%s115 + $0x44] sm:$0x1]
      %v6148 = vld [vmem:[%s115 + $0x4c] sm:$0x1]
      %v6149 = vld [vmem:[%s115 + $0x54] sm:$0x1]
      %v6150 = vld [vmem:[%s115 + $0x5c] sm:$0x1]
      %v6151 = vld [vmem:[%s115 + $0x64] sm:$0x1]
      %v6152 = vld [vmem:[%s115 + $0x6c] sm:$0x1]
      %v6153 = vld [vmem:[%s115 + $0x74] sm:$0x1]
      %v6154 = vld [vmem:[%s115 + $0x7c] sm:$0x1]
      %v6155 = vld [vmem:[%s115 + $0x84] sm:$0x1]
      %v6156 = vld [vmem:[%s115 + $0x8c] sm:$0x1]
      %v6157 = vld [vmem:[%s115 + $0x94] sm:$0x1]
      %v6158 = vld [vmem:[%s115 + $0x9c] sm:$0x1]
      %v6159 = vld [vmem:[%s115 + $0xa4] sm:$0x1]
      %v6160 = vld [vmem:[%s115 + $0xac] sm:$0x1]
      %v6161 = vld [vmem:[%s115 + $0xb4] sm:$0x1]
      %v6162 = vld [vmem:[%s115 + $0xbc] sm:$0x1]
      %v6163 = vld [vmem:[%s115 + $0xc4] sm:$0x1]
      %v6164 = vld [vmem:[%s115 + $0xcc] sm:$0x1]
      %v6165 = vld [vmem:[%s115 + $0xd4] sm:$0x1]
      %v6166 = vld [vmem:[%s115 + $0xdc] sm:$0x1]
      %v6167 = vld [vmem:[%s115 + $0xe4] sm:$0x1]
      %v6168 = vld [vmem:[%s115 + $0xec] sm:$0x1]
      %v6169 = vld [vmem:[%s115 + $0xf4] sm:$0x1]
      %v6170 = vld [vmem:[%s115 + $0xfc] sm:$0x1]
      %v6171 = vld [vmem:[%s115 + $0x104] sm:$0x1]
      %v6172 = vld [vmem:[%s115 + $0x10c] sm:$0x1]
      %v6173 = vld [vmem:[%s115 + $0x114] sm:$0x1]
      %v6174 = vld [vmem:[%s115 + $0x11c] sm:$0x1]
      %v6175 = vld [vmem:[%s115 + $0x124] sm:$0x1]
      %v6176 = vld [vmem:[%s115 + $0x12c] sm:$0x1]
      %v6177 = vld [vmem:[%s115 + $0x134] sm:$0x1]
      %v6178 = vld [vmem:[%s115 + $0x13c] sm:$0x1]
      %v6179 = vld [vmem:[%s115 + $0x144] sm:$0x1]
      %v6180 = vld [vmem:[%s115 + $0x14c] sm:$0x1]
      %v6181 = vld [vmem:[%s115 + $0x154] sm:$0x1]
      %v6182 = vld [vmem:[%s115 + $0x15c] sm:$0x1]
      %v6183 = vld [vmem:[%s115 + $0x164] sm:$0x1]
      %v6184 = vld [vmem:[%s115 + $0x16c] sm:$0x1]
      %v6185 = vld [vmem:[%s115 + $0x174] sm:$0x1]
      %v6186 = vld [vmem:[%s115 + $0x17c] sm:$0x1]
      %v6187 = vld [vmem:[%s115 + $0x184] sm:$0x1]
      %v6188 = vld [vmem:[%s115 + $0x18c] sm:$0x1]
      %v6189 = vld [vmem:[%s115 + $0x194] sm:$0x1]
      %v6190 = vld [vmem:[%s115 + $0x19c] sm:$0x1]
      %v6191 = vld [vmem:[%s115 + $0x1a4] sm:$0x1]
      %v6192 = vld [vmem:[%s115 + $0x1ac] sm:$0x1]
      %v6193 = vld [vmem:[%s115 + $0x1b4] sm:$0x1]
      %v6194 = vld [vmem:[%s115 + $0x1bc] sm:$0x1]
      %v6195 = vld [vmem:[%s115 + $0x1c4] sm:$0x1]
      %v6196 = vld [vmem:[%s115 + $0x1cc] sm:$0x1]
      %v6197 = vld [vmem:[%s115 + $0x1d4] sm:$0x1]
      %v6198 = vld [vmem:[%s115 + $0x1dc] sm:$0x1]
      %v6199 = vld [vmem:[%s115 + $0x1e4] sm:$0x1]
      %v6200 = vld [vmem:[%s115 + $0x1ec] sm:$0x1]
      %v6201 = vld [vmem:[%s115 + $0x1f4] sm:$0x1]
      %v6202 = vld [vmem:[%s115 + $0x1fc] sm:$0x1]
      %v6203 = vld [vmem:[%s115 + $0x204] sm:$0x1]
      %v6204 = vld [vmem:[%s115 + $0x20c] sm:$0x1]
      %v6205 = vld [vmem:[%s115 + $0x214] sm:$0x1]
      %v6206 = vld [vmem:[%s115 + $0x21c] sm:$0x1]
      %v6207 = vld [vmem:[%s115 + $0x224] sm:$0x1]
      %v6208 = vld [vmem:[%s115 + $0x22c] sm:$0x1]
      %v6209 = vld [vmem:[%s115 + $0x234] sm:$0x1]
      %v6210 = vld [vmem:[%s115 + $0x23c] sm:$0x1]
      %v6211 = vld [vmem:[%s115 + $0x244] sm:$0x1]
      %v6212 = vld [vmem:[%s115 + $0x24c] sm:$0x1]
      %v6213 = vld [vmem:[%s115 + $0x254] sm:$0x1]
      %v6214 = vld [vmem:[%s115 + $0x25c] sm:$0x1]
      %v6215 = vld [vmem:[%s115 + $0x264] sm:$0x1]
      %v6216 = vld [vmem:[%s115 + $0x26c] sm:$0x1]
      %v6217 = vld [vmem:[%s115 + $0x274] sm:$0x1]
      %v6218 = vld [vmem:[%s115 + $0x27c] sm:$0x1]
      %v6219 = vld [vmem:[%s115 + $0x284] sm:$0x1]
      %v6220 = vld [vmem:[%s115 + $0x28c] sm:$0x1]
      %v6221 = vld [vmem:[%s115 + $0x294] sm:$0x1]
      %v6222 = vld [vmem:[%s115 + $0x29c] sm:$0x1]
      %v6223 = vld [vmem:[%s115 + $0x2a4] sm:$0x1]
      %v6224 = vld [vmem:[%s115 + $0x2ac] sm:$0x1]
      %v6225 = vld [vmem:[%s115 + $0x2b4] sm:$0x1]
      %v6226 = vld [vmem:[%s115 + $0x2bc] sm:$0x1]
      %v6227 = vld [vmem:[%s115 + $0x2c4] sm:$0x1]
      %v6228 = vld [vmem:[%s115 + $0x2cc] sm:$0x1]
      %v6229 = vld [vmem:[%s115 + $0x2d4] sm:$0x1]
      %v6230 = vld [vmem:[%s115 + $0x2dc] sm:$0x1]
      %v6231 = vld [vmem:[%s115 + $0x2e4] sm:$0x1]
      %v6232 = vld [vmem:[%s115 + $0x2ec] sm:$0x1]
      %v6233 = vld [vmem:[%s115 + $0x2f4] sm:$0x1]
      %v6234 = vld [vmem:[%s115 + $0x2fc] sm:$0x1]
      %v6235 = vld [vmem:[%s115 + $0x304] sm:$0x1]
      %v6236 = vld [vmem:[%s115 + $0x30c] sm:$0x1]
      %v6237 = vld [vmem:[%s115 + $0x314] sm:$0x1]
      %v6238 = vld [vmem:[%s115 + $0x31c] sm:$0x1]
      %v6239 = vld [vmem:[%s115 + $0x324] sm:$0x1]
      %v6240 = vld [vmem:[%s115 + $0x32c] sm:$0x1]
      %v6241 = vld [vmem:[%s115 + $0x334] sm:$0x1]
      %v6242 = vld [vmem:[%s115 + $0x33c] sm:$0x1]
      %v6243 = vld [vmem:[%s115 + $0x344] sm:$0x1]
      %v6244 = vld [vmem:[%s115 + $0x34c] sm:$0x1]
      %v6245 = vld [vmem:[%s115 + $0x354] sm:$0x1]
      %v6246 = vld [vmem:[%s115 + $0x35c] sm:$0x1]
      %v6247 = vld [vmem:[%s115 + $0x364] sm:$0x1]
      %v6248 = vld [vmem:[%s115 + $0x36c] sm:$0x1]
      %v6249 = vld [vmem:[%s115 + $0x374] sm:$0x1]
      %v6250 = vld [vmem:[%s115 + $0x37c] sm:$0x1]
      %v6251 = vld [vmem:[%s115 + $0x384] sm:$0x1]
      %v6252 = vld [vmem:[%s115 + $0x38c] sm:$0x1]
      %v6253 = vld [vmem:[%s115 + $0x394] sm:$0x1]
      %v6254 = vld [vmem:[%s115 + $0x39c] sm:$0x1]
      %v6255 = vld [vmem:[%s115 + $0x3a4] sm:$0x1]
      %v6256 = vld [vmem:[%s115 + $0x3ac] sm:$0x1]
      %v6257 = vld [vmem:[%s115 + $0x3b4] sm:$0x1]
      %v6258 = vld [vmem:[%s115 + $0x3bc] sm:$0x1]
      %v6259 = vld [vmem:[%s115 + $0x3c4] sm:$0x1]
      %v6260 = vld [vmem:[%s115 + $0x3cc] sm:$0x1]
      %v6261 = vld [vmem:[%s115 + $0x3d4] sm:$0x1]
      %v6262 = vld [vmem:[%s115 + $0x3dc] sm:$0x1]
      %v6263 = vld [vmem:[%s115 + $0x3e4] sm:$0x1]
      %v6264 = vld [vmem:[%s115 + $0x3ec] sm:$0x1]
      %v6265 = vld [vmem:[%s115 + $0x3f4] sm:$0x1]
      %v6266 = vld [vmem:[%s115 + $0x3fc] sm:$0x1]
      %v6267 = vmax.bf16 %v6011, %v6139
      %v6268 = vmax.bf16 %v6012, %v6140
      %v6269 = vmax.bf16 %v6013, %v6141
      %v6270 = vmax.bf16 %v6014, %v6142
      %v6271 = vmax.bf16 %v6015, %v6143
      %v6272 = vmax.bf16 %v6016, %v6144
      %v6273 = vmax.bf16 %v6017, %v6145
      %v6274 = vmax.bf16 %v6018, %v6146
      %v6275 = vmax.bf16 %v6019, %v6147
      %v6276 = vmax.bf16 %v6020, %v6148
      %v6277 = vmax.bf16 %v6021, %v6149
      %v6278 = vmax.bf16 %v6022, %v6150
      %v6279 = vmax.bf16 %v6023, %v6151
      %v6280 = vmax.bf16 %v6024, %v6152
      %v6281 = vmax.bf16 %v6025, %v6153
      %v6282 = vmax.bf16 %v6026, %v6154
      %v6283 = vmax.bf16 %v6027, %v6155
      %v6284 = vmax.bf16 %v6028, %v6156
      %v6285 = vmax.bf16 %v6029, %v6157
      %v6286 = vmax.bf16 %v6030, %v6158
      %v6287 = vmax.bf16 %v6031, %v6159
      %v6288 = vmax.bf16 %v6032, %v6160
      %v6289 = vmax.bf16 %v6033, %v6161
      %v6290 = vmax.bf16 %v6034, %v6162
      %v6291 = vmax.bf16 %v6035, %v6163
      %v6292 = vmax.bf16 %v6036, %v6164
      %v6293 = vmax.bf16 %v6037, %v6165
      %v6294 = vmax.bf16 %v6038, %v6166
      %v6295 = vmax.bf16 %v6039, %v6167
      %v6296 = vmax.bf16 %v6040, %v6168
      %v6297 = vmax.bf16 %v6041, %v6169
      %v6298 = vmax.bf16 %v6042, %v6170
      %v6299 = vmax.bf16 %v6043, %v6171
      %v6300 = vmax.bf16 %v6044, %v6172
      %v6301 = vmax.bf16 %v6045, %v6173
      %v6302 = vmax.bf16 %v6046, %v6174
      %v6303 = vmax.bf16 %v6047, %v6175
      %v6304 = vmax.bf16 %v6048, %v6176
      %v6305 = vmax.bf16 %v6049, %v6177
      %v6306 = vmax.bf16 %v6050, %v6178
      %v6307 = vmax.bf16 %v6051, %v6179
      %v6308 = vmax.bf16 %v6052, %v6180
      %v6309 = vmax.bf16 %v6053, %v6181
      %v6310 = vmax.bf16 %v6054, %v6182
      %v6311 = vmax.bf16 %v6055, %v6183
      %v6312 = vmax.bf16 %v6056, %v6184
      %v6313 = vmax.bf16 %v6057, %v6185
      %v6314 = vmax.bf16 %v6058, %v6186
      %v6315 = vmax.bf16 %v6059, %v6187
      %v6316 = vmax.bf16 %v6060, %v6188
      %v6317 = vmax.bf16 %v6061, %v6189
      %v6318 = vmax.bf16 %v6062, %v6190
      %v6319 = vmax.bf16 %v6063, %v6191
      %v6320 = vmax.bf16 %v6064, %v6192
      %v6321 = vmax.bf16 %v6065, %v6193
      %v6322 = vmax.bf16 %v6066, %v6194
      %v6323 = vmax.bf16 %v6067, %v6195
      %v6324 = vmax.bf16 %v6068, %v6196
      %v6325 = vmax.bf16 %v6069, %v6197
      %v6326 = vmax.bf16 %v6070, %v6198
      %v6327 = vmax.bf16 %v6071, %v6199
      %v6328 = vmax.bf16 %v6072, %v6200
      %v6329 = vmax.bf16 %v6073, %v6201
      %v6330 = vmax.bf16 %v6074, %v6202
      %v6331 = vmax.bf16 %v6075, %v6203
      %v6332 = vmax.bf16 %v6076, %v6204
      %v6333 = vmax.bf16 %v6077, %v6205
      %v6334 = vmax.bf16 %v6078, %v6206
      %v6335 = vmax.bf16 %v6079, %v6207
      %v6336 = vmax.bf16 %v6080, %v6208
      %v6337 = vmax.bf16 %v6081, %v6209
      %v6338 = vmax.bf16 %v6082, %v6210
      %v6339 = vmax.bf16 %v6083, %v6211
      %v6340 = vmax.bf16 %v6084, %v6212
      %v6341 = vmax.bf16 %v6085, %v6213
      %v6342 = vmax.bf16 %v6086, %v6214
      %v6343 = vmax.bf16 %v6087, %v6215
      %v6344 = vmax.bf16 %v6088, %v6216
      %v6345 = vmax.bf16 %v6089, %v6217
      %v6346 = vmax.bf16 %v6090, %v6218
      %v6347 = vmax.bf16 %v6091, %v6219
      %v6348 = vmax.bf16 %v6092, %v6220
      %v6349 = vmax.bf16 %v6093, %v6221
      %v6350 = vmax.bf16 %v6094, %v6222
      %v6351 = vmax.bf16 %v6095, %v6223
      %v6352 = vmax.bf16 %v6096, %v6224
      %v6353 = vmax.bf16 %v6097, %v6225
      %v6354 = vmax.bf16 %v6098, %v6226
      %v6355 = vmax.bf16 %v6099, %v6227
      %v6356 = vmax.bf16 %v6100, %v6228
      %v6357 = vmax.bf16 %v6101, %v6229
      %v6358 = vmax.bf16 %v6102, %v6230
      %v6359 = vmax.bf16 %v6103, %v6231
      %v6360 = vmax.bf16 %v6104, %v6232
      %v6361 = vmax.bf16 %v6105, %v6233
      %v6362 = vmax.bf16 %v6106, %v6234
      %v6363 = vmax.bf16 %v6107, %v6235
      %v6364 = vmax.bf16 %v6108, %v6236
      %v6365 = vmax.bf16 %v6109, %v6237
      %v6366 = vmax.bf16 %v6110, %v6238
      %v6367 = vmax.bf16 %v6111, %v6239
      %v6368 = vmax.bf16 %v6112, %v6240
      %v6369 = vmax.bf16 %v6113, %v6241
      %v6370 = vmax.bf16 %v6114, %v6242
      %v6371 = vmax.bf16 %v6115, %v6243
      %v6372 = vmax.bf16 %v6116, %v6244
      %v6373 = vmax.bf16 %v6117, %v6245
      %v6374 = vmax.bf16 %v6118, %v6246
      %v6375 = vmax.bf16 %v6119, %v6247
      %v6376 = vmax.bf16 %v6120, %v6248
      %v6377 = vmax.bf16 %v6121, %v6249
      %v6378 = vmax.bf16 %v6122, %v6250
      %v6379 = vmax.bf16 %v6123, %v6251
      %v6380 = vmax.bf16 %v6124, %v6252
      %v6381 = vmax.bf16 %v6125, %v6253
      %v6382 = vmax.bf16 %v6126, %v6254
      %v6383 = vmax.bf16 %v6127, %v6255
      %v6384 = vmax.bf16 %v6128, %v6256
      %v6385 = vmax.bf16 %v6129, %v6257
      %v6386 = vmax.bf16 %v6130, %v6258
      %v6387 = vmax.bf16 %v6131, %v6259
      %v6388 = vmax.bf16 %v6132, %v6260
      %v6389 = vmax.bf16 %v6133, %v6261
      %v6390 = vmax.bf16 %v6134, %v6262
      %v6391 = vmax.bf16 %v6135, %v6263
      %v6392 = vmax.bf16 %v6136, %v6264
      %v6393 = vmax.bf16 %v6137, %v6265
      %v6394 = vmax.bf16 %v6138, %v6266
      %v6523 = vunpack.c.l.b16 %v6267
      %v6524 = vunpack.c.l.b16 %v6268
      %v6525 = vunpack.c.l.b16 %v6269
      %v6526 = vunpack.c.l.b16 %v6270
      %v6527 = vunpack.c.l.b16 %v6271
      %v6528 = vunpack.c.l.b16 %v6272
      %v6529 = vunpack.c.l.b16 %v6273
      %v6530 = vunpack.c.l.b16 %v6274
      %v6531 = vunpack.c.l.b16 %v6275
      %v6532 = vunpack.c.l.b16 %v6276
      %v6533 = vunpack.c.l.b16 %v6277
      %v6534 = vunpack.c.l.b16 %v6278
      %v6535 = vunpack.c.l.b16 %v6279
      %v6536 = vunpack.c.l.b16 %v6280
      %v6537 = vunpack.c.l.b16 %v6281
      %v6538 = vunpack.c.l.b16 %v6282
      %v6539 = vunpack.c.l.b16 %v6283
      %v6540 = vunpack.c.l.b16 %v6284
      %v6541 = vunpack.c.l.b16 %v6285
      %v6542 = vunpack.c.l.b16 %v6286
      %v6543 = vunpack.c.l.b16 %v6287
      %v6544 = vunpack.c.l.b16 %v6288
      %v6545 = vunpack.c.l.b16 %v6289
      %v6546 = vunpack.c.l.b16 %v6290
      %v6547 = vunpack.c.l.b16 %v6291
      %v6548 = vunpack.c.l.b16 %v6292
      %v6549 = vunpack.c.l.b16 %v6293
      %v6550 = vunpack.c.l.b16 %v6294
      %v6551 = vunpack.c.l.b16 %v6295
      %v6552 = vunpack.c.l.b16 %v6296
      %v6553 = vunpack.c.l.b16 %v6297
      %v6554 = vunpack.c.l.b16 %v6298
      %v6555 = vunpack.c.l.b16 %v6299
      %v6556 = vunpack.c.l.b16 %v6300
      %v6557 = vunpack.c.l.b16 %v6301
      %v6558 = vunpack.c.l.b16 %v6302
      %v6559 = vunpack.c.l.b16 %v6303
      %v6560 = vunpack.c.l.b16 %v6304
      %v6561 = vunpack.c.l.b16 %v6305
      %v6562 = vunpack.c.l.b16 %v6306
      %v6563 = vunpack.c.l.b16 %v6307
      %v6564 = vunpack.c.l.b16 %v6308
      %v6565 = vunpack.c.l.b16 %v6309
      %v6566 = vunpack.c.l.b16 %v6310
      %v6567 = vunpack.c.l.b16 %v6311
      %v6568 = vunpack.c.l.b16 %v6312
      %v6569 = vunpack.c.l.b16 %v6313
      %v6570 = vunpack.c.l.b16 %v6314
      %v6571 = vunpack.c.l.b16 %v6315
      %v6572 = vunpack.c.l.b16 %v6316
      %v6573 = vunpack.c.l.b16 %v6317
      %v6574 = vunpack.c.l.b16 %v6318
      %v6575 = vunpack.c.l.b16 %v6319
      %v6576 = vunpack.c.l.b16 %v6320
      %v6577 = vunpack.c.l.b16 %v6321
      %v6578 = vunpack.c.l.b16 %v6322
      %v6579 = vunpack.c.l.b16 %v6323
      %v6580 = vunpack.c.l.b16 %v6324
      %v6581 = vunpack.c.l.b16 %v6325
      %v6582 = vunpack.c.l.b16 %v6326
      %v6583 = vunpack.c.l.b16 %v6327
      %v6584 = vunpack.c.l.b16 %v6328
      %v6585 = vunpack.c.l.b16 %v6329
      %v6586 = vunpack.c.l.b16 %v6330
      %v6587 = vunpack.c.l.b16 %v6331
      %v6588 = vunpack.c.l.b16 %v6332
      %v6589 = vunpack.c.l.b16 %v6333
      %v6590 = vunpack.c.l.b16 %v6334
      %v6591 = vunpack.c.l.b16 %v6335
      %v6592 = vunpack.c.l.b16 %v6336
      %v6593 = vunpack.c.l.b16 %v6337
      %v6594 = vunpack.c.l.b16 %v6338
      %v6595 = vunpack.c.l.b16 %v6339
      %v6596 = vunpack.c.l.b16 %v6340
      %v6597 = vunpack.c.l.b16 %v6341
      %v6598 = vunpack.c.l.b16 %v6342
      %v6599 = vunpack.c.l.b16 %v6343
      %v6600 = vunpack.c.l.b16 %v6344
      %v6601 = vunpack.c.l.b16 %v6345
      %v6602 = vunpack.c.l.b16 %v6346
      %v6603 = vunpack.c.l.b16 %v6347
      %v6604 = vunpack.c.l.b16 %v6348
      %v6605 = vunpack.c.l.b16 %v6349
      %v6606 = vunpack.c.l.b16 %v6350
      %v6607 = vunpack.c.l.b16 %v6351
      %v6608 = vunpack.c.l.b16 %v6352
      %v6609 = vunpack.c.l.b16 %v6353
      %v6610 = vunpack.c.l.b16 %v6354
      %v6611 = vunpack.c.l.b16 %v6355
      %v6612 = vunpack.c.l.b16 %v6356
      %v6613 = vunpack.c.l.b16 %v6357
      %v6614 = vunpack.c.l.b16 %v6358
      %v6615 = vunpack.c.l.b16 %v6359
      %v6616 = vunpack.c.l.b16 %v6360
      %v6617 = vunpack.c.l.b16 %v6361
      %v6618 = vunpack.c.l.b16 %v6362
      %v6619 = vunpack.c.l.b16 %v6363
      %v6620 = vunpack.c.l.b16 %v6364
      %v6621 = vunpack.c.l.b16 %v6365
      %v6622 = vunpack.c.l.b16 %v6366
      %v6623 = vunpack.c.l.b16 %v6367
      %v6624 = vunpack.c.l.b16 %v6368
      %v6625 = vunpack.c.l.b16 %v6369
      %v6626 = vunpack.c.l.b16 %v6370
      %v6627 = vunpack.c.l.b16 %v6371
      %v6628 = vunpack.c.l.b16 %v6372
      %v6629 = vunpack.c.l.b16 %v6373
      %v6630 = vunpack.c.l.b16 %v6374
      %v6631 = vunpack.c.l.b16 %v6375
      %v6632 = vunpack.c.l.b16 %v6376
      %v6633 = vunpack.c.l.b16 %v6377
      %v6634 = vunpack.c.l.b16 %v6378
      %v6635 = vunpack.c.l.b16 %v6379
      %v6636 = vunpack.c.l.b16 %v6380
      %v6637 = vunpack.c.l.b16 %v6381
      %v6638 = vunpack.c.l.b16 %v6382
      %v6639 = vunpack.c.l.b16 %v6383
      %v6640 = vunpack.c.l.b16 %v6384
      %v6641 = vunpack.c.l.b16 %v6385
      %v6642 = vunpack.c.l.b16 %v6386
      %v6643 = vunpack.c.l.b16 %v6387
      %v6644 = vunpack.c.l.b16 %v6388
      %v6645 = vunpack.c.l.b16 %v6389
      %v6646 = vunpack.c.l.b16 %v6390
      %v6647 = vunpack.c.l.b16 %v6391
      %v6648 = vunpack.c.l.b16 %v6392
      %v6649 = vunpack.c.l.b16 %v6393
      %v6650 = vunpack.c.l.b16 %v6394
      %v6651 = vrot.slane %v6524, 7
      %vm6652 = vcmask 1041409
      %v6653 = vsel %vm6652, %v6651, %v6523
      %v6654 = vrot.slane %v6525, 6
      %vm6655 = vcmask 1042434
      %v6656 = vsel %vm6655, %v6654, %v6653
      %v6657 = vrot.slane %v6526, 5
      %vm6658 = vcmask 1043459
      %v6659 = vsel %vm6658, %v6657, %v6656
      %v6660 = vrot.slane %v6527, 4
      %vm6661 = vcmask 1044484
      %v6662 = vsel %vm6661, %v6660, %v6659
      %v6663 = vrot.slane %v6528, 3
      %vm6664 = vcmask 1045509
      %v6665 = vsel %vm6664, %v6663, %v6662
      %v6666 = vrot.slane %v6529, 2
      %vm6667 = vcmask 1046534
      %v6668 = vsel %vm6667, %v6666, %v6665
      %v6669 = vrot.slane %v6530, 1
      %vm6670 = vcmask 1047559
      %v6671 = vsel %vm6670, %v6669, %v6668
      %v6672 = vrot.slane %v6532, 7
      %v6673 = vsel %vm6652, %v6672, %v6531
      %v6674 = vrot.slane %v6533, 6
      %v6675 = vsel %vm6655, %v6674, %v6673
      %v6676 = vrot.slane %v6534, 5
      %v6677 = vsel %vm6658, %v6676, %v6675
      %v6678 = vrot.slane %v6535, 4
      %v6679 = vsel %vm6661, %v6678, %v6677
      %v6680 = vrot.slane %v6536, 3
      %v6681 = vsel %vm6664, %v6680, %v6679
      %v6682 = vrot.slane %v6537, 2
      %v6683 = vsel %vm6667, %v6682, %v6681
      %v6684 = vrot.slane %v6538, 1
      %v6685 = vsel %vm6670, %v6684, %v6683
      %v6686 = vrot.slane %v6540, 7
      %v6687 = vsel %vm6652, %v6686, %v6539
      %v6688 = vrot.slane %v6541, 6
      %v6689 = vsel %vm6655, %v6688, %v6687
      %v6690 = vrot.slane %v6542, 5
      %v6691 = vsel %vm6658, %v6690, %v6689
      %v6692 = vrot.slane %v6543, 4
      %v6693 = vsel %vm6661, %v6692, %v6691
      %v6694 = vrot.slane %v6544, 3
      %v6695 = vsel %vm6664, %v6694, %v6693
      %v6696 = vrot.slane %v6545, 2
      %v6697 = vsel %vm6667, %v6696, %v6695
      %v6698 = vrot.slane %v6546, 1
      %v6699 = vsel %vm6670, %v6698, %v6697
      %v6700 = vrot.slane %v6548, 7
      %v6701 = vsel %vm6652, %v6700, %v6547
      %v6702 = vrot.slane %v6549, 6
      %v6703 = vsel %vm6655, %v6702, %v6701
      %v6704 = vrot.slane %v6550, 5
      %v6705 = vsel %vm6658, %v6704, %v6703
      %v6706 = vrot.slane %v6551, 4
      %v6707 = vsel %vm6661, %v6706, %v6705
      %v6708 = vrot.slane %v6552, 3
      %v6709 = vsel %vm6664, %v6708, %v6707
      %v6710 = vrot.slane %v6553, 2
      %v6711 = vsel %vm6667, %v6710, %v6709
      %v6712 = vrot.slane %v6554, 1
      %v6713 = vsel %vm6670, %v6712, %v6711
      %v6714 = vrot.slane %v6556, 7
      %v6715 = vsel %vm6652, %v6714, %v6555
      %v6716 = vrot.slane %v6557, 6
      %v6717 = vsel %vm6655, %v6716, %v6715
      %v6718 = vrot.slane %v6558, 5
      %v6719 = vsel %vm6658, %v6718, %v6717
      %v6720 = vrot.slane %v6559, 4
      %v6721 = vsel %vm6661, %v6720, %v6719
      %v6722 = vrot.slane %v6560, 3
      %v6723 = vsel %vm6664, %v6722, %v6721
      %v6724 = vrot.slane %v6561, 2
      %v6725 = vsel %vm6667, %v6724, %v6723
      %v6726 = vrot.slane %v6562, 1
      %v6727 = vsel %vm6670, %v6726, %v6725
      %v6728 = vrot.slane %v6564, 7
      %v6729 = vsel %vm6652, %v6728, %v6563
      %v6730 = vrot.slane %v6565, 6
      %v6731 = vsel %vm6655, %v6730, %v6729
      %v6732 = vrot.slane %v6566, 5
      %v6733 = vsel %vm6658, %v6732, %v6731
      %v6734 = vrot.slane %v6567, 4
      %v6735 = vsel %vm6661, %v6734, %v6733
      %v6736 = vrot.slane %v6568, 3
      %v6737 = vsel %vm6664, %v6736, %v6735
      %v6738 = vrot.slane %v6569, 2
      %v6739 = vsel %vm6667, %v6738, %v6737
      %v6740 = vrot.slane %v6570, 1
      %v6741 = vsel %vm6670, %v6740, %v6739
      %v6742 = vrot.slane %v6572, 7
      %v6743 = vsel %vm6652, %v6742, %v6571
      %v6744 = vrot.slane %v6573, 6
      %v6745 = vsel %vm6655, %v6744, %v6743
      %v6746 = vrot.slane %v6574, 5
      %v6747 = vsel %vm6658, %v6746, %v6745
      %v6748 = vrot.slane %v6575, 4
      %v6749 = vsel %vm6661, %v6748, %v6747
      %v6750 = vrot.slane %v6576, 3
      %v6751 = vsel %vm6664, %v6750, %v6749
      %v6752 = vrot.slane %v6577, 2
      %v6753 = vsel %vm6667, %v6752, %v6751
      %v6754 = vrot.slane %v6578, 1
      %v6755 = vsel %vm6670, %v6754, %v6753
      %v6756 = vrot.slane %v6580, 7
      %v6757 = vsel %vm6652, %v6756, %v6579
      %v6758 = vrot.slane %v6581, 6
      %v6759 = vsel %vm6655, %v6758, %v6757
      %v6760 = vrot.slane %v6582, 5
      %v6761 = vsel %vm6658, %v6760, %v6759
      %v6762 = vrot.slane %v6583, 4
      %v6763 = vsel %vm6661, %v6762, %v6761
      %v6764 = vrot.slane %v6584, 3
      %v6765 = vsel %vm6664, %v6764, %v6763
      %v6766 = vrot.slane %v6585, 2
      %v6767 = vsel %vm6667, %v6766, %v6765
      %v6768 = vrot.slane %v6586, 1
      %v6769 = vsel %vm6670, %v6768, %v6767
      %v6770 = vrot.slane %v6588, 7
      %v6771 = vsel %vm6652, %v6770, %v6587
      %v6772 = vrot.slane %v6589, 6
      %v6773 = vsel %vm6655, %v6772, %v6771
      %v6774 = vrot.slane %v6590, 5
      %v6775 = vsel %vm6658, %v6774, %v6773
      %v6776 = vrot.slane %v6591, 4
      %v6777 = vsel %vm6661, %v6776, %v6775
      %v6778 = vrot.slane %v6592, 3
      %v6779 = vsel %vm6664, %v6778, %v6777
      %v6780 = vrot.slane %v6593, 2
      %v6781 = vsel %vm6667, %v6780, %v6779
      %v6782 = vrot.slane %v6594, 1
      %v6783 = vsel %vm6670, %v6782, %v6781
      %v6784 = vrot.slane %v6596, 7
      %v6785 = vsel %vm6652, %v6784, %v6595
      %v6786 = vrot.slane %v6597, 6
      %v6787 = vsel %vm6655, %v6786, %v6785
      %v6788 = vrot.slane %v6598, 5
      %v6789 = vsel %vm6658, %v6788, %v6787
      %v6790 = vrot.slane %v6599, 4
      %v6791 = vsel %vm6661, %v6790, %v6789
      %v6792 = vrot.slane %v6600, 3
      %v6793 = vsel %vm6664, %v6792, %v6791
      %v6794 = vrot.slane %v6601, 2
      %v6795 = vsel %vm6667, %v6794, %v6793
      %v6796 = vrot.slane %v6602, 1
      %v6797 = vsel %vm6670, %v6796, %v6795
      %v6798 = vrot.slane %v6604, 7
      %v6799 = vsel %vm6652, %v6798, %v6603
      %v6800 = vrot.slane %v6605, 6
      %v6801 = vsel %vm6655, %v6800, %v6799
      %v6802 = vrot.slane %v6606, 5
      %v6803 = vsel %vm6658, %v6802, %v6801
      %v6804 = vrot.slane %v6607, 4
      %v6805 = vsel %vm6661, %v6804, %v6803
      %v6806 = vrot.slane %v6608, 3
      %v6807 = vsel %vm6664, %v6806, %v6805
      %v6808 = vrot.slane %v6609, 2
      %v6809 = vsel %vm6667, %v6808, %v6807
      %v6810 = vrot.slane %v6610, 1
      %v6811 = vsel %vm6670, %v6810, %v6809
      %v6812 = vrot.slane %v6612, 7
      %v6813 = vsel %vm6652, %v6812, %v6611
      %v6814 = vrot.slane %v6613, 6
      %v6815 = vsel %vm6655, %v6814, %v6813
      %v6816 = vrot.slane %v6614, 5
      %v6817 = vsel %vm6658, %v6816, %v6815
      %v6818 = vrot.slane %v6615, 4
      %v6819 = vsel %vm6661, %v6818, %v6817
      %v6820 = vrot.slane %v6616, 3
      %v6821 = vsel %vm6664, %v6820, %v6819
      %v6822 = vrot.slane %v6617, 2
      %v6823 = vsel %vm6667, %v6822, %v6821
      %v6824 = vrot.slane %v6618, 1
      %v6825 = vsel %vm6670, %v6824, %v6823
      %v6826 = vrot.slane %v6620, 7
      %v6827 = vsel %vm6652, %v6826, %v6619
      %v6828 = vrot.slane %v6621, 6
      %v6829 = vsel %vm6655, %v6828, %v6827
      %v6830 = vrot.slane %v6622, 5
      %v6831 = vsel %vm6658, %v6830, %v6829
      %v6832 = vrot.slane %v6623, 4
      %v6833 = vsel %vm6661, %v6832, %v6831
      %v6834 = vrot.slane %v6624, 3
      %v6835 = vsel %vm6664, %v6834, %v6833
      %v6836 = vrot.slane %v6625, 2
      %v6837 = vsel %vm6667, %v6836, %v6835
      %v6838 = vrot.slane %v6626, 1
      %v6839 = vsel %vm6670, %v6838, %v6837
      %v6840 = vrot.slane %v6628, 7
      %v6841 = vsel %vm6652, %v6840, %v6627
      %v6842 = vrot.slane %v6629, 6
      %v6843 = vsel %vm6655, %v6842, %v6841
      %v6844 = vrot.slane %v6630, 5
      %v6845 = vsel %vm6658, %v6844, %v6843
      %v6846 = vrot.slane %v6631, 4
      %v6847 = vsel %vm6661, %v6846, %v6845
      %v6848 = vrot.slane %v6632, 3
      %v6849 = vsel %vm6664, %v6848, %v6847
      %v6850 = vrot.slane %v6633, 2
      %v6851 = vsel %vm6667, %v6850, %v6849
      %v6852 = vrot.slane %v6634, 1
      %v6853 = vsel %vm6670, %v6852, %v6851
      %v6854 = vrot.slane %v6636, 7
      %v6855 = vsel %vm6652, %v6854, %v6635
      %v6856 = vrot.slane %v6637, 6
      %v6857 = vsel %vm6655, %v6856, %v6855
      %v6858 = vrot.slane %v6638, 5
      %v6859 = vsel %vm6658, %v6858, %v6857
      %v6860 = vrot.slane %v6639, 4
      %v6861 = vsel %vm6661, %v6860, %v6859
      %v6862 = vrot.slane %v6640, 3
      %v6863 = vsel %vm6664, %v6862, %v6861
      %v6864 = vrot.slane %v6641, 2
      %v6865 = vsel %vm6667, %v6864, %v6863
      %v6866 = vrot.slane %v6642, 1
      %v6867 = vsel %vm6670, %v6866, %v6865
      %v6868 = vrot.slane %v6644, 7
      %v6869 = vsel %vm6652, %v6868, %v6643
      %v6870 = vrot.slane %v6645, 6
      %v6871 = vsel %vm6655, %v6870, %v6869
      %v6872 = vrot.slane %v6646, 5
      %v6873 = vsel %vm6658, %v6872, %v6871
      %v6874 = vrot.slane %v6647, 4
      %v6875 = vsel %vm6661, %v6874, %v6873
      %v6876 = vrot.slane %v6648, 3
      %v6877 = vsel %vm6664, %v6876, %v6875
      %v6878 = vrot.slane %v6649, 2
      %v6879 = vsel %vm6667, %v6878, %v6877
      %v6880 = vrot.slane %v6650, 1
      %v6881 = vsel %vm6670, %v6880, %v6879
      %v6882 = vpack.c.b16 %v6671, %v6671
      %v6883 = vpack.c.b16 %v6685, %v6685
      %v6884 = vpack.c.b16 %v6699, %v6699
      %v6885 = vpack.c.b16 %v6713, %v6713
      %v6886 = vpack.c.b16 %v6727, %v6727
      %v6887 = vpack.c.b16 %v6741, %v6741
      %v6888 = vpack.c.b16 %v6755, %v6755
      %v6889 = vpack.c.b16 %v6769, %v6769
      %v6890 = vpack.c.b16 %v6783, %v6783
      %v6891 = vpack.c.b16 %v6797, %v6797
      %v6892 = vpack.c.b16 %v6811, %v6811
      %v6893 = vpack.c.b16 %v6825, %v6825
      %v6894 = vpack.c.b16 %v6839, %v6839
      %v6895 = vpack.c.b16 %v6853, %v6853
      %v6896 = vpack.c.b16 %v6867, %v6867
      %v6897 = vpack.c.b16 %v6881, %v6881
      %6914 = vst [vmem:[%s121] sm:$0xf] %v6882
      %6915 = vst [vmem:[%s121 + $0x4] sm:$0xf] %v6883
      %6916 = vst [vmem:[%s121 + $0x8] sm:$0xf] %v6884
      %6917 = vst [vmem:[%s121 + $0xc] sm:$0xf] %v6885
      %6918 = vst [vmem:[%s121 + $0x10] sm:$0xf] %v6886
      %6919 = vst [vmem:[%s121 + $0x14] sm:$0xf] %v6887
      %6920 = vst [vmem:[%s121 + $0x18] sm:$0xf] %v6888
      %6921 = vst [vmem:[%s121 + $0x1c] sm:$0xf] %v6889
      %6922 = vst [vmem:[%s121 + $0x20] sm:$0xf] %v6890
      %6923 = vst [vmem:[%s121 + $0x24] sm:$0xf] %v6891
      %6924 = vst [vmem:[%s121 + $0x28] sm:$0xf] %v6892
      %6925 = vst [vmem:[%s121 + $0x2c] sm:$0xf] %v6893
      %6926 = vst [vmem:[%s121 + $0x30] sm:$0xf] %v6894
      %6927 = vst [vmem:[%s121 + $0x34] sm:$0xf] %v6895
      %6928 = vst [vmem:[%s121 + $0x38] sm:$0xf] %v6896
      %6929 = vst [vmem:[%s121 + $0x3c] sm:$0xf] %v6897
      %s6930 = smul.u32 16, %s12
      %p6931 = scmp.lt.s32.totalorder %s6930, 63
      %s6932 = scalar_select %p6931, %s6930, 63
      %s6933 = smul.addr %s6932, 4
      %s6934 = scalar_lea.vmem %s1, %s6933
      // Predicated region
      $region25: #{densenet_imagenet_forward.10} parent=23 // pred_check
        %p6935 = pneg %p56
      $region26: #{densenet_imagenet_forward.10} parent=23 // pred_check_branch
        %6937 = sbr.rel (%p6935) target = $region28
      $region27: #{densenet_imagenet_forward.10} parent=23 // pred_region
        %s6938 = smul.u32 16, %s12
      $region28: #{densenet_imagenet_forward.10} parent=23 // pred_fallthru
        _
    $region24: #{densenet_imagenet_forward.10} parent=5 // pred_fallthru
      _
    %p6939 = scmp.le.s32.totalorder 2, %s7
    // Predicated region
    $region29: #{densenet_imagenet_forward.10} parent=5 // pred_check
      %p6940 = pneg %p6939
    $region30: #{densenet_imagenet_forward.10} parent=5 // pred_check_branch
      %6942 = sbr.rel (%p6940) target = $region32
    $region31: #{densenet_imagenet_forward.10} parent=5 // pred_region
      %s6943 = ssub.s32 %s7, 2
      // Predicated region
      $region33: #{densenet_imagenet_forward.10} parent=31 // pred_check
        %p6944 = pneg %p62
      $region34: #{densenet_imagenet_forward.10} parent=31 // pred_check_branch
        %6946 = sbr.rel (%p6944) target = $region36
      $region35: #{densenet_imagenet_forward.10} parent=31 // pred_region
        %s6947 = smul.u32 16, %s13
        %p6948 = scmp.lt.s32.totalorder %s6947, 63
        %s6949 = scalar_select %p6948, %s6947, 63
        %s6950 = smul.addr %s6949, 4
        %s6951 = scalar_lea.vmem %s1, %s6950
      $region36: #{densenet_imagenet_forward.10} parent=31 // pred_fallthru
        _
    $region32: #{densenet_imagenet_forward.10} parent=5 // pred_fallthru
      _
  $region6: #{densenet_imagenet_forward.10} parent=0 // loop_footer
    %s11 = sadd.s32 1, %s7
  $region7: #{densenet_imagenet_forward.10} parent=0 // loop_footer_branch
    %6 = sbr.rel target = $region3
  $region8: #{densenet_imagenet_forward.10} parent=0 // loop_exit
    _

// kernel: densenet_imagenet_forward.12
$region0: #{densenet_imagenet_forward.12}
  #allocation0 [shape = 'u32[]', space=smem, size = 0x4, offset = 0x4, fixed_abs, tag = 'smem constant byte address 0x4 - core index']
  #allocation1 [shape = 'u32[144,128]{1,0:T(1,128)}', space=vmem, size = 0x12000, scoped, tag = 'internal scratch']
  %s0 = inlined_call_operand.vmem [shape: bf16[512,384], index: 0, kind: input, shape index: {}]
  %s1 = inlined_call_operand.vmem [shape: bf16[512,128], index: 1, kind: input, shape index: {}, may-alias: {1,3}]
  %s2 = inlined_call_operand.vmem [shape: bf16[384,128], index: 2, kind: input, shape index: {}]
  %s3 = inlined_call_operand.vmem [shape: bf16[512,128], index: 3, kind: output, shape index: {}, may-alias: {1,3}]
  %s4 = sld [smem:[#allocation0]]
  $region45: #{densenet_imagenet_forward.12} parent=0
    _
  %s6 = ssub.s32 1, %s4
  %s7 = scalar_select 0, %s6, %s4
  loop: start=0, step=1, limit=6
  $region2: #{densenet_imagenet_forward.12} parent=0 // loop_pre_header
    _
  $region3: #{densenet_imagenet_forward.12} parent=0 // loop_header
    %s9 = sphi 0, %s13
    %p10 = scmp.ge.s32.totalorder %s9, 6
    %s19 = sphi 0, %s21
    %s22 = sphi 0, %s19
    %s23 = sphi 0, %s22
    %s39 = sphi 0, %s23
    %s45 = sphi 0, %s47
    %s48 = sphi 0, %s45
    %s49 = sphi 0, %s48
    %s65 = sphi 0, %s49
    %s69 = sphi 0, %s69
    %s71 = sphi 0, %s69
    %s72 = sphi 0, %s71
    %s86 = sphi 0, %s72
    %s92 = sphi 0, %s94
    %s95 = sphi 0, %s92
    %s96 = sphi 0, %s95
    %s112 = sphi 0, %s96
  $region4: #{densenet_imagenet_forward.12} parent=0 // loop_header_branch
    %12 = sbr.rel (%p10) target = $region8
  $region5: #{densenet_imagenet_forward.12} parent=0 // loop_body
    %s14 = ssub.s32 %s9, 1
    %s15 = ssub.s32 %s9, 2
    %s16 = sadd.s32 %s9, 1
    %s17 = ssub.s32 %s9, %s16
    %p18 = scmp.eq.s32.totalorder %s17, 0
    %s20 = sadd.s32 %s19, 1
    %s21 = scalar_select %p18, %s19, %s20
    %p24 = pneg %p18
    %p25 = scmp.eq.s32.totalorder %s9, 3
    %p26 = por %p24, %p25
    %p27 = scmp.ne.s32.totalorder %s19, %s22
    %p28 = scmp.eq.s32.totalorder %s9, 0
    %p29 = por %p27, %p28
    %p30 = scmp.ne.s32.totalorder %s19, %s22
    %p31 = scmp.eq.s32.totalorder %s14, 3
    %p32 = por %p30, %p31
    %p33 = scmp.ne.s32.totalorder %s22, %s23
    %p34 = scmp.eq.s32.totalorder %s14, 0
    %p35 = por %p33, %p34
    %p36 = scmp.ne.s32.totalorder %s22, %s23
    %p37 = scmp.eq.s32.totalorder %s15, 3
    %p38 = por %p36, %p37
    %p40 = scmp.ne.s32.totalorder %s23, %s39
    %p41 = scmp.eq.s32.totalorder %s15, 0
    %p42 = por %p40, %p41
    %s43 = ssub.s32 %s9, %s16
    %p44 = scmp.eq.s32.totalorder %s43, 0
    %s46 = sadd.s32 %s45, 1
    %s47 = scalar_select %p44, %s45, %s46
    %p50 = pneg %p44
    %p51 = scmp.eq.s32.totalorder %s9, 3
    %p52 = por %p50, %p51
    %p53 = scmp.ne.s32.totalorder %s45, %s48
    %p54 = scmp.eq.s32.totalorder %s9, 0
    %p55 = por %p53, %p54
    %p56 = scmp.ne.s32.totalorder %s45, %s48
    %p57 = scmp.eq.s32.totalorder %s14, 3
    %p58 = por %p56, %p57
    %p59 = scmp.ne.s32.totalorder %s48, %s49
    %p60 = scmp.eq.s32.totalorder %s14, 0
    %p61 = por %p59, %p60
    %p62 = scmp.ne.s32.totalorder %s48, %s49
    %p63 = scmp.eq.s32.totalorder %s15, 3
    %p64 = por %p62, %p63
    %p66 = scmp.ne.s32.totalorder %s49, %s65
    %p67 = scmp.eq.s32.totalorder %s15, 0
    %p68 = por %p66, %p67
    %s70 = sadd.s32 %s69, 1
    %p73 = scmp.eq.s32.totalorder %s9, 3
    %p74 = scmp.ne.s32.totalorder %s69, %s71
    %p75 = scmp.eq.s32.totalorder %s9, 0
    %p76 = por %p74, %p75
    %p77 = scmp.ne.s32.totalorder %s69, %s71
    %p78 = scmp.eq.s32.totalorder %s14, 3
    %p79 = por %p77, %p78
    %p80 = scmp.ne.s32.totalorder %s71, %s72
    %p81 = scmp.eq.s32.totalorder %s14, 0
    %p82 = por %p80, %p81
    %p83 = scmp.ne.s32.totalorder %s71, %s72
    %p84 = scmp.eq.s32.totalorder %s15, 3
    %p85 = por %p83, %p84
    %p87 = scmp.ne.s32.totalorder %s72, %s86
    %p88 = scmp.eq.s32.totalorder %s15, 0
    %p89 = por %p87, %p88
    %s90 = ssub.s32 %s9, %s16
    %p91 = scmp.eq.s32.totalorder %s90, 0
    %s93 = sadd.s32 %s92, 1
    %s94 = scalar_select %p91, %s92, %s93
    %p97 = pneg %p91
    %p98 = scmp.eq.s32.totalorder %s9, 3
    %p99 = por %p97, %p98
    %p100 = scmp.ne.s32.totalorder %s92, %s95
    %p101 = scmp.eq.s32.totalorder %s9, 0
    %p102 = por %p100, %p101
    %p103 = scmp.ne.s32.totalorder %s92, %s95
    %p104 = scmp.eq.s32.totalorder %s14, 3
    %p105 = por %p103, %p104
    %p106 = scmp.ne.s32.totalorder %s95, %s96
    %p107 = scmp.eq.s32.totalorder %s14, 0
    %p108 = por %p106, %p107
    %p109 = scmp.ne.s32.totalorder %s95, %s96
    %p110 = scmp.eq.s32.totalorder %s15, 3
    %p111 = por %p109, %p110
    %p113 = scmp.ne.s32.totalorder %s96, %s112
    %p114 = scmp.eq.s32.totalorder %s15, 0
    %p115 = por %p113, %p114
    %p116 = scmp.le.s32.totalorder 1, %s9
    %p117 = scmp.lt.s32.totalorder %s9, 5
    %p118 = pnand %p116, %p117
    %p119 = pneg %p118
    // Predicated region
    $region9: #{densenet_imagenet_forward.12} parent=5 // pred_check
      _
    $region10: #{densenet_imagenet_forward.12} parent=5 // pred_check_branch
      %121 = sbr.rel (%p118) target = $region12
    $region11: #{densenet_imagenet_forward.12} parent=5 // pred_region
      %s122 = ssub.s32 %s9, 1
      // Predicated region
      $region13: #{densenet_imagenet_forward.12} parent=11 // pred_check
        %p123 = pneg %p82
      $region14: #{densenet_imagenet_forward.12} parent=11 // pred_check_branch
        %125 = sbr.rel (%p123) target = $region16
      $region15: #{densenet_imagenet_forward.12} parent=11 // pred_region
        _
      $region16: #{densenet_imagenet_forward.12} parent=11 // pred_fallthru
        _
    $region12: #{densenet_imagenet_forward.12} parent=5 // pred_fallthru
      _
    %p126 = scmp.lt.s32.totalorder %s9, 4
    // Predicated region
    $region17: #{densenet_imagenet_forward.12} parent=5 // pred_check
      %p127 = pneg %p126
    $region18: #{densenet_imagenet_forward.12} parent=5 // pred_check_branch
      %129 = sbr.rel (%p127) target = $region20
    $region19: #{densenet_imagenet_forward.12} parent=5 // pred_region
      // Predicated region
      $region21: #{densenet_imagenet_forward.12} parent=19 // pred_check
        %p130 = pneg %p29
      $region22: #{densenet_imagenet_forward.12} parent=19 // pred_check_branch
        %132 = sbr.rel (%p130) target = $region24
      $region23: #{densenet_imagenet_forward.12} parent=19 // pred_region
        %s133 = smul.u32 16, %s9
        %p134 = scmp.lt.s32.totalorder %s133, 63
        %s135 = scalar_select %p134, %s133, 63
        %s136 = smul.addr %s135, 3
        %s137 = smul.addr %s136, 4
        %s138 = scalar_lea.vmem %s0, %s137
        %s139 = smul.u32 16, %s9
      $region24: #{densenet_imagenet_forward.12} parent=19 // pred_fallthru
        _
      // Predicated region
      $region25: #{densenet_imagenet_forward.12} parent=19 // pred_check
        %p140 = pneg %p55
      $region26: #{densenet_imagenet_forward.12} parent=19 // pred_check_branch
        %142 = sbr.rel (%p140) target = $region28
      $region27: #{densenet_imagenet_forward.12} parent=19 // pred_region
        %s143 = smul.u32 16, %s9
        %p144 = scmp.lt.s32.totalorder %s143, 63
        %s145 = scalar_select %p144, %s143, 63
        %s146 = smul.addr %s145, 4
        %s147 = scalar_lea.vmem %s1, %s146
        %s148 = smul.u32 16, %s9
      $region28: #{densenet_imagenet_forward.12} parent=19 // pred_fallthru
        _
    $region20: #{densenet_imagenet_forward.12} parent=5 // pred_fallthru
      _
    %p149 = scmp.le.s32.totalorder 1, %s9
    %p150 = scmp.lt.s32.totalorder %s9, 5
    %p151 = pnand %p149, %p150
    %p152 = pneg %p151
    // Predicated region
    $region29: #{densenet_imagenet_forward.12} parent=5 // pred_check
      _
    $region30: #{densenet_imagenet_forward.12} parent=5 // pred_check_branch
      %154 = sbr.rel (%p151) target = $region32
    $region31: #{densenet_imagenet_forward.12} parent=5 // pred_region
      %s155 = ssub.s32 %s9, 1
      %s156 = smul.u32 16, %s14
      %p157 = scmp.lt.s32.totalorder %s156, 63
      %s158 = scalar_select %p157, %s156, 63
      %s159 = smul.addr %s158, 3
      %s160 = smul.addr %s159, 4
      %s161 = scalar_lea.vmem %s0, %s160
      %p162 = pneg %p35
      %p163 = pneg %p32
      %s164 = smul.u32 16, %s14
      %p165 = scmp.lt.s32.totalorder %s164, 63
      %s166 = scalar_select %p165, %s164, 63
      %s167 = smul.addr %s166, 4
      %s168 = scalar_lea.vmem %s1, %s167
      %p169 = pneg %p61
      %p170 = pneg %p58
      %p171 = pneg %p82
      %p172 = pneg %p79
      %p173 = pneg %p108
      %p174 = pneg %p105
      %s175 = smul.u32 16, %s14
      %p176 = scmp.lt.s32.totalorder %s175, 63
      %s177 = scalar_select %p176, %s175, 63
      %s178 = smul.addr %s177, 4
      %s179 = scalar_lea.vmem %s3, %s178
      %s180 = smul.u32 16, %s14
      %p181 = scmp.lt.s32.totalorder %s180, 63
      %s182 = scalar_select %p181, %s180, 63
      %s183 = smul.addr %s182, 3
      %s184 = smul.addr %s183, 4
      %s185 = scalar_lea.vmem %s0, %s184
      %s186 = smul.u32 16, %s14
      %s187 = smul.u32 16, %s14
      %p188 = scmp.lt.s32.totalorder %s187, 63
      %s189 = scalar_select %p188, %s187, 63
      %s190 = smul.addr %s189, 4
      %s191 = scalar_lea.vmem %s1, %s190
      %s192 = smul.u32 16, %s14
      %s193 = smul.u32 16, %s14
      %p194 = scmp.lt.s32.totalorder %s193, 63
      %s195 = scalar_select %p194, %s193, 63
      %s196 = smul.addr %s195, 4
      %s197 = scalar_lea.vmem %s3, %s196
      %s198 = smul.u32 16, %s14
      %v200 = vld [vmem:[%s185] sm:$0xff]
      %v201 = vld [vmem:[%s185 + $0x8] sm:$0xf]
      %v202 = vld [vmem:[%s185 + $0xc] sm:$0xff]
      %v203 = vld [vmem:[%s185 + $0x14] sm:$0xf]
      %v204 = vld [vmem:[%s185 + $0x18] sm:$0xff]
      %v205 = vld [vmem:[%s185 + $0x20] sm:$0xf]
      %v206 = vld [vmem:[%s185 + $0x24] sm:$0xff]
      %v207 = vld [vmem:[%s185 + $0x2c] sm:$0xf]
      %v208 = vld [vmem:[%s185 + $0x30] sm:$0xff]
      %v209 = vld [vmem:[%s185 + $0x38] sm:$0xf]
      %v210 = vld [vmem:[%s185 + $0x3c] sm:$0xff]
      %v211 = vld [vmem:[%s185 + $0x44] sm:$0xf]
      %v212 = vld [vmem:[%s185 + $0x48] sm:$0xff]
      %v213 = vld [vmem:[%s185 + $0x50] sm:$0xf]
      %v214 = vld [vmem:[%s185 + $0x54] sm:$0xff]
      %v215 = vld [vmem:[%s185 + $0x5c] sm:$0xf]
      %v216 = vld [vmem:[%s185 + $0x60] sm:$0xff]
      %v217 = vld [vmem:[%s185 + $0x68] sm:$0xf]
      %v218 = vld [vmem:[%s185 + $0x6c] sm:$0xff]
      %v219 = vld [vmem:[%s185 + $0x74] sm:$0xf]
      %v220 = vld [vmem:[%s185 + $0x78] sm:$0xff]
      %v221 = vld [vmem:[%s185 + $0x80] sm:$0xf]
      %v222 = vld [vmem:[%s185 + $0x84] sm:$0xff]
      %v223 = vld [vmem:[%s185 + $0x8c] sm:$0xf]
      %v224 = vld [vmem:[%s185 + $0x90] sm:$0xff]
      %v225 = vld [vmem:[%s185 + $0x98] sm:$0xf]
      %v226 = vld [vmem:[%s185 + $0x9c] sm:$0xff]
      %v227 = vld [vmem:[%s185 + $0xa4] sm:$0xf]
      %v228 = vld [vmem:[%s185 + $0xa8] sm:$0xff]
      %v229 = vld [vmem:[%s185 + $0xb0] sm:$0xf]
      %v230 = vld [vmem:[%s185 + $0xb4] sm:$0xff]
      %v231 = vld [vmem:[%s185 + $0xbc] sm:$0xf]
      %v232 = vld [vmem:[%s2] sm:$0xf]
      %v233 = vld [vmem:[%s2 + $0x4] sm:$0xf]
      %v234 = vld [vmem:[%s2 + $0x8] sm:$0xf]
      %v235 = vld [vmem:[%s2 + $0xc] sm:$0xf]
      %v236 = vld [vmem:[%s2 + $0x10] sm:$0xf]
      %v237 = vld [vmem:[%s2 + $0x14] sm:$0xf]
      %v238 = vld [vmem:[%s2 + $0x18] sm:$0xf]
      %v239 = vld [vmem:[%s2 + $0x1c] sm:$0xf]
      %v240 = vld [vmem:[%s2 + $0x20] sm:$0xf]
      %v241 = vld [vmem:[%s2 + $0x24] sm:$0xf]
      %v242 = vld [vmem:[%s2 + $0x28] sm:$0xf]
      %v243 = vld [vmem:[%s2 + $0x2c] sm:$0xf]
      %v244 = vld [vmem:[%s2 + $0x30] sm:$0xf]
      %v245 = vld [vmem:[%s2 + $0x34] sm:$0xf]
      %v246 = vld [vmem:[%s2 + $0x38] sm:$0xf]
      %v247 = vld [vmem:[%s2 + $0x3c] sm:$0xf]
      %v248 = vld [vmem:[%s2 + $0x40] sm:$0xf]
      %v249 = vld [vmem:[%s2 + $0x44] sm:$0xf]
      %v250 = vld [vmem:[%s2 + $0x48] sm:$0xf]
      %v251 = vld [vmem:[%s2 + $0x4c] sm:$0xf]
      %v252 = vld [vmem:[%s2 + $0x50] sm:$0xf]
      %v253 = vld [vmem:[%s2 + $0x54] sm:$0xf]
      %v254 = vld [vmem:[%s2 + $0x58] sm:$0xf]
      %v255 = vld [vmem:[%s2 + $0x5c] sm:$0xf]
      %v256 = vld [vmem:[%s2 + $0x60] sm:$0xf]
      %v257 = vld [vmem:[%s2 + $0x64] sm:$0xf]
      %v258 = vld [vmem:[%s2 + $0x68] sm:$0xf]
      %v259 = vld [vmem:[%s2 + $0x6c] sm:$0xf]
      %v260 = vld [vmem:[%s2 + $0x70] sm:$0xf]
      %v261 = vld [vmem:[%s2 + $0x74] sm:$0xf]
      %v262 = vld [vmem:[%s2 + $0x78] sm:$0xf]
      %v263 = vld [vmem:[%s2 + $0x7c] sm:$0xf]
      %v264 = vld [vmem:[%s2 + $0x80] sm:$0xf]
      %v265 = vld [vmem:[%s2 + $0x84] sm:$0xf]
      %v266 = vld [vmem:[%s2 + $0x88] sm:$0xf]
      %v267 = vld [vmem:[%s2 + $0x8c] sm:$0xf]
      %v268 = vld [vmem:[%s2 + $0x90] sm:$0xf]
      %v269 = vld [vmem:[%s2 + $0x94] sm:$0xf]
      %v270 = vld [vmem:[%s2 + $0x98] sm:$0xf]
      %v271 = vld [vmem:[%s2 + $0x9c] sm:$0xf]
      %v272 = vld [vmem:[%s2 + $0xa0] sm:$0xf]
      %v273 = vld [vmem:[%s2 + $0xa4] sm:$0xf]
      %v274 = vld [vmem:[%s2 + $0xa8] sm:$0xf]
      %v275 = vld [vmem:[%s2 + $0xac] sm:$0xf]
      %v276 = vld [vmem:[%s2 + $0xb0] sm:$0xf]
      %v277 = vld [vmem:[%s2 + $0xb4] sm:$0xf]
      %v278 = vld [vmem:[%s2 + $0xb8] sm:$0xf]
      %v279 = vld [vmem:[%s2 + $0xbc] sm:$0xf]
      %v312 = vunpack.c.l.b16 %v200
      %v313 = vunpack.c.h.b16 %v200
      %v314 = vunpack.c.l.b16 %v201
      %v315 = vunpack.c.l.b16 %v202
      %v316 = vunpack.c.h.b16 %v202
      %v317 = vunpack.c.l.b16 %v203
      %v318 = vunpack.c.l.b16 %v204
      %v319 = vunpack.c.h.b16 %v204
      %v320 = vunpack.c.l.b16 %v205
      %v321 = vunpack.c.l.b16 %v206
      %v322 = vunpack.c.h.b16 %v206
      %v323 = vunpack.c.l.b16 %v207
      %v324 = vunpack.c.l.b16 %v208
      %v325 = vunpack.c.h.b16 %v208
      %v326 = vunpack.c.l.b16 %v209
      %v327 = vunpack.c.l.b16 %v210
      %v328 = vunpack.c.h.b16 %v210
      %v329 = vunpack.c.l.b16 %v211
      %v330 = vunpack.c.l.b16 %v212
      %v331 = vunpack.c.h.b16 %v212
      %v332 = vunpack.c.l.b16 %v213
      %v333 = vunpack.c.l.b16 %v214
      %v334 = vunpack.c.h.b16 %v214
      %v335 = vunpack.c.l.b16 %v215
      %v336 = vunpack.c.l.b16 %v216
      %v337 = vunpack.c.h.b16 %v216
      %v338 = vunpack.c.l.b16 %v217
      %v339 = vunpack.c.l.b16 %v218
      %v340 = vunpack.c.h.b16 %v218
      %v341 = vunpack.c.l.b16 %v219
      %v342 = vunpack.c.l.b16 %v220
      %v343 = vunpack.c.h.b16 %v220
      %v344 = vunpack.c.l.b16 %v221
      %v345 = vunpack.c.l.b16 %v222
      %v346 = vunpack.c.h.b16 %v222
      %v347 = vunpack.c.l.b16 %v223
      %v348 = vunpack.c.l.b16 %v224
      %v349 = vunpack.c.h.b16 %v224
      %v350 = vunpack.c.l.b16 %v225
      %v351 = vunpack.c.l.b16 %v226
      %v352 = vunpack.c.h.b16 %v226
      %v353 = vunpack.c.l.b16 %v227
      %v354 = vunpack.c.l.b16 %v228
      %v355 = vunpack.c.h.b16 %v228
      %v356 = vunpack.c.l.b16 %v229
      %v357 = vunpack.c.l.b16 %v230
      %v358 = vunpack.c.h.b16 %v230
      %v359 = vunpack.c.l.b16 %v231
      %v360 = vpack.c.b16 %v315, %v312
      %v361 = vpack.c.b16 %v316, %v313
      %v362 = vpack.c.b16 %v317, %v314
      %v363 = vpack.c.b16 %v321, %v318
      %v364 = vpack.c.b16 %v322, %v319
      %v365 = vpack.c.b16 %v323, %v320
      %v366 = vpack.c.b16 %v327, %v324
      %v367 = vpack.c.b16 %v328, %v325
      %v368 = vpack.c.b16 %v329, %v326
      %v369 = vpack.c.b16 %v333, %v330
      %v370 = vpack.c.b16 %v334, %v331
      %v371 = vpack.c.b16 %v335, %v332
      %v372 = vpack.c.b16 %v339, %v336
      %v373 = vpack.c.b16 %v340, %v337
      %v374 = vpack.c.b16 %v341, %v338
      %v375 = vpack.c.b16 %v345, %v342
      %v376 = vpack.c.b16 %v346, %v343
      %v377 = vpack.c.b16 %v347, %v344
      %v378 = vpack.c.b16 %v351, %v348
      %v379 = vpack.c.b16 %v352, %v349
      %v380 = vpack.c.b16 %v353, %v350
      %v381 = vpack.c.b16 %v357, %v354
      %v382 = vpack.c.b16 %v358, %v355
      %v383 = vpack.c.b16 %v359, %v356
      %v456 = vunpack.c.l.b16 %v232
      %v457 = vunpack.c.l.b16 %v233
      %v458 = vunpack.c.l.b16 %v234
      %v459 = vunpack.c.l.b16 %v235
      %v460 = vunpack.c.l.b16 %v236
      %v461 = vunpack.c.l.b16 %v237
      %v462 = vunpack.c.l.b16 %v238
      %v463 = vunpack.c.l.b16 %v239
      %v464 = vunpack.c.l.b16 %v240
      %v465 = vunpack.c.l.b16 %v241
      %v466 = vunpack.c.l.b16 %v242
      %v467 = vunpack.c.l.b16 %v243
      %v468 = vunpack.c.l.b16 %v244
      %v469 = vunpack.c.l.b16 %v245
      %v470 = vunpack.c.l.b16 %v246
      %v471 = vunpack.c.l.b16 %v247
      %v472 = vunpack.c.l.b16 %v248
      %v473 = vunpack.c.l.b16 %v249
      %v474 = vunpack.c.l.b16 %v250
      %v475 = vunpack.c.l.b16 %v251
      %v476 = vunpack.c.l.b16 %v252
      %v477 = vunpack.c.l.b16 %v253
      %v478 = vunpack.c.l.b16 %v254
      %v479 = vunpack.c.l.b16 %v255
      %v480 = vunpack.c.l.b16 %v256
      %v481 = vunpack.c.l.b16 %v257
      %v482 = vunpack.c.l.b16 %v258
      %v483 = vunpack.c.l.b16 %v259
      %v484 = vunpack.c.l.b16 %v260
      %v485 = vunpack.c.l.b16 %v261
      %v486 = vunpack.c.l.b16 %v262
      %v487 = vunpack.c.l.b16 %v263
      %v488 = vunpack.c.l.b16 %v264
      %v489 = vunpack.c.l.b16 %v265
      %v490 = vunpack.c.l.b16 %v266
      %v491 = vunpack.c.l.b16 %v267
      %v492 = vunpack.c.l.b16 %v268
      %v493 = vunpack.c.l.b16 %v269
      %v494 = vunpack.c.l.b16 %v270
      %v495 = vunpack.c.l.b16 %v271
      %v496 = vunpack.c.l.b16 %v272
      %v497 = vunpack.c.l.b16 %v273
      %v498 = vunpack.c.l.b16 %v274
      %v499 = vunpack.c.l.b16 %v275
      %v500 = vunpack.c.l.b16 %v276
      %v501 = vunpack.c.l.b16 %v277
      %v502 = vunpack.c.l.b16 %v278
      %v503 = vunpack.c.l.b16 %v279
      %v504 = vpack.c.b16 %v457, %v456
      %v505 = vpack.c.b16 %v459, %v458
      %v506 = vpack.c.b16 %v461, %v460
      %v507 = vpack.c.b16 %v463, %v462
      %v508 = vpack.c.b16 %v465, %v464
      %v509 = vpack.c.b16 %v467, %v466
      %v510 = vpack.c.b16 %v469, %v468
      %v511 = vpack.c.b16 %v471, %v470
      %v512 = vpack.c.b16 %v473, %v472
      %v513 = vpack.c.b16 %v475, %v474
      %v514 = vpack.c.b16 %v477, %v476
      %v515 = vpack.c.b16 %v479, %v478
      %v516 = vpack.c.b16 %v481, %v480
      %v517 = vpack.c.b16 %v483, %v482
      %v518 = vpack.c.b16 %v485, %v484
      %v519 = vpack.c.b16 %v487, %v486
      %v520 = vpack.c.b16 %v489, %v488
      %v521 = vpack.c.b16 %v491, %v490
      %v522 = vpack.c.b16 %v493, %v492
      %v523 = vpack.c.b16 %v495, %v494
      %v524 = vpack.c.b16 %v497, %v496
      %v525 = vpack.c.b16 %v499, %v498
      %v526 = vpack.c.b16 %v501, %v500
      %v527 = vpack.c.b16 %v503, %v502
      %552 = vmatprep.subr.bf16.mxu0 0
      %553 = vmatpush1.bf16.msra.mxu0 %v511
      %554 = vmatprep.subr.bf16.mxu0 0
      %555 = vmatpush1.bf16.msra.mxu0 %v510
      %556 = vmatprep.subr.bf16.mxu0 0
      %557 = vmatpush1.bf16.msra.mxu0 %v509
      %558 = vmatprep.subr.bf16.mxu0 0
      %559 = vmatpush1.bf16.msra.mxu0 %v508
      %560 = vmatprep.subr.bf16.mxu0 0
      %561 = vmatpush1.bf16.msra.mxu0 %v507
      %562 = vmatprep.subr.bf16.mxu0 0
      %563 = vmatpush1.bf16.msra.mxu0 %v506
      %564 = vmatprep.subr.bf16.mxu0 0
      %565 = vmatpush1.bf16.msra.mxu0 %v505
      %566 = vmatprep.subr.bf16.mxu0 0
      %567 = vmatpush1.bf16.msra.mxu0 %v504
      %568 = vmatprep.subr.bf16.mxu0 0
      %569 = vmatpush2.bf16.msra.mxu0 %v519
      %570 = vmatprep.subr.bf16.mxu0 0
      %571 = vmatpush2.bf16.msra.mxu0 %v518
      %572 = vmatprep.subr.bf16.mxu0 0
      %573 = vmatpush2.bf16.msra.mxu0 %v517
      %574 = vmatprep.subr.bf16.mxu0 0
      %575 = vmatpush2.bf16.msra.mxu0 %v516
      %576 = vmatprep.subr.bf16.mxu0 0
      %577 = vmatpush2.bf16.msra.mxu0 %v515
      %578 = vmatprep.subr.bf16.mxu0 0
      %579 = vmatpush2.bf16.msra.mxu0 %v514
      %580 = vmatprep.subr.bf16.mxu0 0
      %581 = vmatpush2.bf16.msra.mxu0 %v513
      %582 = vmatprep.subr.bf16.mxu0 0
      %583 = vmatpush2.bf16.msra.mxu0 %v512
      %584 = vmatprep.mubr.bf16.mxu0 %v361
      %585 = vmatmul.mubr.bf16.gmra.mxu0 %v360
      %v586 = vpop.f32.mrf.mxu0
      %v587 = vadd.f32 0.0, %v586
      %v588 = vpop.f32.mrf.mxu0
      %v589 = vpop.f32.mrf.mxu0
      %v590 = vadd.f32 0.0, %v589
      %v591 = vpop.f32.mrf.mxu0
      %592 = vmatprep.mubr.bf16.mxu0 %v364
      %593 = vmatmul.mubr.bf16.gmra.mxu0 %v363
      %v594 = vpop.f32.mrf.mxu0
      %v595 = vadd.f32 0.0, %v594
      %v596 = vpop.f32.mrf.mxu0
      %v597 = vpop.f32.mrf.mxu0
      %v598 = vadd.f32 0.0, %v597
      %v599 = vpop.f32.mrf.mxu0
      %600 = vmatprep.mubr.bf16.mxu0 %v367
      %601 = vmatmul.mubr.bf16.gmra.mxu0 %v366
      %v602 = vpop.f32.mrf.mxu0
      %v603 = vadd.f32 0.0, %v602
      %v604 = vpop.f32.mrf.mxu0
      %v605 = vpop.f32.mrf.mxu0
      %v606 = vadd.f32 0.0, %v605
      %v607 = vpop.f32.mrf.mxu0
      %608 = vmatprep.mubr.bf16.mxu0 %v370
      %609 = vmatmul.mubr.bf16.gmra.mxu0 %v369
      %v610 = vpop.f32.mrf.mxu0
      %v611 = vadd.f32 0.0, %v610
      %v612 = vpop.f32.mrf.mxu0
      %v613 = vpop.f32.mrf.mxu0
      %v614 = vadd.f32 0.0, %v613
      %v615 = vpop.f32.mrf.mxu0
      %616 = vmatprep.mubr.bf16.mxu0 %v373
      %617 = vmatmul.mubr.bf16.gmra.mxu0 %v372
      %v618 = vpop.f32.mrf.mxu0
      %v619 = vadd.f32 0.0, %v618
      %v620 = vpop.f32.mrf.mxu0
      %v621 = vpop.f32.mrf.mxu0
      %v622 = vadd.f32 0.0, %v621
      %v623 = vpop.f32.mrf.mxu0
      %624 = vmatprep.mubr.bf16.mxu0 %v376
      %625 = vmatmul.mubr.bf16.gmra.mxu0 %v375
      %v626 = vpop.f32.mrf.mxu0
      %v627 = vadd.f32 0.0, %v626
      %v628 = vpop.f32.mrf.mxu0
      %v629 = vpop.f32.mrf.mxu0
      %v630 = vadd.f32 0.0, %v629
      %v631 = vpop.f32.mrf.mxu0
      %632 = vmatprep.mubr.bf16.mxu0 %v379
      %633 = vmatmul.mubr.bf16.gmra.mxu0 %v378
      %v634 = vpop.f32.mrf.mxu0
      %v635 = vadd.f32 0.0, %v634
      %v636 = vpop.f32.mrf.mxu0
      %v637 = vpop.f32.mrf.mxu0
      %v638 = vadd.f32 0.0, %v637
      %v639 = vpop.f32.mrf.mxu0
      %640 = vmatprep.mubr.bf16.mxu0 %v382
      %641 = vmatmul.mubr.bf16.gmra.mxu0 %v381
      %v642 = vpop.f32.mrf.mxu0
      %v643 = vadd.f32 0.0, %v642
      %v644 = vpop.f32.mrf.mxu0
      %v645 = vpop.f32.mrf.mxu0
      %v646 = vadd.f32 0.0, %v645
      %v647 = vpop.f32.mrf.mxu0
      %648 = vdwg.mxu0
      %649 = vmatprep.subr.bf16.mxu0 0
      %650 = vmatpush1.bf16.msra.mxu0 %v527
      %651 = vmatprep.subr.bf16.mxu0 0
      %652 = vmatpush1.bf16.msra.mxu0 %v526
      %653 = vmatprep.subr.bf16.mxu0 0
      %654 = vmatpush1.bf16.msra.mxu0 %v525
      %655 = vmatprep.subr.bf16.mxu0 0
      %656 = vmatpush1.bf16.msra.mxu0 %v524
      %657 = vmatprep.subr.bf16.mxu0 0
      %658 = vmatpush1.bf16.msra.mxu0 %v523
      %659 = vmatprep.subr.bf16.mxu0 0
      %660 = vmatpush1.bf16.msra.mxu0 %v522
      %661 = vmatprep.subr.bf16.mxu0 0
      %662 = vmatpush1.bf16.msra.mxu0 %v521
      %663 = vmatprep.subr.bf16.mxu0 0
      %664 = vmatpush1.bf16.msra.mxu0 %v520
      %665 = vmatprep.subr.bf16.mxu0 0
      %666 = vmatpush2.bf16.msra.mxu0 0
      %667 = vmatprep.subr.bf16.mxu0 0
      %668 = vmatpush2.bf16.msra.mxu0 0
      %669 = vmatprep.subr.bf16.mxu0 0
      %670 = vmatpush2.bf16.msra.mxu0 0
      %671 = vmatprep.subr.bf16.mxu0 0
      %672 = vmatpush2.bf16.msra.mxu0 0
      %673 = vmatprep.subr.bf16.mxu0 0
      %674 = vmatpush2.bf16.msra.mxu0 0
      %675 = vmatprep.subr.bf16.mxu0 0
      %676 = vmatpush2.bf16.msra.mxu0 0
      %677 = vmatprep.subr.bf16.mxu0 0
      %678 = vmatpush2.bf16.msra.mxu0 0
      %679 = vmatprep.subr.bf16.mxu0 0
      %680 = vmatpush2.bf16.msra.mxu0 0
      %681 = vmatprep.mubr.bf16.mxu0 0
      %682 = vmatmul.mubr.bf16.gmra.mxu0 %v362
      %v683 = vpop.f32.mrf.mxu0
      %v684 = vadd.f32 %v587, %v683
      %v685 = vpop.f32.mrf.mxu0
      %v686 = vpop.f32.mrf.mxu0
      %v687 = vadd.f32 %v590, %v686
      %v688 = vpop.f32.mrf.mxu0
      %689 = vmatprep.mubr.bf16.mxu0 0
      %690 = vmatmul.mubr.bf16.gmra.mxu0 %v365
      %v691 = vpop.f32.mrf.mxu0
      %v692 = vadd.f32 %v595, %v691
      %v693 = vpop.f32.mrf.mxu0
      %v694 = vpop.f32.mrf.mxu0
      %v695 = vadd.f32 %v598, %v694
      %v696 = vpop.f32.mrf.mxu0
      %697 = vmatprep.mubr.bf16.mxu0 0
      %698 = vmatmul.mubr.bf16.gmra.mxu0 %v368
      %v699 = vpop.f32.mrf.mxu0
      %v700 = vadd.f32 %v603, %v699
      %v701 = vpop.f32.mrf.mxu0
      %v702 = vpop.f32.mrf.mxu0
      %v703 = vadd.f32 %v606, %v702
      %v704 = vpop.f32.mrf.mxu0
      %705 = vmatprep.mubr.bf16.mxu0 0
      %706 = vmatmul.mubr.bf16.gmra.mxu0 %v371
      %v707 = vpop.f32.mrf.mxu0
      %v708 = vadd.f32 %v611, %v707
      %v709 = vpop.f32.mrf.mxu0
      %v710 = vpop.f32.mrf.mxu0
      %v711 = vadd.f32 %v614, %v710
      %v712 = vpop.f32.mrf.mxu0
      %713 = vmatprep.mubr.bf16.mxu0 0
      %714 = vmatmul.mubr.bf16.gmra.mxu0 %v374
      %v715 = vpop.f32.mrf.mxu0
      %v716 = vadd.f32 %v619, %v715
      %v717 = vpop.f32.mrf.mxu0
      %v718 = vpop.f32.mrf.mxu0
      %v719 = vadd.f32 %v622, %v718
      %v720 = vpop.f32.mrf.mxu0
      %721 = vmatprep.mubr.bf16.mxu0 0
      %722 = vmatmul.mubr.bf16.gmra.mxu0 %v377
      %v723 = vpop.f32.mrf.mxu0
      %v724 = vadd.f32 %v627, %v723
      %v725 = vpop.f32.mrf.mxu0
      %v726 = vpop.f32.mrf.mxu0
      %v727 = vadd.f32 %v630, %v726
      %v728 = vpop.f32.mrf.mxu0
      %729 = vmatprep.mubr.bf16.mxu0 0
      %730 = vmatmul.mubr.bf16.gmra.mxu0 %v380
      %v731 = vpop.f32.mrf.mxu0
      %v732 = vadd.f32 %v635, %v731
      %v733 = vpop.f32.mrf.mxu0
      %v734 = vpop.f32.mrf.mxu0
      %v735 = vadd.f32 %v638, %v734
      %v736 = vpop.f32.mrf.mxu0
      %737 = vmatprep.mubr.bf16.mxu0 0
      %738 = vmatmul.mubr.bf16.gmra.mxu0 %v383
      %v739 = vpop.f32.mrf.mxu0
      %v740 = vadd.f32 %v643, %v739
      %v741 = vpop.f32.mrf.mxu0
      %v742 = vpop.f32.mrf.mxu0
      %v743 = vadd.f32 %v646, %v742
      %v744 = vpop.f32.mrf.mxu0
      %745 = vdwg.mxu0
      %v746 = vld [vmem:[%s191] sm:$0xf]
      %v747 = vld [vmem:[%s191 + $0x4] sm:$0xf]
      %v748 = vld [vmem:[%s191 + $0x8] sm:$0xf]
      %v749 = vld [vmem:[%s191 + $0xc] sm:$0xf]
      %v750 = vld [vmem:[%s191 + $0x10] sm:$0xf]
      %v751 = vld [vmem:[%s191 + $0x14] sm:$0xf]
      %v752 = vld [vmem:[%s191 + $0x18] sm:$0xf]
      %v753 = vld [vmem:[%s191 + $0x1c] sm:$0xf]
      %v754 = vld [vmem:[%s191 + $0x20] sm:$0xf]
      %v755 = vld [vmem:[%s191 + $0x24] sm:$0xf]
      %v756 = vld [vmem:[%s191 + $0x28] sm:$0xf]
      %v757 = vld [vmem:[%s191 + $0x2c] sm:$0xf]
      %v758 = vld [vmem:[%s191 + $0x30] sm:$0xf]
      %v759 = vld [vmem:[%s191 + $0x34] sm:$0xf]
      %v760 = vld [vmem:[%s191 + $0x38] sm:$0xf]
      %v761 = vld [vmem:[%s191 + $0x3c] sm:$0xf]
      %v762 = vunpack.c.l.bf16 %v746
      %v763 = vunpack.c.l.bf16 %v747
      %v764 = vunpack.c.l.bf16 %v748
      %v765 = vunpack.c.l.bf16 %v749
      %v766 = vunpack.c.l.bf16 %v750
      %v767 = vunpack.c.l.bf16 %v751
      %v768 = vunpack.c.l.bf16 %v752
      %v769 = vunpack.c.l.bf16 %v753
      %v770 = vunpack.c.l.bf16 %v754
      %v771 = vunpack.c.l.bf16 %v755
      %v772 = vunpack.c.l.bf16 %v756
      %v773 = vunpack.c.l.bf16 %v757
      %v774 = vunpack.c.l.bf16 %v758
      %v775 = vunpack.c.l.bf16 %v759
      %v776 = vunpack.c.l.bf16 %v760
      %v777 = vunpack.c.l.bf16 %v761
      %v778 = vadd.f32 %v762, %v684
      %v779 = vadd.f32 %v763, %v687
      %v780 = vadd.f32 %v764, %v692
      %v781 = vadd.f32 %v765, %v695
      %v782 = vadd.f32 %v766, %v700
      %v783 = vadd.f32 %v767, %v703
      %v784 = vadd.f32 %v768, %v708
      %v785 = vadd.f32 %v769, %v711
      %v786 = vadd.f32 %v770, %v716
      %v787 = vadd.f32 %v771, %v719
      %v788 = vadd.f32 %v772, %v724
      %v789 = vadd.f32 %v773, %v727
      %v790 = vadd.f32 %v774, %v732
      %v791 = vadd.f32 %v775, %v735
      %v792 = vadd.f32 %v776, %v740
      %v793 = vadd.f32 %v777, %v743
      %v794 = vpack.c.bf16 %v779, %v778
      %v795 = vpack.c.bf16 %v781, %v780
      %v796 = vpack.c.bf16 %v783, %v782
      %v797 = vpack.c.bf16 %v785, %v784
      %v798 = vpack.c.bf16 %v787, %v786
      %v799 = vpack.c.bf16 %v789, %v788
      %v800 = vpack.c.bf16 %v791, %v790
      %v801 = vpack.c.bf16 %v793, %v792
      %v810 = vunpack.c.l.b16 %v794
      %v811 = vunpack.c.h.b16 %v794
      %v812 = vunpack.c.l.b16 %v795
      %v813 = vunpack.c.h.b16 %v795
      %v814 = vunpack.c.l.b16 %v796
      %v815 = vunpack.c.h.b16 %v796
      %v816 = vunpack.c.l.b16 %v797
      %v817 = vunpack.c.h.b16 %v797
      %v818 = vunpack.c.l.b16 %v798
      %v819 = vunpack.c.h.b16 %v798
      %v820 = vunpack.c.l.b16 %v799
      %v821 = vunpack.c.h.b16 %v799
      %v822 = vunpack.c.l.b16 %v800
      %v823 = vunpack.c.h.b16 %v800
      %v824 = vunpack.c.l.b16 %v801
      %v825 = vunpack.c.h.b16 %v801
      %v826 = vpack.c.b16 %v810, %v810
      %v827 = vpack.c.b16 %v811, %v811
      %v828 = vpack.c.b16 %v812, %v812
      %v829 = vpack.c.b16 %v813, %v813
      %v830 = vpack.c.b16 %v814, %v814
      %v831 = vpack.c.b16 %v815, %v815
      %v832 = vpack.c.b16 %v816, %v816
      %v833 = vpack.c.b16 %v817, %v817
      %v834 = vpack.c.b16 %v818, %v818
      %v835 = vpack.c.b16 %v819, %v819
      %v836 = vpack.c.b16 %v820, %v820
      %v837 = vpack.c.b16 %v821, %v821
      %v838 = vpack.c.b16 %v822, %v822
      %v839 = vpack.c.b16 %v823, %v823
      %v840 = vpack.c.b16 %v824, %v824
      %v841 = vpack.c.b16 %v825, %v825
      %858 = vst [vmem:[%s197] sm:$0xf] %v826
      %859 = vst [vmem:[%s197 + $0x4] sm:$0xf] %v827
      %860 = vst [vmem:[%s197 + $0x8] sm:$0xf] %v828
      %861 = vst [vmem:[%s197 + $0xc] sm:$0xf] %v829
      %862 = vst [vmem:[%s197 + $0x10] sm:$0xf] %v830
      %863 = vst [vmem:[%s197 + $0x14] sm:$0xf] %v831
      %864 = vst [vmem:[%s197 + $0x18] sm:$0xf] %v832
      %865 = vst [vmem:[%s197 + $0x1c] sm:$0xf] %v833
      %866 = vst [vmem:[%s197 + $0x20] sm:$0xf] %v834
      %867 = vst [vmem:[%s197 + $0x24] sm:$0xf] %v835
      %868 = vst [vmem:[%s197 + $0x28] sm:$0xf] %v836
      %869 = vst [vmem:[%s197 + $0x2c] sm:$0xf] %v837
      %870 = vst [vmem:[%s197 + $0x30] sm:$0xf] %v838
      %871 = vst [vmem:[%s197 + $0x34] sm:$0xf] %v839
      %872 = vst [vmem:[%s197 + $0x38] sm:$0xf] %v840
      %873 = vst [vmem:[%s197 + $0x3c] sm:$0xf] %v841
      %s874 = smul.u32 16, %s14
      %p875 = scmp.lt.s32.totalorder %s874, 63
      %s876 = scalar_select %p875, %s874, 63
      %s877 = smul.addr %s876, 4
      %s878 = scalar_lea.vmem %s3, %s877
      // Predicated region
      $region33: #{densenet_imagenet_forward.12} parent=31 // pred_check
        %p879 = pneg %p105
      $region34: #{densenet_imagenet_forward.12} parent=31 // pred_check_branch
        %881 = sbr.rel (%p879) target = $region36
      $region35: #{densenet_imagenet_forward.12} parent=31 // pred_region
        %s882 = smul.u32 16, %s14
      $region36: #{densenet_imagenet_forward.12} parent=31 // pred_fallthru
        _
    $region32: #{densenet_imagenet_forward.12} parent=5 // pred_fallthru
      _
    %p883 = scmp.le.s32.totalorder 2, %s9
    // Predicated region
    $region37: #{densenet_imagenet_forward.12} parent=5 // pred_check
      %p884 = pneg %p883
    $region38: #{densenet_imagenet_forward.12} parent=5 // pred_check_branch
      %886 = sbr.rel (%p884) target = $region40
    $region39: #{densenet_imagenet_forward.12} parent=5 // pred_region
      %s887 = ssub.s32 %s9, 2
      // Predicated region
      $region41: #{densenet_imagenet_forward.12} parent=39 // pred_check
        %p888 = pneg %p111
      $region42: #{densenet_imagenet_forward.12} parent=39 // pred_check_branch
        %890 = sbr.rel (%p888) target = $region44
      $region43: #{densenet_imagenet_forward.12} parent=39 // pred_region
        %s891 = smul.u32 16, %s15
        %p892 = scmp.lt.s32.totalorder %s891, 63
        %s893 = scalar_select %p892, %s891, 63
        %s894 = smul.addr %s893, 4
        %s895 = scalar_lea.vmem %s3, %s894
      $region44: #{densenet_imagenet_forward.12} parent=39 // pred_fallthru
        _
    $region40: #{densenet_imagenet_forward.12} parent=5 // pred_fallthru
      _
  $region6: #{densenet_imagenet_forward.12} parent=0 // loop_footer
    %s13 = sadd.s32 1, %s9
  $region7: #{densenet_imagenet_forward.12} parent=0 // loop_footer_branch
    %8 = sbr.rel target = $region3
  $region8: #{densenet_imagenet_forward.12} parent=0 // loop_exit
    _

// kernel: densenet_imagenet_forward.17
$region0: #{densenet_imagenet_forward.17}
  #allocation0 [shape = 'u32[]', space=smem, size = 0x4, offset = 0x4, fixed_abs, tag = 'smem constant byte address 0x4 - core index']
  #allocation1 [shape = 'u32[144,128]{1,0:T(1,128)}', space=vmem, size = 0x12000, scoped, tag = 'internal scratch']
  %s0 = inlined_call_operand.vmem [shape: bf16[2,256,128], index: 0, kind: input, shape index: {}]
  %s1 = inlined_call_operand.vmem [shape: f32[1,128], index: 1, kind: input, shape index: {}]
  %s2 = inlined_call_operand.vmem [shape: f32[1,128], index: 2, kind: input, shape index: {}]
  %s3 = inlined_call_operand.vmem [shape: bf16[128,128], index: 3, kind: input, shape index: {}]
  %s4 = inlined_call_operand.vmem [shape: f32[1,128], index: 4, kind: input, shape index: {}]
  %s5 = inlined_call_operand.hbm [shape: f32[2,128], index: 5, kind: output, shape index: {}]
  %s6 = sld [smem:[#allocation0]]
  $region30: #{densenet_imagenet_forward.17} parent=0
    _
  %s8 = ssub.s32 1, %s6
  %s9 = scalar_select 0, %s8, %s6
  $region1: #{densenet_imagenet_forward.17} parent=0
    #allocation2 [shape = 'u8[1024]{0}', space=vmem, size = 0x400, scoped, tag = 'output window, operand 0, single buffered']
    #allocation3 [shape = 's32[1]{0}', space=sflag, size = 0x4, scoped, tag = 'scoped memory for densenet_imagenet_forward.17']
    %10 = vsyncpa [#allocation3], 0
    // Predicated region
    $region2: #{densenet_imagenet_forward.17} parent=1 // pred_check
      _
    $region3: #{densenet_imagenet_forward.17} parent=1 // pred_check_branch
      %12 = sbr.rel (0) target = $region5
    $region4: #{densenet_imagenet_forward.17} parent=1 // pred_region
      _
    $region5: #{densenet_imagenet_forward.17} parent=1 // pred_fallthru
      _
    // Predicated region
    $region6: #{densenet_imagenet_forward.17} parent=1 // pred_check
      _
    $region7: #{densenet_imagenet_forward.17} parent=1 // pred_check_branch
      %14 = sbr.rel (0) target = $region9
    $region8: #{densenet_imagenet_forward.17} parent=1 // pred_region
      _
    $region9: #{densenet_imagenet_forward.17} parent=1 // pred_fallthru
      _
    // Predicated region
    $region10: #{densenet_imagenet_forward.17} parent=1 // pred_check
      _
    $region11: #{densenet_imagenet_forward.17} parent=1 // pred_check_branch
      %16 = sbr.rel (0) target = $region13
    $region12: #{densenet_imagenet_forward.17} parent=1 // pred_region
      _
    $region13: #{densenet_imagenet_forward.17} parent=1 // pred_fallthru
      _
    // Predicated region
    $region14: #{densenet_imagenet_forward.17} parent=1 // pred_check
      _
    $region15: #{densenet_imagenet_forward.17} parent=1 // pred_check_branch
      %18 = sbr.rel (0) target = $region17
    $region16: #{densenet_imagenet_forward.17} parent=1 // pred_region
      _
    $region17: #{densenet_imagenet_forward.17} parent=1 // pred_fallthru
      _
    // Predicated region
    $region18: #{densenet_imagenet_forward.17} parent=1 // pred_check
      _
    $region19: #{densenet_imagenet_forward.17} parent=1 // pred_check_branch
      %20 = sbr.rel (0) target = $region21
    $region20: #{densenet_imagenet_forward.17} parent=1 // pred_region
      _
    $region21: #{densenet_imagenet_forward.17} parent=1 // pred_fallthru
      _
    %v22 = vld [vmem:[%s0] sm:$0xf]
    %v23 = vld [vmem:[%s0 + $0x4] sm:$0xf]
    %v24 = vld [vmem:[%s0 + $0x8] sm:$0xf]
    %v25 = vld [vmem:[%s0 + $0xc] sm:$0xf]
    %v26 = vld [vmem:[%s0 + $0x10] sm:$0xf]
    %v27 = vld [vmem:[%s0 + $0x14] sm:$0xf]
    %v28 = vld [vmem:[%s0 + $0x18] sm:$0xf]
    %v29 = vld [vmem:[%s0 + $0x1c] sm:$0xf]
    %v30 = vld [vmem:[%s0 + $0x20] sm:$0xf]
    %v31 = vld [vmem:[%s0 + $0x24] sm:$0xf]
    %v32 = vld [vmem:[%s0 + $0x28] sm:$0xf]
    %v33 = vld [vmem:[%s0 + $0x2c] sm:$0xf]
    %v34 = vld [vmem:[%s0 + $0x30] sm:$0xf]
    %v35 = vld [vmem:[%s0 + $0x34] sm:$0xf]
    %v36 = vld [vmem:[%s0 + $0x38] sm:$0xf]
    %v37 = vld [vmem:[%s0 + $0x3c] sm:$0xf]
    %v38 = vld [vmem:[%s0 + $0x40] sm:$0xf]
    %v39 = vld [vmem:[%s0 + $0x44] sm:$0xf]
    %v40 = vld [vmem:[%s0 + $0x48] sm:$0xf]
    %v41 = vld [vmem:[%s0 + $0x4c] sm:$0xf]
    %v42 = vld [vmem:[%s0 + $0x50] sm:$0xf]
    %v43 = vld [vmem:[%s0 + $0x54] sm:$0xf]
    %v44 = vld [vmem:[%s0 + $0x58] sm:$0xf]
    %v45 = vld [vmem:[%s0 + $0x5c] sm:$0xf]
    %v46 = vld [vmem:[%s0 + $0x60] sm:$0xf]
    %v47 = vld [vmem:[%s0 + $0x64] sm:$0xf]
    %v48 = vld [vmem:[%s0 + $0x68] sm:$0xf]
    %v49 = vld [vmem:[%s0 + $0x6c] sm:$0xf]
    %v50 = vld [vmem:[%s0 + $0x70] sm:$0xf]
    %v51 = vld [vmem:[%s0 + $0x74] sm:$0xf]
    %v52 = vld [vmem:[%s0 + $0x78] sm:$0xf]
    %v53 = vld [vmem:[%s0 + $0x7c] sm:$0xf]
    %v54 = vld [vmem:[%s0 + $0x80] sm:$0xf]
    %v55 = vld [vmem:[%s0 + $0x84] sm:$0xf]
    %v56 = vld [vmem:[%s0 + $0x88] sm:$0xf]
    %v57 = vld [vmem:[%s0 + $0x8c] sm:$0xf]
    %v58 = vld [vmem:[%s0 + $0x90] sm:$0xf]
    %v59 = vld [vmem:[%s0 + $0x94] sm:$0xf]
    %v60 = vld [vmem:[%s0 + $0x98] sm:$0xf]
    %v61 = vld [vmem:[%s0 + $0x9c] sm:$0xf]
    %v62 = vld [vmem:[%s0 + $0xa0] sm:$0xf]
    %v63 = vld [vmem:[%s0 + $0xa4] sm:$0xf]
    %v64 = vld [vmem:[%s0 + $0xa8] sm:$0xf]
    %v65 = vld [vmem:[%s0 + $0xac] sm:$0xf]
    %v66 = vld [vmem:[%s0 + $0xb0] sm:$0xf]
    %v67 = vld [vmem:[%s0 + $0xb4] sm:$0xf]
    %v68 = vld [vmem:[%s0 + $0xb8] sm:$0xf]
    %v69 = vld [vmem:[%s0 + $0xbc] sm:$0xf]
    %v70 = vld [vmem:[%s0 + $0xc0] sm:$0xf]
    %v71 = vld [vmem:[%s0 + $0xc4] sm:$0xf]
    %v72 = vld [vmem:[%s0 + $0xc8] sm:$0xf]
    %v73 = vld [vmem:[%s0 + $0xcc] sm:$0xf]
    %v74 = vld [vmem:[%s0 + $0xd0] sm:$0xf]
    %v75 = vld [vmem:[%s0 + $0xd4] sm:$0xf]
    %v76 = vld [vmem:[%s0 + $0xd8] sm:$0xf]
    %v77 = vld [vmem:[%s0 + $0xdc] sm:$0xf]
    %v78 = vld [vmem:[%s0 + $0xe0] sm:$0xf]
    %v79 = vld [vmem:[%s0 + $0xe4] sm:$0xf]
    %v80 = vld [vmem:[%s0 + $0xe8] sm:$0xf]
    %v81 = vld [vmem:[%s0 + $0xec] sm:$0xf]
    %v82 = vld [vmem:[%s0 + $0xf0] sm:$0xf]
    %v83 = vld [vmem:[%s0 + $0xf4] sm:$0xf]
    %v84 = vld [vmem:[%s0 + $0xf8] sm:$0xf]
    %v85 = vld [vmem:[%s0 + $0xfc] sm:$0xf]
    %v86 = vunpack.c.l.bf16 %v22
    %v87 = vunpack.c.l.bf16 %v23
    %v88 = vunpack.c.l.bf16 %v24
    %v89 = vunpack.c.l.bf16 %v25
    %v90 = vunpack.c.l.bf16 %v26
    %v91 = vunpack.c.l.bf16 %v27
    %v92 = vunpack.c.l.bf16 %v28
    %v93 = vunpack.c.l.bf16 %v29
    %v94 = vunpack.c.l.bf16 %v30
    %v95 = vunpack.c.l.bf16 %v31
    %v96 = vunpack.c.l.bf16 %v32
    %v97 = vunpack.c.l.bf16 %v33
    %v98 = vunpack.c.l.bf16 %v34
    %v99 = vunpack.c.l.bf16 %v35
    %v100 = vunpack.c.l.bf16 %v36
    %v101 = vunpack.c.l.bf16 %v37
    %v102 = vunpack.c.l.bf16 %v38
    %v103 = vunpack.c.l.bf16 %v39
    %v104 = vunpack.c.l.bf16 %v40
    %v105 = vunpack.c.l.bf16 %v41
    %v106 = vunpack.c.l.bf16 %v42
    %v107 = vunpack.c.l.bf16 %v43
    %v108 = vunpack.c.l.bf16 %v44
    %v109 = vunpack.c.l.bf16 %v45
    %v110 = vunpack.c.l.bf16 %v46
    %v111 = vunpack.c.l.bf16 %v47
    %v112 = vunpack.c.l.bf16 %v48
    %v113 = vunpack.c.l.bf16 %v49
    %v114 = vunpack.c.l.bf16 %v50
    %v115 = vunpack.c.l.bf16 %v51
    %v116 = vunpack.c.l.bf16 %v52
    %v117 = vunpack.c.l.bf16 %v53
    %v118 = vunpack.c.l.bf16 %v54
    %v119 = vunpack.c.l.bf16 %v55
    %v120 = vunpack.c.l.bf16 %v56
    %v121 = vunpack.c.l.bf16 %v57
    %v122 = vunpack.c.l.bf16 %v58
    %v123 = vunpack.c.l.bf16 %v59
    %v124 = vunpack.c.l.bf16 %v60
    %v125 = vunpack.c.l.bf16 %v61
    %v126 = vunpack.c.l.bf16 %v62
    %v127 = vunpack.c.l.bf16 %v63
    %v128 = vunpack.c.l.bf16 %v64
    %v129 = vunpack.c.l.bf16 %v65
    %v130 = vunpack.c.l.bf16 %v66
    %v131 = vunpack.c.l.bf16 %v67
    %v132 = vunpack.c.l.bf16 %v68
    %v133 = vunpack.c.l.bf16 %v69
    %v134 = vunpack.c.l.bf16 %v70
    %v135 = vunpack.c.l.bf16 %v71
    %v136 = vunpack.c.l.bf16 %v72
    %v137 = vunpack.c.l.bf16 %v73
    %v138 = vunpack.c.l.bf16 %v74
    %v139 = vunpack.c.l.bf16 %v75
    %v140 = vunpack.c.l.bf16 %v76
    %v141 = vunpack.c.l.bf16 %v77
    %v142 = vunpack.c.l.bf16 %v78
    %v143 = vunpack.c.l.bf16 %v79
    %v144 = vunpack.c.l.bf16 %v80
    %v145 = vunpack.c.l.bf16 %v81
    %v146 = vunpack.c.l.bf16 %v82
    %v147 = vunpack.c.l.bf16 %v83
    %v148 = vunpack.c.l.bf16 %v84
    %v149 = vunpack.c.l.bf16 %v85
    %v150 = vld [vmem:[%s1] sm:$0x1]
    %v152 = vlaneseq
    %v153 = vshrl.u32 %v152, 7
    %v154 = vsub.s32 0, %v153
    %v155 = vrot.slane %v150, %v154
    %v157 = vmul.f32 %v86, %v155
    %v158 = vmul.f32 %v87, %v155
    %v159 = vmul.f32 %v88, %v155
    %v160 = vmul.f32 %v89, %v155
    %v161 = vmul.f32 %v90, %v155
    %v162 = vmul.f32 %v91, %v155
    %v163 = vmul.f32 %v92, %v155
    %v164 = vmul.f32 %v93, %v155
    %v165 = vmul.f32 %v94, %v155
    %v166 = vmul.f32 %v95, %v155
    %v167 = vmul.f32 %v96, %v155
    %v168 = vmul.f32 %v97, %v155
    %v169 = vmul.f32 %v98, %v155
    %v170 = vmul.f32 %v99, %v155
    %v171 = vmul.f32 %v100, %v155
    %v172 = vmul.f32 %v101, %v155
    %v173 = vmul.f32 %v102, %v155
    %v174 = vmul.f32 %v103, %v155
    %v175 = vmul.f32 %v104, %v155
    %v176 = vmul.f32 %v105, %v155
    %v177 = vmul.f32 %v106, %v155
    %v178 = vmul.f32 %v107, %v155
    %v179 = vmul.f32 %v108, %v155
    %v180 = vmul.f32 %v109, %v155
    %v181 = vmul.f32 %v110, %v155
    %v182 = vmul.f32 %v111, %v155
    %v183 = vmul.f32 %v112, %v155
    %v184 = vmul.f32 %v113, %v155
    %v185 = vmul.f32 %v114, %v155
    %v186 = vmul.f32 %v115, %v155
    %v187 = vmul.f32 %v116, %v155
    %v188 = vmul.f32 %v117, %v155
    %v189 = vmul.f32 %v118, %v155
    %v190 = vmul.f32 %v119, %v155
    %v191 = vmul.f32 %v120, %v155
    %v192 = vmul.f32 %v121, %v155
    %v193 = vmul.f32 %v122, %v155
    %v194 = vmul.f32 %v123, %v155
    %v195 = vmul.f32 %v124, %v155
    %v196 = vmul.f32 %v125, %v155
    %v197 = vmul.f32 %v126, %v155
    %v198 = vmul.f32 %v127, %v155
    %v199 = vmul.f32 %v128, %v155
    %v200 = vmul.f32 %v129, %v155
    %v201 = vmul.f32 %v130, %v155
    %v202 = vmul.f32 %v131, %v155
    %v203 = vmul.f32 %v132, %v155
    %v204 = vmul.f32 %v133, %v155
    %v205 = vmul.f32 %v134, %v155
    %v206 = vmul.f32 %v135, %v155
    %v207 = vmul.f32 %v136, %v155
    %v208 = vmul.f32 %v137, %v155
    %v209 = vmul.f32 %v138, %v155
    %v210 = vmul.f32 %v139, %v155
    %v211 = vmul.f32 %v140, %v155
    %v212 = vmul.f32 %v141, %v155
    %v213 = vmul.f32 %v142, %v155
    %v214 = vmul.f32 %v143, %v155
    %v215 = vmul.f32 %v144, %v155
    %v216 = vmul.f32 %v145, %v155
    %v217 = vmul.f32 %v146, %v155
    %v218 = vmul.f32 %v147, %v155
    %v219 = vmul.f32 %v148, %v155
    %v220 = vmul.f32 %v149, %v155
    %v221 = vld [vmem:[%s2] sm:$0x1]
    %v223 = vlaneseq
    %v224 = vshrl.u32 %v223, 7
    %v225 = vsub.s32 0, %v224
    %v226 = vrot.slane %v221, %v225
    %v228 = vadd.f32 %v157, %v226
    %v229 = vadd.f32 %v158, %v226
    %v230 = vadd.f32 %v159, %v226
    %v231 = vadd.f32 %v160, %v226
    %v232 = vadd.f32 %v161, %v226
    %v233 = vadd.f32 %v162, %v226
    %v234 = vadd.f32 %v163, %v226
    %v235 = vadd.f32 %v164, %v226
    %v236 = vadd.f32 %v165, %v226
    %v237 = vadd.f32 %v166, %v226
    %v238 = vadd.f32 %v167, %v226
    %v239 = vadd.f32 %v168, %v226
    %v240 = vadd.f32 %v169, %v226
    %v241 = vadd.f32 %v170, %v226
    %v242 = vadd.f32 %v171, %v226
    %v243 = vadd.f32 %v172, %v226
    %v244 = vadd.f32 %v173, %v226
    %v245 = vadd.f32 %v174, %v226
    %v246 = vadd.f32 %v175, %v226
    %v247 = vadd.f32 %v176, %v226
    %v248 = vadd.f32 %v177, %v226
    %v249 = vadd.f32 %v178, %v226
    %v250 = vadd.f32 %v179, %v226
    %v251 = vadd.f32 %v180, %v226
    %v252 = vadd.f32 %v181, %v226
    %v253 = vadd.f32 %v182, %v226
    %v254 = vadd.f32 %v183, %v226
    %v255 = vadd.f32 %v184, %v226
    %v256 = vadd.f32 %v185, %v226
    %v257 = vadd.f32 %v186, %v226
    %v258 = vadd.f32 %v187, %v226
    %v259 = vadd.f32 %v188, %v226
    %v260 = vadd.f32 %v189, %v226
    %v261 = vadd.f32 %v190, %v226
    %v262 = vadd.f32 %v191, %v226
    %v263 = vadd.f32 %v192, %v226
    %v264 = vadd.f32 %v193, %v226
    %v265 = vadd.f32 %v194, %v226
    %v266 = vadd.f32 %v195, %v226
    %v267 = vadd.f32 %v196, %v226
    %v268 = vadd.f32 %v197, %v226
    %v269 = vadd.f32 %v198, %v226
    %v270 = vadd.f32 %v199, %v226
    %v271 = vadd.f32 %v200, %v226
    %v272 = vadd.f32 %v201, %v226
    %v273 = vadd.f32 %v202, %v226
    %v274 = vadd.f32 %v203, %v226
    %v275 = vadd.f32 %v204, %v226
    %v276 = vadd.f32 %v205, %v226
    %v277 = vadd.f32 %v206, %v226
    %v278 = vadd.f32 %v207, %v226
    %v279 = vadd.f32 %v208, %v226
    %v280 = vadd.f32 %v209, %v226
    %v281 = vadd.f32 %v210, %v226
    %v282 = vadd.f32 %v211, %v226
    %v283 = vadd.f32 %v212, %v226
    %v284 = vadd.f32 %v213, %v226
    %v285 = vadd.f32 %v214, %v226
    %v286 = vadd.f32 %v215, %v226
    %v287 = vadd.f32 %v216, %v226
    %v288 = vadd.f32 %v217, %v226
    %v289 = vadd.f32 %v218, %v226
    %v290 = vadd.f32 %v219, %v226
    %v291 = vadd.f32 %v220, %v226
    %v292 = vmax.f32 %v228, 0.0
    %v293 = vmax.f32 %v229, 0.0
    %v294 = vmax.f32 %v230, 0.0
    %v295 = vmax.f32 %v231, 0.0
    %v296 = vmax.f32 %v232, 0.0
    %v297 = vmax.f32 %v233, 0.0
    %v298 = vmax.f32 %v234, 0.0
    %v299 = vmax.f32 %v235, 0.0
    %v300 = vmax.f32 %v236, 0.0
    %v301 = vmax.f32 %v237, 0.0
    %v302 = vmax.f32 %v238, 0.0
    %v303 = vmax.f32 %v239, 0.0
    %v304 = vmax.f32 %v240, 0.0
    %v305 = vmax.f32 %v241, 0.0
    %v306 = vmax.f32 %v242, 0.0
    %v307 = vmax.f32 %v243, 0.0
    %v308 = vmax.f32 %v244, 0.0
    %v309 = vmax.f32 %v245, 0.0
    %v310 = vmax.f32 %v246, 0.0
    %v311 = vmax.f32 %v247, 0.0
    %v312 = vmax.f32 %v248, 0.0
    %v313 = vmax.f32 %v249, 0.0
    %v314 = vmax.f32 %v250, 0.0
    %v315 = vmax.f32 %v251, 0.0
    %v316 = vmax.f32 %v252, 0.0
    %v317 = vmax.f32 %v253, 0.0
    %v318 = vmax.f32 %v254, 0.0
    %v319 = vmax.f32 %v255, 0.0
    %v320 = vmax.f32 %v256, 0.0
    %v321 = vmax.f32 %v257, 0.0
    %v322 = vmax.f32 %v258, 0.0
    %v323 = vmax.f32 %v259, 0.0
    %v324 = vmax.f32 %v260, 0.0
    %v325 = vmax.f32 %v261, 0.0
    %v326 = vmax.f32 %v262, 0.0
    %v327 = vmax.f32 %v263, 0.0
    %v328 = vmax.f32 %v264, 0.0
    %v329 = vmax.f32 %v265, 0.0
    %v330 = vmax.f32 %v266, 0.0
    %v331 = vmax.f32 %v267, 0.0
    %v332 = vmax.f32 %v268, 0.0
    %v333 = vmax.f32 %v269, 0.0
    %v334 = vmax.f32 %v270, 0.0
    %v335 = vmax.f32 %v271, 0.0
    %v336 = vmax.f32 %v272, 0.0
    %v337 = vmax.f32 %v273, 0.0
    %v338 = vmax.f32 %v274, 0.0
    %v339 = vmax.f32 %v275, 0.0
    %v340 = vmax.f32 %v276, 0.0
    %v341 = vmax.f32 %v277, 0.0
    %v342 = vmax.f32 %v278, 0.0
    %v343 = vmax.f32 %v279, 0.0
    %v344 = vmax.f32 %v280, 0.0
    %v345 = vmax.f32 %v281, 0.0
    %v346 = vmax.f32 %v282, 0.0
    %v347 = vmax.f32 %v283, 0.0
    %v348 = vmax.f32 %v284, 0.0
    %v349 = vmax.f32 %v285, 0.0
    %v350 = vmax.f32 %v286, 0.0
    %v351 = vmax.f32 %v287, 0.0
    %v352 = vmax.f32 %v288, 0.0
    %v353 = vmax.f32 %v289, 0.0
    %v354 = vmax.f32 %v290, 0.0
    %v355 = vmax.f32 %v291, 0.0
    %v356 = vadd.f32 %v292, %v293
    %v357 = vadd.f32 %v356, %v294
    %v358 = vadd.f32 %v357, %v295
    %v359 = vadd.f32 %v358, %v296
    %v360 = vadd.f32 %v359, %v297
    %v361 = vadd.f32 %v360, %v298
    %v362 = vadd.f32 %v361, %v299
    %v363 = vadd.f32 %v362, %v300
    %v364 = vadd.f32 %v363, %v301
    %v365 = vadd.f32 %v364, %v302
    %v366 = vadd.f32 %v365, %v303
    %v367 = vadd.f32 %v366, %v304
    %v368 = vadd.f32 %v367, %v305
    %v369 = vadd.f32 %v368, %v306
    %v370 = vadd.f32 %v369, %v307
    %v371 = vadd.f32 %v370, %v308
    %v372 = vadd.f32 %v371, %v309
    %v373 = vadd.f32 %v372, %v310
    %v374 = vadd.f32 %v373, %v311
    %v375 = vadd.f32 %v374, %v312
    %v376 = vadd.f32 %v375, %v313
    %v377 = vadd.f32 %v376, %v314
    %v378 = vadd.f32 %v377, %v315
    %v379 = vadd.f32 %v378, %v316
    %v380 = vadd.f32 %v379, %v317
    %v381 = vadd.f32 %v380, %v318
    %v382 = vadd.f32 %v381, %v319
    %v383 = vadd.f32 %v382, %v320
    %v384 = vadd.f32 %v383, %v321
    %v385 = vadd.f32 %v384, %v322
    %v386 = vadd.f32 %v385, %v323
    %v387 = vrot.slane %v386, 4
    %v388 = vadd.f32 %v386, %v387
    %v389 = vrot.slane %v388, 2
    %v390 = vadd.f32 %v388, %v389
    %v391 = vrot.slane %v390, 1
    %v392 = vadd.f32 %v390, %v391
    %v393 = vadd.f32 %v324, %v325
    %v394 = vadd.f32 %v393, %v326
    %v395 = vadd.f32 %v394, %v327
    %v396 = vadd.f32 %v395, %v328
    %v397 = vadd.f32 %v396, %v329
    %v398 = vadd.f32 %v397, %v330
    %v399 = vadd.f32 %v398, %v331
    %v400 = vadd.f32 %v399, %v332
    %v401 = vadd.f32 %v400, %v333
    %v402 = vadd.f32 %v401, %v334
    %v403 = vadd.f32 %v402, %v335
    %v404 = vadd.f32 %v403, %v336
    %v405 = vadd.f32 %v404, %v337
    %v406 = vadd.f32 %v405, %v338
    %v407 = vadd.f32 %v406, %v339
    %v408 = vadd.f32 %v407, %v340
    %v409 = vadd.f32 %v408, %v341
    %v410 = vadd.f32 %v409, %v342
    %v411 = vadd.f32 %v410, %v343
    %v412 = vadd.f32 %v411, %v344
    %v413 = vadd.f32 %v412, %v345
    %v414 = vadd.f32 %v413, %v346
    %v415 = vadd.f32 %v414, %v347
    %v416 = vadd.f32 %v415, %v348
    %v417 = vadd.f32 %v416, %v349
    %v418 = vadd.f32 %v417, %v350
    %v419 = vadd.f32 %v418, %v351
    %v420 = vadd.f32 %v419, %v352
    %v421 = vadd.f32 %v420, %v353
    %v422 = vadd.f32 %v421, %v354
    %v423 = vadd.f32 %v422, %v355
    %v424 = vrot.slane %v423, 4
    %v425 = vadd.f32 %v423, %v424
    %v426 = vrot.slane %v425, 2
    %v427 = vadd.f32 %v425, %v426
    %v428 = vrot.slane %v427, 1
    %v429 = vadd.f32 %v427, %v428
    %v430 = vrcp.pop 256.0
    %v431 = vmul.f32 %v392, %v430
    %v432 = vmul.f32 %v429, %v430
    %v433 = vpack.c.bf16 %v431, %v431
    %v434 = vpack.c.bf16 %v432, %v432
    %v435 = vld [vmem:[%s3] sm:$0xf]
    %v436 = vld [vmem:[%s3 + $0x4] sm:$0xf]
    %v437 = vld [vmem:[%s3 + $0x8] sm:$0xf]
    %v438 = vld [vmem:[%s3 + $0xc] sm:$0xf]
    %v439 = vld [vmem:[%s3 + $0x10] sm:$0xf]
    %v440 = vld [vmem:[%s3 + $0x14] sm:$0xf]
    %v441 = vld [vmem:[%s3 + $0x18] sm:$0xf]
    %v442 = vld [vmem:[%s3 + $0x1c] sm:$0xf]
    %v443 = vld [vmem:[%s3 + $0x20] sm:$0xf]
    %v444 = vld [vmem:[%s3 + $0x24] sm:$0xf]
    %v445 = vld [vmem:[%s3 + $0x28] sm:$0xf]
    %v446 = vld [vmem:[%s3 + $0x2c] sm:$0xf]
    %v447 = vld [vmem:[%s3 + $0x30] sm:$0xf]
    %v448 = vld [vmem:[%s3 + $0x34] sm:$0xf]
    %v449 = vld [vmem:[%s3 + $0x38] sm:$0xf]
    %v450 = vld [vmem:[%s3 + $0x3c] sm:$0xf]
    %v451 = vld [vmem:[%s4] sm:$0x1]
    %v453 = vlaneseq
    %v454 = vshrl.u32 %v453, 7
    %v455 = vsub.s32 0, %v454
    %v456 = vrot.slane %v451, %v455
    %v460 = vunpack.c.l.b16 %v433
    %v461 = vunpack.c.l.b16 %v434
    %vm462 = vcmask 1041409
    %v463 = vsel %vm462, %v461, %v460
    %v464 = vpack.c.b16 %v463, %v463
    %v482 = vunpack.c.l.b16 %v435
    %v483 = vunpack.c.l.b16 %v436
    %v484 = vunpack.c.l.b16 %v437
    %v485 = vunpack.c.l.b16 %v438
    %v486 = vunpack.c.l.b16 %v439
    %v487 = vunpack.c.l.b16 %v440
    %v488 = vunpack.c.l.b16 %v441
    %v489 = vunpack.c.l.b16 %v442
    %v490 = vunpack.c.l.b16 %v443
    %v491 = vunpack.c.l.b16 %v444
    %v492 = vunpack.c.l.b16 %v445
    %v493 = vunpack.c.l.b16 %v446
    %v494 = vunpack.c.l.b16 %v447
    %v495 = vunpack.c.l.b16 %v448
    %v496 = vunpack.c.l.b16 %v449
    %v497 = vunpack.c.l.b16 %v450
    %v498 = vpack.c.b16 %v483, %v482
    %v499 = vpack.c.b16 %v485, %v484
    %v500 = vpack.c.b16 %v487, %v486
    %v501 = vpack.c.b16 %v489, %v488
    %v502 = vpack.c.b16 %v491, %v490
    %v503 = vpack.c.b16 %v493, %v492
    %v504 = vpack.c.b16 %v495, %v494
    %v505 = vpack.c.b16 %v497, %v496
    %514 = vmatprep.subr.bf16.mxu0 0
    %515 = vmatpush1.bf16.msra.mxu0 %v505
    %516 = vmatprep.subr.bf16.mxu0 0
    %517 = vmatpush1.bf16.msra.mxu0 %v504
    %518 = vmatprep.subr.bf16.mxu0 0
    %519 = vmatpush1.bf16.msra.mxu0 %v503
    %520 = vmatprep.subr.bf16.mxu0 0
    %521 = vmatpush1.bf16.msra.mxu0 %v502
    %522 = vmatprep.subr.bf16.mxu0 0
    %523 = vmatpush1.bf16.msra.mxu0 %v501
    %524 = vmatprep.subr.bf16.mxu0 0
    %525 = vmatpush1.bf16.msra.mxu0 %v500
    %526 = vmatprep.subr.bf16.mxu0 0
    %527 = vmatpush1.bf16.msra.mxu0 %v499
    %528 = vmatprep.subr.bf16.mxu0 0
    %529 = vmatpush1.bf16.msra.mxu0 %v498
    %530 = vmatprep.subr.bf16.mxu0 0
    %531 = vmatpush2.bf16.msra.mxu0 0
    %532 = vmatprep.subr.bf16.mxu0 0
    %533 = vmatpush2.bf16.msra.mxu0 0
    %534 = vmatprep.subr.bf16.mxu0 0
    %535 = vmatpush2.bf16.msra.mxu0 0
    %536 = vmatprep.subr.bf16.mxu0 0
    %537 = vmatpush2.bf16.msra.mxu0 0
    %538 = vmatprep.subr.bf16.mxu0 0
    %539 = vmatpush2.bf16.msra.mxu0 0
    %540 = vmatprep.subr.bf16.mxu0 0
    %541 = vmatpush2.bf16.msra.mxu0 0
    %542 = vmatprep.subr.bf16.mxu0 0
    %543 = vmatpush2.bf16.msra.mxu0 0
    %544 = vmatprep.subr.bf16.mxu0 0
    %545 = vmatpush2.bf16.msra.mxu0 0
    %546 = vmatprep.mubr.bf16.mxu0 0
    %547 = vmatmul.mubr.bf16.gmra.mxu0 %v464
    %v548 = vpop.f32.mrf.mxu0
    %v549 = vadd.f32 %v456, %v548
    %v550 = vpop.f32.mrf.mxu0
    %v551 = vpop.f32.mrf.mxu0
    %v552 = vpop.f32.mrf.mxu0
    %553 = vdwg.mxu0
    %v554 = vxor.u32 %v549, 2147483648
    %v555 = vmul.f32 %v554, 1.442695
    %v556 = vpow.pop %v555
    %v557 = vadd.f32 %v556, 1.0
    %v558 = vrcp.pop %v557
    %v559 = vmul.f32 1.0, %v558
    %560 = vst [vmem:[#allocation2] sm:$0x3] %v559
    // Predicated region
    $region22: #{densenet_imagenet_forward.17} parent=1 // pred_check
      _
    $region23: #{densenet_imagenet_forward.17} parent=1 // pred_check_branch
      %562 = sbr.rel (0) target = $region25
    $region24: #{densenet_imagenet_forward.17} parent=1 // pred_region
      %s564 = ssub.s32 32, 32
      %565 = vsyncadd [#allocation3], %s564
      %s567 = sshll.u32 [#allocation2], 4
      %s568 = int_to_ptr.vmem [resolvable:$true] %s567
      %570 = dma.vmem_to_hbm [thread:$0]  %s568, 32, %s5, [#allocation3]
    $region25: #{densenet_imagenet_forward.17} parent=1 // pred_fallthru
      _
    // Predicated region
    $region26: #{densenet_imagenet_forward.17} parent=1 // pred_check
      _
    $region27: #{densenet_imagenet_forward.17} parent=1 // pred_check_branch
      %572 = sbr.rel (0) target = $region29
    $region28: #{densenet_imagenet_forward.17} parent=1 // pred_region
      %573 = dma.done [#allocation3], 32
    $region29: #{densenet_imagenet_forward.17} parent=1 // pred_fallthru
      _
    %574 = vsyncpa [#allocation3], 1

</llo_original>
